<compile_context>
chip_gen: v6e
topology: v6e:2x2x1
jax: 0.10.0
libtpu: 0.0.40
codegen_flags: <defaults>
</compile_context>

<pallas_src>
import jax
import jax.numpy as jnp
from jax import lax
from jax.experimental import pallas as pl
from jax.experimental.pallas import tpu as pltpu

# ---- module hyper-params (from Rehab_training/GRU.py) ----
INPUT_SIZE = 12
HIDDEN_SIZE = 128          # lane-aligned gate slices (3H = 384)
NUM_LAYERS = 2
NUM_CLASSES = 16

# ---- small example shapes ----
BATCH = 2
SEQ = 8

BATCH_PAD = 8              # f32 sublane count -> tile-aligned per-timestep slices
CLASS_PAD = 128            # lane-dense head output (sliced back to NUM_CLASSES outside)

_VMEM = pl.BlockSpec(memory_space=pltpu.MemorySpace.VMEM)
_ANY = pl.BlockSpec(memory_space=pl.ANY)


# ----------------------------------------------------------------------------
# Fused Pallas kernel: 2 bidirectional GRU layers + linear head
# ----------------------------------------------------------------------------
def _fused_bigru_kernel(
    x_ref,                       # (S*BP, D_in)      f32, time-major, row = t*BP + b
    w_ih_0_ref,                  # (D_in, 6H)        f32   [fwd | bwd] along N
    w_hh_0f_ref, w_hh_0b_ref,    # (H, 3H)           bf16
    w_ih_1_hbm,                  # (2H, 6H)          bf16, ANY (manually DMA'd)
    w_hh_1f_hbm, w_hh_1b_hbm,    # (H, 3H)           bf16, ANY (manually DMA'd)
    fc_w_ref,                    # (2H, CP)          bf16
    fc_b_ref,                    # (1, CP)           f32
    b_gi_ref,                    # (NUM_LAYERS, 6H)  f32, folded gi biases (both dirs)
    b_n_ref,                     # (4, H)            f32, b_hh_n rows [l0f, l0b, l1f, l1b]
    out_ref,                     # (BP, CP)          f32
    l0_out,                      # VMEM (S*BP, 2H)   f32 scratch: layer-0 output
    w_ih_1_vmem, w_hh_1f_vmem, w_hh_1b_vmem,   # VMEM staging for layer-1 weights
    dma_sem,                     # DMA semaphores (3,)
):
    f32, bf16 = jnp.float32, jnp.bfloat16
    H = w_hh_0f_ref.shape[0]
    BP = out_ref.shape[0]
    S = x_ref.shape[0] // BP

    # ---- kick off layer-1 weight DMAs; they hide behind the layer-0 recurrence ----
    cp_wi1 = pltpu.make_async_copy(w_ih_1_hbm, w_ih_1_vmem, dma_sem.at[0])
    cp_whf = pltpu.make_async_copy(w_hh_1f_hbm, w_hh_1f_vmem, dma_sem.at[1])
    cp_whb = pltpu.make_async_copy(w_hh_1b_hbm, w_hh_1b_vmem, dma_sem.at[2])
    cp_wi1.start(); cp_whf.start(); cp_whb.start()

    def gru_cell(gi_t, h_prev, w_hh, bn_b):
        # gi_t already holds x @ W_ih + b_ih (+ b_hh for the r/z gates).
        gh = jnp.dot(h_prev.astype(bf16), w_hh, preferred_element_type=f32)
        r = jax.nn.sigmoid(gi_t[:, 0:H] + gh[:, 0:H])
        z = jax.nn.sigmoid(gi_t[:, H:2 * H] + gh[:, H:2 * H])
        n = jnp.tanh(gi_t[:, 2 * H:3 * H] + r * (gh[:, 2 * H:3 * H] + bn_b))
        return (1.0 - z) * n + z * h_prev

    # ---------------- layer 0: ONE fused hoisted input projection (both dirs) ----
    gi0 = (jnp.dot(x_ref[...], w_ih_0_ref[...], preferred_element_type=f32)
           + b_gi_ref[0:1, :])                          # (S*BP, 6H) f32
    gi0f = gi0[:, 0:3 * H]
    gi0b = gi0[:, 3 * H:6 * H]

    w_hh_0f = w_hh_0f_ref[...]
    w_hh_0b = w_hh_0b_ref[...]
    bn_0f = jnp.broadcast_to(b_n_ref[0:1, :], (BP, H))   # hoisted out of the unrolled loop
    bn_0b = jnp.broadcast_to(b_n_ref[1:2, :], (BP, H))

    h_f = jnp.zeros((BP, H), f32)                        # h0 = zeros (matches torch.zeros h0)
    h_b = jnp.zeros((BP, H), f32)
    for t in range(S):            # static unroll; every slice below is (8,128)-tile aligned
        tb = S - 1 - t
        h_f = gru_cell(gi0f[t * BP:(t + 1) * BP], h_f, w_hh_0f, bn_0f)
        h_b = gru_cell(gi0b[tb * BP:(tb + 1) * BP], h_b, w_hh_0b, bn_0b)
        l0_out[t * BP:(t + 1) * BP, 0:H] = h_f           # fwd output at time t
        l0_out[tb * BP:(tb + 1) * BP, H:2 * H] = h_b     # bwd output at time tb

    # ---------------- layer 1 -----------------------------------------------------
    cp_wi1.wait(); cp_whf.wait(); cp_whb.wait()          # prefetched behind layer-0 compute

    l1_in = l0_out[...].astype(bf16)                     # (S*BP, 2H)
    gi1 = (jnp.dot(l1_in, w_ih_1_vmem[...], preferred_element_type=f32)
           + b_gi_ref[1:2, :])                           # (S*BP, 6H) f32

    w_hh_1f = w_hh_1f_vmem[...]
    bn_1f = jnp.broadcast_to(b_n_ref[2:3, :], (BP, H))
    h_f = jnp.zeros((BP, H), f32)
    for t in range(S):                                   # forward chain: need h at t = S-1
        h_f = gru_cell(gi1[t * BP:(t + 1) * BP, 0:3 * H], h_f, w_hh_1f, bn_1f)

    # Backward direction of the last layer only contributes its output at position S-1
    # to out[:, -1, :], and that output is its FIRST step (it has seen only x[S-1]).
    # NOTE: only valid because the head consumes out[:, -1, :] exclusively.
    bn_1b = jnp.broadcast_to(b_n_ref[3:4, :], (BP, H))
    gi1b_last = gi1[(S - 1) * BP:S * BP, 3 * H:6 * H]
    h_b1 = gru_cell(gi1b_last, jnp.zeros((BP, H), f32), w_hh_1b_vmem[...], bn_1b)

    # ---------------- linear head (no lane concatenate, lane-dense store) ---------
    out_ref[...] = (
        jnp.dot(h_f.astype(bf16), fc_w_ref[0:H, :], preferred_element_type=f32)
        + jnp.dot(h_b1.astype(bf16), fc_w_ref[H:2 * H, :], preferred_element_type=f32)
        + fc_b_ref[...])


# ----------------------------------------------------------------------------
# Wrapper
# ----------------------------------------------------------------------------
def _fold_dir_biases(b_ih, b_hh):
    """r/z gate biases fold into the gi precompute; b_hh_n stays inside the r*(.) term."""
    H = HIDDEN_SIZE
    b_gi = jnp.concatenate([b_ih[:, :2 * H] + b_hh[:, :2 * H], b_ih[:, 2 * H:]], axis=-1)
    b_n = b_hh[:, 2 * H:]
    return b_gi, b_n


@jax.jit
def bigru_classifier_forward(x, params):
    """x: (batch, seq, input_size) float32 -> (batch, num_classes) float32."""
    B, S, D = x.shape
    BP, H, CP = BATCH_PAD, HIDDEN_SIZE, CLASS_PAD
    f32, bf16 = jnp.float32, jnp.bfloat16

    # Pad batch to the sublane count and go time-major: row index = t*BP + b.
    x_pad = jnp.zeros((BP, S, D), f32).at[:B].set(x.astype(f32))
    x_tm = jnp.transpose(x_pad, (1, 0, 2)).reshape(S * BP, D)

    # Direction-fused input-projection weights; hidden-sized weights cast to bf16
    # (matmuls accumulate in f32 via preferred_element_type).
    w_ih_0 = jnp.concatenate([params["l0f_w_ih"], params["l0b_w_ih"]], axis=1)          # f32
    w_ih_1 = jnp.concatenate([params["l1f_w_ih"], params["l1b_w_ih"]], axis=1).astype(bf16)
    w_hh_0f = params["l0f_w_hh"].astype(bf16)
    w_hh_0b = params["l0b_w_hh"].astype(bf16)
    w_hh_1f = params["l1f_w_hh"].astype(bf16)
    w_hh_1b = params["l1b_w_hh"].astype(bf16)

    # Folded biases, coalesced into two small f32 arrays (fewer prologue DMAs).
    gi_rows, n_rows = [], []
    for layer in range(NUM_LAYERS):
        row = []
        for d in ("f", "b"):
            bg, bn = _fold_dir_biases(params[f"l{layer}{d}_b_ih"],
                                      params[f"l{layer}{d}_b_hh"])
            row.append(bg[0])
            n_rows.append(bn)
        gi_rows.append(jnp.concatenate(row))
    b_gi = jnp.stack(gi_rows, axis=0)                    # (NUM_LAYERS, 6H)
    b_n = jnp.concatenate(n_rows, axis=0)                # (4, H)  [l0f, l0b, l1f, l1b]

    # Classifier head padded to 128 output lanes for an unmasked store.
    fc_w = jnp.zeros((2 * H, CP), f32).at[:, :NUM_CLASSES].set(params["fc_w"]).astype(bf16)
    fc_b = jnp.zeros((1, CP), f32).at[:, :NUM_CLASSES].set(params["fc_b"])

    out = pl.pallas_call(
        _fused_bigru_kernel,
        out_shape=jax.ShapeDtypeStruct((BP, CP), jnp.float32),
        in_specs=[_VMEM, _VMEM, _VMEM, _VMEM,            # x, layer-0 weights
                  _ANY, _ANY, _ANY,                      # layer-1 weights (manual DMA)
                  _VMEM, _VMEM, _VMEM, _VMEM],           # fc_w, fc_b, b_gi, b_n
        out_specs=_VMEM,
        scratch_shapes=[
            pltpu.VMEM((S * BP, 2 * H), jnp.float32),    # layer-0 output
            pltpu.VMEM((2 * H, 6 * H), jnp.bfloat16),    # w_ih_1 staging
            pltpu.VMEM((H, 3 * H), jnp.bfloat16),        # w_hh_1f staging
            pltpu.VMEM((H, 3 * H), jnp.bfloat16),        # w_hh_1b staging
            pltpu.SemaphoreType.DMA((3,)),
        ],
        compiler_params=pltpu.CompilerParams(
            vmem_limit_bytes=32 * 1024 * 1024),          # footprint ~2 MB; explicit headroom
    )(x_tm, w_ih_0, w_hh_0f, w_hh_0b, w_ih_1, w_hh_1f, w_hh_1b,
      fc_w, fc_b, b_gi, b_n)

    return out[:B, :NUM_CLASSES]


# ----------------------------------------------------------------------------
# Parameter construction (deterministic, PyTorch-style uniform(-k, k))
# ----------------------------------------------------------------------------
def init_params(key):
    k = 1.0 / jnp.sqrt(HIDDEN_SIZE)
    n_keys = NUM_LAYERS * 2 * 4 + 2
    keys = list(jax.random.split(key, n_keys))
    params = {}

    def u(shape):
        return jax.random.uniform(keys.pop(), shape, jnp.float32, -k, k)

    for layer in range(NUM_LAYERS):
        d_in = INPUT_SIZE if layer == 0 else 2 * HIDDEN_SIZE
        for d in ("f", "b"):
            prefix = f"l{layer}{d}"
            # stored already transposed for x @ W: (D_in, 3H), (H, 3H); gates [r,z,n]
            params[prefix + "_w_ih"] = u((d_in, 3 * HIDDEN_SIZE))
            params[prefix + "_w_hh"] = u((HIDDEN_SIZE, 3 * HIDDEN_SIZE))
            params[prefix + "_b_ih"] = u((1, 3 * HIDDEN_SIZE))
            params[prefix + "_b_hh"] = u((1, 3 * HIDDEN_SIZE))
    params["fc_w"] = u((2 * HIDDEN_SIZE, NUM_CLASSES))
    params["fc_b"] = u((1, NUM_CLASSES))
    return params


# ----------------------------------------------------------------------------
# Pure-JAX reference (mirrors the original PyTorch forward exactly, f32)
# ----------------------------------------------------------------------------
def _ref_gru_dir(x_tm, w_ih, w_hh, b_ih, b_hh):
    H = HIDDEN_SIZE
    hi = jax.lax.Precision.HIGHEST

    def step(h, x_t):
        gi = jnp.dot(x_t, w_ih, precision=hi) + b_ih
        gh = jnp.dot(h, w_hh, precision=hi) + b_hh
        r = jax.nn.sigmoid(gi[:, :H] + gh[:, :H])
        z = jax.nn.sigmoid(gi[:, H:2 * H] + gh[:, H:2 * H])
        n = jnp.tanh(gi[:, 2 * H:] + r * gh[:, 2 * H:])
        h_new = (1.0 - z) * n + z * h
        return h_new, h_new

    h0 = jnp.zeros((x_tm.shape[1], H), jnp.float32)
    _, outs = lax.scan(step, h0, x_tm)
    return outs


def _ref_forward(x, params):
    h = jnp.transpose(x, (1, 0, 2)).astype(jnp.float32)       # (seq, B, D)
    for layer in range(NUM_LAYERS):
        pf = {n: params[f"l{layer}f_{n}"] for n in ("w_ih", "w_hh", "b_ih", "b_hh")}
        pb = {n: params[f"l{layer}b_{n}"] for n in ("w_ih", "w_hh", "b_ih", "b_hh")}
        out_f = _ref_gru_dir(h, **pf)
        out_b = _ref_gru_dir(h[::-1], **pb)[::-1]
        h = jnp.concatenate([out_f, out_b], axis=-1)           # (seq, B, 2H)
    return (jnp.dot(h[-1], params["fc_w"], precision=jax.lax.Precision.HIGHEST)
            + params["fc_b"])


# ----------------------------------------------------------------------------
if __name__ == "__main__":
    key = jax.random.PRNGKey(0)
    kx, kp = jax.random.split(key)

    x = jax.random.normal(kx, (BATCH, SEQ, INPUT_SIZE), jnp.float32)
    params = init_params(kp)

    out = jax.block_until_ready(bigru_classifier_forward(x, params))
    assert out.shape == (BATCH, NUM_CLASSES), out.shape

    ref = jax.block_until_ready(_ref_forward(x, params))
    # Hidden-sized weights are consumed in bf16 (f32 accumulation), so allow a modest
    # tolerance against the f32 HIGHEST-precision XLA reference.
    assert jnp.allclose(out, ref, atol=3e-2, rtol=3e-2), (
        float(jnp.max(jnp.abs(out - ref))))

    print("KERNEL_OK")
</pallas_src>

<mosaic_0001>
module attributes {stable_mosaic.version = 11 : i64} {
  func.func @_fused_bigru_kernel(%arg0: memref<64x12xf32, #tpu.memory_space<vmem>>, %arg1: memref<12x768xf32, #tpu.memory_space<vmem>>, %arg2: memref<128x384xbf16, #tpu.memory_space<vmem>>, %arg3: memref<128x384xbf16, #tpu.memory_space<vmem>>, %arg4: memref<256x768xbf16, #tpu.memory_space<any>>, %arg5: memref<128x384xbf16, #tpu.memory_space<any>>, %arg6: memref<128x384xbf16, #tpu.memory_space<any>>, %arg7: memref<256x128xbf16, #tpu.memory_space<vmem>>, %arg8: memref<1x128xf32, #tpu.memory_space<vmem>>, %arg9: memref<2x768xf32, #tpu.memory_space<vmem>>, %arg10: memref<4x128xf32, #tpu.memory_space<vmem>>, %arg11: memref<8x128xf32, #tpu.memory_space<vmem>>, %arg12: memref<64x256xf32, #tpu.memory_space<vmem>>, %arg13: memref<256x768xbf16, #tpu.memory_space<vmem>>, %arg14: memref<128x384xbf16, #tpu.memory_space<vmem>>, %arg15: memref<128x384xbf16, #tpu.memory_space<vmem>>, %arg16: memref<3x!tpu.dma_semaphore, #tpu.memory_space<semaphore_mem>>) attributes {dimension_semantics = [], scalar_prefetch = 0 : i64, scratch_operands = 5 : i64, tpu.core_type = #tpu.core_type<tc>} {
    %c0_i32 = arith.constant 0 : i32
    %0 = tpu.memref_slice %arg16[%c0_i32] : memref<3x!tpu.dma_semaphore, #tpu.memory_space<semaphore_mem>> -> memref<1x!tpu.dma_semaphore, #tpu.memory_space<semaphore_mem>>
    %1 = tpu.memref_squeeze %0 : memref<1x!tpu.dma_semaphore, #tpu.memory_space<semaphore_mem>> -> memref<!tpu.dma_semaphore, #tpu.memory_space<semaphore_mem>>
    tpu.enqueue_dma source(%arg4 : memref<256x768xbf16, #tpu.memory_space<any>>) target(%arg13 : memref<256x768xbf16, #tpu.memory_space<vmem>>) target_semaphore(%1 : memref<!tpu.dma_semaphore, #tpu.memory_space<semaphore_mem>>)
    %c1_i32 = arith.constant 1 : i32
    %2 = tpu.memref_slice %arg16[%c1_i32] : memref<3x!tpu.dma_semaphore, #tpu.memory_space<semaphore_mem>> -> memref<1x!tpu.dma_semaphore, #tpu.memory_space<semaphore_mem>>
    %3 = tpu.memref_squeeze %2 : memref<1x!tpu.dma_semaphore, #tpu.memory_space<semaphore_mem>> -> memref<!tpu.dma_semaphore, #tpu.memory_space<semaphore_mem>>
    tpu.enqueue_dma source(%arg5 : memref<128x384xbf16, #tpu.memory_space<any>>) target(%arg14 : memref<128x384xbf16, #tpu.memory_space<vmem>>) target_semaphore(%3 : memref<!tpu.dma_semaphore, #tpu.memory_space<semaphore_mem>>)
    %c2_i32 = arith.constant 2 : i32
    %4 = tpu.memref_slice %arg16[%c2_i32] : memref<3x!tpu.dma_semaphore, #tpu.memory_space<semaphore_mem>> -> memref<1x!tpu.dma_semaphore, #tpu.memory_space<semaphore_mem>>
    %5 = tpu.memref_squeeze %4 : memref<1x!tpu.dma_semaphore, #tpu.memory_space<semaphore_mem>> -> memref<!tpu.dma_semaphore, #tpu.memory_space<semaphore_mem>>
    tpu.enqueue_dma source(%arg6 : memref<128x384xbf16, #tpu.memory_space<any>>) target(%arg15 : memref<128x384xbf16, #tpu.memory_space<vmem>>) target_semaphore(%5 : memref<!tpu.dma_semaphore, #tpu.memory_space<semaphore_mem>>)
    %c0 = arith.constant 0 : index
    %c0_0 = arith.constant 0 : index
    %6 = vector.load %arg0[%c0, %c0_0] : memref<64x12xf32, #tpu.memory_space<vmem>>, vector<64x12xf32>
    %c0_1 = arith.constant 0 : index
    %c0_2 = arith.constant 0 : index
    %7 = vector.load %arg1[%c0_1, %c0_2] : memref<12x768xf32, #tpu.memory_space<vmem>>, vector<12x768xf32>
    %cst = arith.constant dense<0.000000e+00> : vector<64x768xf32>
    %8 = tpu.matmul %6, %7, %cst {dimension_numbers = #tpu.dot_dimension_numbers<[1], [0], [0], [1], [0, 0, 1, 1], [], []>} : vector<64x12xf32>, vector<12x768xf32>, vector<64x768xf32> -> vector<64x768xf32>
    %c0_3 = arith.constant 0 : index
    %c0_4 = arith.constant 0 : index
    %9 = vector.load %arg9[%c0_3, %c0_4] : memref<2x768xf32, #tpu.memory_space<vmem>>, vector<1x768xf32>
    %10 = vector.broadcast %9 : vector<1x768xf32> to vector<64x768xf32>
    %11 = arith.addf %8, %10 : vector<64x768xf32>
    %12 = vector.extract_strided_slice %11 {offsets = [0, 0], sizes = [64, 384], strides = [1, 1]} : vector<64x768xf32> to vector<64x384xf32>
    %13 = vector.extract_strided_slice %11 {offsets = [0, 384], sizes = [64, 384], strides = [1, 1]} : vector<64x768xf32> to vector<64x384xf32>
    %c0_5 = arith.constant 0 : index
    %c0_6 = arith.constant 0 : index
    %14 = vector.load %arg2[%c0_5, %c0_6] : memref<128x384xbf16, #tpu.memory_space<vmem>>, vector<128x384xbf16>
    %c0_7 = arith.constant 0 : index
    %c0_8 = arith.constant 0 : index
    %15 = vector.load %arg3[%c0_7, %c0_8] : memref<128x384xbf16, #tpu.memory_space<vmem>>, vector<128x384xbf16>
    %c0_9 = arith.constant 0 : index
    %c0_10 = arith.constant 0 : index
    %16 = vector.load %arg10[%c0_9, %c0_10] : memref<4x128xf32, #tpu.memory_space<vmem>>, vector<1x128xf32>
    %17 = vector.shape_cast %16 : vector<1x128xf32> to vector<1x128xf32>
    %18 = vector.broadcast %17 : vector<1x128xf32> to vector<8x128xf32>
    %c1 = arith.constant 1 : index
    %c0_11 = arith.constant 0 : index
    %19 = vector.load %arg10[%c1, %c0_11] : memref<4x128xf32, #tpu.memory_space<vmem>>, vector<1x128xf32>
    %20 = vector.shape_cast %19 : vector<1x128xf32> to vector<1x128xf32>
    %21 = vector.broadcast %20 : vector<1x128xf32> to vector<8x128xf32>
    %cst_12 = arith.constant 0.000000e+00 : f32
    %22 = vector.broadcast %cst_12 : f32 to vector<8x128xf32>
    %cst_13 = arith.constant 0.000000e+00 : f32
    %23 = vector.broadcast %cst_13 : f32 to vector<8x128xf32>
    %24 = vector.extract_strided_slice %12 {offsets = [0, 0], sizes = [8, 384], strides = [1, 1]} : vector<64x384xf32> to vector<8x384xf32>
    %25 = arith.truncf %22 : vector<8x128xf32> to vector<8x128xbf16>
    %cst_14 = arith.constant dense<0.000000e+00> : vector<8x384xf32>
    %26 = tpu.matmul %25, %14, %cst_14 {dimension_numbers = #tpu.dot_dimension_numbers<[1], [0], [0], [1], [0, 0, 1, 1], [], []>} : vector<8x128xbf16>, vector<128x384xbf16>, vector<8x384xf32> -> vector<8x384xf32>
    %27 = vector.extract_strided_slice %24 {offsets = [0, 0], sizes = [8, 128], strides = [1, 1]} : vector<8x384xf32> to vector<8x128xf32>
    %28 = vector.extract_strided_slice %26 {offsets = [0, 0], sizes = [8, 128], strides = [1, 1]} : vector<8x384xf32> to vector<8x128xf32>
    %29 = arith.addf %27, %28 : vector<8x128xf32>
    %30 = arith.negf %29 : vector<8x128xf32>
    %31 = math.exp %30 : vector<8x128xf32>
    %cst_15 = arith.constant 1.000000e+00 : f32
    %32 = vector.broadcast %cst_15 : f32 to vector<8x128xf32>
    %33 = arith.addf %32, %31 : vector<8x128xf32>
    %34 = arith.divf %32, %33 : vector<8x128xf32>
    %35 = vector.extract_strided_slice %24 {offsets = [0, 128], sizes = [8, 128], strides = [1, 1]} : vector<8x384xf32> to vector<8x128xf32>
    %36 = vector.extract_strided_slice %26 {offsets = [0, 128], sizes = [8, 128], strides = [1, 1]} : vector<8x384xf32> to vector<8x128xf32>
    %37 = arith.addf %35, %36 : vector<8x128xf32>
    %38 = arith.negf %37 : vector<8x128xf32>
    %39 = math.exp %38 : vector<8x128xf32>
    %cst_16 = arith.constant 1.000000e+00 : f32
    %40 = vector.broadcast %cst_16 : f32 to vector<8x128xf32>
    %41 = arith.addf %40, %39 : vector<8x128xf32>
    %42 = arith.divf %40, %41 : vector<8x128xf32>
    %43 = vector.extract_strided_slice %24 {offsets = [0, 256], sizes = [8, 128], strides = [1, 1]} : vector<8x384xf32> to vector<8x128xf32>
    %44 = vector.extract_strided_slice %26 {offsets = [0, 256], sizes = [8, 128], strides = [1, 1]} : vector<8x384xf32> to vector<8x128xf32>
    %45 = arith.addf %44, %18 : vector<8x128xf32>
    %46 = arith.mulf %34, %45 : vector<8x128xf32>
    %47 = arith.addf %43, %46 : vector<8x128xf32>
    %48 = math.tanh %47 : vector<8x128xf32>
    %cst_17 = arith.constant 1.000000e+00 : f32
    %49 = vector.broadcast %cst_17 : f32 to vector<8x128xf32>
    %50 = arith.subf %49, %42 : vector<8x128xf32>
    %51 = arith.mulf %50, %48 : vector<8x128xf32>
    %52 = arith.mulf %42, %22 : vector<8x128xf32>
    %53 = arith.addf %51, %52 : vector<8x128xf32>
    %54 = vector.extract_strided_slice %13 {offsets = [56, 0], sizes = [8, 384], strides = [1, 1]} : vector<64x384xf32> to vector<8x384xf32>
    %55 = arith.truncf %23 : vector<8x128xf32> to vector<8x128xbf16>
    %cst_18 = arith.constant dense<0.000000e+00> : vector<8x384xf32>
    %56 = tpu.matmul %55, %15, %cst_18 {dimension_numbers = #tpu.dot_dimension_numbers<[1], [0], [0], [1], [0, 0, 1, 1], [], []>} : vector<8x128xbf16>, vector<128x384xbf16>, vector<8x384xf32> -> vector<8x384xf32>
    %57 = vector.extract_strided_slice %54 {offsets = [0, 0], sizes = [8, 128], strides = [1, 1]} : vector<8x384xf32> to vector<8x128xf32>
    %58 = vector.extract_strided_slice %56 {offsets = [0, 0], sizes = [8, 128], strides = [1, 1]} : vector<8x384xf32> to vector<8x128xf32>
    %59 = arith.addf %57, %58 : vector<8x128xf32>
    %60 = arith.negf %59 : vector<8x128xf32>
    %61 = math.exp %60 : vector<8x128xf32>
    %cst_19 = arith.constant 1.000000e+00 : f32
    %62 = vector.broadcast %cst_19 : f32 to vector<8x128xf32>
    %63 = arith.addf %62, %61 : vector<8x128xf32>
    %64 = arith.divf %62, %63 : vector<8x128xf32>
    %65 = vector.extract_strided_slice %54 {offsets = [0, 128], sizes = [8, 128], strides = [1, 1]} : vector<8x384xf32> to vector<8x128xf32>
    %66 = vector.extract_strided_slice %56 {offsets = [0, 128], sizes = [8, 128], strides = [1, 1]} : vector<8x384xf32> to vector<8x128xf32>
    %67 = arith.addf %65, %66 : vector<8x128xf32>
    %68 = arith.negf %67 : vector<8x128xf32>
    %69 = math.exp %68 : vector<8x128xf32>
    %cst_20 = arith.constant 1.000000e+00 : f32
    %70 = vector.broadcast %cst_20 : f32 to vector<8x128xf32>
    %71 = arith.addf %70, %69 : vector<8x128xf32>
    %72 = arith.divf %70, %71 : vector<8x128xf32>
    %73 = vector.extract_strided_slice %54 {offsets = [0, 256], sizes = [8, 128], strides = [1, 1]} : vector<8x384xf32> to vector<8x128xf32>
    %74 = vector.extract_strided_slice %56 {offsets = [0, 256], sizes = [8, 128], strides = [1, 1]} : vector<8x384xf32> to vector<8x128xf32>
    %75 = arith.addf %74, %21 : vector<8x128xf32>
    %76 = arith.mulf %64, %75 : vector<8x128xf32>
    %77 = arith.addf %73, %76 : vector<8x128xf32>
    %78 = math.tanh %77 : vector<8x128xf32>
    %cst_21 = arith.constant 1.000000e+00 : f32
    %79 = vector.broadcast %cst_21 : f32 to vector<8x128xf32>
    %80 = arith.subf %79, %72 : vector<8x128xf32>
    %81 = arith.mulf %80, %78 : vector<8x128xf32>
    %82 = arith.mulf %72, %23 : vector<8x128xf32>
    %83 = arith.addf %81, %82 : vector<8x128xf32>
    %c0_22 = arith.constant 0 : index
    %c0_23 = arith.constant 0 : index
    %84 = vector.load %arg12[%c0_22, %c0_23] : memref<64x256xf32, #tpu.memory_space<vmem>>, vector<8x128xf32>
    tpu.vector_store %arg12[%c0_22, %c0_23], %53 {strides = array<i32>} : memref<64x256xf32, #tpu.memory_space<vmem>>, vector<8x128xf32>,
    %c56 = arith.constant 56 : index
    %c128 = arith.constant 128 : index
    %85 = vector.load %arg12[%c56, %c128] : memref<64x256xf32, #tpu.memory_space<vmem>>, vector<8x128xf32>
    tpu.vector_store %arg12[%c56, %c128], %83 {strides = array<i32>} : memref<64x256xf32, #tpu.memory_space<vmem>>, vector<8x128xf32>,
    %86 = vector.extract_strided_slice %12 {offsets = [8, 0], sizes = [8, 384], strides = [1, 1]} : vector<64x384xf32> to vector<8x384xf32>
    %87 = arith.truncf %53 : vector<8x128xf32> to vector<8x128xbf16>
    %cst_24 = arith.constant dense<0.000000e+00> : vector<8x384xf32>
    %88 = tpu.matmul %87, %14, %cst_24 {dimension_numbers = #tpu.dot_dimension_numbers<[1], [0], [0], [1], [0, 0, 1, 1], [], []>} : vector<8x128xbf16>, vector<128x384xbf16>, vector<8x384xf32> -> vector<8x384xf32>
    %89 = vector.extract_strided_slice %86 {offsets = [0, 0], sizes = [8, 128], strides = [1, 1]} : vector<8x384xf32> to vector<8x128xf32>
    %90 = vector.extract_strided_slice %88 {offsets = [0, 0], sizes = [8, 128], strides = [1, 1]} : vector<8x384xf32> to vector<8x128xf32>
    %91 = arith.addf %89, %90 : vector<8x128xf32>
    %92 = arith.negf %91 : vector<8x128xf32>
    %93 = math.exp %92 : vector<8x128xf32>
    %cst_25 = arith.constant 1.000000e+00 : f32
    %94 = vector.broadcast %cst_25 : f32 to vector<8x128xf32>
    %95 = arith.addf %94, %93 : vector<8x128xf32>
    %96 = arith.divf %94, %95 : vector<8x128xf32>
    %97 = vector.extract_strided_slice %86 {offsets = [0, 128], sizes = [8, 128], strides = [1, 1]} : vector<8x384xf32> to vector<8x128xf32>
    %98 = vector.extract_strided_slice %88 {offsets = [0, 128], sizes = [8, 128], strides = [1, 1]} : vector<8x384xf32> to vector<8x128xf32>
    %99 = arith.addf %97, %98 : vector<8x128xf32>
    %100 = arith.negf %99 : vector<8x128xf32>
    %101 = math.exp %100 : vector<8x128xf32>
    %cst_26 = arith.constant 1.000000e+00 : f32
    %102 = vector.broadcast %cst_26 : f32 to vector<8x128xf32>
    %103 = arith.addf %102, %101 : vector<8x128xf32>
    %104 = arith.divf %102, %103 : vector<8x128xf32>
    %105 = vector.extract_strided_slice %86 {offsets = [0, 256], sizes = [8, 128], strides = [1, 1]} : vector<8x384xf32> to vector<8x128xf32>
    %106 = vector.extract_strided_slice %88 {offsets = [0, 256], sizes = [8, 128], strides = [1, 1]} : vector<8x384xf32> to vector<8x128xf32>
    %107 = arith.addf %106, %18 : vector<8x128xf32>
    %108 = arith.mulf %96, %107 : vector<8x128xf32>
    %109 = arith.addf %105, %108 : vector<8x128xf32>
    %110 = math.tanh %109 : vector<8x128xf32>
    %cst_27 = arith.constant 1.000000e+00 : f32
    %111 = vector.broadcast %cst_27 : f32 to vector<8x128xf32>
    %112 = arith.subf %111, %104 : vector<8x128xf32>
    %113 = arith.mulf %112, %110 : vector<8x128xf32>
    %114 = arith.mulf %104, %53 : vector<8x128xf32>
    %115 = arith.addf %113, %114 : vector<8x128xf32>
    %116 = vector.extract_strided_slice %13 {offsets = [48, 0], sizes = [8, 384], strides = [1, 1]} : vector<64x384xf32> to vector<8x384xf32>
    %117 = arith.truncf %83 : vector<8x128xf32> to vector<8x128xbf16>
    %cst_28 = arith.constant dense<0.000000e+00> : vector<8x384xf32>
    %118 = tpu.matmul %117, %15, %cst_28 {dimension_numbers = #tpu.dot_dimension_numbers<[1], [0], [0], [1], [0, 0, 1, 1], [], []>} : vector<8x128xbf16>, vector<128x384xbf16>, vector<8x384xf32> -> vector<8x384xf32>
    %119 = vector.extract_strided_slice %116 {offsets = [0, 0], sizes = [8, 128], strides = [1, 1]} : vector<8x384xf32> to vector<8x128xf32>
    %120 = vector.extract_strided_slice %118 {offsets = [0, 0], sizes = [8, 128], strides = [1, 1]} : vector<8x384xf32> to vector<8x128xf32>
    %121 = arith.addf %119, %120 : vector<8x128xf32>
    %122 = arith.negf %121 : vector<8x128xf32>
    %123 = math.exp %122 : vector<8x128xf32>
    %cst_29 = arith.constant 1.000000e+00 : f32
    %124 = vector.broadcast %cst_29 : f32 to vector<8x128xf32>
    %125 = arith.addf %124, %123 : vector<8x128xf32>
    %126 = arith.divf %124, %125 : vector<8x128xf32>
    %127 = vector.extract_strided_slice %116 {offsets = [0, 128], sizes = [8, 128], strides = [1, 1]} : vector<8x384xf32> to vector<8x128xf32>
    %128 = vector.extract_strided_slice %118 {offsets = [0, 128], sizes = [8, 128], strides = [1, 1]} : vector<8x384xf32> to vector<8x128xf32>
    %129 = arith.addf %127, %128 : vector<8x128xf32>
    %130 = arith.negf %129 : vector<8x128xf32>
    %131 = math.exp %130 : vector<8x128xf32>
    %cst_30 = arith.constant 1.000000e+00 : f32
    %132 = vector.broadcast %cst_30 : f32 to vector<8x128xf32>
    %133 = arith.addf %132, %131 : vector<8x128xf32>
    %134 = arith.divf %132, %133 : vector<8x128xf32>
    %135 = vector.extract_strided_slice %116 {offsets = [0, 256], sizes = [8, 128], strides = [1, 1]} : vector<8x384xf32> to vector<8x128xf32>
    %136 = vector.extract_strided_slice %118 {offsets = [0, 256], sizes = [8, 128], strides = [1, 1]} : vector<8x384xf32> to vector<8x128xf32>
    %137 = arith.addf %136, %21 : vector<8x128xf32>
    %138 = arith.mulf %126, %137 : vector<8x128xf32>
    %139 = arith.addf %135, %138 : vector<8x128xf32>
    %140 = math.tanh %139 : vector<8x128xf32>
    %cst_31 = arith.constant 1.000000e+00 : f32
    %141 = vector.broadcast %cst_31 : f32 to vector<8x128xf32>
    %142 = arith.subf %141, %134 : vector<8x128xf32>
    %143 = arith.mulf %142, %140 : vector<8x128xf32>
    %144 = arith.mulf %134, %83 : vector<8x128xf32>
    %145 = arith.addf %143, %144 : vector<8x128xf32>
    %c8 = arith.constant 8 : index
    %c0_32 = arith.constant 0 : index
    %146 = vector.load %arg12[%c8, %c0_32] : memref<64x256xf32, #tpu.memory_space<vmem>>, vector<8x128xf32>
    tpu.vector_store %arg12[%c8, %c0_32], %115 {strides = array<i32>} : memref<64x256xf32, #tpu.memory_space<vmem>>, vector<8x128xf32>,
    %c48 = arith.constant 48 : index
    %c128_33 = arith.constant 128 : index
    %147 = vector.load %arg12[%c48, %c128_33] : memref<64x256xf32, #tpu.memory_space<vmem>>, vector<8x128xf32>
    tpu.vector_store %arg12[%c48, %c128_33], %145 {strides = array<i32>} : memref<64x256xf32, #tpu.memory_space<vmem>>, vector<8x128xf32>,
    %148 = vector.extract_strided_slice %12 {offsets = [16, 0], sizes = [8, 384], strides = [1, 1]} : vector<64x384xf32> to vector<8x384xf32>
    %149 = arith.truncf %115 : vector<8x128xf32> to vector<8x128xbf16>
    %cst_34 = arith.constant dense<0.000000e+00> : vector<8x384xf32>
    %150 = tpu.matmul %149, %14, %cst_34 {dimension_numbers = #tpu.dot_dimension_numbers<[1], [0], [0], [1], [0, 0, 1, 1], [], []>} : vector<8x128xbf16>, vector<128x384xbf16>, vector<8x384xf32> -> vector<8x384xf32>
    %151 = vector.extract_strided_slice %148 {offsets = [0, 0], sizes = [8, 128], strides = [1, 1]} : vector<8x384xf32> to vector<8x128xf32>
    %152 = vector.extract_strided_slice %150 {offsets = [0, 0], sizes = [8, 128], strides = [1, 1]} : vector<8x384xf32> to vector<8x128xf32>
    %153 = arith.addf %151, %152 : vector<8x128xf32>
    %154 = arith.negf %153 : vector<8x128xf32>
    %155 = math.exp %154 : vector<8x128xf32>
    %cst_35 = arith.constant 1.000000e+00 : f32
    %156 = vector.broadcast %cst_35 : f32 to vector<8x128xf32>
    %157 = arith.addf %156, %155 : vector<8x128xf32>
    %158 = arith.divf %156, %157 : vector<8x128xf32>
    %159 = vector.extract_strided_slice %148 {offsets = [0, 128], sizes = [8, 128], strides = [1, 1]} : vector<8x384xf32> to vector<8x128xf32>
    %160 = vector.extract_strided_slice %150 {offsets = [0, 128], sizes = [8, 128], strides = [1, 1]} : vector<8x384xf32> to vector<8x128xf32>
    %161 = arith.addf %159, %160 : vector<8x128xf32>
    %162 = arith.negf %161 : vector<8x128xf32>
    %163 = math.exp %162 : vector<8x128xf32>
    %cst_36 = arith.constant 1.000000e+00 : f32
    %164 = vector.broadcast %cst_36 : f32 to vector<8x128xf32>
    %165 = arith.addf %164, %163 : vector<8x128xf32>
    %166 = arith.divf %164, %165 : vector<8x128xf32>
    %167 = vector.extract_strided_slice %148 {offsets = [0, 256], sizes = [8, 128], strides = [1, 1]} : vector<8x384xf32> to vector<8x128xf32>
    %168 = vector.extract_strided_slice %150 {offsets = [0, 256], sizes = [8, 128], strides = [1, 1]} : vector<8x384xf32> to vector<8x128xf32>
    %169 = arith.addf %168, %18 : vector<8x128xf32>
    %170 = arith.mulf %158, %169 : vector<8x128xf32>
    %171 = arith.addf %167, %170 : vector<8x128xf32>
    %172 = math.tanh %171 : vector<8x128xf32>
    %cst_37 = arith.constant 1.000000e+00 : f32
    %173 = vector.broadcast %cst_37 : f32 to vector<8x128xf32>
    %174 = arith.subf %173, %166 : vector<8x128xf32>
    %175 = arith.mulf %174, %172 : vector<8x128xf32>
    %176 = arith.mulf %166, %115 : vector<8x128xf32>
    %177 = arith.addf %175, %176 : vector<8x128xf32>
    %178 = vector.extract_strided_slice %13 {offsets = [40, 0], sizes = [8, 384], strides = [1, 1]} : vector<64x384xf32> to vector<8x384xf32>
    %179 = arith.truncf %145 : vector<8x128xf32> to vector<8x128xbf16>
    %cst_38 = arith.constant dense<0.000000e+00> : vector<8x384xf32>
    %180 = tpu.matmul %179, %15, %cst_38 {dimension_numbers = #tpu.dot_dimension_numbers<[1], [0], [0], [1], [0, 0, 1, 1], [], []>} : vector<8x128xbf16>, vector<128x384xbf16>, vector<8x384xf32> -> vector<8x384xf32>
    %181 = vector.extract_strided_slice %178 {offsets = [0, 0], sizes = [8, 128], strides = [1, 1]} : vector<8x384xf32> to vector<8x128xf32>
    %182 = vector.extract_strided_slice %180 {offsets = [0, 0], sizes = [8, 128], strides = [1, 1]} : vector<8x384xf32> to vector<8x128xf32>
    %183 = arith.addf %181, %182 : vector<8x128xf32>
    %184 = arith.negf %183 : vector<8x128xf32>
    %185 = math.exp %184 : vector<8x128xf32>
    %cst_39 = arith.constant 1.000000e+00 : f32
    %186 = vector.broadcast %cst_39 : f32 to vector<8x128xf32>
    %187 = arith.addf %186, %185 : vector<8x128xf32>
    %188 = arith.divf %186, %187 : vector<8x128xf32>
    %189 = vector.extract_strided_slice %178 {offsets = [0, 128], sizes = [8, 128], strides = [1, 1]} : vector<8x384xf32> to vector<8x128xf32>
    %190 = vector.extract_strided_slice %180 {offsets = [0, 128], sizes = [8, 128], strides = [1, 1]} : vector<8x384xf32> to vector<8x128xf32>
    %191 = arith.addf %189, %190 : vector<8x128xf32>
    %192 = arith.negf %191 : vector<8x128xf32>
    %193 = math.exp %192 : vector<8x128xf32>
    %cst_40 = arith.constant 1.000000e+00 : f32
    %194 = vector.broadcast %cst_40 : f32 to vector<8x128xf32>
    %195 = arith.addf %194, %193 : vector<8x128xf32>
    %196 = arith.divf %194, %195 : vector<8x128xf32>
    %197 = vector.extract_strided_slice %178 {offsets = [0, 256], sizes = [8, 128], strides = [1, 1]} : vector<8x384xf32> to vector<8x128xf32>
    %198 = vector.extract_strided_slice %180 {offsets = [0, 256], sizes = [8, 128], strides = [1, 1]} : vector<8x384xf32> to vector<8x128xf32>
    %199 = arith.addf %198, %21 : vector<8x128xf32>
    %200 = arith.mulf %188, %199 : vector<8x128xf32>
    %201 = arith.addf %197, %200 : vector<8x128xf32>
    %202 = math.tanh %201 : vector<8x128xf32>
    %cst_41 = arith.constant 1.000000e+00 : f32
    %203 = vector.broadcast %cst_41 : f32 to vector<8x128xf32>
    %204 = arith.subf %203, %196 : vector<8x128xf32>
    %205 = arith.mulf %204, %202 : vector<8x128xf32>
    %206 = arith.mulf %196, %145 : vector<8x128xf32>
    %207 = arith.addf %205, %206 : vector<8x128xf32>
    %c16 = arith.constant 16 : index
    %c0_42 = arith.constant 0 : index
    %208 = vector.load %arg12[%c16, %c0_42] : memref<64x256xf32, #tpu.memory_space<vmem>>, vector<8x128xf32>
    tpu.vector_store %arg12[%c16, %c0_42], %177 {strides = array<i32>} : memref<64x256xf32, #tpu.memory_space<vmem>>, vector<8x128xf32>,
    %c40 = arith.constant 40 : index
    %c128_43 = arith.constant 128 : index
    %209 = vector.load %arg12[%c40, %c128_43] : memref<64x256xf32, #tpu.memory_space<vmem>>, vector<8x128xf32>
    tpu.vector_store %arg12[%c40, %c128_43], %207 {strides = array<i32>} : memref<64x256xf32, #tpu.memory_space<vmem>>, vector<8x128xf32>,
    %210 = vector.extract_strided_slice %12 {offsets = [24, 0], sizes = [8, 384], strides = [1, 1]} : vector<64x384xf32> to vector<8x384xf32>
    %211 = arith.truncf %177 : vector<8x128xf32> to vector<8x128xbf16>
    %cst_44 = arith.constant dense<0.000000e+00> : vector<8x384xf32>
    %212 = tpu.matmul %211, %14, %cst_44 {dimension_numbers = #tpu.dot_dimension_numbers<[1], [0], [0], [1], [0, 0, 1, 1], [], []>} : vector<8x128xbf16>, vector<128x384xbf16>, vector<8x384xf32> -> vector<8x384xf32>
    %213 = vector.extract_strided_slice %210 {offsets = [0, 0], sizes = [8, 128], strides = [1, 1]} : vector<8x384xf32> to vector<8x128xf32>
    %214 = vector.extract_strided_slice %212 {offsets = [0, 0], sizes = [8, 128], strides = [1, 1]} : vector<8x384xf32> to vector<8x128xf32>
    %215 = arith.addf %213, %214 : vector<8x128xf32>
    %216 = arith.negf %215 : vector<8x128xf32>
    %217 = math.exp %216 : vector<8x128xf32>
    %cst_45 = arith.constant 1.000000e+00 : f32
    %218 = vector.broadcast %cst_45 : f32 to vector<8x128xf32>
    %219 = arith.addf %218, %217 : vector<8x128xf32>
    %220 = arith.divf %218, %219 : vector<8x128xf32>
    %221 = vector.extract_strided_slice %210 {offsets = [0, 128], sizes = [8, 128], strides = [1, 1]} : vector<8x384xf32> to vector<8x128xf32>
    %222 = vector.extract_strided_slice %212 {offsets = [0, 128], sizes = [8, 128], strides = [1, 1]} : vector<8x384xf32> to vector<8x128xf32>
    %223 = arith.addf %221, %222 : vector<8x128xf32>
    %224 = arith.negf %223 : vector<8x128xf32>
    %225 = math.exp %224 : vector<8x128xf32>
    %cst_46 = arith.constant 1.000000e+00 : f32
    %226 = vector.broadcast %cst_46 : f32 to vector<8x128xf32>
    %227 = arith.addf %226, %225 : vector<8x128xf32>
    %228 = arith.divf %226, %227 : vector<8x128xf32>
    %229 = vector.extract_strided_slice %210 {offsets = [0, 256], sizes = [8, 128], strides = [1, 1]} : vector<8x384xf32> to vector<8x128xf32>
    %230 = vector.extract_strided_slice %212 {offsets = [0, 256], sizes = [8, 128], strides = [1, 1]} : vector<8x384xf32> to vector<8x128xf32>
    %231 = arith.addf %230, %18 : vector<8x128xf32>
    %232 = arith.mulf %220, %231 : vector<8x128xf32>
    %233 = arith.addf %229, %232 : vector<8x128xf32>
    %234 = math.tanh %233 : vector<8x128xf32>
    %cst_47 = arith.constant 1.000000e+00 : f32
    %235 = vector.broadcast %cst_47 : f32 to vector<8x128xf32>
    %236 = arith.subf %235, %228 : vector<8x128xf32>
    %237 = arith.mulf %236, %234 : vector<8x128xf32>
    %238 = arith.mulf %228, %177 : vector<8x128xf32>
    %239 = arith.addf %237, %238 : vector<8x128xf32>
    %240 = vector.extract_strided_slice %13 {offsets = [32, 0], sizes = [8, 384], strides = [1, 1]} : vector<64x384xf32> to vector<8x384xf32>
    %241 = arith.truncf %207 : vector<8x128xf32> to vector<8x128xbf16>
    %cst_48 = arith.constant dense<0.000000e+00> : vector<8x384xf32>
    %242 = tpu.matmul %241, %15, %cst_48 {dimension_numbers = #tpu.dot_dimension_numbers<[1], [0], [0], [1], [0, 0, 1, 1], [], []>} : vector<8x128xbf16>, vector<128x384xbf16>, vector<8x384xf32> -> vector<8x384xf32>
    %243 = vector.extract_strided_slice %240 {offsets = [0, 0], sizes = [8, 128], strides = [1, 1]} : vector<8x384xf32> to vector<8x128xf32>
    %244 = vector.extract_strided_slice %242 {offsets = [0, 0], sizes = [8, 128], strides = [1, 1]} : vector<8x384xf32> to vector<8x128xf32>
    %245 = arith.addf %243, %244 : vector<8x128xf32>
    %246 = arith.negf %245 : vector<8x128xf32>
    %247 = math.exp %246 : vector<8x128xf32>
    %cst_49 = arith.constant 1.000000e+00 : f32
    %248 = vector.broadcast %cst_49 : f32 to vector<8x128xf32>
    %249 = arith.addf %248, %247 : vector<8x128xf32>
    %250 = arith.divf %248, %249 : vector<8x128xf32>
    %251 = vector.extract_strided_slice %240 {offsets = [0, 128], sizes = [8, 128], strides = [1, 1]} : vector<8x384xf32> to vector<8x128xf32>
    %252 = vector.extract_strided_slice %242 {offsets = [0, 128], sizes = [8, 128], strides = [1, 1]} : vector<8x384xf32> to vector<8x128xf32>
    %253 = arith.addf %251, %252 : vector<8x128xf32>
    %254 = arith.negf %253 : vector<8x128xf32>
    %255 = math.exp %254 : vector<8x128xf32>
    %cst_50 = arith.constant 1.000000e+00 : f32
    %256 = vector.broadcast %cst_50 : f32 to vector<8x128xf32>
    %257 = arith.addf %256, %255 : vector<8x128xf32>
    %258 = arith.divf %256, %257 : vector<8x128xf32>
    %259 = vector.extract_strided_slice %240 {offsets = [0, 256], sizes = [8, 128], strides = [1, 1]} : vector<8x384xf32> to vector<8x128xf32>
    %260 = vector.extract_strided_slice %242 {offsets = [0, 256], sizes = [8, 128], strides = [1, 1]} : vector<8x384xf32> to vector<8x128xf32>
    %261 = arith.addf %260, %21 : vector<8x128xf32>
    %262 = arith.mulf %250, %261 : vector<8x128xf32>
    %263 = arith.addf %259, %262 : vector<8x128xf32>
    %264 = math.tanh %263 : vector<8x128xf32>
    %cst_51 = arith.constant 1.000000e+00 : f32
    %265 = vector.broadcast %cst_51 : f32 to vector<8x128xf32>
    %266 = arith.subf %265, %258 : vector<8x128xf32>
    %267 = arith.mulf %266, %264 : vector<8x128xf32>
    %268 = arith.mulf %258, %207 : vector<8x128xf32>
    %269 = arith.addf %267, %268 : vector<8x128xf32>
    %c24 = arith.constant 24 : index
    %c0_52 = arith.constant 0 : index
    %270 = vector.load %arg12[%c24, %c0_52] : memref<64x256xf32, #tpu.memory_space<vmem>>, vector<8x128xf32>
    tpu.vector_store %arg12[%c24, %c0_52], %239 {strides = array<i32>} : memref<64x256xf32, #tpu.memory_space<vmem>>, vector<8x128xf32>,
    %c32 = arith.constant 32 : index
    %c128_53 = arith.constant 128 : index
    %271 = vector.load %arg12[%c32, %c128_53] : memref<64x256xf32, #tpu.memory_space<vmem>>, vector<8x128xf32>
    tpu.vector_store %arg12[%c32, %c128_53], %269 {strides = array<i32>} : memref<64x256xf32, #tpu.memory_space<vmem>>, vector<8x128xf32>,
    %272 = vector.extract_strided_slice %12 {offsets = [32, 0], sizes = [8, 384], strides = [1, 1]} : vector<64x384xf32> to vector<8x384xf32>
    %273 = arith.truncf %239 : vector<8x128xf32> to vector<8x128xbf16>
    %cst_54 = arith.constant dense<0.000000e+00> : vector<8x384xf32>
    %274 = tpu.matmul %273, %14, %cst_54 {dimension_numbers = #tpu.dot_dimension_numbers<[1], [0], [0], [1], [0, 0, 1, 1], [], []>} : vector<8x128xbf16>, vector<128x384xbf16>, vector<8x384xf32> -> vector<8x384xf32>
    %275 = vector.extract_strided_slice %272 {offsets = [0, 0], sizes = [8, 128], strides = [1, 1]} : vector<8x384xf32> to vector<8x128xf32>
    %276 = vector.extract_strided_slice %274 {offsets = [0, 0], sizes = [8, 128], strides = [1, 1]} : vector<8x384xf32> to vector<8x128xf32>
    %277 = arith.addf %275, %276 : vector<8x128xf32>
    %278 = arith.negf %277 : vector<8x128xf32>
    %279 = math.exp %278 : vector<8x128xf32>
    %cst_55 = arith.constant 1.000000e+00 : f32
    %280 = vector.broadcast %cst_55 : f32 to vector<8x128xf32>
    %281 = arith.addf %280, %279 : vector<8x128xf32>
    %282 = arith.divf %280, %281 : vector<8x128xf32>
    %283 = vector.extract_strided_slice %272 {offsets = [0, 128], sizes = [8, 128], strides = [1, 1]} : vector<8x384xf32> to vector<8x128xf32>
    %284 = vector.extract_strided_slice %274 {offsets = [0, 128], sizes = [8, 128], strides = [1, 1]} : vector<8x384xf32> to vector<8x128xf32>
    %285 = arith.addf %283, %284 : vector<8x128xf32>
    %286 = arith.negf %285 : vector<8x128xf32>
    %287 = math.exp %286 : vector<8x128xf32>
    %cst_56 = arith.constant 1.000000e+00 : f32
    %288 = vector.broadcast %cst_56 : f32 to vector<8x128xf32>
    %289 = arith.addf %288, %287 : vector<8x128xf32>
    %290 = arith.divf %288, %289 : vector<8x128xf32>
    %291 = vector.extract_strided_slice %272 {offsets = [0, 256], sizes = [8, 128], strides = [1, 1]} : vector<8x384xf32> to vector<8x128xf32>
    %292 = vector.extract_strided_slice %274 {offsets = [0, 256], sizes = [8, 128], strides = [1, 1]} : vector<8x384xf32> to vector<8x128xf32>
    %293 = arith.addf %292, %18 : vector<8x128xf32>
    %294 = arith.mulf %282, %293 : vector<8x128xf32>
    %295 = arith.addf %291, %294 : vector<8x128xf32>
    %296 = math.tanh %295 : vector<8x128xf32>
    %cst_57 = arith.constant 1.000000e+00 : f32
    %297 = vector.broadcast %cst_57 : f32 to vector<8x128xf32>
    %298 = arith.subf %297, %290 : vector<8x128xf32>
    %299 = arith.mulf %298, %296 : vector<8x128xf32>
    %300 = arith.mulf %290, %239 : vector<8x128xf32>
    %301 = arith.addf %299, %300 : vector<8x128xf32>
    %302 = vector.extract_strided_slice %13 {offsets = [24, 0], sizes = [8, 384], strides = [1, 1]} : vector<64x384xf32> to vector<8x384xf32>
    %303 = arith.truncf %269 : vector<8x128xf32> to vector<8x128xbf16>
    %cst_58 = arith.constant dense<0.000000e+00> : vector<8x384xf32>
    %304 = tpu.matmul %303, %15, %cst_58 {dimension_numbers = #tpu.dot_dimension_numbers<[1], [0], [0], [1], [0, 0, 1, 1], [], []>} : vector<8x128xbf16>, vector<128x384xbf16>, vector<8x384xf32> -> vector<8x384xf32>
    %305 = vector.extract_strided_slice %302 {offsets = [0, 0], sizes = [8, 128], strides = [1, 1]} : vector<8x384xf32> to vector<8x128xf32>
    %306 = vector.extract_strided_slice %304 {offsets = [0, 0], sizes = [8, 128], strides = [1, 1]} : vector<8x384xf32> to vector<8x128xf32>
    %307 = arith.addf %305, %306 : vector<8x128xf32>
    %308 = arith.negf %307 : vector<8x128xf32>
    %309 = math.exp %308 : vector<8x128xf32>
    %cst_59 = arith.constant 1.000000e+00 : f32
    %310 = vector.broadcast %cst_59 : f32 to vector<8x128xf32>
    %311 = arith.addf %310, %309 : vector<8x128xf32>
    %312 = arith.divf %310, %311 : vector<8x128xf32>
    %313 = vector.extract_strided_slice %302 {offsets = [0, 128], sizes = [8, 128], strides = [1, 1]} : vector<8x384xf32> to vector<8x128xf32>
    %314 = vector.extract_strided_slice %304 {offsets = [0, 128], sizes = [8, 128], strides = [1, 1]} : vector<8x384xf32> to vector<8x128xf32>
    %315 = arith.addf %313, %314 : vector<8x128xf32>
    %316 = arith.negf %315 : vector<8x128xf32>
    %317 = math.exp %316 : vector<8x128xf32>
    %cst_60 = arith.constant 1.000000e+00 : f32
    %318 = vector.broadcast %cst_60 : f32 to vector<8x128xf32>
    %319 = arith.addf %318, %317 : vector<8x128xf32>
    %320 = arith.divf %318, %319 : vector<8x128xf32>
    %321 = vector.extract_strided_slice %302 {offsets = [0, 256], sizes = [8, 128], strides = [1, 1]} : vector<8x384xf32> to vector<8x128xf32>
    %322 = vector.extract_strided_slice %304 {offsets = [0, 256], sizes = [8, 128], strides = [1, 1]} : vector<8x384xf32> to vector<8x128xf32>
    %323 = arith.addf %322, %21 : vector<8x128xf32>
    %324 = arith.mulf %312, %323 : vector<8x128xf32>
    %325 = arith.addf %321, %324 : vector<8x128xf32>
    %326 = math.tanh %325 : vector<8x128xf32>
    %cst_61 = arith.constant 1.000000e+00 : f32
    %327 = vector.broadcast %cst_61 : f32 to vector<8x128xf32>
    %328 = arith.subf %327, %320 : vector<8x128xf32>
    %329 = arith.mulf %328, %326 : vector<8x128xf32>
    %330 = arith.mulf %320, %269 : vector<8x128xf32>
    %331 = arith.addf %329, %330 : vector<8x128xf32>
    %c32_62 = arith.constant 32 : index
    %c0_63 = arith.constant 0 : index
    %332 = vector.load %arg12[%c32_62, %c0_63] : memref<64x256xf32, #tpu.memory_space<vmem>>, vector<8x128xf32>
    tpu.vector_store %arg12[%c32_62, %c0_63], %301 {strides = array<i32>} : memref<64x256xf32, #tpu.memory_space<vmem>>, vector<8x128xf32>,
    %c24_64 = arith.constant 24 : index
    %c128_65 = arith.constant 128 : index
    %333 = vector.load %arg12[%c24_64, %c128_65] : memref<64x256xf32, #tpu.memory_space<vmem>>, vector<8x128xf32>
    tpu.vector_store %arg12[%c24_64, %c128_65], %331 {strides = array<i32>} : memref<64x256xf32, #tpu.memory_space<vmem>>, vector<8x128xf32>,
    %334 = vector.extract_strided_slice %12 {offsets = [40, 0], sizes = [8, 384], strides = [1, 1]} : vector<64x384xf32> to vector<8x384xf32>
    %335 = arith.truncf %301 : vector<8x128xf32> to vector<8x128xbf16>
    %cst_66 = arith.constant dense<0.000000e+00> : vector<8x384xf32>
    %336 = tpu.matmul %335, %14, %cst_66 {dimension_numbers = #tpu.dot_dimension_numbers<[1], [0], [0], [1], [0, 0, 1, 1], [], []>} : vector<8x128xbf16>, vector<128x384xbf16>, vector<8x384xf32> -> vector<8x384xf32>
    %337 = vector.extract_strided_slice %334 {offsets = [0, 0], sizes = [8, 128], strides = [1, 1]} : vector<8x384xf32> to vector<8x128xf32>
    %338 = vector.extract_strided_slice %336 {offsets = [0, 0], sizes = [8, 128], strides = [1, 1]} : vector<8x384xf32> to vector<8x128xf32>
    %339 = arith.addf %337, %338 : vector<8x128xf32>
    %340 = arith.negf %339 : vector<8x128xf32>
    %341 = math.exp %340 : vector<8x128xf32>
    %cst_67 = arith.constant 1.000000e+00 : f32
    %342 = vector.broadcast %cst_67 : f32 to vector<8x128xf32>
    %343 = arith.addf %342, %341 : vector<8x128xf32>
    %344 = arith.divf %342, %343 : vector<8x128xf32>
    %345 = vector.extract_strided_slice %334 {offsets = [0, 128], sizes = [8, 128], strides = [1, 1]} : vector<8x384xf32> to vector<8x128xf32>
    %346 = vector.extract_strided_slice %336 {offsets = [0, 128], sizes = [8, 128], strides = [1, 1]} : vector<8x384xf32> to vector<8x128xf32>
    %347 = arith.addf %345, %346 : vector<8x128xf32>
    %348 = arith.negf %347 : vector<8x128xf32>
    %349 = math.exp %348 : vector<8x128xf32>
    %cst_68 = arith.constant 1.000000e+00 : f32
    %350 = vector.broadcast %cst_68 : f32 to vector<8x128xf32>
    %351 = arith.addf %350, %349 : vector<8x128xf32>
    %352 = arith.divf %350, %351 : vector<8x128xf32>
    %353 = vector.extract_strided_slice %334 {offsets = [0, 256], sizes = [8, 128], strides = [1, 1]} : vector<8x384xf32> to vector<8x128xf32>
    %354 = vector.extract_strided_slice %336 {offsets = [0, 256], sizes = [8, 128], strides = [1, 1]} : vector<8x384xf32> to vector<8x128xf32>
    %355 = arith.addf %354, %18 : vector<8x128xf32>
    %356 = arith.mulf %344, %355 : vector<8x128xf32>
    %357 = arith.addf %353, %356 : vector<8x128xf32>
    %358 = math.tanh %357 : vector<8x128xf32>
    %cst_69 = arith.constant 1.000000e+00 : f32
    %359 = vector.broadcast %cst_69 : f32 to vector<8x128xf32>
    %360 = arith.subf %359, %352 : vector<8x128xf32>
    %361 = arith.mulf %360, %358 : vector<8x128xf32>
    %362 = arith.mulf %352, %301 : vector<8x128xf32>
    %363 = arith.addf %361, %362 : vector<8x128xf32>
    %364 = vector.extract_strided_slice %13 {offsets = [16, 0], sizes = [8, 384], strides = [1, 1]} : vector<64x384xf32> to vector<8x384xf32>
    %365 = arith.truncf %331 : vector<8x128xf32> to vector<8x128xbf16>
    %cst_70 = arith.constant dense<0.000000e+00> : vector<8x384xf32>
    %366 = tpu.matmul %365, %15, %cst_70 {dimension_numbers = #tpu.dot_dimension_numbers<[1], [0], [0], [1], [0, 0, 1, 1], [], []>} : vector<8x128xbf16>, vector<128x384xbf16>, vector<8x384xf32> -> vector<8x384xf32>
    %367 = vector.extract_strided_slice %364 {offsets = [0, 0], sizes = [8, 128], strides = [1, 1]} : vector<8x384xf32> to vector<8x128xf32>
    %368 = vector.extract_strided_slice %366 {offsets = [0, 0], sizes = [8, 128], strides = [1, 1]} : vector<8x384xf32> to vector<8x128xf32>
    %369 = arith.addf %367, %368 : vector<8x128xf32>
    %370 = arith.negf %369 : vector<8x128xf32>
    %371 = math.exp %370 : vector<8x128xf32>
    %cst_71 = arith.constant 1.000000e+00 : f32
    %372 = vector.broadcast %cst_71 : f32 to vector<8x128xf32>
    %373 = arith.addf %372, %371 : vector<8x128xf32>
    %374 = arith.divf %372, %373 : vector<8x128xf32>
    %375 = vector.extract_strided_slice %364 {offsets = [0, 128], sizes = [8, 128], strides = [1, 1]} : vector<8x384xf32> to vector<8x128xf32>
    %376 = vector.extract_strided_slice %366 {offsets = [0, 128], sizes = [8, 128], strides = [1, 1]} : vector<8x384xf32> to vector<8x128xf32>
    %377 = arith.addf %375, %376 : vector<8x128xf32>
    %378 = arith.negf %377 : vector<8x128xf32>
    %379 = math.exp %378 : vector<8x128xf32>
    %cst_72 = arith.constant 1.000000e+00 : f32
    %380 = vector.broadcast %cst_72 : f32 to vector<8x128xf32>
    %381 = arith.addf %380, %379 : vector<8x128xf32>
    %382 = arith.divf %380, %381 : vector<8x128xf32>
    %383 = vector.extract_strided_slice %364 {offsets = [0, 256], sizes = [8, 128], strides = [1, 1]} : vector<8x384xf32> to vector<8x128xf32>
    %384 = vector.extract_strided_slice %366 {offsets = [0, 256], sizes = [8, 128], strides = [1, 1]} : vector<8x384xf32> to vector<8x128xf32>
    %385 = arith.addf %384, %21 : vector<8x128xf32>
    %386 = arith.mulf %374, %385 : vector<8x128xf32>
    %387 = arith.addf %383, %386 : vector<8x128xf32>
    %388 = math.tanh %387 : vector<8x128xf32>
    %cst_73 = arith.constant 1.000000e+00 : f32
    %389 = vector.broadcast %cst_73 : f32 to vector<8x128xf32>
    %390 = arith.subf %389, %382 : vector<8x128xf32>
    %391 = arith.mulf %390, %388 : vector<8x128xf32>
    %392 = arith.mulf %382, %331 : vector<8x128xf32>
    %393 = arith.addf %391, %392 : vector<8x128xf32>
    %c40_74 = arith.constant 40 : index
    %c0_75 = arith.constant 0 : index
    %394 = vector.load %arg12[%c40_74, %c0_75] : memref<64x256xf32, #tpu.memory_space<vmem>>, vector<8x128xf32>
    tpu.vector_store %arg12[%c40_74, %c0_75], %363 {strides = array<i32>} : memref<64x256xf32, #tpu.memory_space<vmem>>, vector<8x128xf32>,
    %c16_76 = arith.constant 16 : index
    %c128_77 = arith.constant 128 : index
    %395 = vector.load %arg12[%c16_76, %c128_77] : memref<64x256xf32, #tpu.memory_space<vmem>>, vector<8x128xf32>
    tpu.vector_store %arg12[%c16_76, %c128_77], %393 {strides = array<i32>} : memref<64x256xf32, #tpu.memory_space<vmem>>, vector<8x128xf32>,
    %396 = vector.extract_strided_slice %12 {offsets = [48, 0], sizes = [8, 384], strides = [1, 1]} : vector<64x384xf32> to vector<8x384xf32>
    %397 = arith.truncf %363 : vector<8x128xf32> to vector<8x128xbf16>
    %cst_78 = arith.constant dense<0.000000e+00> : vector<8x384xf32>
    %398 = tpu.matmul %397, %14, %cst_78 {dimension_numbers = #tpu.dot_dimension_numbers<[1], [0], [0], [1], [0, 0, 1, 1], [], []>} : vector<8x128xbf16>, vector<128x384xbf16>, vector<8x384xf32> -> vector<8x384xf32>
    %399 = vector.extract_strided_slice %396 {offsets = [0, 0], sizes = [8, 128], strides = [1, 1]} : vector<8x384xf32> to vector<8x128xf32>
    %400 = vector.extract_strided_slice %398 {offsets = [0, 0], sizes = [8, 128], strides = [1, 1]} : vector<8x384xf32> to vector<8x128xf32>
    %401 = arith.addf %399, %400 : vector<8x128xf32>
    %402 = arith.negf %401 : vector<8x128xf32>
    %403 = math.exp %402 : vector<8x128xf32>
    %cst_79 = arith.constant 1.000000e+00 : f32
    %404 = vector.broadcast %cst_79 : f32 to vector<8x128xf32>
    %405 = arith.addf %404, %403 : vector<8x128xf32>
    %406 = arith.divf %404, %405 : vector<8x128xf32>
    %407 = vector.extract_strided_slice %396 {offsets = [0, 128], sizes = [8, 128], strides = [1, 1]} : vector<8x384xf32> to vector<8x128xf32>
    %408 = vector.extract_strided_slice %398 {offsets = [0, 128], sizes = [8, 128], strides = [1, 1]} : vector<8x384xf32> to vector<8x128xf32>
    %409 = arith.addf %407, %408 : vector<8x128xf32>
    %410 = arith.negf %409 : vector<8x128xf32>
    %411 = math.exp %410 : vector<8x128xf32>
    %cst_80 = arith.constant 1.000000e+00 : f32
    %412 = vector.broadcast %cst_80 : f32 to vector<8x128xf32>
    %413 = arith.addf %412, %411 : vector<8x128xf32>
    %414 = arith.divf %412, %413 : vector<8x128xf32>
    %415 = vector.extract_strided_slice %396 {offsets = [0, 256], sizes = [8, 128], strides = [1, 1]} : vector<8x384xf32> to vector<8x128xf32>
    %416 = vector.extract_strided_slice %398 {offsets = [0, 256], sizes = [8, 128], strides = [1, 1]} : vector<8x384xf32> to vector<8x128xf32>
    %417 = arith.addf %416, %18 : vector<8x128xf32>
    %418 = arith.mulf %406, %417 : vector<8x128xf32>
    %419 = arith.addf %415, %418 : vector<8x128xf32>
    %420 = math.tanh %419 : vector<8x128xf32>
    %cst_81 = arith.constant 1.000000e+00 : f32
    %421 = vector.broadcast %cst_81 : f32 to vector<8x128xf32>
    %422 = arith.subf %421, %414 : vector<8x128xf32>
    %423 = arith.mulf %422, %420 : vector<8x128xf32>
    %424 = arith.mulf %414, %363 : vector<8x128xf32>
    %425 = arith.addf %423, %424 : vector<8x128xf32>
    %426 = vector.extract_strided_slice %13 {offsets = [8, 0], sizes = [8, 384], strides = [1, 1]} : vector<64x384xf32> to vector<8x384xf32>
    %427 = arith.truncf %393 : vector<8x128xf32> to vector<8x128xbf16>
    %cst_82 = arith.constant dense<0.000000e+00> : vector<8x384xf32>
    %428 = tpu.matmul %427, %15, %cst_82 {dimension_numbers = #tpu.dot_dimension_numbers<[1], [0], [0], [1], [0, 0, 1, 1], [], []>} : vector<8x128xbf16>, vector<128x384xbf16>, vector<8x384xf32> -> vector<8x384xf32>
    %429 = vector.extract_strided_slice %426 {offsets = [0, 0], sizes = [8, 128], strides = [1, 1]} : vector<8x384xf32> to vector<8x128xf32>
    %430 = vector.extract_strided_slice %428 {offsets = [0, 0], sizes = [8, 128], strides = [1, 1]} : vector<8x384xf32> to vector<8x128xf32>
    %431 = arith.addf %429, %430 : vector<8x128xf32>
    %432 = arith.negf %431 : vector<8x128xf32>
    %433 = math.exp %432 : vector<8x128xf32>
    %cst_83 = arith.constant 1.000000e+00 : f32
    %434 = vector.broadcast %cst_83 : f32 to vector<8x128xf32>
    %435 = arith.addf %434, %433 : vector<8x128xf32>
    %436 = arith.divf %434, %435 : vector<8x128xf32>
    %437 = vector.extract_strided_slice %426 {offsets = [0, 128], sizes = [8, 128], strides = [1, 1]} : vector<8x384xf32> to vector<8x128xf32>
    %438 = vector.extract_strided_slice %428 {offsets = [0, 128], sizes = [8, 128], strides = [1, 1]} : vector<8x384xf32> to vector<8x128xf32>
    %439 = arith.addf %437, %438 : vector<8x128xf32>
    %440 = arith.negf %439 : vector<8x128xf32>
    %441 = math.exp %440 : vector<8x128xf32>
    %cst_84 = arith.constant 1.000000e+00 : f32
    %442 = vector.broadcast %cst_84 : f32 to vector<8x128xf32>
    %443 = arith.addf %442, %441 : vector<8x128xf32>
    %444 = arith.divf %442, %443 : vector<8x128xf32>
    %445 = vector.extract_strided_slice %426 {offsets = [0, 256], sizes = [8, 128], strides = [1, 1]} : vector<8x384xf32> to vector<8x128xf32>
    %446 = vector.extract_strided_slice %428 {offsets = [0, 256], sizes = [8, 128], strides = [1, 1]} : vector<8x384xf32> to vector<8x128xf32>
    %447 = arith.addf %446, %21 : vector<8x128xf32>
    %448 = arith.mulf %436, %447 : vector<8x128xf32>
    %449 = arith.addf %445, %448 : vector<8x128xf32>
    %450 = math.tanh %449 : vector<8x128xf32>
    %cst_85 = arith.constant 1.000000e+00 : f32
    %451 = vector.broadcast %cst_85 : f32 to vector<8x128xf32>
    %452 = arith.subf %451, %444 : vector<8x128xf32>
    %453 = arith.mulf %452, %450 : vector<8x128xf32>
    %454 = arith.mulf %444, %393 : vector<8x128xf32>
    %455 = arith.addf %453, %454 : vector<8x128xf32>
    %c48_86 = arith.constant 48 : index
    %c0_87 = arith.constant 0 : index
    %456 = vector.load %arg12[%c48_86, %c0_87] : memref<64x256xf32, #tpu.memory_space<vmem>>, vector<8x128xf32>
    tpu.vector_store %arg12[%c48_86, %c0_87], %425 {strides = array<i32>} : memref<64x256xf32, #tpu.memory_space<vmem>>, vector<8x128xf32>,
    %c8_88 = arith.constant 8 : index
    %c128_89 = arith.constant 128 : index
    %457 = vector.load %arg12[%c8_88, %c128_89] : memref<64x256xf32, #tpu.memory_space<vmem>>, vector<8x128xf32>
    tpu.vector_store %arg12[%c8_88, %c128_89], %455 {strides = array<i32>} : memref<64x256xf32, #tpu.memory_space<vmem>>, vector<8x128xf32>,
    %458 = vector.extract_strided_slice %12 {offsets = [56, 0], sizes = [8, 384], strides = [1, 1]} : vector<64x384xf32> to vector<8x384xf32>
    %459 = arith.truncf %425 : vector<8x128xf32> to vector<8x128xbf16>
    %cst_90 = arith.constant dense<0.000000e+00> : vector<8x384xf32>
    %460 = tpu.matmul %459, %14, %cst_90 {dimension_numbers = #tpu.dot_dimension_numbers<[1], [0], [0], [1], [0, 0, 1, 1], [], []>} : vector<8x128xbf16>, vector<128x384xbf16>, vector<8x384xf32> -> vector<8x384xf32>
    %461 = vector.extract_strided_slice %458 {offsets = [0, 0], sizes = [8, 128], strides = [1, 1]} : vector<8x384xf32> to vector<8x128xf32>
    %462 = vector.extract_strided_slice %460 {offsets = [0, 0], sizes = [8, 128], strides = [1, 1]} : vector<8x384xf32> to vector<8x128xf32>
    %463 = arith.addf %461, %462 : vector<8x128xf32>
    %464 = arith.negf %463 : vector<8x128xf32>
    %465 = math.exp %464 : vector<8x128xf32>
    %cst_91 = arith.constant 1.000000e+00 : f32
    %466 = vector.broadcast %cst_91 : f32 to vector<8x128xf32>
    %467 = arith.addf %466, %465 : vector<8x128xf32>
    %468 = arith.divf %466, %467 : vector<8x128xf32>
    %469 = vector.extract_strided_slice %458 {offsets = [0, 128], sizes = [8, 128], strides = [1, 1]} : vector<8x384xf32> to vector<8x128xf32>
    %470 = vector.extract_strided_slice %460 {offsets = [0, 128], sizes = [8, 128], strides = [1, 1]} : vector<8x384xf32> to vector<8x128xf32>
    %471 = arith.addf %469, %470 : vector<8x128xf32>
    %472 = arith.negf %471 : vector<8x128xf32>
    %473 = math.exp %472 : vector<8x128xf32>
    %cst_92 = arith.constant 1.000000e+00 : f32
    %474 = vector.broadcast %cst_92 : f32 to vector<8x128xf32>
    %475 = arith.addf %474, %473 : vector<8x128xf32>
    %476 = arith.divf %474, %475 : vector<8x128xf32>
    %477 = vector.extract_strided_slice %458 {offsets = [0, 256], sizes = [8, 128], strides = [1, 1]} : vector<8x384xf32> to vector<8x128xf32>
    %478 = vector.extract_strided_slice %460 {offsets = [0, 256], sizes = [8, 128], strides = [1, 1]} : vector<8x384xf32> to vector<8x128xf32>
    %479 = arith.addf %478, %18 : vector<8x128xf32>
    %480 = arith.mulf %468, %479 : vector<8x128xf32>
    %481 = arith.addf %477, %480 : vector<8x128xf32>
    %482 = math.tanh %481 : vector<8x128xf32>
    %cst_93 = arith.constant 1.000000e+00 : f32
    %483 = vector.broadcast %cst_93 : f32 to vector<8x128xf32>
    %484 = arith.subf %483, %476 : vector<8x128xf32>
    %485 = arith.mulf %484, %482 : vector<8x128xf32>
    %486 = arith.mulf %476, %425 : vector<8x128xf32>
    %487 = arith.addf %485, %486 : vector<8x128xf32>
    %488 = vector.extract_strided_slice %13 {offsets = [0, 0], sizes = [8, 384], strides = [1, 1]} : vector<64x384xf32> to vector<8x384xf32>
    %489 = arith.truncf %455 : vector<8x128xf32> to vector<8x128xbf16>
    %cst_94 = arith.constant dense<0.000000e+00> : vector<8x384xf32>
    %490 = tpu.matmul %489, %15, %cst_94 {dimension_numbers = #tpu.dot_dimension_numbers<[1], [0], [0], [1], [0, 0, 1, 1], [], []>} : vector<8x128xbf16>, vector<128x384xbf16>, vector<8x384xf32> -> vector<8x384xf32>
    %491 = vector.extract_strided_slice %488 {offsets = [0, 0], sizes = [8, 128], strides = [1, 1]} : vector<8x384xf32> to vector<8x128xf32>
    %492 = vector.extract_strided_slice %490 {offsets = [0, 0], sizes = [8, 128], strides = [1, 1]} : vector<8x384xf32> to vector<8x128xf32>
    %493 = arith.addf %491, %492 : vector<8x128xf32>
    %494 = arith.negf %493 : vector<8x128xf32>
    %495 = math.exp %494 : vector<8x128xf32>
    %cst_95 = arith.constant 1.000000e+00 : f32
    %496 = vector.broadcast %cst_95 : f32 to vector<8x128xf32>
    %497 = arith.addf %496, %495 : vector<8x128xf32>
    %498 = arith.divf %496, %497 : vector<8x128xf32>
    %499 = vector.extract_strided_slice %488 {offsets = [0, 128], sizes = [8, 128], strides = [1, 1]} : vector<8x384xf32> to vector<8x128xf32>
    %500 = vector.extract_strided_slice %490 {offsets = [0, 128], sizes = [8, 128], strides = [1, 1]} : vector<8x384xf32> to vector<8x128xf32>
    %501 = arith.addf %499, %500 : vector<8x128xf32>
    %502 = arith.negf %501 : vector<8x128xf32>
    %503 = math.exp %502 : vector<8x128xf32>
    %cst_96 = arith.constant 1.000000e+00 : f32
    %504 = vector.broadcast %cst_96 : f32 to vector<8x128xf32>
    %505 = arith.addf %504, %503 : vector<8x128xf32>
    %506 = arith.divf %504, %505 : vector<8x128xf32>
    %507 = vector.extract_strided_slice %488 {offsets = [0, 256], sizes = [8, 128], strides = [1, 1]} : vector<8x384xf32> to vector<8x128xf32>
    %508 = vector.extract_strided_slice %490 {offsets = [0, 256], sizes = [8, 128], strides = [1, 1]} : vector<8x384xf32> to vector<8x128xf32>
    %509 = arith.addf %508, %21 : vector<8x128xf32>
    %510 = arith.mulf %498, %509 : vector<8x128xf32>
    %511 = arith.addf %507, %510 : vector<8x128xf32>
    %512 = math.tanh %511 : vector<8x128xf32>
    %cst_97 = arith.constant 1.000000e+00 : f32
    %513 = vector.broadcast %cst_97 : f32 to vector<8x128xf32>
    %514 = arith.subf %513, %506 : vector<8x128xf32>
    %515 = arith.mulf %514, %512 : vector<8x128xf32>
    %516 = arith.mulf %506, %455 : vector<8x128xf32>
    %517 = arith.addf %515, %516 : vector<8x128xf32>
    %c56_98 = arith.constant 56 : index
    %c0_99 = arith.constant 0 : index
    %518 = vector.load %arg12[%c56_98, %c0_99] : memref<64x256xf32, #tpu.memory_space<vmem>>, vector<8x128xf32>
    tpu.vector_store %arg12[%c56_98, %c0_99], %487 {strides = array<i32>} : memref<64x256xf32, #tpu.memory_space<vmem>>, vector<8x128xf32>,
    %c0_100 = arith.constant 0 : index
    %c128_101 = arith.constant 128 : index
    %519 = vector.load %arg12[%c0_100, %c128_101] : memref<64x256xf32, #tpu.memory_space<vmem>>, vector<8x128xf32>
    tpu.vector_store %arg12[%c0_100, %c128_101], %517 {strides = array<i32>} : memref<64x256xf32, #tpu.memory_space<vmem>>, vector<8x128xf32>,
    %c0_i32_102 = arith.constant 0 : i32
    %520 = tpu.memref_slice %arg16[%c0_i32_102] : memref<3x!tpu.dma_semaphore, #tpu.memory_space<semaphore_mem>> -> memref<1x!tpu.dma_semaphore, #tpu.memory_space<semaphore_mem>>
    %521 = tpu.memref_squeeze %520 : memref<1x!tpu.dma_semaphore, #tpu.memory_space<semaphore_mem>> -> memref<!tpu.dma_semaphore, #tpu.memory_space<semaphore_mem>>
    tpu.wait_dma2 semaphore(%521 : memref<!tpu.dma_semaphore, #tpu.memory_space<semaphore_mem>>) src(%arg4 : memref<256x768xbf16, #tpu.memory_space<any>>) dst(%arg13 : memref<256x768xbf16, #tpu.memory_space<vmem>>)
    %c1_i32_103 = arith.constant 1 : i32
    %522 = tpu.memref_slice %arg16[%c1_i32_103] : memref<3x!tpu.dma_semaphore, #tpu.memory_space<semaphore_mem>> -> memref<1x!tpu.dma_semaphore, #tpu.memory_space<semaphore_mem>>
    %523 = tpu.memref_squeeze %522 : memref<1x!tpu.dma_semaphore, #tpu.memory_space<semaphore_mem>> -> memref<!tpu.dma_semaphore, #tpu.memory_space<semaphore_mem>>
    tpu.wait_dma2 semaphore(%523 : memref<!tpu.dma_semaphore, #tpu.memory_space<semaphore_mem>>) src(%arg5 : memref<128x384xbf16, #tpu.memory_space<any>>) dst(%arg14 : memref<128x384xbf16, #tpu.memory_space<vmem>>)
    %c2_i32_104 = arith.constant 2 : i32
    %524 = tpu.memref_slice %arg16[%c2_i32_104] : memref<3x!tpu.dma_semaphore, #tpu.memory_space<semaphore_mem>> -> memref<1x!tpu.dma_semaphore, #tpu.memory_space<semaphore_mem>>
    %525 = tpu.memref_squeeze %524 : memref<1x!tpu.dma_semaphore, #tpu.memory_space<semaphore_mem>> -> memref<!tpu.dma_semaphore, #tpu.memory_space<semaphore_mem>>
    tpu.wait_dma2 semaphore(%525 : memref<!tpu.dma_semaphore, #tpu.memory_space<semaphore_mem>>) src(%arg6 : memref<128x384xbf16, #tpu.memory_space<any>>) dst(%arg15 : memref<128x384xbf16, #tpu.memory_space<vmem>>)
    %c0_105 = arith.constant 0 : index
    %c0_106 = arith.constant 0 : index
    %526 = vector.load %arg12[%c0_105, %c0_106] : memref<64x256xf32, #tpu.memory_space<vmem>>, vector<64x256xf32>
    %527 = arith.truncf %526 : vector<64x256xf32> to vector<64x256xbf16>
    %c0_107 = arith.constant 0 : index
    %c0_108 = arith.constant 0 : index
    %528 = vector.load %arg13[%c0_107, %c0_108] : memref<256x768xbf16, #tpu.memory_space<vmem>>, vector<256x768xbf16>
    %cst_109 = arith.constant dense<0.000000e+00> : vector<64x768xf32>
    %529 = tpu.matmul %527, %528, %cst_109 {dimension_numbers = #tpu.dot_dimension_numbers<[1], [0], [0], [1], [0, 0, 1, 1], [], []>} : vector<64x256xbf16>, vector<256x768xbf16>, vector<64x768xf32> -> vector<64x768xf32>
    %c1_110 = arith.constant 1 : index
    %c0_111 = arith.constant 0 : index
    %530 = vector.load %arg9[%c1_110, %c0_111] : memref<2x768xf32, #tpu.memory_space<vmem>>, vector<1x768xf32>
    %531 = vector.broadcast %530 : vector<1x768xf32> to vector<64x768xf32>
    %532 = arith.addf %529, %531 : vector<64x768xf32>
    %c0_112 = arith.constant 0 : index
    %c0_113 = arith.constant 0 : index
    %533 = vector.load %arg14[%c0_112, %c0_113] : memref<128x384xbf16, #tpu.memory_space<vmem>>, vector<128x384xbf16>
    %c2 = arith.constant 2 : index
    %c0_114 = arith.constant 0 : index
    %534 = vector.load %arg10[%c2, %c0_114] : memref<4x128xf32, #tpu.memory_space<vmem>>, vector<1x128xf32>
    %535 = vector.shape_cast %534 : vector<1x128xf32> to vector<1x128xf32>
    %536 = vector.broadcast %535 : vector<1x128xf32> to vector<8x128xf32>
    %cst_115 = arith.constant 0.000000e+00 : f32
    %537 = vector.broadcast %cst_115 : f32 to vector<8x128xf32>
    %538 = vector.extract_strided_slice %532 {offsets = [0, 0], sizes = [8, 384], strides = [1, 1]} : vector<64x768xf32> to vector<8x384xf32>
    %539 = arith.truncf %537 : vector<8x128xf32> to vector<8x128xbf16>
    %cst_116 = arith.constant dense<0.000000e+00> : vector<8x384xf32>
    %540 = tpu.matmul %539, %533, %cst_116 {dimension_numbers = #tpu.dot_dimension_numbers<[1], [0], [0], [1], [0, 0, 1, 1], [], []>} : vector<8x128xbf16>, vector<128x384xbf16>, vector<8x384xf32> -> vector<8x384xf32>
    %541 = vector.extract_strided_slice %538 {offsets = [0, 0], sizes = [8, 128], strides = [1, 1]} : vector<8x384xf32> to vector<8x128xf32>
    %542 = vector.extract_strided_slice %540 {offsets = [0, 0], sizes = [8, 128], strides = [1, 1]} : vector<8x384xf32> to vector<8x128xf32>
    %543 = arith.addf %541, %542 : vector<8x128xf32>
    %544 = arith.negf %543 : vector<8x128xf32>
    %545 = math.exp %544 : vector<8x128xf32>
    %cst_117 = arith.constant 1.000000e+00 : f32
    %546 = vector.broadcast %cst_117 : f32 to vector<8x128xf32>
    %547 = arith.addf %546, %545 : vector<8x128xf32>
    %548 = arith.divf %546, %547 : vector<8x128xf32>
    %549 = vector.extract_strided_slice %538 {offsets = [0, 128], sizes = [8, 128], strides = [1, 1]} : vector<8x384xf32> to vector<8x128xf32>
    %550 = vector.extract_strided_slice %540 {offsets = [0, 128], sizes = [8, 128], strides = [1, 1]} : vector<8x384xf32> to vector<8x128xf32>
    %551 = arith.addf %549, %550 : vector<8x128xf32>
    %552 = arith.negf %551 : vector<8x128xf32>
    %553 = math.exp %552 : vector<8x128xf32>
    %cst_118 = arith.constant 1.000000e+00 : f32
    %554 = vector.broadcast %cst_118 : f32 to vector<8x128xf32>
    %555 = arith.addf %554, %553 : vector<8x128xf32>
    %556 = arith.divf %554, %555 : vector<8x128xf32>
    %557 = vector.extract_strided_slice %538 {offsets = [0, 256], sizes = [8, 128], strides = [1, 1]} : vector<8x384xf32> to vector<8x128xf32>
    %558 = vector.extract_strided_slice %540 {offsets = [0, 256], sizes = [8, 128], strides = [1, 1]} : vector<8x384xf32> to vector<8x128xf32>
    %559 = arith.addf %558, %536 : vector<8x128xf32>
    %560 = arith.mulf %548, %559 : vector<8x128xf32>
    %561 = arith.addf %557, %560 : vector<8x128xf32>
    %562 = math.tanh %561 : vector<8x128xf32>
    %cst_119 = arith.constant 1.000000e+00 : f32
    %563 = vector.broadcast %cst_119 : f32 to vector<8x128xf32>
    %564 = arith.subf %563, %556 : vector<8x128xf32>
    %565 = arith.mulf %564, %562 : vector<8x128xf32>
    %566 = arith.mulf %556, %537 : vector<8x128xf32>
    %567 = arith.addf %565, %566 : vector<8x128xf32>
    %568 = vector.extract_strided_slice %532 {offsets = [8, 0], sizes = [8, 384], strides = [1, 1]} : vector<64x768xf32> to vector<8x384xf32>
    %569 = arith.truncf %567 : vector<8x128xf32> to vector<8x128xbf16>
    %cst_120 = arith.constant dense<0.000000e+00> : vector<8x384xf32>
    %570 = tpu.matmul %569, %533, %cst_120 {dimension_numbers = #tpu.dot_dimension_numbers<[1], [0], [0], [1], [0, 0, 1, 1], [], []>} : vector<8x128xbf16>, vector<128x384xbf16>, vector<8x384xf32> -> vector<8x384xf32>
    %571 = vector.extract_strided_slice %568 {offsets = [0, 0], sizes = [8, 128], strides = [1, 1]} : vector<8x384xf32> to vector<8x128xf32>
    %572 = vector.extract_strided_slice %570 {offsets = [0, 0], sizes = [8, 128], strides = [1, 1]} : vector<8x384xf32> to vector<8x128xf32>
    %573 = arith.addf %571, %572 : vector<8x128xf32>
    %574 = arith.negf %573 : vector<8x128xf32>
    %575 = math.exp %574 : vector<8x128xf32>
    %cst_121 = arith.constant 1.000000e+00 : f32
    %576 = vector.broadcast %cst_121 : f32 to vector<8x128xf32>
    %577 = arith.addf %576, %575 : vector<8x128xf32>
    %578 = arith.divf %576, %577 : vector<8x128xf32>
    %579 = vector.extract_strided_slice %568 {offsets = [0, 128], sizes = [8, 128], strides = [1, 1]} : vector<8x384xf32> to vector<8x128xf32>
    %580 = vector.extract_strided_slice %570 {offsets = [0, 128], sizes = [8, 128], strides = [1, 1]} : vector<8x384xf32> to vector<8x128xf32>
    %581 = arith.addf %579, %580 : vector<8x128xf32>
    %582 = arith.negf %581 : vector<8x128xf32>
    %583 = math.exp %582 : vector<8x128xf32>
    %cst_122 = arith.constant 1.000000e+00 : f32
    %584 = vector.broadcast %cst_122 : f32 to vector<8x128xf32>
    %585 = arith.addf %584, %583 : vector<8x128xf32>
    %586 = arith.divf %584, %585 : vector<8x128xf32>
    %587 = vector.extract_strided_slice %568 {offsets = [0, 256], sizes = [8, 128], strides = [1, 1]} : vector<8x384xf32> to vector<8x128xf32>
    %588 = vector.extract_strided_slice %570 {offsets = [0, 256], sizes = [8, 128], strides = [1, 1]} : vector<8x384xf32> to vector<8x128xf32>
    %589 = arith.addf %588, %536 : vector<8x128xf32>
    %590 = arith.mulf %578, %589 : vector<8x128xf32>
    %591 = arith.addf %587, %590 : vector<8x128xf32>
    %592 = math.tanh %591 : vector<8x128xf32>
    %cst_123 = arith.constant 1.000000e+00 : f32
    %593 = vector.broadcast %cst_123 : f32 to vector<8x128xf32>
    %594 = arith.subf %593, %586 : vector<8x128xf32>
    %595 = arith.mulf %594, %592 : vector<8x128xf32>
    %596 = arith.mulf %586, %567 : vector<8x128xf32>
    %597 = arith.addf %595, %596 : vector<8x128xf32>
    %598 = vector.extract_strided_slice %532 {offsets = [16, 0], sizes = [8, 384], strides = [1, 1]} : vector<64x768xf32> to vector<8x384xf32>
    %599 = arith.truncf %597 : vector<8x128xf32> to vector<8x128xbf16>
    %cst_124 = arith.constant dense<0.000000e+00> : vector<8x384xf32>
    %600 = tpu.matmul %599, %533, %cst_124 {dimension_numbers = #tpu.dot_dimension_numbers<[1], [0], [0], [1], [0, 0, 1, 1], [], []>} : vector<8x128xbf16>, vector<128x384xbf16>, vector<8x384xf32> -> vector<8x384xf32>
    %601 = vector.extract_strided_slice %598 {offsets = [0, 0], sizes = [8, 128], strides = [1, 1]} : vector<8x384xf32> to vector<8x128xf32>
    %602 = vector.extract_strided_slice %600 {offsets = [0, 0], sizes = [8, 128], strides = [1, 1]} : vector<8x384xf32> to vector<8x128xf32>
    %603 = arith.addf %601, %602 : vector<8x128xf32>
    %604 = arith.negf %603 : vector<8x128xf32>
    %605 = math.exp %604 : vector<8x128xf32>
    %cst_125 = arith.constant 1.000000e+00 : f32
    %606 = vector.broadcast %cst_125 : f32 to vector<8x128xf32>
    %607 = arith.addf %606, %605 : vector<8x128xf32>
    %608 = arith.divf %606, %607 : vector<8x128xf32>
    %609 = vector.extract_strided_slice %598 {offsets = [0, 128], sizes = [8, 128], strides = [1, 1]} : vector<8x384xf32> to vector<8x128xf32>
    %610 = vector.extract_strided_slice %600 {offsets = [0, 128], sizes = [8, 128], strides = [1, 1]} : vector<8x384xf32> to vector<8x128xf32>
    %611 = arith.addf %609, %610 : vector<8x128xf32>
    %612 = arith.negf %611 : vector<8x128xf32>
    %613 = math.exp %612 : vector<8x128xf32>
    %cst_126 = arith.constant 1.000000e+00 : f32
    %614 = vector.broadcast %cst_126 : f32 to vector<8x128xf32>
    %615 = arith.addf %614, %613 : vector<8x128xf32>
    %616 = arith.divf %614, %615 : vector<8x128xf32>
    %617 = vector.extract_strided_slice %598 {offsets = [0, 256], sizes = [8, 128], strides = [1, 1]} : vector<8x384xf32> to vector<8x128xf32>
    %618 = vector.extract_strided_slice %600 {offsets = [0, 256], sizes = [8, 128], strides = [1, 1]} : vector<8x384xf32> to vector<8x128xf32>
    %619 = arith.addf %618, %536 : vector<8x128xf32>
    %620 = arith.mulf %608, %619 : vector<8x128xf32>
    %621 = arith.addf %617, %620 : vector<8x128xf32>
    %622 = math.tanh %621 : vector<8x128xf32>
    %cst_127 = arith.constant 1.000000e+00 : f32
    %623 = vector.broadcast %cst_127 : f32 to vector<8x128xf32>
    %624 = arith.subf %623, %616 : vector<8x128xf32>
    %625 = arith.mulf %624, %622 : vector<8x128xf32>
    %626 = arith.mulf %616, %597 : vector<8x128xf32>
    %627 = arith.addf %625, %626 : vector<8x128xf32>
    %628 = vector.extract_strided_slice %532 {offsets = [24, 0], sizes = [8, 384], strides = [1, 1]} : vector<64x768xf32> to vector<8x384xf32>
    %629 = arith.truncf %627 : vector<8x128xf32> to vector<8x128xbf16>
    %cst_128 = arith.constant dense<0.000000e+00> : vector<8x384xf32>
    %630 = tpu.matmul %629, %533, %cst_128 {dimension_numbers = #tpu.dot_dimension_numbers<[1], [0], [0], [1], [0, 0, 1, 1], [], []>} : vector<8x128xbf16>, vector<128x384xbf16>, vector<8x384xf32> -> vector<8x384xf32>
    %631 = vector.extract_strided_slice %628 {offsets = [0, 0], sizes = [8, 128], strides = [1, 1]} : vector<8x384xf32> to vector<8x128xf32>
    %632 = vector.extract_strided_slice %630 {offsets = [0, 0], sizes = [8, 128], strides = [1, 1]} : vector<8x384xf32> to vector<8x128xf32>
    %633 = arith.addf %631, %632 : vector<8x128xf32>
    %634 = arith.negf %633 : vector<8x128xf32>
    %635 = math.exp %634 : vector<8x128xf32>
    %cst_129 = arith.constant 1.000000e+00 : f32
    %636 = vector.broadcast %cst_129 : f32 to vector<8x128xf32>
    %637 = arith.addf %636, %635 : vector<8x128xf32>
    %638 = arith.divf %636, %637 : vector<8x128xf32>
    %639 = vector.extract_strided_slice %628 {offsets = [0, 128], sizes = [8, 128], strides = [1, 1]} : vector<8x384xf32> to vector<8x128xf32>
    %640 = vector.extract_strided_slice %630 {offsets = [0, 128], sizes = [8, 128], strides = [1, 1]} : vector<8x384xf32> to vector<8x128xf32>
    %641 = arith.addf %639, %640 : vector<8x128xf32>
    %642 = arith.negf %641 : vector<8x128xf32>
    %643 = math.exp %642 : vector<8x128xf32>
    %cst_130 = arith.constant 1.000000e+00 : f32
    %644 = vector.broadcast %cst_130 : f32 to vector<8x128xf32>
    %645 = arith.addf %644, %643 : vector<8x128xf32>
    %646 = arith.divf %644, %645 : vector<8x128xf32>
    %647 = vector.extract_strided_slice %628 {offsets = [0, 256], sizes = [8, 128], strides = [1, 1]} : vector<8x384xf32> to vector<8x128xf32>
    %648 = vector.extract_strided_slice %630 {offsets = [0, 256], sizes = [8, 128], strides = [1, 1]} : vector<8x384xf32> to vector<8x128xf32>
    %649 = arith.addf %648, %536 : vector<8x128xf32>
    %650 = arith.mulf %638, %649 : vector<8x128xf32>
    %651 = arith.addf %647, %650 : vector<8x128xf32>
    %652 = math.tanh %651 : vector<8x128xf32>
    %cst_131 = arith.constant 1.000000e+00 : f32
    %653 = vector.broadcast %cst_131 : f32 to vector<8x128xf32>
    %654 = arith.subf %653, %646 : vector<8x128xf32>
    %655 = arith.mulf %654, %652 : vector<8x128xf32>
    %656 = arith.mulf %646, %627 : vector<8x128xf32>
    %657 = arith.addf %655, %656 : vector<8x128xf32>
    %658 = vector.extract_strided_slice %532 {offsets = [32, 0], sizes = [8, 384], strides = [1, 1]} : vector<64x768xf32> to vector<8x384xf32>
    %659 = arith.truncf %657 : vector<8x128xf32> to vector<8x128xbf16>
    %cst_132 = arith.constant dense<0.000000e+00> : vector<8x384xf32>
    %660 = tpu.matmul %659, %533, %cst_132 {dimension_numbers = #tpu.dot_dimension_numbers<[1], [0], [0], [1], [0, 0, 1, 1], [], []>} : vector<8x128xbf16>, vector<128x384xbf16>, vector<8x384xf32> -> vector<8x384xf32>
    %661 = vector.extract_strided_slice %658 {offsets = [0, 0], sizes = [8, 128], strides = [1, 1]} : vector<8x384xf32> to vector<8x128xf32>
    %662 = vector.extract_strided_slice %660 {offsets = [0, 0], sizes = [8, 128], strides = [1, 1]} : vector<8x384xf32> to vector<8x128xf32>
    %663 = arith.addf %661, %662 : vector<8x128xf32>
    %664 = arith.negf %663 : vector<8x128xf32>
    %665 = math.exp %664 : vector<8x128xf32>
    %cst_133 = arith.constant 1.000000e+00 : f32
    %666 = vector.broadcast %cst_133 : f32 to vector<8x128xf32>
    %667 = arith.addf %666, %665 : vector<8x128xf32>
    %668 = arith.divf %666, %667 : vector<8x128xf32>
    %669 = vector.extract_strided_slice %658 {offsets = [0, 128], sizes = [8, 128], strides = [1, 1]} : vector<8x384xf32> to vector<8x128xf32>
    %670 = vector.extract_strided_slice %660 {offsets = [0, 128], sizes = [8, 128], strides = [1, 1]} : vector<8x384xf32> to vector<8x128xf32>
    %671 = arith.addf %669, %670 : vector<8x128xf32>
    %672 = arith.negf %671 : vector<8x128xf32>
    %673 = math.exp %672 : vector<8x128xf32>
    %cst_134 = arith.constant 1.000000e+00 : f32
    %674 = vector.broadcast %cst_134 : f32 to vector<8x128xf32>
    %675 = arith.addf %674, %673 : vector<8x128xf32>
    %676 = arith.divf %674, %675 : vector<8x128xf32>
    %677 = vector.extract_strided_slice %658 {offsets = [0, 256], sizes = [8, 128], strides = [1, 1]} : vector<8x384xf32> to vector<8x128xf32>
    %678 = vector.extract_strided_slice %660 {offsets = [0, 256], sizes = [8, 128], strides = [1, 1]} : vector<8x384xf32> to vector<8x128xf32>
    %679 = arith.addf %678, %536 : vector<8x128xf32>
    %680 = arith.mulf %668, %679 : vector<8x128xf32>
    %681 = arith.addf %677, %680 : vector<8x128xf32>
    %682 = math.tanh %681 : vector<8x128xf32>
    %cst_135 = arith.constant 1.000000e+00 : f32
    %683 = vector.broadcast %cst_135 : f32 to vector<8x128xf32>
    %684 = arith.subf %683, %676 : vector<8x128xf32>
    %685 = arith.mulf %684, %682 : vector<8x128xf32>
    %686 = arith.mulf %676, %657 : vector<8x128xf32>
    %687 = arith.addf %685, %686 : vector<8x128xf32>
    %688 = vector.extract_strided_slice %532 {offsets = [40, 0], sizes = [8, 384], strides = [1, 1]} : vector<64x768xf32> to vector<8x384xf32>
    %689 = arith.truncf %687 : vector<8x128xf32> to vector<8x128xbf16>
    %cst_136 = arith.constant dense<0.000000e+00> : vector<8x384xf32>
    %690 = tpu.matmul %689, %533, %cst_136 {dimension_numbers = #tpu.dot_dimension_numbers<[1], [0], [0], [1], [0, 0, 1, 1], [], []>} : vector<8x128xbf16>, vector<128x384xbf16>, vector<8x384xf32> -> vector<8x384xf32>
    %691 = vector.extract_strided_slice %688 {offsets = [0, 0], sizes = [8, 128], strides = [1, 1]} : vector<8x384xf32> to vector<8x128xf32>
    %692 = vector.extract_strided_slice %690 {offsets = [0, 0], sizes = [8, 128], strides = [1, 1]} : vector<8x384xf32> to vector<8x128xf32>
    %693 = arith.addf %691, %692 : vector<8x128xf32>
    %694 = arith.negf %693 : vector<8x128xf32>
    %695 = math.exp %694 : vector<8x128xf32>
    %cst_137 = arith.constant 1.000000e+00 : f32
    %696 = vector.broadcast %cst_137 : f32 to vector<8x128xf32>
    %697 = arith.addf %696, %695 : vector<8x128xf32>
    %698 = arith.divf %696, %697 : vector<8x128xf32>
    %699 = vector.extract_strided_slice %688 {offsets = [0, 128], sizes = [8, 128], strides = [1, 1]} : vector<8x384xf32> to vector<8x128xf32>
    %700 = vector.extract_strided_slice %690 {offsets = [0, 128], sizes = [8, 128], strides = [1, 1]} : vector<8x384xf32> to vector<8x128xf32>
    %701 = arith.addf %699, %700 : vector<8x128xf32>
    %702 = arith.negf %701 : vector<8x128xf32>
    %703 = math.exp %702 : vector<8x128xf32>
    %cst_138 = arith.constant 1.000000e+00 : f32
    %704 = vector.broadcast %cst_138 : f32 to vector<8x128xf32>
    %705 = arith.addf %704, %703 : vector<8x128xf32>
    %706 = arith.divf %704, %705 : vector<8x128xf32>
    %707 = vector.extract_strided_slice %688 {offsets = [0, 256], sizes = [8, 128], strides = [1, 1]} : vector<8x384xf32> to vector<8x128xf32>
    %708 = vector.extract_strided_slice %690 {offsets = [0, 256], sizes = [8, 128], strides = [1, 1]} : vector<8x384xf32> to vector<8x128xf32>
    %709 = arith.addf %708, %536 : vector<8x128xf32>
    %710 = arith.mulf %698, %709 : vector<8x128xf32>
    %711 = arith.addf %707, %710 : vector<8x128xf32>
    %712 = math.tanh %711 : vector<8x128xf32>
    %cst_139 = arith.constant 1.000000e+00 : f32
    %713 = vector.broadcast %cst_139 : f32 to vector<8x128xf32>
    %714 = arith.subf %713, %706 : vector<8x128xf32>
    %715 = arith.mulf %714, %712 : vector<8x128xf32>
    %716 = arith.mulf %706, %687 : vector<8x128xf32>
    %717 = arith.addf %715, %716 : vector<8x128xf32>
    %718 = vector.extract_strided_slice %532 {offsets = [48, 0], sizes = [8, 384], strides = [1, 1]} : vector<64x768xf32> to vector<8x384xf32>
    %719 = arith.truncf %717 : vector<8x128xf32> to vector<8x128xbf16>
    %cst_140 = arith.constant dense<0.000000e+00> : vector<8x384xf32>
    %720 = tpu.matmul %719, %533, %cst_140 {dimension_numbers = #tpu.dot_dimension_numbers<[1], [0], [0], [1], [0, 0, 1, 1], [], []>} : vector<8x128xbf16>, vector<128x384xbf16>, vector<8x384xf32> -> vector<8x384xf32>
    %721 = vector.extract_strided_slice %718 {offsets = [0, 0], sizes = [8, 128], strides = [1, 1]} : vector<8x384xf32> to vector<8x128xf32>
    %722 = vector.extract_strided_slice %720 {offsets = [0, 0], sizes = [8, 128], strides = [1, 1]} : vector<8x384xf32> to vector<8x128xf32>
    %723 = arith.addf %721, %722 : vector<8x128xf32>
    %724 = arith.negf %723 : vector<8x128xf32>
    %725 = math.exp %724 : vector<8x128xf32>
    %cst_141 = arith.constant 1.000000e+00 : f32
    %726 = vector.broadcast %cst_141 : f32 to vector<8x128xf32>
    %727 = arith.addf %726, %725 : vector<8x128xf32>
    %728 = arith.divf %726, %727 : vector<8x128xf32>
    %729 = vector.extract_strided_slice %718 {offsets = [0, 128], sizes = [8, 128], strides = [1, 1]} : vector<8x384xf32> to vector<8x128xf32>
    %730 = vector.extract_strided_slice %720 {offsets = [0, 128], sizes = [8, 128], strides = [1, 1]} : vector<8x384xf32> to vector<8x128xf32>
    %731 = arith.addf %729, %730 : vector<8x128xf32>
    %732 = arith.negf %731 : vector<8x128xf32>
    %733 = math.exp %732 : vector<8x128xf32>
    %cst_142 = arith.constant 1.000000e+00 : f32
    %734 = vector.broadcast %cst_142 : f32 to vector<8x128xf32>
    %735 = arith.addf %734, %733 : vector<8x128xf32>
    %736 = arith.divf %734, %735 : vector<8x128xf32>
    %737 = vector.extract_strided_slice %718 {offsets = [0, 256], sizes = [8, 128], strides = [1, 1]} : vector<8x384xf32> to vector<8x128xf32>
    %738 = vector.extract_strided_slice %720 {offsets = [0, 256], sizes = [8, 128], strides = [1, 1]} : vector<8x384xf32> to vector<8x128xf32>
    %739 = arith.addf %738, %536 : vector<8x128xf32>
    %740 = arith.mulf %728, %739 : vector<8x128xf32>
    %741 = arith.addf %737, %740 : vector<8x128xf32>
    %742 = math.tanh %741 : vector<8x128xf32>
    %cst_143 = arith.constant 1.000000e+00 : f32
    %743 = vector.broadcast %cst_143 : f32 to vector<8x128xf32>
    %744 = arith.subf %743, %736 : vector<8x128xf32>
    %745 = arith.mulf %744, %742 : vector<8x128xf32>
    %746 = arith.mulf %736, %717 : vector<8x128xf32>
    %747 = arith.addf %745, %746 : vector<8x128xf32>
    %748 = vector.extract_strided_slice %532 {offsets = [56, 0], sizes = [8, 384], strides = [1, 1]} : vector<64x768xf32> to vector<8x384xf32>
    %749 = arith.truncf %747 : vector<8x128xf32> to vector<8x128xbf16>
    %cst_144 = arith.constant dense<0.000000e+00> : vector<8x384xf32>
    %750 = tpu.matmul %749, %533, %cst_144 {dimension_numbers = #tpu.dot_dimension_numbers<[1], [0], [0], [1], [0, 0, 1, 1], [], []>} : vector<8x128xbf16>, vector<128x384xbf16>, vector<8x384xf32> -> vector<8x384xf32>
    %751 = vector.extract_strided_slice %748 {offsets = [0, 0], sizes = [8, 128], strides = [1, 1]} : vector<8x384xf32> to vector<8x128xf32>
    %752 = vector.extract_strided_slice %750 {offsets = [0, 0], sizes = [8, 128], strides = [1, 1]} : vector<8x384xf32> to vector<8x128xf32>
    %753 = arith.addf %751, %752 : vector<8x128xf32>
    %754 = arith.negf %753 : vector<8x128xf32>
    %755 = math.exp %754 : vector<8x128xf32>
    %cst_145 = arith.constant 1.000000e+00 : f32
    %756 = vector.broadcast %cst_145 : f32 to vector<8x128xf32>
    %757 = arith.addf %756, %755 : vector<8x128xf32>
    %758 = arith.divf %756, %757 : vector<8x128xf32>
    %759 = vector.extract_strided_slice %748 {offsets = [0, 128], sizes = [8, 128], strides = [1, 1]} : vector<8x384xf32> to vector<8x128xf32>
    %760 = vector.extract_strided_slice %750 {offsets = [0, 128], sizes = [8, 128], strides = [1, 1]} : vector<8x384xf32> to vector<8x128xf32>
    %761 = arith.addf %759, %760 : vector<8x128xf32>
    %762 = arith.negf %761 : vector<8x128xf32>
    %763 = math.exp %762 : vector<8x128xf32>
    %cst_146 = arith.constant 1.000000e+00 : f32
    %764 = vector.broadcast %cst_146 : f32 to vector<8x128xf32>
    %765 = arith.addf %764, %763 : vector<8x128xf32>
    %766 = arith.divf %764, %765 : vector<8x128xf32>
    %767 = vector.extract_strided_slice %748 {offsets = [0, 256], sizes = [8, 128], strides = [1, 1]} : vector<8x384xf32> to vector<8x128xf32>
    %768 = vector.extract_strided_slice %750 {offsets = [0, 256], sizes = [8, 128], strides = [1, 1]} : vector<8x384xf32> to vector<8x128xf32>
    %769 = arith.addf %768, %536 : vector<8x128xf32>
    %770 = arith.mulf %758, %769 : vector<8x128xf32>
    %771 = arith.addf %767, %770 : vector<8x128xf32>
    %772 = math.tanh %771 : vector<8x128xf32>
    %cst_147 = arith.constant 1.000000e+00 : f32
    %773 = vector.broadcast %cst_147 : f32 to vector<8x128xf32>
    %774 = arith.subf %773, %766 : vector<8x128xf32>
    %775 = arith.mulf %774, %772 : vector<8x128xf32>
    %776 = arith.mulf %766, %747 : vector<8x128xf32>
    %777 = arith.addf %775, %776 : vector<8x128xf32>
    %c3 = arith.constant 3 : index
    %c0_148 = arith.constant 0 : index
    %778 = vector.load %arg10[%c3, %c0_148] : memref<4x128xf32, #tpu.memory_space<vmem>>, vector<1x128xf32>
    %779 = vector.shape_cast %778 : vector<1x128xf32> to vector<1x128xf32>
    %780 = vector.broadcast %779 : vector<1x128xf32> to vector<8x128xf32>
    %781 = vector.extract_strided_slice %532 {offsets = [56, 384], sizes = [8, 384], strides = [1, 1]} : vector<64x768xf32> to vector<8x384xf32>
    %cst_149 = arith.constant 0.000000e+00 : f32
    %782 = vector.broadcast %cst_149 : f32 to vector<8x128xf32>
    %c0_150 = arith.constant 0 : index
    %c0_151 = arith.constant 0 : index
    %783 = vector.load %arg15[%c0_150, %c0_151] : memref<128x384xbf16, #tpu.memory_space<vmem>>, vector<128x384xbf16>
    %784 = arith.truncf %782 : vector<8x128xf32> to vector<8x128xbf16>
    %cst_152 = arith.constant dense<0.000000e+00> : vector<8x384xf32>
    %785 = tpu.matmul %784, %783, %cst_152 {dimension_numbers = #tpu.dot_dimension_numbers<[1], [0], [0], [1], [0, 0, 1, 1], [], []>} : vector<8x128xbf16>, vector<128x384xbf16>, vector<8x384xf32> -> vector<8x384xf32>
    %786 = vector.extract_strided_slice %781 {offsets = [0, 0], sizes = [8, 128], strides = [1, 1]} : vector<8x384xf32> to vector<8x128xf32>
    %787 = vector.extract_strided_slice %785 {offsets = [0, 0], sizes = [8, 128], strides = [1, 1]} : vector<8x384xf32> to vector<8x128xf32>
    %788 = arith.addf %786, %787 : vector<8x128xf32>
    %789 = arith.negf %788 : vector<8x128xf32>
    %790 = math.exp %789 : vector<8x128xf32>
    %cst_153 = arith.constant 1.000000e+00 : f32
    %791 = vector.broadcast %cst_153 : f32 to vector<8x128xf32>
    %792 = arith.addf %791, %790 : vector<8x128xf32>
    %793 = arith.divf %791, %792 : vector<8x128xf32>
    %794 = vector.extract_strided_slice %781 {offsets = [0, 128], sizes = [8, 128], strides = [1, 1]} : vector<8x384xf32> to vector<8x128xf32>
    %795 = vector.extract_strided_slice %785 {offsets = [0, 128], sizes = [8, 128], strides = [1, 1]} : vector<8x384xf32> to vector<8x128xf32>
    %796 = arith.addf %794, %795 : vector<8x128xf32>
    %797 = arith.negf %796 : vector<8x128xf32>
    %798 = math.exp %797 : vector<8x128xf32>
    %cst_154 = arith.constant 1.000000e+00 : f32
    %799 = vector.broadcast %cst_154 : f32 to vector<8x128xf32>
    %800 = arith.addf %799, %798 : vector<8x128xf32>
    %801 = arith.divf %799, %800 : vector<8x128xf32>
    %802 = vector.extract_strided_slice %781 {offsets = [0, 256], sizes = [8, 128], strides = [1, 1]} : vector<8x384xf32> to vector<8x128xf32>
    %803 = vector.extract_strided_slice %785 {offsets = [0, 256], sizes = [8, 128], strides = [1, 1]} : vector<8x384xf32> to vector<8x128xf32>
    %804 = arith.addf %803, %780 : vector<8x128xf32>
    %805 = arith.mulf %793, %804 : vector<8x128xf32>
    %806 = arith.addf %802, %805 : vector<8x128xf32>
    %807 = math.tanh %806 : vector<8x128xf32>
    %cst_155 = arith.constant 1.000000e+00 : f32
    %808 = vector.broadcast %cst_155 : f32 to vector<8x128xf32>
    %809 = arith.subf %808, %801 : vector<8x128xf32>
    %810 = arith.mulf %809, %807 : vector<8x128xf32>
    %811 = arith.mulf %801, %782 : vector<8x128xf32>
    %812 = arith.addf %810, %811 : vector<8x128xf32>
    %813 = arith.truncf %777 : vector<8x128xf32> to vector<8x128xbf16>
    %c0_156 = arith.constant 0 : index
    %c0_157 = arith.constant 0 : index
    %814 = vector.load %arg7[%c0_156, %c0_157] : memref<256x128xbf16, #tpu.memory_space<vmem>>, vector<128x128xbf16>
    %cst_158 = arith.constant dense<0.000000e+00> : vector<8x128xf32>
    %815 = tpu.matmul %813, %814, %cst_158 {dimension_numbers = #tpu.dot_dimension_numbers<[1], [0], [0], [1], [0, 0, 1, 1], [], []>} : vector<8x128xbf16>, vector<128x128xbf16>, vector<8x128xf32> -> vector<8x128xf32>
    %816 = arith.truncf %812 : vector<8x128xf32> to vector<8x128xbf16>
    %c128_159 = arith.constant 128 : index
    %c0_160 = arith.constant 0 : index
    %817 = vector.load %arg7[%c128_159, %c0_160] : memref<256x128xbf16, #tpu.memory_space<vmem>>, vector<128x128xbf16>
    %cst_161 = arith.constant dense<0.000000e+00> : vector<8x128xf32>
    %818 = tpu.matmul %816, %817, %cst_161 {dimension_numbers = #tpu.dot_dimension_numbers<[1], [0], [0], [1], [0, 0, 1, 1], [], []>} : vector<8x128xbf16>, vector<128x128xbf16>, vector<8x128xf32> -> vector<8x128xf32>
    %819 = arith.addf %815, %818 : vector<8x128xf32>
    %c0_162 = arith.constant 0 : index
    %c0_163 = arith.constant 0 : index
    %820 = vector.load %arg8[%c0_162, %c0_163] : memref<1x128xf32, #tpu.memory_space<vmem>>, vector<1x128xf32>
    %821 = vector.broadcast %820 : vector<1x128xf32> to vector<8x128xf32>
    %822 = arith.addf %819, %821 : vector<8x128xf32>
    %c0_164 = arith.constant 0 : index
    %c0_165 = arith.constant 0 : index
    %823 = vector.load %arg11[%c0_164, %c0_165] : memref<8x128xf32, #tpu.memory_space<vmem>>, vector<8x128xf32>
    tpu.vector_store %arg11[%c0_164, %c0_165], %822 {strides = array<i32>} : memref<8x128xf32, #tpu.memory_space<vmem>>, vector<8x128xf32>,
    return
  }
}

</mosaic_0001>

<llo_original>
// kernel: bigru_classifier_forward.1
$region0: #{bigru_classifier_forward.1}
  #allocation0 [shape = 'u32[]', space=smem, size = 0x4, offset = 0x4, fixed_abs, tag = 'smem constant byte address 0x4 - core index']
  #allocation1 [shape = 'u32[144,128]{1,0:T(1,128)}', space=vmem, size = 0x12000, scoped, tag = 'internal scratch']
  #allocation2 [shape = 'f32[64,256]{1,0:T(8,128)}', space=vmem, size = 0x10000, scoped, tag = 'scratch operand']
  #allocation3 [shape = 'bf16[256,768]{1,0:T(8,128)(2,1)}', space=vmem, size = 0x60000, scoped, tag = 'scratch operand']
  #allocation4 [shape = 'bf16[128,384]{1,0:T(8,128)(2,1)}', space=vmem, size = 0x18000, scoped, tag = 'scratch operand']
  #allocation5 [shape = 'bf16[128,384]{1,0:T(8,128)(2,1)}', space=vmem, size = 0x18000, scoped, tag = 'scratch operand']
  #allocation6 [shape = 's32[3]{0}', space=sflag, size = 0xc, scoped, tag = 'scratch operand']
  #allocation7 [shape = 's32[]', space=sflag, size = 0x4, offset = 0, fixed_abs, tag = 'sflag constant byte address 0x0 - dummy sync flag']
  #allocation8 [shape = 's32[]', space=sflag, size = 0x4, offset = 0, fixed_abs, tag = 'sflag constant byte address 0x0 - dummy sync flag']
  #allocation9 [shape = 's32[]', space=sflag, size = 0x4, offset = 0, fixed_abs, tag = 'sflag constant byte address 0x0 - dummy sync flag']
  %s0 = inlined_call_operand.vmem [shape: f32[64,12], index: 0, kind: input, shape index: {}]
  %s1 = inlined_call_operand.vmem [shape: f32[12,768], index: 1, kind: input, shape index: {}]
  %s2 = inlined_call_operand.vmem [shape: bf16[128,384], index: 2, kind: input, shape index: {}]
  %s3 = inlined_call_operand.vmem [shape: bf16[128,384], index: 3, kind: input, shape index: {}]
  %s4 = inlined_call_operand.vmem [shape: bf16[256,768], index: 4, kind: input, shape index: {}]
  %s5 = inlined_call_operand.vmem [shape: bf16[128,384], index: 5, kind: input, shape index: {}]
  %s6 = inlined_call_operand.vmem [shape: bf16[128,384], index: 6, kind: input, shape index: {}]
  %s7 = inlined_call_operand.vmem [shape: bf16[256,128], index: 7, kind: input, shape index: {}]
  %s8 = inlined_call_operand.vmem [shape: f32[1,128], index: 8, kind: input, shape index: {}]
  %s9 = inlined_call_operand.vmem [shape: f32[2,768], index: 9, kind: input, shape index: {}]
  %s10 = inlined_call_operand.vmem [shape: f32[4,128], index: 10, kind: input, shape index: {}]
  %s11 = inlined_call_operand.vmem [shape: f32[8,128], index: 11, kind: output, shape index: {}]
  %s12 = sld [smem:[#allocation0]]
  $region144: #{bigru_classifier_forward.1} parent=0
    _
  %s14 = ssub.s32 1, %s12
  %s15 = scalar_select 0, %s14, %s12
  // Predicated region
  $region2: #{bigru_classifier_forward.1} parent=0 // pred_check
    _
  $region3: #{bigru_classifier_forward.1} parent=0 // pred_check_branch
    %17 = sbr.rel (0) target = $region5
  $region4: #{bigru_classifier_forward.1} parent=0 // pred_region
    _
  $region5: #{bigru_classifier_forward.1} parent=0 // pred_fallthru
    _
  // Predicated region
  $region6: #{bigru_classifier_forward.1} parent=0 // pred_check
    _
  $region7: #{bigru_classifier_forward.1} parent=0 // pred_check_branch
    %19 = sbr.rel (0) target = $region9
  $region8: #{bigru_classifier_forward.1} parent=0 // pred_region
    _
  $region9: #{bigru_classifier_forward.1} parent=0 // pred_fallthru
    _
  // Predicated region
  $region10: #{bigru_classifier_forward.1} parent=0 // pred_check
    _
  $region11: #{bigru_classifier_forward.1} parent=0 // pred_check_branch
    %21 = sbr.rel (0) target = $region13
  $region12: #{bigru_classifier_forward.1} parent=0 // pred_region
    _
  $region13: #{bigru_classifier_forward.1} parent=0 // pred_fallthru
    _
  // Predicated region
  $region14: #{bigru_classifier_forward.1} parent=0 // pred_check
    _
  $region15: #{bigru_classifier_forward.1} parent=0 // pred_check_branch
    %23 = sbr.rel (0) target = $region17
  $region16: #{bigru_classifier_forward.1} parent=0 // pred_region
    _
  $region17: #{bigru_classifier_forward.1} parent=0 // pred_fallthru
    _
  // Predicated region
  $region18: #{bigru_classifier_forward.1} parent=0 // pred_check
    _
  $region19: #{bigru_classifier_forward.1} parent=0 // pred_check_branch
    %25 = sbr.rel (0) target = $region21
  $region20: #{bigru_classifier_forward.1} parent=0 // pred_region
    _
  $region21: #{bigru_classifier_forward.1} parent=0 // pred_fallthru
    _
  // Predicated region
  $region22: #{bigru_classifier_forward.1} parent=0 // pred_check
    _
  $region23: #{bigru_classifier_forward.1} parent=0 // pred_check_branch
    %27 = sbr.rel (0) target = $region25
  $region24: #{bigru_classifier_forward.1} parent=0 // pred_region
    _
  $region25: #{bigru_classifier_forward.1} parent=0 // pred_fallthru
    _
  // Predicated region
  $region26: #{bigru_classifier_forward.1} parent=0 // pred_check
    _
  $region27: #{bigru_classifier_forward.1} parent=0 // pred_check_branch
    %29 = sbr.rel (0) target = $region29
  $region28: #{bigru_classifier_forward.1} parent=0 // pred_region
    _
  $region29: #{bigru_classifier_forward.1} parent=0 // pred_fallthru
    _
  // Predicated region
  $region30: #{bigru_classifier_forward.1} parent=0 // pred_check
    _
  $region31: #{bigru_classifier_forward.1} parent=0 // pred_check_branch
    %31 = sbr.rel (0) target = $region33
  $region32: #{bigru_classifier_forward.1} parent=0 // pred_region
    _
  $region33: #{bigru_classifier_forward.1} parent=0 // pred_fallthru
    _
  %p34 = scmp.lt.u32.totalorder 768, 8
  %p35 = pneg %p34
  // Predicated region
  $region34: #{bigru_classifier_forward.1} parent=0 // pred_check
    _
  $region35: #{bigru_classifier_forward.1} parent=0 // pred_check_branch
    %37 = sbr.rel (%p34) target = $region37
  $region36: #{bigru_classifier_forward.1} parent=0 // pred_region
    %s53 = sand.u32 768, 7
    %p54 = scmp.eq.s32.totalorder %s53, 0
    // Predicated region
    $region49: #{bigru_classifier_forward.1} parent=36 // pred_check
      %p55 = pneg %p54
    $region50: #{bigru_classifier_forward.1} parent=36 // pred_check_branch
      %57 = sbr.rel (%p55) target = $region52
    $region51: #{bigru_classifier_forward.1} parent=36 // pred_region
      loop: start=0, step=1, limit=1
      $region53: #{bigru_classifier_forward.1} parent=51 // loop_pre_header
        _
      $region54: #{bigru_classifier_forward.1} parent=51 // loop_header
        %s59 = sphi 0, %s63
        %p60 = scmp.ge.s32.totalorder %s59, 1
        %s64 = sphi %s4, %s4
        %s65 = sphi [#allocation3], [#allocation3]
      $region55: #{bigru_classifier_forward.1} parent=51 // loop_header_branch
        %62 = sbr.rel (%p60) target = $region59
      $region56: #{bigru_classifier_forward.1} parent=51 // loop_body
        %v66 = vld [vmem:[%s64] sm:$0xff]
        %67 = vst [vmem:[%s65] sm:$0xff] %v66
        %v68 = vld [vmem:[%s64 + $0x8] sm:$0xff]
        %69 = vst [vmem:[%s65 + $0x8] sm:$0xff] %v68
        %v70 = vld [vmem:[%s64 + $0x10] sm:$0xff]
        %71 = vst [vmem:[%s65 + $0x10] sm:$0xff] %v70
        %v72 = vld [vmem:[%s64 + $0x18] sm:$0xff]
        %73 = vst [vmem:[%s65 + $0x18] sm:$0xff] %v72
        %v74 = vld [vmem:[%s64 + $0x20] sm:$0xff]
        %75 = vst [vmem:[%s65 + $0x20] sm:$0xff] %v74
        %v76 = vld [vmem:[%s64 + $0x28] sm:$0xff]
        %77 = vst [vmem:[%s65 + $0x28] sm:$0xff] %v76
        %v78 = vld [vmem:[%s64 + $0x30] sm:$0xff]
        %79 = vst [vmem:[%s65 + $0x30] sm:$0xff] %v78
        %v80 = vld [vmem:[%s64 + $0x38] sm:$0xff]
        %81 = vst [vmem:[%s65 + $0x38] sm:$0xff] %v80
        %v82 = vld [vmem:[%s64 + $0x40] sm:$0xff]
        %83 = vst [vmem:[%s65 + $0x40] sm:$0xff] %v82
        %v84 = vld [vmem:[%s64 + $0x48] sm:$0xff]
        %85 = vst [vmem:[%s65 + $0x48] sm:$0xff] %v84
        %v86 = vld [vmem:[%s64 + $0x50] sm:$0xff]
        %87 = vst [vmem:[%s65 + $0x50] sm:$0xff] %v86
        %v88 = vld [vmem:[%s64 + $0x58] sm:$0xff]
        %89 = vst [vmem:[%s65 + $0x58] sm:$0xff] %v88
        %v90 = vld [vmem:[%s64 + $0x60] sm:$0xff]
        %91 = vst [vmem:[%s65 + $0x60] sm:$0xff] %v90
        %v92 = vld [vmem:[%s64 + $0x68] sm:$0xff]
        %93 = vst [vmem:[%s65 + $0x68] sm:$0xff] %v92
        %v94 = vld [vmem:[%s64 + $0x70] sm:$0xff]
        %95 = vst [vmem:[%s65 + $0x70] sm:$0xff] %v94
        %v96 = vld [vmem:[%s64 + $0x78] sm:$0xff]
        %97 = vst [vmem:[%s65 + $0x78] sm:$0xff] %v96
        %v98 = vld [vmem:[%s64 + $0x80] sm:$0xff]
        %99 = vst [vmem:[%s65 + $0x80] sm:$0xff] %v98
        %v100 = vld [vmem:[%s64 + $0x88] sm:$0xff]
        %101 = vst [vmem:[%s65 + $0x88] sm:$0xff] %v100
        %v102 = vld [vmem:[%s64 + $0x90] sm:$0xff]
        %103 = vst [vmem:[%s65 + $0x90] sm:$0xff] %v102
        %v104 = vld [vmem:[%s64 + $0x98] sm:$0xff]
        %105 = vst [vmem:[%s65 + $0x98] sm:$0xff] %v104
        %v106 = vld [vmem:[%s64 + $0xa0] sm:$0xff]
        %107 = vst [vmem:[%s65 + $0xa0] sm:$0xff] %v106
        %v108 = vld [vmem:[%s64 + $0xa8] sm:$0xff]
        %109 = vst [vmem:[%s65 + $0xa8] sm:$0xff] %v108
        %v110 = vld [vmem:[%s64 + $0xb0] sm:$0xff]
        %111 = vst [vmem:[%s65 + $0xb0] sm:$0xff] %v110
        %v112 = vld [vmem:[%s64 + $0xb8] sm:$0xff]
        %113 = vst [vmem:[%s65 + $0xb8] sm:$0xff] %v112
        %v114 = vld [vmem:[%s64 + $0xc0] sm:$0xff]
        %115 = vst [vmem:[%s65 + $0xc0] sm:$0xff] %v114
        %v116 = vld [vmem:[%s64 + $0xc8] sm:$0xff]
        %117 = vst [vmem:[%s65 + $0xc8] sm:$0xff] %v116
        %v118 = vld [vmem:[%s64 + $0xd0] sm:$0xff]
        %119 = vst [vmem:[%s65 + $0xd0] sm:$0xff] %v118
        %v120 = vld [vmem:[%s64 + $0xd8] sm:$0xff]
        %121 = vst [vmem:[%s65 + $0xd8] sm:$0xff] %v120
        %v122 = vld [vmem:[%s64 + $0xe0] sm:$0xff]
        %123 = vst [vmem:[%s65 + $0xe0] sm:$0xff] %v122
        %v124 = vld [vmem:[%s64 + $0xe8] sm:$0xff]
        %125 = vst [vmem:[%s65 + $0xe8] sm:$0xff] %v124
        %v126 = vld [vmem:[%s64 + $0xf0] sm:$0xff]
        %127 = vst [vmem:[%s65 + $0xf0] sm:$0xff] %v126
        %v128 = vld [vmem:[%s64 + $0xf8] sm:$0xff]
        %129 = vst [vmem:[%s65 + $0xf8] sm:$0xff] %v128
        %v130 = vld [vmem:[%s64 + $0x100] sm:$0xff]
        %131 = vst [vmem:[%s65 + $0x100] sm:$0xff] %v130
        %v132 = vld [vmem:[%s64 + $0x108] sm:$0xff]
        %133 = vst [vmem:[%s65 + $0x108] sm:$0xff] %v132
        %v134 = vld [vmem:[%s64 + $0x110] sm:$0xff]
        %135 = vst [vmem:[%s65 + $0x110] sm:$0xff] %v134
        %v136 = vld [vmem:[%s64 + $0x118] sm:$0xff]
        %137 = vst [vmem:[%s65 + $0x118] sm:$0xff] %v136
        %v138 = vld [vmem:[%s64 + $0x120] sm:$0xff]
        %139 = vst [vmem:[%s65 + $0x120] sm:$0xff] %v138
        %v140 = vld [vmem:[%s64 + $0x128] sm:$0xff]
        %141 = vst [vmem:[%s65 + $0x128] sm:$0xff] %v140
        %v142 = vld [vmem:[%s64 + $0x130] sm:$0xff]
        %143 = vst [vmem:[%s65 + $0x130] sm:$0xff] %v142
        %v144 = vld [vmem:[%s64 + $0x138] sm:$0xff]
        %145 = vst [vmem:[%s65 + $0x138] sm:$0xff] %v144
        %v146 = vld [vmem:[%s64 + $0x140] sm:$0xff]
        %147 = vst [vmem:[%s65 + $0x140] sm:$0xff] %v146
        %v148 = vld [vmem:[%s64 + $0x148] sm:$0xff]
        %149 = vst [vmem:[%s65 + $0x148] sm:$0xff] %v148
        %v150 = vld [vmem:[%s64 + $0x150] sm:$0xff]
        %151 = vst [vmem:[%s65 + $0x150] sm:$0xff] %v150
        %v152 = vld [vmem:[%s64 + $0x158] sm:$0xff]
        %153 = vst [vmem:[%s65 + $0x158] sm:$0xff] %v152
        %v154 = vld [vmem:[%s64 + $0x160] sm:$0xff]
        %155 = vst [vmem:[%s65 + $0x160] sm:$0xff] %v154
        %v156 = vld [vmem:[%s64 + $0x168] sm:$0xff]
        %157 = vst [vmem:[%s65 + $0x168] sm:$0xff] %v156
        %v158 = vld [vmem:[%s64 + $0x170] sm:$0xff]
        %159 = vst [vmem:[%s65 + $0x170] sm:$0xff] %v158
        %v160 = vld [vmem:[%s64 + $0x178] sm:$0xff]
        %161 = vst [vmem:[%s65 + $0x178] sm:$0xff] %v160
        %v162 = vld [vmem:[%s64 + $0x180] sm:$0xff]
        %163 = vst [vmem:[%s65 + $0x180] sm:$0xff] %v162
        %v164 = vld [vmem:[%s64 + $0x188] sm:$0xff]
        %165 = vst [vmem:[%s65 + $0x188] sm:$0xff] %v164
        %v166 = vld [vmem:[%s64 + $0x190] sm:$0xff]
        %167 = vst [vmem:[%s65 + $0x190] sm:$0xff] %v166
        %v168 = vld [vmem:[%s64 + $0x198] sm:$0xff]
        %169 = vst [vmem:[%s65 + $0x198] sm:$0xff] %v168
        %v170 = vld [vmem:[%s64 + $0x1a0] sm:$0xff]
        %171 = vst [vmem:[%s65 + $0x1a0] sm:$0xff] %v170
        %v172 = vld [vmem:[%s64 + $0x1a8] sm:$0xff]
        %173 = vst [vmem:[%s65 + $0x1a8] sm:$0xff] %v172
        %v174 = vld [vmem:[%s64 + $0x1b0] sm:$0xff]
        %175 = vst [vmem:[%s65 + $0x1b0] sm:$0xff] %v174
        %v176 = vld [vmem:[%s64 + $0x1b8] sm:$0xff]
        %177 = vst [vmem:[%s65 + $0x1b8] sm:$0xff] %v176
        %v178 = vld [vmem:[%s64 + $0x1c0] sm:$0xff]
        %179 = vst [vmem:[%s65 + $0x1c0] sm:$0xff] %v178
        %v180 = vld [vmem:[%s64 + $0x1c8] sm:$0xff]
        %181 = vst [vmem:[%s65 + $0x1c8] sm:$0xff] %v180
        %v182 = vld [vmem:[%s64 + $0x1d0] sm:$0xff]
        %183 = vst [vmem:[%s65 + $0x1d0] sm:$0xff] %v182
        %v184 = vld [vmem:[%s64 + $0x1d8] sm:$0xff]
        %185 = vst [vmem:[%s65 + $0x1d8] sm:$0xff] %v184
        %v186 = vld [vmem:[%s64 + $0x1e0] sm:$0xff]
        %187 = vst [vmem:[%s65 + $0x1e0] sm:$0xff] %v186
        %v188 = vld [vmem:[%s64 + $0x1e8] sm:$0xff]
        %189 = vst [vmem:[%s65 + $0x1e8] sm:$0xff] %v188
        %v190 = vld [vmem:[%s64 + $0x1f0] sm:$0xff]
        %191 = vst [vmem:[%s65 + $0x1f0] sm:$0xff] %v190
        %v192 = vld [vmem:[%s64 + $0x1f8] sm:$0xff]
        %193 = vst [vmem:[%s65 + $0x1f8] sm:$0xff] %v192
        %v194 = vld [vmem:[%s64 + $0x200] sm:$0xff]
        %195 = vst [vmem:[%s65 + $0x200] sm:$0xff] %v194
        %v196 = vld [vmem:[%s64 + $0x208] sm:$0xff]
        %197 = vst [vmem:[%s65 + $0x208] sm:$0xff] %v196
        %v198 = vld [vmem:[%s64 + $0x210] sm:$0xff]
        %199 = vst [vmem:[%s65 + $0x210] sm:$0xff] %v198
        %v200 = vld [vmem:[%s64 + $0x218] sm:$0xff]
        %201 = vst [vmem:[%s65 + $0x218] sm:$0xff] %v200
        %v202 = vld [vmem:[%s64 + $0x220] sm:$0xff]
        %203 = vst [vmem:[%s65 + $0x220] sm:$0xff] %v202
        %v204 = vld [vmem:[%s64 + $0x228] sm:$0xff]
        %205 = vst [vmem:[%s65 + $0x228] sm:$0xff] %v204
        %v206 = vld [vmem:[%s64 + $0x230] sm:$0xff]
        %207 = vst [vmem:[%s65 + $0x230] sm:$0xff] %v206
        %v208 = vld [vmem:[%s64 + $0x238] sm:$0xff]
        %209 = vst [vmem:[%s65 + $0x238] sm:$0xff] %v208
        %v210 = vld [vmem:[%s64 + $0x240] sm:$0xff]
        %211 = vst [vmem:[%s65 + $0x240] sm:$0xff] %v210
        %v212 = vld [vmem:[%s64 + $0x248] sm:$0xff]
        %213 = vst [vmem:[%s65 + $0x248] sm:$0xff] %v212
        %v214 = vld [vmem:[%s64 + $0x250] sm:$0xff]
        %215 = vst [vmem:[%s65 + $0x250] sm:$0xff] %v214
        %v216 = vld [vmem:[%s64 + $0x258] sm:$0xff]
        %217 = vst [vmem:[%s65 + $0x258] sm:$0xff] %v216
        %v218 = vld [vmem:[%s64 + $0x260] sm:$0xff]
        %219 = vst [vmem:[%s65 + $0x260] sm:$0xff] %v218
        %v220 = vld [vmem:[%s64 + $0x268] sm:$0xff]
        %221 = vst [vmem:[%s65 + $0x268] sm:$0xff] %v220
        %v222 = vld [vmem:[%s64 + $0x270] sm:$0xff]
        %223 = vst [vmem:[%s65 + $0x270] sm:$0xff] %v222
        %v224 = vld [vmem:[%s64 + $0x278] sm:$0xff]
        %225 = vst [vmem:[%s65 + $0x278] sm:$0xff] %v224
        %v226 = vld [vmem:[%s64 + $0x280] sm:$0xff]
        %227 = vst [vmem:[%s65 + $0x280] sm:$0xff] %v226
        %v228 = vld [vmem:[%s64 + $0x288] sm:$0xff]
        %229 = vst [vmem:[%s65 + $0x288] sm:$0xff] %v228
        %v230 = vld [vmem:[%s64 + $0x290] sm:$0xff]
        %231 = vst [vmem:[%s65 + $0x290] sm:$0xff] %v230
        %v232 = vld [vmem:[%s64 + $0x298] sm:$0xff]
        %233 = vst [vmem:[%s65 + $0x298] sm:$0xff] %v232
        %v234 = vld [vmem:[%s64 + $0x2a0] sm:$0xff]
        %235 = vst [vmem:[%s65 + $0x2a0] sm:$0xff] %v234
        %v236 = vld [vmem:[%s64 + $0x2a8] sm:$0xff]
        %237 = vst [vmem:[%s65 + $0x2a8] sm:$0xff] %v236
        %v238 = vld [vmem:[%s64 + $0x2b0] sm:$0xff]
        %239 = vst [vmem:[%s65 + $0x2b0] sm:$0xff] %v238
        %v240 = vld [vmem:[%s64 + $0x2b8] sm:$0xff]
        %241 = vst [vmem:[%s65 + $0x2b8] sm:$0xff] %v240
        %v242 = vld [vmem:[%s64 + $0x2c0] sm:$0xff]
        %243 = vst [vmem:[%s65 + $0x2c0] sm:$0xff] %v242
        %v244 = vld [vmem:[%s64 + $0x2c8] sm:$0xff]
        %245 = vst [vmem:[%s65 + $0x2c8] sm:$0xff] %v244
        %v246 = vld [vmem:[%s64 + $0x2d0] sm:$0xff]
        %247 = vst [vmem:[%s65 + $0x2d0] sm:$0xff] %v246
        %v248 = vld [vmem:[%s64 + $0x2d8] sm:$0xff]
        %249 = vst [vmem:[%s65 + $0x2d8] sm:$0xff] %v248
        %v250 = vld [vmem:[%s64 + $0x2e0] sm:$0xff]
        %251 = vst [vmem:[%s65 + $0x2e0] sm:$0xff] %v250
        %v252 = vld [vmem:[%s64 + $0x2e8] sm:$0xff]
        %253 = vst [vmem:[%s65 + $0x2e8] sm:$0xff] %v252
        %v254 = vld [vmem:[%s64 + $0x2f0] sm:$0xff]
        %255 = vst [vmem:[%s65 + $0x2f0] sm:$0xff] %v254
        %v256 = vld [vmem:[%s64 + $0x2f8] sm:$0xff]
        %257 = vst [vmem:[%s65 + $0x2f8] sm:$0xff] %v256
      $region57: #{bigru_classifier_forward.1} parent=51 // loop_footer
        %s63 = sadd.s32 1, %s59
      $region58: #{bigru_classifier_forward.1} parent=51 // loop_footer_branch
        %58 = sbr.rel target = $region54
      $region59: #{bigru_classifier_forward.1} parent=51 // loop_exit
        _
    $region52: #{bigru_classifier_forward.1} parent=36 // pred_fallthru
      _
    %p258 = pneg %p54
    // Predicated region
    $region60: #{bigru_classifier_forward.1} parent=36 // pred_check
      _
    $region61: #{bigru_classifier_forward.1} parent=36 // pred_check_branch
      %260 = sbr.rel (%p54) target = $region63
    $region62: #{bigru_classifier_forward.1} parent=36 // pred_region
      %s261 = sand.u32 768, 7
    $region63: #{bigru_classifier_forward.1} parent=36 // pred_fallthru
      _
  $region37: #{bigru_classifier_forward.1} parent=0 // pred_fallthru
    _
  // Predicated region
  $region38: #{bigru_classifier_forward.1} parent=0 // pred_check
    %p38 = pneg %p34
  $region39: #{bigru_classifier_forward.1} parent=0 // pred_check_branch
    %40 = sbr.rel (%p38) target = $region41
  $region40: #{bigru_classifier_forward.1} parent=0 // pred_region
    %s41 = sshll.u32 1, 768
    %s42 = ssub.s32 %s41, 1
    loop: start=0, step=1, limit=1
    $region42: #{bigru_classifier_forward.1} parent=40 // loop_pre_header
      _
    $region43: #{bigru_classifier_forward.1} parent=40 // loop_header
      %s44 = sphi 0, %s48
      %p45 = scmp.ge.s32.totalorder %s44, 1
      %s49 = sphi %s4, %s4
      %s50 = sphi [#allocation3], [#allocation3]
    $region44: #{bigru_classifier_forward.1} parent=40 // loop_header_branch
      %47 = sbr.rel (%p45) target = $region48
    $region45: #{bigru_classifier_forward.1} parent=40 // loop_body
      %v51 = vld [vmem:[%s49] sm:%s42]
      %52 = vst [vmem:[%s50] sm:%s42] %v51
    $region46: #{bigru_classifier_forward.1} parent=40 // loop_footer
      %s48 = sadd.s32 1, %s44
    $region47: #{bigru_classifier_forward.1} parent=40 // loop_footer_branch
      %43 = sbr.rel target = $region43
    $region48: #{bigru_classifier_forward.1} parent=40 // loop_exit
      _
  $region41: #{bigru_classifier_forward.1} parent=0 // pred_fallthru
    _
  // Predicated region
  $region64: #{bigru_classifier_forward.1} parent=0 // pred_check
    _
  $region65: #{bigru_classifier_forward.1} parent=0 // pred_check_branch
    %264 = sbr.rel (0) target = $region67
  $region66: #{bigru_classifier_forward.1} parent=0 // pred_region
    %265 = vsyncadd [#allocation6], 12288
  $region67: #{bigru_classifier_forward.1} parent=0 // pred_fallthru
    _
  %s266 = scalar_lea.sflag [#allocation6], 1
  %p268 = scmp.lt.u32.totalorder 192, 8
  %p269 = pneg %p268
  // Predicated region
  $region68: #{bigru_classifier_forward.1} parent=0 // pred_check
    _
  $region69: #{bigru_classifier_forward.1} parent=0 // pred_check_branch
    %271 = sbr.rel (%p268) target = $region71
  $region70: #{bigru_classifier_forward.1} parent=0 // pred_region
    %s287 = sand.u32 192, 7
    %p288 = scmp.eq.s32.totalorder %s287, 0
    // Predicated region
    $region83: #{bigru_classifier_forward.1} parent=70 // pred_check
      %p289 = pneg %p288
    $region84: #{bigru_classifier_forward.1} parent=70 // pred_check_branch
      %291 = sbr.rel (%p289) target = $region86
    $region85: #{bigru_classifier_forward.1} parent=70 // pred_region
      loop: start=0, step=1, limit=1
      $region87: #{bigru_classifier_forward.1} parent=85 // loop_pre_header
        _
      $region88: #{bigru_classifier_forward.1} parent=85 // loop_header
        %s293 = sphi 0, %s297
        %p294 = scmp.ge.s32.totalorder %s293, 1
        %s298 = sphi %s5, %s5
        %s299 = sphi [#allocation4], [#allocation4]
      $region89: #{bigru_classifier_forward.1} parent=85 // loop_header_branch
        %296 = sbr.rel (%p294) target = $region93
      $region90: #{bigru_classifier_forward.1} parent=85 // loop_body
        %v300 = vld [vmem:[%s298] sm:$0xff]
        %301 = vst [vmem:[%s299] sm:$0xff] %v300
        %v302 = vld [vmem:[%s298 + $0x8] sm:$0xff]
        %303 = vst [vmem:[%s299 + $0x8] sm:$0xff] %v302
        %v304 = vld [vmem:[%s298 + $0x10] sm:$0xff]
        %305 = vst [vmem:[%s299 + $0x10] sm:$0xff] %v304
        %v306 = vld [vmem:[%s298 + $0x18] sm:$0xff]
        %307 = vst [vmem:[%s299 + $0x18] sm:$0xff] %v306
        %v308 = vld [vmem:[%s298 + $0x20] sm:$0xff]
        %309 = vst [vmem:[%s299 + $0x20] sm:$0xff] %v308
        %v310 = vld [vmem:[%s298 + $0x28] sm:$0xff]
        %311 = vst [vmem:[%s299 + $0x28] sm:$0xff] %v310
        %v312 = vld [vmem:[%s298 + $0x30] sm:$0xff]
        %313 = vst [vmem:[%s299 + $0x30] sm:$0xff] %v312
        %v314 = vld [vmem:[%s298 + $0x38] sm:$0xff]
        %315 = vst [vmem:[%s299 + $0x38] sm:$0xff] %v314
        %v316 = vld [vmem:[%s298 + $0x40] sm:$0xff]
        %317 = vst [vmem:[%s299 + $0x40] sm:$0xff] %v316
        %v318 = vld [vmem:[%s298 + $0x48] sm:$0xff]
        %319 = vst [vmem:[%s299 + $0x48] sm:$0xff] %v318
        %v320 = vld [vmem:[%s298 + $0x50] sm:$0xff]
        %321 = vst [vmem:[%s299 + $0x50] sm:$0xff] %v320
        %v322 = vld [vmem:[%s298 + $0x58] sm:$0xff]
        %323 = vst [vmem:[%s299 + $0x58] sm:$0xff] %v322
        %v324 = vld [vmem:[%s298 + $0x60] sm:$0xff]
        %325 = vst [vmem:[%s299 + $0x60] sm:$0xff] %v324
        %v326 = vld [vmem:[%s298 + $0x68] sm:$0xff]
        %327 = vst [vmem:[%s299 + $0x68] sm:$0xff] %v326
        %v328 = vld [vmem:[%s298 + $0x70] sm:$0xff]
        %329 = vst [vmem:[%s299 + $0x70] sm:$0xff] %v328
        %v330 = vld [vmem:[%s298 + $0x78] sm:$0xff]
        %331 = vst [vmem:[%s299 + $0x78] sm:$0xff] %v330
        %v332 = vld [vmem:[%s298 + $0x80] sm:$0xff]
        %333 = vst [vmem:[%s299 + $0x80] sm:$0xff] %v332
        %v334 = vld [vmem:[%s298 + $0x88] sm:$0xff]
        %335 = vst [vmem:[%s299 + $0x88] sm:$0xff] %v334
        %v336 = vld [vmem:[%s298 + $0x90] sm:$0xff]
        %337 = vst [vmem:[%s299 + $0x90] sm:$0xff] %v336
        %v338 = vld [vmem:[%s298 + $0x98] sm:$0xff]
        %339 = vst [vmem:[%s299 + $0x98] sm:$0xff] %v338
        %v340 = vld [vmem:[%s298 + $0xa0] sm:$0xff]
        %341 = vst [vmem:[%s299 + $0xa0] sm:$0xff] %v340
        %v342 = vld [vmem:[%s298 + $0xa8] sm:$0xff]
        %343 = vst [vmem:[%s299 + $0xa8] sm:$0xff] %v342
        %v344 = vld [vmem:[%s298 + $0xb0] sm:$0xff]
        %345 = vst [vmem:[%s299 + $0xb0] sm:$0xff] %v344
        %v346 = vld [vmem:[%s298 + $0xb8] sm:$0xff]
        %347 = vst [vmem:[%s299 + $0xb8] sm:$0xff] %v346
      $region91: #{bigru_classifier_forward.1} parent=85 // loop_footer
        %s297 = sadd.s32 1, %s293
      $region92: #{bigru_classifier_forward.1} parent=85 // loop_footer_branch
        %292 = sbr.rel target = $region88
      $region93: #{bigru_classifier_forward.1} parent=85 // loop_exit
        _
    $region86: #{bigru_classifier_forward.1} parent=70 // pred_fallthru
      _
    %p348 = pneg %p288
    // Predicated region
    $region94: #{bigru_classifier_forward.1} parent=70 // pred_check
      _
    $region95: #{bigru_classifier_forward.1} parent=70 // pred_check_branch
      %350 = sbr.rel (%p288) target = $region97
    $region96: #{bigru_classifier_forward.1} parent=70 // pred_region
      %s351 = sand.u32 192, 7
    $region97: #{bigru_classifier_forward.1} parent=70 // pred_fallthru
      _
  $region71: #{bigru_classifier_forward.1} parent=0 // pred_fallthru
    _
  // Predicated region
  $region72: #{bigru_classifier_forward.1} parent=0 // pred_check
    %p272 = pneg %p268
  $region73: #{bigru_classifier_forward.1} parent=0 // pred_check_branch
    %274 = sbr.rel (%p272) target = $region75
  $region74: #{bigru_classifier_forward.1} parent=0 // pred_region
    %s275 = sshll.u32 1, 192
    %s276 = ssub.s32 %s275, 1
    loop: start=0, step=1, limit=1
    $region76: #{bigru_classifier_forward.1} parent=74 // loop_pre_header
      _
    $region77: #{bigru_classifier_forward.1} parent=74 // loop_header
      %s278 = sphi 0, %s282
      %p279 = scmp.ge.s32.totalorder %s278, 1
      %s283 = sphi %s5, %s5
      %s284 = sphi [#allocation4], [#allocation4]
    $region78: #{bigru_classifier_forward.1} parent=74 // loop_header_branch
      %281 = sbr.rel (%p279) target = $region82
    $region79: #{bigru_classifier_forward.1} parent=74 // loop_body
      %v285 = vld [vmem:[%s283] sm:%s276]
      %286 = vst [vmem:[%s284] sm:%s276] %v285
    $region80: #{bigru_classifier_forward.1} parent=74 // loop_footer
      %s282 = sadd.s32 1, %s278
    $region81: #{bigru_classifier_forward.1} parent=74 // loop_footer_branch
      %277 = sbr.rel target = $region77
    $region82: #{bigru_classifier_forward.1} parent=74 // loop_exit
      _
  $region75: #{bigru_classifier_forward.1} parent=0 // pred_fallthru
    _
  // Predicated region
  $region98: #{bigru_classifier_forward.1} parent=0 // pred_check
    _
  $region99: #{bigru_classifier_forward.1} parent=0 // pred_check_branch
    %354 = sbr.rel (0) target = $region101
  $region100: #{bigru_classifier_forward.1} parent=0 // pred_region
    %355 = vsyncadd %s266, 3072
  $region101: #{bigru_classifier_forward.1} parent=0 // pred_fallthru
    _
  %s356 = scalar_lea.sflag [#allocation6], 2
  %p358 = scmp.lt.u32.totalorder 192, 8
  %p359 = pneg %p358
  // Predicated region
  $region102: #{bigru_classifier_forward.1} parent=0 // pred_check
    _
  $region103: #{bigru_classifier_forward.1} parent=0 // pred_check_branch
    %361 = sbr.rel (%p358) target = $region105
  $region104: #{bigru_classifier_forward.1} parent=0 // pred_region
    %s377 = sand.u32 192, 7
    %p378 = scmp.eq.s32.totalorder %s377, 0
    // Predicated region
    $region117: #{bigru_classifier_forward.1} parent=104 // pred_check
      %p379 = pneg %p378
    $region118: #{bigru_classifier_forward.1} parent=104 // pred_check_branch
      %381 = sbr.rel (%p379) target = $region120
    $region119: #{bigru_classifier_forward.1} parent=104 // pred_region
      loop: start=0, step=1, limit=1
      $region121: #{bigru_classifier_forward.1} parent=119 // loop_pre_header
        _
      $region122: #{bigru_classifier_forward.1} parent=119 // loop_header
        %s383 = sphi 0, %s387
        %p384 = scmp.ge.s32.totalorder %s383, 1
        %s388 = sphi %s6, %s6
        %s389 = sphi [#allocation5], [#allocation5]
      $region123: #{bigru_classifier_forward.1} parent=119 // loop_header_branch
        %386 = sbr.rel (%p384) target = $region127
      $region124: #{bigru_classifier_forward.1} parent=119 // loop_body
        %v390 = vld [vmem:[%s388] sm:$0xff]
        %391 = vst [vmem:[%s389] sm:$0xff] %v390
        %v392 = vld [vmem:[%s388 + $0x8] sm:$0xff]
        %393 = vst [vmem:[%s389 + $0x8] sm:$0xff] %v392
        %v394 = vld [vmem:[%s388 + $0x10] sm:$0xff]
        %395 = vst [vmem:[%s389 + $0x10] sm:$0xff] %v394
        %v396 = vld [vmem:[%s388 + $0x18] sm:$0xff]
        %397 = vst [vmem:[%s389 + $0x18] sm:$0xff] %v396
        %v398 = vld [vmem:[%s388 + $0x20] sm:$0xff]
        %399 = vst [vmem:[%s389 + $0x20] sm:$0xff] %v398
        %v400 = vld [vmem:[%s388 + $0x28] sm:$0xff]
        %401 = vst [vmem:[%s389 + $0x28] sm:$0xff] %v400
        %v402 = vld [vmem:[%s388 + $0x30] sm:$0xff]
        %403 = vst [vmem:[%s389 + $0x30] sm:$0xff] %v402
        %v404 = vld [vmem:[%s388 + $0x38] sm:$0xff]
        %405 = vst [vmem:[%s389 + $0x38] sm:$0xff] %v404
        %v406 = vld [vmem:[%s388 + $0x40] sm:$0xff]
        %407 = vst [vmem:[%s389 + $0x40] sm:$0xff] %v406
        %v408 = vld [vmem:[%s388 + $0x48] sm:$0xff]
        %409 = vst [vmem:[%s389 + $0x48] sm:$0xff] %v408
        %v410 = vld [vmem:[%s388 + $0x50] sm:$0xff]
        %411 = vst [vmem:[%s389 + $0x50] sm:$0xff] %v410
        %v412 = vld [vmem:[%s388 + $0x58] sm:$0xff]
        %413 = vst [vmem:[%s389 + $0x58] sm:$0xff] %v412
        %v414 = vld [vmem:[%s388 + $0x60] sm:$0xff]
        %415 = vst [vmem:[%s389 + $0x60] sm:$0xff] %v414
        %v416 = vld [vmem:[%s388 + $0x68] sm:$0xff]
        %417 = vst [vmem:[%s389 + $0x68] sm:$0xff] %v416
        %v418 = vld [vmem:[%s388 + $0x70] sm:$0xff]
        %419 = vst [vmem:[%s389 + $0x70] sm:$0xff] %v418
        %v420 = vld [vmem:[%s388 + $0x78] sm:$0xff]
        %421 = vst [vmem:[%s389 + $0x78] sm:$0xff] %v420
        %v422 = vld [vmem:[%s388 + $0x80] sm:$0xff]
        %423 = vst [vmem:[%s389 + $0x80] sm:$0xff] %v422
        %v424 = vld [vmem:[%s388 + $0x88] sm:$0xff]
        %425 = vst [vmem:[%s389 + $0x88] sm:$0xff] %v424
        %v426 = vld [vmem:[%s388 + $0x90] sm:$0xff]
        %427 = vst [vmem:[%s389 + $0x90] sm:$0xff] %v426
        %v428 = vld [vmem:[%s388 + $0x98] sm:$0xff]
        %429 = vst [vmem:[%s389 + $0x98] sm:$0xff] %v428
        %v430 = vld [vmem:[%s388 + $0xa0] sm:$0xff]
        %431 = vst [vmem:[%s389 + $0xa0] sm:$0xff] %v430
        %v432 = vld [vmem:[%s388 + $0xa8] sm:$0xff]
        %433 = vst [vmem:[%s389 + $0xa8] sm:$0xff] %v432
        %v434 = vld [vmem:[%s388 + $0xb0] sm:$0xff]
        %435 = vst [vmem:[%s389 + $0xb0] sm:$0xff] %v434
        %v436 = vld [vmem:[%s388 + $0xb8] sm:$0xff]
        %437 = vst [vmem:[%s389 + $0xb8] sm:$0xff] %v436
      $region125: #{bigru_classifier_forward.1} parent=119 // loop_footer
        %s387 = sadd.s32 1, %s383
      $region126: #{bigru_classifier_forward.1} parent=119 // loop_footer_branch
        %382 = sbr.rel target = $region122
      $region127: #{bigru_classifier_forward.1} parent=119 // loop_exit
        _
    $region120: #{bigru_classifier_forward.1} parent=104 // pred_fallthru
      _
    %p438 = pneg %p378
    // Predicated region
    $region128: #{bigru_classifier_forward.1} parent=104 // pred_check
      _
    $region129: #{bigru_classifier_forward.1} parent=104 // pred_check_branch
      %440 = sbr.rel (%p378) target = $region131
    $region130: #{bigru_classifier_forward.1} parent=104 // pred_region
      %s441 = sand.u32 192, 7
    $region131: #{bigru_classifier_forward.1} parent=104 // pred_fallthru
      _
  $region105: #{bigru_classifier_forward.1} parent=0 // pred_fallthru
    _
  // Predicated region
  $region106: #{bigru_classifier_forward.1} parent=0 // pred_check
    %p362 = pneg %p358
  $region107: #{bigru_classifier_forward.1} parent=0 // pred_check_branch
    %364 = sbr.rel (%p362) target = $region109
  $region108: #{bigru_classifier_forward.1} parent=0 // pred_region
    %s365 = sshll.u32 1, 192
    %s366 = ssub.s32 %s365, 1
    loop: start=0, step=1, limit=1
    $region110: #{bigru_classifier_forward.1} parent=108 // loop_pre_header
      _
    $region111: #{bigru_classifier_forward.1} parent=108 // loop_header
      %s368 = sphi 0, %s372
      %p369 = scmp.ge.s32.totalorder %s368, 1
      %s373 = sphi %s6, %s6
      %s374 = sphi [#allocation5], [#allocation5]
    $region112: #{bigru_classifier_forward.1} parent=108 // loop_header_branch
      %371 = sbr.rel (%p369) target = $region116
    $region113: #{bigru_classifier_forward.1} parent=108 // loop_body
      %v375 = vld [vmem:[%s373] sm:%s366]
      %376 = vst [vmem:[%s374] sm:%s366] %v375
    $region114: #{bigru_classifier_forward.1} parent=108 // loop_footer
      %s372 = sadd.s32 1, %s368
    $region115: #{bigru_classifier_forward.1} parent=108 // loop_footer_branch
      %367 = sbr.rel target = $region111
    $region116: #{bigru_classifier_forward.1} parent=108 // loop_exit
      _
  $region109: #{bigru_classifier_forward.1} parent=0 // pred_fallthru
    _
  // Predicated region
  $region132: #{bigru_classifier_forward.1} parent=0 // pred_check
    _
  $region133: #{bigru_classifier_forward.1} parent=0 // pred_check_branch
    %444 = sbr.rel (0) target = $region135
  $region134: #{bigru_classifier_forward.1} parent=0 // pred_region
    %445 = vsyncadd %s356, 3072
  $region135: #{bigru_classifier_forward.1} parent=0 // pred_fallthru
    _
  %v446 = vld [vmem:[%s0] sm:$0xff]
  %v447 = vld [vmem:[%s0 + $0x8] sm:$0xff]
  %v448 = vld [vmem:[%s0 + $0x10] sm:$0xff]
  %v449 = vld [vmem:[%s0 + $0x18] sm:$0xff]
  %v450 = vld [vmem:[%s0 + $0x20] sm:$0xff]
  %v451 = vld [vmem:[%s0 + $0x28] sm:$0xff]
  %v452 = vld [vmem:[%s0 + $0x30] sm:$0xff]
  %v453 = vld [vmem:[%s0 + $0x38] sm:$0xff]
  %v454 = vld [vmem:[%s1] sm:$0xff]
  %v455 = vld [vmem:[%s1 + $0x8] sm:$0xff]
  %v456 = vld [vmem:[%s1 + $0x10] sm:$0xff]
  %v457 = vld [vmem:[%s1 + $0x18] sm:$0xff]
  %v458 = vld [vmem:[%s1 + $0x20] sm:$0xff]
  %v459 = vld [vmem:[%s1 + $0x28] sm:$0xff]
  %v460 = vld [vmem:[%s1 + $0x30] sm:$0xf]
  %v461 = vld [vmem:[%s1 + $0x38] sm:$0xf]
  %v462 = vld [vmem:[%s1 + $0x40] sm:$0xf]
  %v463 = vld [vmem:[%s1 + $0x48] sm:$0xf]
  %v464 = vld [vmem:[%s1 + $0x50] sm:$0xf]
  %v465 = vld [vmem:[%s1 + $0x58] sm:$0xf]
  %v466 = vld [vmem:[%s9] ss:$2 sm:$0x3f]
  %v468 = vlaneseq
  %v469 = vshrl.u32 %v468, 7
  %v470 = vsub.s32 0, %v469
  %v471 = vrot.slane %v466, %v470
  %v472 = vlaneseq
  %v473 = vshrl.u32 %v472, 7
  %v474 = vsub.s32 1, %v473
  %v475 = vrot.slane %v466, %v474
  %v476 = vlaneseq
  %v477 = vshrl.u32 %v476, 7
  %v478 = vsub.s32 2, %v477
  %v479 = vrot.slane %v466, %v478
  %v480 = vlaneseq
  %v481 = vshrl.u32 %v480, 7
  %v482 = vsub.s32 3, %v481
  %v483 = vrot.slane %v466, %v482
  %v484 = vlaneseq
  %v485 = vshrl.u32 %v484, 7
  %v486 = vsub.s32 4, %v485
  %v487 = vrot.slane %v466, %v486
  %v488 = vlaneseq
  %v489 = vshrl.u32 %v488, 7
  %v490 = vsub.s32 5, %v489
  %v491 = vrot.slane %v466, %v490
  %vm498 = vcmask 97280
  %v500 = vsel %vm498, %v446, 0
  %v503 = vsel %vm498, %v447, 0
  %v506 = vsel %vm498, %v448, 0
  %v509 = vsel %vm498, %v449, 0
  %v512 = vsel %vm498, %v450, 0
  %v515 = vsel %vm498, %v451, 0
  %v518 = vsel %vm498, %v452, 0
  %v521 = vsel %vm498, %v453, 0
  %vm523 = vcmask 1043456
  %v525 = vsel %vm523, %v460, 0
  %v528 = vsel %vm523, %v461, 0
  %v531 = vsel %vm523, %v462, 0
  %v534 = vsel %vm523, %v463, 0
  %v537 = vsel %vm523, %v464, 0
  %v540 = vsel %vm523, %v465, 0
  %542 = vmatprep.subr.mxu0 0.0
  %543 = vmatpush1.msra.mxu0 0.0
  %544 = vmatprep.subr.mxu0 0.0
  %545 = vmatpush1.msra.mxu0 0.0
  %546 = vmatprep.subr.mxu0 0.0
  %547 = vmatpush1.msra.mxu0 0.0
  %548 = vmatprep.subr.mxu0 0.0
  %549 = vmatpush1.msra.mxu0 0.0
  %550 = vmatprep.subr.mxu0 0.0
  %551 = vmatpush1.msra.mxu0 0.0
  %552 = vmatprep.subr.mxu0 0.0
  %553 = vmatpush1.msra.mxu0 0.0
  %554 = vmatprep.subr.mxu0 0.0
  %555 = vmatpush1.msra.mxu0 0.0
  %556 = vmatprep.subr.mxu0 0.0
  %557 = vmatpush1.msra.mxu0 0.0
  %558 = vmatprep.subr.mxu0 0.0
  %559 = vmatpush1.msra.mxu0 0.0
  %560 = vmatprep.subr.mxu0 0.0
  %561 = vmatpush1.msra.mxu0 0.0
  %562 = vmatprep.subr.mxu0 0.0
  %563 = vmatpush1.msra.mxu0 0.0
  %564 = vmatprep.subr.mxu0 0.0
  %565 = vmatpush1.msra.mxu0 0.0
  %566 = vmatprep.subr.mxu0 0.0
  %567 = vmatpush1.msra.mxu0 0.0
  %568 = vmatprep.subr.mxu0 0.0
  %569 = vmatpush1.msra.mxu0 0.0
  %570 = vmatprep.subr.mxu0 %v528
  %571 = vmatpush1.msra.mxu0 %v525
  %572 = vmatprep.subr.mxu0 %v455
  %573 = vmatpush1.msra.mxu0 %v454
  %574 = vmatprep.subr.mxu0 0.0
  %575 = vmatpush2.msra.mxu0 0.0
  %576 = vmatprep.subr.mxu0 0.0
  %577 = vmatpush2.msra.mxu0 0.0
  %578 = vmatprep.subr.mxu0 0.0
  %579 = vmatpush2.msra.mxu0 0.0
  %580 = vmatprep.subr.mxu0 0.0
  %581 = vmatpush2.msra.mxu0 0.0
  %582 = vmatprep.subr.mxu0 0.0
  %583 = vmatpush2.msra.mxu0 0.0
  %584 = vmatprep.subr.mxu0 0.0
  %585 = vmatpush2.msra.mxu0 0.0
  %586 = vmatprep.subr.mxu0 0.0
  %587 = vmatpush2.msra.mxu0 0.0
  %588 = vmatprep.subr.mxu0 0.0
  %589 = vmatpush2.msra.mxu0 0.0
  %590 = vmatprep.subr.mxu0 0.0
  %591 = vmatpush2.msra.mxu0 0.0
  %592 = vmatprep.subr.mxu0 0.0
  %593 = vmatpush2.msra.mxu0 0.0
  %594 = vmatprep.subr.mxu0 0.0
  %595 = vmatpush2.msra.mxu0 0.0
  %596 = vmatprep.subr.mxu0 0.0
  %597 = vmatpush2.msra.mxu0 0.0
  %598 = vmatprep.subr.mxu0 0.0
  %599 = vmatpush2.msra.mxu0 0.0
  %600 = vmatprep.subr.mxu0 0.0
  %601 = vmatpush2.msra.mxu0 0.0
  %602 = vmatprep.subr.mxu0 0.0
  %603 = vmatpush2.msra.mxu0 0.0
  %604 = vmatprep.subr.mxu0 0.0
  %605 = vmatpush2.msra.mxu0 0.0
  %606 = vmatprep.mubr.f32.mxu0 0.0
  %607 = vmatmul.mubr.f32.gmra.mxu0 %v500
  %v608 = vpop.f32.mrf.mxu0
  %v609 = vadd.f32 %v471, %v608
  %v610 = vpop.f32.mrf.mxu0
  %v611 = vadd.f32 %v475, %v610
  %612 = vmatprep.mubr.f32.mxu0 0.0
  %613 = vmatmul.mubr.f32.gmra.mxu0 %v503
  %v614 = vpop.f32.mrf.mxu0
  %v615 = vadd.f32 %v471, %v614
  %v616 = vpop.f32.mrf.mxu0
  %v617 = vadd.f32 %v475, %v616
  %618 = vmatprep.mubr.f32.mxu0 0.0
  %619 = vmatmul.mubr.f32.gmra.mxu0 %v506
  %v620 = vpop.f32.mrf.mxu0
  %v621 = vadd.f32 %v471, %v620
  %v622 = vpop.f32.mrf.mxu0
  %v623 = vadd.f32 %v475, %v622
  %624 = vmatprep.mubr.f32.mxu0 0.0
  %625 = vmatmul.mubr.f32.gmra.mxu0 %v509
  %v626 = vpop.f32.mrf.mxu0
  %v627 = vadd.f32 %v471, %v626
  %v628 = vpop.f32.mrf.mxu0
  %v629 = vadd.f32 %v475, %v628
  %630 = vmatprep.mubr.f32.mxu0 0.0
  %631 = vmatmul.mubr.f32.gmra.mxu0 %v512
  %v632 = vpop.f32.mrf.mxu0
  %v633 = vadd.f32 %v471, %v632
  %v634 = vpop.f32.mrf.mxu0
  %v635 = vadd.f32 %v475, %v634
  %636 = vmatprep.mubr.f32.mxu0 0.0
  %637 = vmatmul.mubr.f32.gmra.mxu0 %v515
  %v638 = vpop.f32.mrf.mxu0
  %v639 = vadd.f32 %v471, %v638
  %v640 = vpop.f32.mrf.mxu0
  %v641 = vadd.f32 %v475, %v640
  %642 = vmatprep.mubr.f32.mxu0 0.0
  %643 = vmatmul.mubr.f32.gmra.mxu0 %v518
  %v644 = vpop.f32.mrf.mxu0
  %v645 = vadd.f32 %v471, %v644
  %v646 = vpop.f32.mrf.mxu0
  %v647 = vadd.f32 %v475, %v646
  %648 = vmatprep.mubr.f32.mxu0 0.0
  %649 = vmatmul.mubr.f32.gmra.mxu0 %v521
  %v650 = vpop.f32.mrf.mxu0
  %v651 = vadd.f32 %v471, %v650
  %v652 = vpop.f32.mrf.mxu0
  %v653 = vadd.f32 %v475, %v652
  %654 = vdwg.mxu0
  %655 = vmatprep.subr.mxu0 0.0
  %656 = vmatpush1.msra.mxu0 0.0
  %657 = vmatprep.subr.mxu0 0.0
  %658 = vmatpush1.msra.mxu0 0.0
  %659 = vmatprep.subr.mxu0 0.0
  %660 = vmatpush1.msra.mxu0 0.0
  %661 = vmatprep.subr.mxu0 0.0
  %662 = vmatpush1.msra.mxu0 0.0
  %663 = vmatprep.subr.mxu0 0.0
  %664 = vmatpush1.msra.mxu0 0.0
  %665 = vmatprep.subr.mxu0 0.0
  %666 = vmatpush1.msra.mxu0 0.0
  %667 = vmatprep.subr.mxu0 0.0
  %668 = vmatpush1.msra.mxu0 0.0
  %669 = vmatprep.subr.mxu0 0.0
  %670 = vmatpush1.msra.mxu0 0.0
  %671 = vmatprep.subr.mxu0 0.0
  %672 = vmatpush1.msra.mxu0 0.0
  %673 = vmatprep.subr.mxu0 0.0
  %674 = vmatpush1.msra.mxu0 0.0
  %675 = vmatprep.subr.mxu0 0.0
  %676 = vmatpush1.msra.mxu0 0.0
  %677 = vmatprep.subr.mxu0 0.0
  %678 = vmatpush1.msra.mxu0 0.0
  %679 = vmatprep.subr.mxu0 0.0
  %680 = vmatpush1.msra.mxu0 0.0
  %681 = vmatprep.subr.mxu0 0.0
  %682 = vmatpush1.msra.mxu0 0.0
  %683 = vmatprep.subr.mxu0 %v534
  %684 = vmatpush1.msra.mxu0 %v531
  %685 = vmatprep.subr.mxu0 %v457
  %686 = vmatpush1.msra.mxu0 %v456
  %687 = vmatprep.subr.mxu0 0.0
  %688 = vmatpush2.msra.mxu0 0.0
  %689 = vmatprep.subr.mxu0 0.0
  %690 = vmatpush2.msra.mxu0 0.0
  %691 = vmatprep.subr.mxu0 0.0
  %692 = vmatpush2.msra.mxu0 0.0
  %693 = vmatprep.subr.mxu0 0.0
  %694 = vmatpush2.msra.mxu0 0.0
  %695 = vmatprep.subr.mxu0 0.0
  %696 = vmatpush2.msra.mxu0 0.0
  %697 = vmatprep.subr.mxu0 0.0
  %698 = vmatpush2.msra.mxu0 0.0
  %699 = vmatprep.subr.mxu0 0.0
  %700 = vmatpush2.msra.mxu0 0.0
  %701 = vmatprep.subr.mxu0 0.0
  %702 = vmatpush2.msra.mxu0 0.0
  %703 = vmatprep.subr.mxu0 0.0
  %704 = vmatpush2.msra.mxu0 0.0
  %705 = vmatprep.subr.mxu0 0.0
  %706 = vmatpush2.msra.mxu0 0.0
  %707 = vmatprep.subr.mxu0 0.0
  %708 = vmatpush2.msra.mxu0 0.0
  %709 = vmatprep.subr.mxu0 0.0
  %710 = vmatpush2.msra.mxu0 0.0
  %711 = vmatprep.subr.mxu0 0.0
  %712 = vmatpush2.msra.mxu0 0.0
  %713 = vmatprep.subr.mxu0 0.0
  %714 = vmatpush2.msra.mxu0 0.0
  %715 = vmatprep.subr.mxu0 0.0
  %716 = vmatpush2.msra.mxu0 0.0
  %717 = vmatprep.subr.mxu0 0.0
  %718 = vmatpush2.msra.mxu0 0.0
  %719 = vmatprep.mubr.f32.mxu0 0.0
  %720 = vmatmul.mubr.f32.gmra.mxu0 %v500
  %v721 = vpop.f32.mrf.mxu0
  %v722 = vadd.f32 %v479, %v721
  %v723 = vpop.f32.mrf.mxu0
  %v724 = vadd.f32 %v483, %v723
  %725 = vmatprep.mubr.f32.mxu0 0.0
  %726 = vmatmul.mubr.f32.gmra.mxu0 %v503
  %v727 = vpop.f32.mrf.mxu0
  %v728 = vadd.f32 %v479, %v727
  %v729 = vpop.f32.mrf.mxu0
  %v730 = vadd.f32 %v483, %v729
  %731 = vmatprep.mubr.f32.mxu0 0.0
  %732 = vmatmul.mubr.f32.gmra.mxu0 %v506
  %v733 = vpop.f32.mrf.mxu0
  %v734 = vadd.f32 %v479, %v733
  %v735 = vpop.f32.mrf.mxu0
  %v736 = vadd.f32 %v483, %v735
  %737 = vmatprep.mubr.f32.mxu0 0.0
  %738 = vmatmul.mubr.f32.gmra.mxu0 %v509
  %v739 = vpop.f32.mrf.mxu0
  %v740 = vadd.f32 %v479, %v739
  %v741 = vpop.f32.mrf.mxu0
  %v742 = vadd.f32 %v483, %v741
  %743 = vmatprep.mubr.f32.mxu0 0.0
  %744 = vmatmul.mubr.f32.gmra.mxu0 %v512
  %v745 = vpop.f32.mrf.mxu0
  %v746 = vadd.f32 %v479, %v745
  %v747 = vpop.f32.mrf.mxu0
  %v748 = vadd.f32 %v483, %v747
  %749 = vmatprep.mubr.f32.mxu0 0.0
  %750 = vmatmul.mubr.f32.gmra.mxu0 %v515
  %v751 = vpop.f32.mrf.mxu0
  %v752 = vadd.f32 %v479, %v751
  %v753 = vpop.f32.mrf.mxu0
  %v754 = vadd.f32 %v483, %v753
  %755 = vmatprep.mubr.f32.mxu0 0.0
  %756 = vmatmul.mubr.f32.gmra.mxu0 %v518
  %v757 = vpop.f32.mrf.mxu0
  %v758 = vadd.f32 %v479, %v757
  %v759 = vpop.f32.mrf.mxu0
  %v760 = vadd.f32 %v483, %v759
  %761 = vmatprep.mubr.f32.mxu0 0.0
  %762 = vmatmul.mubr.f32.gmra.mxu0 %v521
  %v763 = vpop.f32.mrf.mxu0
  %v764 = vadd.f32 %v479, %v763
  %v765 = vpop.f32.mrf.mxu0
  %v766 = vadd.f32 %v483, %v765
  %767 = vdwg.mxu0
  %768 = vmatprep.subr.mxu0 0.0
  %769 = vmatpush1.msra.mxu0 0.0
  %770 = vmatprep.subr.mxu0 0.0
  %771 = vmatpush1.msra.mxu0 0.0
  %772 = vmatprep.subr.mxu0 0.0
  %773 = vmatpush1.msra.mxu0 0.0
  %774 = vmatprep.subr.mxu0 0.0
  %775 = vmatpush1.msra.mxu0 0.0
  %776 = vmatprep.subr.mxu0 0.0
  %777 = vmatpush1.msra.mxu0 0.0
  %778 = vmatprep.subr.mxu0 0.0
  %779 = vmatpush1.msra.mxu0 0.0
  %780 = vmatprep.subr.mxu0 0.0
  %781 = vmatpush1.msra.mxu0 0.0
  %782 = vmatprep.subr.mxu0 0.0
  %783 = vmatpush1.msra.mxu0 0.0
  %784 = vmatprep.subr.mxu0 0.0
  %785 = vmatpush1.msra.mxu0 0.0
  %786 = vmatprep.subr.mxu0 0.0
  %787 = vmatpush1.msra.mxu0 0.0
  %788 = vmatprep.subr.mxu0 0.0
  %789 = vmatpush1.msra.mxu0 0.0
  %790 = vmatprep.subr.mxu0 0.0
  %791 = vmatpush1.msra.mxu0 0.0
  %792 = vmatprep.subr.mxu0 0.0
  %793 = vmatpush1.msra.mxu0 0.0
  %794 = vmatprep.subr.mxu0 0.0
  %795 = vmatpush1.msra.mxu0 0.0
  %796 = vmatprep.subr.mxu0 %v540
  %797 = vmatpush1.msra.mxu0 %v537
  %798 = vmatprep.subr.mxu0 %v459
  %799 = vmatpush1.msra.mxu0 %v458
  %800 = vmatprep.subr.mxu0 0.0
  %801 = vmatpush2.msra.mxu0 0.0
  %802 = vmatprep.subr.mxu0 0.0
  %803 = vmatpush2.msra.mxu0 0.0
  %804 = vmatprep.subr.mxu0 0.0
  %805 = vmatpush2.msra.mxu0 0.0
  %806 = vmatprep.subr.mxu0 0.0
  %807 = vmatpush2.msra.mxu0 0.0
  %808 = vmatprep.subr.mxu0 0.0
  %809 = vmatpush2.msra.mxu0 0.0
  %810 = vmatprep.subr.mxu0 0.0
  %811 = vmatpush2.msra.mxu0 0.0
  %812 = vmatprep.subr.mxu0 0.0
  %813 = vmatpush2.msra.mxu0 0.0
  %814 = vmatprep.subr.mxu0 0.0
  %815 = vmatpush2.msra.mxu0 0.0
  %816 = vmatprep.subr.mxu0 0.0
  %817 = vmatpush2.msra.mxu0 0.0
  %818 = vmatprep.subr.mxu0 0.0
  %819 = vmatpush2.msra.mxu0 0.0
  %820 = vmatprep.subr.mxu0 0.0
  %821 = vmatpush2.msra.mxu0 0.0
  %822 = vmatprep.subr.mxu0 0.0
  %823 = vmatpush2.msra.mxu0 0.0
  %824 = vmatprep.subr.mxu0 0.0
  %825 = vmatpush2.msra.mxu0 0.0
  %826 = vmatprep.subr.mxu0 0.0
  %827 = vmatpush2.msra.mxu0 0.0
  %828 = vmatprep.subr.mxu0 0.0
  %829 = vmatpush2.msra.mxu0 0.0
  %830 = vmatprep.subr.mxu0 0.0
  %831 = vmatpush2.msra.mxu0 0.0
  %832 = vmatprep.mubr.f32.mxu0 0.0
  %833 = vmatmul.mubr.f32.gmra.mxu0 %v500
  %v834 = vpop.f32.mrf.mxu0
  %v835 = vadd.f32 %v487, %v834
  %v836 = vpop.f32.mrf.mxu0
  %v837 = vadd.f32 %v491, %v836
  %838 = vmatprep.mubr.f32.mxu0 0.0
  %839 = vmatmul.mubr.f32.gmra.mxu0 %v503
  %v840 = vpop.f32.mrf.mxu0
  %v841 = vadd.f32 %v487, %v840
  %v842 = vpop.f32.mrf.mxu0
  %v843 = vadd.f32 %v491, %v842
  %844 = vmatprep.mubr.f32.mxu0 0.0
  %845 = vmatmul.mubr.f32.gmra.mxu0 %v506
  %v846 = vpop.f32.mrf.mxu0
  %v847 = vadd.f32 %v487, %v846
  %v848 = vpop.f32.mrf.mxu0
  %v849 = vadd.f32 %v491, %v848
  %850 = vmatprep.mubr.f32.mxu0 0.0
  %851 = vmatmul.mubr.f32.gmra.mxu0 %v509
  %v852 = vpop.f32.mrf.mxu0
  %v853 = vadd.f32 %v487, %v852
  %v854 = vpop.f32.mrf.mxu0
  %v855 = vadd.f32 %v491, %v854
  %856 = vmatprep.mubr.f32.mxu0 0.0
  %857 = vmatmul.mubr.f32.gmra.mxu0 %v512
  %v858 = vpop.f32.mrf.mxu0
  %v859 = vadd.f32 %v487, %v858
  %v860 = vpop.f32.mrf.mxu0
  %v861 = vadd.f32 %v491, %v860
  %862 = vmatprep.mubr.f32.mxu0 0.0
  %863 = vmatmul.mubr.f32.gmra.mxu0 %v515
  %v864 = vpop.f32.mrf.mxu0
  %v865 = vadd.f32 %v487, %v864
  %v866 = vpop.f32.mrf.mxu0
  %v867 = vadd.f32 %v491, %v866
  %868 = vmatprep.mubr.f32.mxu0 0.0
  %869 = vmatmul.mubr.f32.gmra.mxu0 %v518
  %v870 = vpop.f32.mrf.mxu0
  %v871 = vadd.f32 %v487, %v870
  %v872 = vpop.f32.mrf.mxu0
  %v873 = vadd.f32 %v491, %v872
  %874 = vmatprep.mubr.f32.mxu0 0.0
  %875 = vmatmul.mubr.f32.gmra.mxu0 %v521
  %v876 = vpop.f32.mrf.mxu0
  %v877 = vadd.f32 %v487, %v876
  %v878 = vpop.f32.mrf.mxu0
  %v879 = vadd.f32 %v491, %v878
  %880 = vdwg.mxu0
  %v881 = vld [vmem:[%s2] sm:$0xff]
  %v882 = vld [vmem:[%s2 + $0x8] sm:$0xf]
  %v883 = vld [vmem:[%s2 + $0xc] sm:$0xff]
  %v884 = vld [vmem:[%s2 + $0x14] sm:$0xf]
  %v885 = vld [vmem:[%s2 + $0x18] sm:$0xff]
  %v886 = vld [vmem:[%s2 + $0x20] sm:$0xf]
  %v887 = vld [vmem:[%s2 + $0x24] sm:$0xff]
  %v888 = vld [vmem:[%s2 + $0x2c] sm:$0xf]
  %v889 = vld [vmem:[%s2 + $0x30] sm:$0xff]
  %v890 = vld [vmem:[%s2 + $0x38] sm:$0xf]
  %v891 = vld [vmem:[%s2 + $0x3c] sm:$0xff]
  %v892 = vld [vmem:[%s2 + $0x44] sm:$0xf]
  %v893 = vld [vmem:[%s2 + $0x48] sm:$0xff]
  %v894 = vld [vmem:[%s2 + $0x50] sm:$0xf]
  %v895 = vld [vmem:[%s2 + $0x54] sm:$0xff]
  %v896 = vld [vmem:[%s2 + $0x5c] sm:$0xf]
  %v897 = vld [vmem:[%s2 + $0x60] sm:$0xff]
  %v898 = vld [vmem:[%s2 + $0x68] sm:$0xf]
  %v899 = vld [vmem:[%s2 + $0x6c] sm:$0xff]
  %v900 = vld [vmem:[%s2 + $0x74] sm:$0xf]
  %v901 = vld [vmem:[%s2 + $0x78] sm:$0xff]
  %v902 = vld [vmem:[%s2 + $0x80] sm:$0xf]
  %v903 = vld [vmem:[%s2 + $0x84] sm:$0xff]
  %v904 = vld [vmem:[%s2 + $0x8c] sm:$0xf]
  %v905 = vld [vmem:[%s2 + $0x90] sm:$0xff]
  %v906 = vld [vmem:[%s2 + $0x98] sm:$0xf]
  %v907 = vld [vmem:[%s2 + $0x9c] sm:$0xff]
  %v908 = vld [vmem:[%s2 + $0xa4] sm:$0xf]
  %v909 = vld [vmem:[%s2 + $0xa8] sm:$0xff]
  %v910 = vld [vmem:[%s2 + $0xb0] sm:$0xf]
  %v911 = vld [vmem:[%s2 + $0xb4] sm:$0xff]
  %v912 = vld [vmem:[%s2 + $0xbc] sm:$0xf]
  %v913 = vld [vmem:[%s3] sm:$0xff]
  %v914 = vld [vmem:[%s3 + $0x8] sm:$0xf]
  %v915 = vld [vmem:[%s3 + $0xc] sm:$0xff]
  %v916 = vld [vmem:[%s3 + $0x14] sm:$0xf]
  %v917 = vld [vmem:[%s3 + $0x18] sm:$0xff]
  %v918 = vld [vmem:[%s3 + $0x20] sm:$0xf]
  %v919 = vld [vmem:[%s3 + $0x24] sm:$0xff]
  %v920 = vld [vmem:[%s3 + $0x2c] sm:$0xf]
  %v921 = vld [vmem:[%s3 + $0x30] sm:$0xff]
  %v922 = vld [vmem:[%s3 + $0x38] sm:$0xf]
  %v923 = vld [vmem:[%s3 + $0x3c] sm:$0xff]
  %v924 = vld [vmem:[%s3 + $0x44] sm:$0xf]
  %v925 = vld [vmem:[%s3 + $0x48] sm:$0xff]
  %v926 = vld [vmem:[%s3 + $0x50] sm:$0xf]
  %v927 = vld [vmem:[%s3 + $0x54] sm:$0xff]
  %v928 = vld [vmem:[%s3 + $0x5c] sm:$0xf]
  %v929 = vld [vmem:[%s3 + $0x60] sm:$0xff]
  %v930 = vld [vmem:[%s3 + $0x68] sm:$0xf]
  %v931 = vld [vmem:[%s3 + $0x6c] sm:$0xff]
  %v932 = vld [vmem:[%s3 + $0x74] sm:$0xf]
  %v933 = vld [vmem:[%s3 + $0x78] sm:$0xff]
  %v934 = vld [vmem:[%s3 + $0x80] sm:$0xf]
  %v935 = vld [vmem:[%s3 + $0x84] sm:$0xff]
  %v936 = vld [vmem:[%s3 + $0x8c] sm:$0xf]
  %v937 = vld [vmem:[%s3 + $0x90] sm:$0xff]
  %v938 = vld [vmem:[%s3 + $0x98] sm:$0xf]
  %v939 = vld [vmem:[%s3 + $0x9c] sm:$0xff]
  %v940 = vld [vmem:[%s3 + $0xa4] sm:$0xf]
  %v941 = vld [vmem:[%s3 + $0xa8] sm:$0xff]
  %v942 = vld [vmem:[%s3 + $0xb0] sm:$0xf]
  %v943 = vld [vmem:[%s3 + $0xb4] sm:$0xff]
  %v944 = vld [vmem:[%s3 + $0xbc] sm:$0xf]
  %v945 = vld [vmem:[%s10] sm:$0x1]
  %v946 = vlaneseq
  %v947 = vshrl.u32 %v946, 7
  %v948 = vsub.s32 0, %v947
  %v949 = vrot.slane %v945, %v948
  %v950 = vld [vmem:[%s10 + $0x1] sm:$0x1]
  %v951 = vlaneseq
  %v952 = vshrl.u32 %v951, 7
  %v953 = vsub.s32 0, %v952
  %v954 = vrot.slane %v950, %v953
  %v987 = vunpack.c.l.b16 %v881
  %v988 = vunpack.c.h.b16 %v881
  %v989 = vunpack.c.l.b16 %v882
  %v990 = vunpack.c.l.b16 %v883
  %v991 = vunpack.c.h.b16 %v883
  %v992 = vunpack.c.l.b16 %v884
  %v993 = vunpack.c.l.b16 %v885
  %v994 = vunpack.c.h.b16 %v885
  %v995 = vunpack.c.l.b16 %v886
  %v996 = vunpack.c.l.b16 %v887
  %v997 = vunpack.c.h.b16 %v887
  %v998 = vunpack.c.l.b16 %v888
  %v999 = vunpack.c.l.b16 %v889
  %v1000 = vunpack.c.h.b16 %v889
  %v1001 = vunpack.c.l.b16 %v890
  %v1002 = vunpack.c.l.b16 %v891
  %v1003 = vunpack.c.h.b16 %v891
  %v1004 = vunpack.c.l.b16 %v892
  %v1005 = vunpack.c.l.b16 %v893
  %v1006 = vunpack.c.h.b16 %v893
  %v1007 = vunpack.c.l.b16 %v894
  %v1008 = vunpack.c.l.b16 %v895
  %v1009 = vunpack.c.h.b16 %v895
  %v1010 = vunpack.c.l.b16 %v896
  %v1011 = vunpack.c.l.b16 %v897
  %v1012 = vunpack.c.h.b16 %v897
  %v1013 = vunpack.c.l.b16 %v898
  %v1014 = vunpack.c.l.b16 %v899
  %v1015 = vunpack.c.h.b16 %v899
  %v1016 = vunpack.c.l.b16 %v900
  %v1017 = vunpack.c.l.b16 %v901
  %v1018 = vunpack.c.h.b16 %v901
  %v1019 = vunpack.c.l.b16 %v902
  %v1020 = vunpack.c.l.b16 %v903
  %v1021 = vunpack.c.h.b16 %v903
  %v1022 = vunpack.c.l.b16 %v904
  %v1023 = vunpack.c.l.b16 %v905
  %v1024 = vunpack.c.h.b16 %v905
  %v1025 = vunpack.c.l.b16 %v906
  %v1026 = vunpack.c.l.b16 %v907
  %v1027 = vunpack.c.h.b16 %v907
  %v1028 = vunpack.c.l.b16 %v908
  %v1029 = vunpack.c.l.b16 %v909
  %v1030 = vunpack.c.h.b16 %v909
  %v1031 = vunpack.c.l.b16 %v910
  %v1032 = vunpack.c.l.b16 %v911
  %v1033 = vunpack.c.h.b16 %v911
  %v1034 = vunpack.c.l.b16 %v912
  %v1035 = vpack.c.b16 %v990, %v987
  %v1036 = vpack.c.b16 %v991, %v988
  %v1037 = vpack.c.b16 %v992, %v989
  %v1038 = vpack.c.b16 %v996, %v993
  %v1039 = vpack.c.b16 %v997, %v994
  %v1040 = vpack.c.b16 %v998, %v995
  %v1041 = vpack.c.b16 %v1002, %v999
  %v1042 = vpack.c.b16 %v1003, %v1000
  %v1043 = vpack.c.b16 %v1004, %v1001
  %v1044 = vpack.c.b16 %v1008, %v1005
  %v1045 = vpack.c.b16 %v1009, %v1006
  %v1046 = vpack.c.b16 %v1010, %v1007
  %v1047 = vpack.c.b16 %v1014, %v1011
  %v1048 = vpack.c.b16 %v1015, %v1012
  %v1049 = vpack.c.b16 %v1016, %v1013
  %v1050 = vpack.c.b16 %v1020, %v1017
  %v1051 = vpack.c.b16 %v1021, %v1018
  %v1052 = vpack.c.b16 %v1022, %v1019
  %v1053 = vpack.c.b16 %v1026, %v1023
  %v1054 = vpack.c.b16 %v1027, %v1024
  %v1055 = vpack.c.b16 %v1028, %v1025
  %v1056 = vpack.c.b16 %v1032, %v1029
  %v1057 = vpack.c.b16 %v1033, %v1030
  %v1058 = vpack.c.b16 %v1034, %v1031
  %1083 = vmatprep.subr.bf16.mxu0 %v1057
  %1084 = vmatpush1.bf16.msra.mxu0 %v1056
  %1085 = vmatprep.subr.bf16.mxu0 %v1054
  %1086 = vmatpush1.bf16.msra.mxu0 %v1053
  %1087 = vmatprep.subr.bf16.mxu0 %v1051
  %1088 = vmatpush1.bf16.msra.mxu0 %v1050
  %1089 = vmatprep.subr.bf16.mxu0 %v1048
  %1090 = vmatpush1.bf16.msra.mxu0 %v1047
  %1091 = vmatprep.subr.bf16.mxu0 %v1045
  %1092 = vmatpush1.bf16.msra.mxu0 %v1044
  %1093 = vmatprep.subr.bf16.mxu0 %v1042
  %1094 = vmatpush1.bf16.msra.mxu0 %v1041
  %1095 = vmatprep.subr.bf16.mxu0 %v1039
  %1096 = vmatpush1.bf16.msra.mxu0 %v1038
  %1097 = vmatprep.subr.bf16.mxu0 %v1036
  %1098 = vmatpush1.bf16.msra.mxu0 %v1035
  %1099 = vmatprep.subr.bf16.mxu0 0
  %1100 = vmatpush2.bf16.msra.mxu0 0
  %1101 = vmatprep.subr.bf16.mxu0 0
  %1102 = vmatpush2.bf16.msra.mxu0 0
  %1103 = vmatprep.subr.bf16.mxu0 0
  %1104 = vmatpush2.bf16.msra.mxu0 0
  %1105 = vmatprep.subr.bf16.mxu0 0
  %1106 = vmatpush2.bf16.msra.mxu0 0
  %1107 = vmatprep.subr.bf16.mxu0 0
  %1108 = vmatpush2.bf16.msra.mxu0 0
  %1109 = vmatprep.subr.bf16.mxu0 0
  %1110 = vmatpush2.bf16.msra.mxu0 0
  %1111 = vmatprep.subr.bf16.mxu0 0
  %1112 = vmatpush2.bf16.msra.mxu0 0
  %1113 = vmatprep.subr.bf16.mxu0 0
  %1114 = vmatpush2.bf16.msra.mxu0 0
  %1115 = vmatprep.mubr.bf16.mxu0 0
  %1116 = vmatmul.mubr.bf16.gmra.mxu0 0
  %v1117 = vpop.f32.mrf.mxu0
  %v1118 = vadd.f32 0.0, %v1117
  %v1119 = vpop.f32.mrf.mxu0
  %v1120 = vadd.f32 0.0, %v1119
  %v1121 = vpop.f32.mrf.mxu0
  %v1122 = vpop.f32.mrf.mxu0
  %1123 = vdwg.mxu0
  %1124 = vmatprep.subr.bf16.mxu0 0
  %1125 = vmatpush1.bf16.msra.mxu0 %v1058
  %1126 = vmatprep.subr.bf16.mxu0 0
  %1127 = vmatpush1.bf16.msra.mxu0 %v1055
  %1128 = vmatprep.subr.bf16.mxu0 0
  %1129 = vmatpush1.bf16.msra.mxu0 %v1052
  %1130 = vmatprep.subr.bf16.mxu0 0
  %1131 = vmatpush1.bf16.msra.mxu0 %v1049
  %1132 = vmatprep.subr.bf16.mxu0 0
  %1133 = vmatpush1.bf16.msra.mxu0 %v1046
  %1134 = vmatprep.subr.bf16.mxu0 0
  %1135 = vmatpush1.bf16.msra.mxu0 %v1043
  %1136 = vmatprep.subr.bf16.mxu0 0
  %1137 = vmatpush1.bf16.msra.mxu0 %v1040
  %1138 = vmatprep.subr.bf16.mxu0 0
  %1139 = vmatpush1.bf16.msra.mxu0 %v1037
  %1140 = vmatprep.subr.bf16.mxu0 0
  %1141 = vmatpush2.bf16.msra.mxu0 0
  %1142 = vmatprep.subr.bf16.mxu0 0
  %1143 = vmatpush2.bf16.msra.mxu0 0
  %1144 = vmatprep.subr.bf16.mxu0 0
  %1145 = vmatpush2.bf16.msra.mxu0 0
  %1146 = vmatprep.subr.bf16.mxu0 0
  %1147 = vmatpush2.bf16.msra.mxu0 0
  %1148 = vmatprep.subr.bf16.mxu0 0
  %1149 = vmatpush2.bf16.msra.mxu0 0
  %1150 = vmatprep.subr.bf16.mxu0 0
  %1151 = vmatpush2.bf16.msra.mxu0 0
  %1152 = vmatprep.subr.bf16.mxu0 0
  %1153 = vmatpush2.bf16.msra.mxu0 0
  %1154 = vmatprep.subr.bf16.mxu0 0
  %1155 = vmatpush2.bf16.msra.mxu0 0
  %1156 = vmatprep.mubr.bf16.mxu0 0
  %1157 = vmatmul.mubr.bf16.gmra.mxu0 0
  %v1158 = vpop.f32.mrf.mxu0
  %v1159 = vadd.f32 0.0, %v1158
  %v1160 = vpop.f32.mrf.mxu0
  %v1161 = vpop.f32.mrf.mxu0
  %v1162 = vpop.f32.mrf.mxu0
  %1163 = vdwg.mxu0
  %v1164 = vadd.f32 %v609, %v1118
  %v1165 = vxor.u32 %v1164, 2147483648
  %v1166 = vmul.f32 %v1165, 1.442695
  %v1167 = vpow.pop %v1166
  %v1168 = vadd.f32 %v1167, 1.0
  %v1169 = vrcp.pop %v1168
  %v1170 = vmul.f32 1.0, %v1169
  %v1171 = vadd.f32 %v611, %v1120
  %v1172 = vxor.u32 %v1171, 2147483648
  %v1173 = vmul.f32 %v1172, 1.442695
  %v1174 = vpow.pop %v1173
  %v1175 = vadd.f32 %v1174, 1.0
  %v1176 = vrcp.pop %v1175
  %v1177 = vmul.f32 1.0, %v1176
  %v1178 = vadd.f32 %v1159, %v949
  %v1179 = vmul.f32 %v1170, %v1178
  %v1180 = vadd.f32 %v722, %v1179
  %v1181 = vtanh.pop %v1180
  %v1182 = vsub.f32 1.0, %v1177
  %v1183 = vmul.f32 %v1182, %v1181
  %v1184 = vmul.f32 %v1177, 0.0
  %v1185 = vadd.f32 %v1183, %v1184
  %v1218 = vunpack.c.l.b16 %v913
  %v1219 = vunpack.c.h.b16 %v913
  %v1220 = vunpack.c.l.b16 %v914
  %v1221 = vunpack.c.l.b16 %v915
  %v1222 = vunpack.c.h.b16 %v915
  %v1223 = vunpack.c.l.b16 %v916
  %v1224 = vunpack.c.l.b16 %v917
  %v1225 = vunpack.c.h.b16 %v917
  %v1226 = vunpack.c.l.b16 %v918
  %v1227 = vunpack.c.l.b16 %v919
  %v1228 = vunpack.c.h.b16 %v919
  %v1229 = vunpack.c.l.b16 %v920
  %v1230 = vunpack.c.l.b16 %v921
  %v1231 = vunpack.c.h.b16 %v921
  %v1232 = vunpack.c.l.b16 %v922
  %v1233 = vunpack.c.l.b16 %v923
  %v1234 = vunpack.c.h.b16 %v923
  %v1235 = vunpack.c.l.b16 %v924
  %v1236 = vunpack.c.l.b16 %v925
  %v1237 = vunpack.c.h.b16 %v925
  %v1238 = vunpack.c.l.b16 %v926
  %v1239 = vunpack.c.l.b16 %v927
  %v1240 = vunpack.c.h.b16 %v927
  %v1241 = vunpack.c.l.b16 %v928
  %v1242 = vunpack.c.l.b16 %v929
  %v1243 = vunpack.c.h.b16 %v929
  %v1244 = vunpack.c.l.b16 %v930
  %v1245 = vunpack.c.l.b16 %v931
  %v1246 = vunpack.c.h.b16 %v931
  %v1247 = vunpack.c.l.b16 %v932
  %v1248 = vunpack.c.l.b16 %v933
  %v1249 = vunpack.c.h.b16 %v933
  %v1250 = vunpack.c.l.b16 %v934
  %v1251 = vunpack.c.l.b16 %v935
  %v1252 = vunpack.c.h.b16 %v935
  %v1253 = vunpack.c.l.b16 %v936
  %v1254 = vunpack.c.l.b16 %v937
  %v1255 = vunpack.c.h.b16 %v937
  %v1256 = vunpack.c.l.b16 %v938
  %v1257 = vunpack.c.l.b16 %v939
  %v1258 = vunpack.c.h.b16 %v939
  %v1259 = vunpack.c.l.b16 %v940
  %v1260 = vunpack.c.l.b16 %v941
  %v1261 = vunpack.c.h.b16 %v941
  %v1262 = vunpack.c.l.b16 %v942
  %v1263 = vunpack.c.l.b16 %v943
  %v1264 = vunpack.c.h.b16 %v943
  %v1265 = vunpack.c.l.b16 %v944
  %v1266 = vpack.c.b16 %v1221, %v1218
  %v1267 = vpack.c.b16 %v1222, %v1219
  %v1268 = vpack.c.b16 %v1223, %v1220
  %v1269 = vpack.c.b16 %v1227, %v1224
  %v1270 = vpack.c.b16 %v1228, %v1225
  %v1271 = vpack.c.b16 %v1229, %v1226
  %v1272 = vpack.c.b16 %v1233, %v1230
  %v1273 = vpack.c.b16 %v1234, %v1231
  %v1274 = vpack.c.b16 %v1235, %v1232
  %v1275 = vpack.c.b16 %v1239, %v1236
  %v1276 = vpack.c.b16 %v1240, %v1237
  %v1277 = vpack.c.b16 %v1241, %v1238
  %v1278 = vpack.c.b16 %v1245, %v1242
  %v1279 = vpack.c.b16 %v1246, %v1243
  %v1280 = vpack.c.b16 %v1247, %v1244
  %v1281 = vpack.c.b16 %v1251, %v1248
  %v1282 = vpack.c.b16 %v1252, %v1249
  %v1283 = vpack.c.b16 %v1253, %v1250
  %v1284 = vpack.c.b16 %v1257, %v1254
  %v1285 = vpack.c.b16 %v1258, %v1255
  %v1286 = vpack.c.b16 %v1259, %v1256
  %v1287 = vpack.c.b16 %v1263, %v1260
  %v1288 = vpack.c.b16 %v1264, %v1261
  %v1289 = vpack.c.b16 %v1265, %v1262
  %1314 = vmatprep.subr.bf16.mxu0 %v1288
  %1315 = vmatpush1.bf16.msra.mxu0 %v1287
  %1316 = vmatprep.subr.bf16.mxu0 %v1285
  %1317 = vmatpush1.bf16.msra.mxu0 %v1284
  %1318 = vmatprep.subr.bf16.mxu0 %v1282
  %1319 = vmatpush1.bf16.msra.mxu0 %v1281
  %1320 = vmatprep.subr.bf16.mxu0 %v1279
  %1321 = vmatpush1.bf16.msra.mxu0 %v1278
  %1322 = vmatprep.subr.bf16.mxu0 %v1276
  %1323 = vmatpush1.bf16.msra.mxu0 %v1275
  %1324 = vmatprep.subr.bf16.mxu0 %v1273
  %1325 = vmatpush1.bf16.msra.mxu0 %v1272
  %1326 = vmatprep.subr.bf16.mxu0 %v1270
  %1327 = vmatpush1.bf16.msra.mxu0 %v1269
  %1328 = vmatprep.subr.bf16.mxu0 %v1267
  %1329 = vmatpush1.bf16.msra.mxu0 %v1266
  %1330 = vmatprep.subr.bf16.mxu0 0
  %1331 = vmatpush2.bf16.msra.mxu0 0
  %1332 = vmatprep.subr.bf16.mxu0 0
  %1333 = vmatpush2.bf16.msra.mxu0 0
  %1334 = vmatprep.subr.bf16.mxu0 0
  %1335 = vmatpush2.bf16.msra.mxu0 0
  %1336 = vmatprep.subr.bf16.mxu0 0
  %1337 = vmatpush2.bf16.msra.mxu0 0
  %1338 = vmatprep.subr.bf16.mxu0 0
  %1339 = vmatpush2.bf16.msra.mxu0 0
  %1340 = vmatprep.subr.bf16.mxu0 0
  %1341 = vmatpush2.bf16.msra.mxu0 0
  %1342 = vmatprep.subr.bf16.mxu0 0
  %1343 = vmatpush2.bf16.msra.mxu0 0
  %1344 = vmatprep.subr.bf16.mxu0 0
  %1345 = vmatpush2.bf16.msra.mxu0 0
  %1346 = vmatprep.mubr.bf16.mxu0 0
  %1347 = vmatmul.mubr.bf16.gmra.mxu0 0
  %v1348 = vpop.f32.mrf.mxu0
  %v1349 = vadd.f32 0.0, %v1348
  %v1350 = vpop.f32.mrf.mxu0
  %v1351 = vadd.f32 0.0, %v1350
  %v1352 = vpop.f32.mrf.mxu0
  %v1353 = vpop.f32.mrf.mxu0
  %1354 = vdwg.mxu0
  %1355 = vmatprep.subr.bf16.mxu0 0
  %1356 = vmatpush1.bf16.msra.mxu0 %v1289
  %1357 = vmatprep.subr.bf16.mxu0 0
  %1358 = vmatpush1.bf16.msra.mxu0 %v1286
  %1359 = vmatprep.subr.bf16.mxu0 0
  %1360 = vmatpush1.bf16.msra.mxu0 %v1283
  %1361 = vmatprep.subr.bf16.mxu0 0
  %1362 = vmatpush1.bf16.msra.mxu0 %v1280
  %1363 = vmatprep.subr.bf16.mxu0 0
  %1364 = vmatpush1.bf16.msra.mxu0 %v1277
  %1365 = vmatprep.subr.bf16.mxu0 0
  %1366 = vmatpush1.bf16.msra.mxu0 %v1274
  %1367 = vmatprep.subr.bf16.mxu0 0
  %1368 = vmatpush1.bf16.msra.mxu0 %v1271
  %1369 = vmatprep.subr.bf16.mxu0 0
  %1370 = vmatpush1.bf16.msra.mxu0 %v1268
  %1371 = vmatprep.subr.bf16.mxu0 0
  %1372 = vmatpush2.bf16.msra.mxu0 0
  %1373 = vmatprep.subr.bf16.mxu0 0
  %1374 = vmatpush2.bf16.msra.mxu0 0
  %1375 = vmatprep.subr.bf16.mxu0 0
  %1376 = vmatpush2.bf16.msra.mxu0 0
  %1377 = vmatprep.subr.bf16.mxu0 0
  %1378 = vmatpush2.bf16.msra.mxu0 0
  %1379 = vmatprep.subr.bf16.mxu0 0
  %1380 = vmatpush2.bf16.msra.mxu0 0
  %1381 = vmatprep.subr.bf16.mxu0 0
  %1382 = vmatpush2.bf16.msra.mxu0 0
  %1383 = vmatprep.subr.bf16.mxu0 0
  %1384 = vmatpush2.bf16.msra.mxu0 0
  %1385 = vmatprep.subr.bf16.mxu0 0
  %1386 = vmatpush2.bf16.msra.mxu0 0
  %1387 = vmatprep.mubr.bf16.mxu0 0
  %1388 = vmatmul.mubr.bf16.gmra.mxu0 0
  %v1389 = vpop.f32.mrf.mxu0
  %v1390 = vadd.f32 0.0, %v1389
  %v1391 = vpop.f32.mrf.mxu0
  %v1392 = vpop.f32.mrf.mxu0
  %v1393 = vpop.f32.mrf.mxu0
  %1394 = vdwg.mxu0
  %v1395 = vadd.f32 %v766, %v1349
  %v1396 = vxor.u32 %v1395, 2147483648
  %v1397 = vmul.f32 %v1396, 1.442695
  %v1398 = vpow.pop %v1397
  %v1399 = vadd.f32 %v1398, 1.0
  %v1400 = vrcp.pop %v1399
  %v1401 = vmul.f32 1.0, %v1400
  %v1402 = vadd.f32 %v877, %v1351
  %v1403 = vxor.u32 %v1402, 2147483648
  %v1404 = vmul.f32 %v1403, 1.442695
  %v1405 = vpow.pop %v1404
  %v1406 = vadd.f32 %v1405, 1.0
  %v1407 = vrcp.pop %v1406
  %v1408 = vmul.f32 1.0, %v1407
  %v1409 = vadd.f32 %v1390, %v954
  %v1410 = vmul.f32 %v1401, %v1409
  %v1411 = vadd.f32 %v879, %v1410
  %v1412 = vtanh.pop %v1411
  %v1413 = vsub.f32 1.0, %v1408
  %v1414 = vmul.f32 %v1413, %v1412
  %v1415 = vmul.f32 %v1408, 0.0
  %v1416 = vadd.f32 %v1414, %v1415
  %1417 = vst [vmem:[#allocation2] sm:$0xff] %v1185
  %1418 = vst [vmem:[#allocation2 + $0x78] sm:$0xff] %v1416
  %v1419 = vpack.c.bf16 %v1185, %v1185
  %1420 = vmatprep.subr.bf16.mxu0 %v1057
  %1421 = vmatpush1.bf16.msra.mxu0 %v1056
  %1422 = vmatprep.subr.bf16.mxu0 %v1054
  %1423 = vmatpush1.bf16.msra.mxu0 %v1053
  %1424 = vmatprep.subr.bf16.mxu0 %v1051
  %1425 = vmatpush1.bf16.msra.mxu0 %v1050
  %1426 = vmatprep.subr.bf16.mxu0 %v1048
  %1427 = vmatpush1.bf16.msra.mxu0 %v1047
  %1428 = vmatprep.subr.bf16.mxu0 %v1045
  %1429 = vmatpush1.bf16.msra.mxu0 %v1044
  %1430 = vmatprep.subr.bf16.mxu0 %v1042
  %1431 = vmatpush1.bf16.msra.mxu0 %v1041
  %1432 = vmatprep.subr.bf16.mxu0 %v1039
  %1433 = vmatpush1.bf16.msra.mxu0 %v1038
  %1434 = vmatprep.subr.bf16.mxu0 %v1036
  %1435 = vmatpush1.bf16.msra.mxu0 %v1035
  %1436 = vmatprep.subr.bf16.mxu0 0
  %1437 = vmatpush2.bf16.msra.mxu0 0
  %1438 = vmatprep.subr.bf16.mxu0 0
  %1439 = vmatpush2.bf16.msra.mxu0 0
  %1440 = vmatprep.subr.bf16.mxu0 0
  %1441 = vmatpush2.bf16.msra.mxu0 0
  %1442 = vmatprep.subr.bf16.mxu0 0
  %1443 = vmatpush2.bf16.msra.mxu0 0
  %1444 = vmatprep.subr.bf16.mxu0 0
  %1445 = vmatpush2.bf16.msra.mxu0 0
  %1446 = vmatprep.subr.bf16.mxu0 0
  %1447 = vmatpush2.bf16.msra.mxu0 0
  %1448 = vmatprep.subr.bf16.mxu0 0
  %1449 = vmatpush2.bf16.msra.mxu0 0
  %1450 = vmatprep.subr.bf16.mxu0 0
  %1451 = vmatpush2.bf16.msra.mxu0 0
  %1452 = vmatprep.mubr.bf16.mxu0 0
  %1453 = vmatmul.mubr.bf16.gmra.mxu0 %v1419
  %v1454 = vpop.f32.mrf.mxu0
  %v1455 = vadd.f32 0.0, %v1454
  %v1456 = vpop.f32.mrf.mxu0
  %v1457 = vadd.f32 0.0, %v1456
  %v1458 = vpop.f32.mrf.mxu0
  %v1459 = vpop.f32.mrf.mxu0
  %1460 = vdwg.mxu0
  %1461 = vmatprep.subr.bf16.mxu0 0
  %1462 = vmatpush1.bf16.msra.mxu0 %v1058
  %1463 = vmatprep.subr.bf16.mxu0 0
  %1464 = vmatpush1.bf16.msra.mxu0 %v1055
  %1465 = vmatprep.subr.bf16.mxu0 0
  %1466 = vmatpush1.bf16.msra.mxu0 %v1052
  %1467 = vmatprep.subr.bf16.mxu0 0
  %1468 = vmatpush1.bf16.msra.mxu0 %v1049
  %1469 = vmatprep.subr.bf16.mxu0 0
  %1470 = vmatpush1.bf16.msra.mxu0 %v1046
  %1471 = vmatprep.subr.bf16.mxu0 0
  %1472 = vmatpush1.bf16.msra.mxu0 %v1043
  %1473 = vmatprep.subr.bf16.mxu0 0
  %1474 = vmatpush1.bf16.msra.mxu0 %v1040
  %1475 = vmatprep.subr.bf16.mxu0 0
  %1476 = vmatpush1.bf16.msra.mxu0 %v1037
  %1477 = vmatprep.subr.bf16.mxu0 0
  %1478 = vmatpush2.bf16.msra.mxu0 0
  %1479 = vmatprep.subr.bf16.mxu0 0
  %1480 = vmatpush2.bf16.msra.mxu0 0
  %1481 = vmatprep.subr.bf16.mxu0 0
  %1482 = vmatpush2.bf16.msra.mxu0 0
  %1483 = vmatprep.subr.bf16.mxu0 0
  %1484 = vmatpush2.bf16.msra.mxu0 0
  %1485 = vmatprep.subr.bf16.mxu0 0
  %1486 = vmatpush2.bf16.msra.mxu0 0
  %1487 = vmatprep.subr.bf16.mxu0 0
  %1488 = vmatpush2.bf16.msra.mxu0 0
  %1489 = vmatprep.subr.bf16.mxu0 0
  %1490 = vmatpush2.bf16.msra.mxu0 0
  %1491 = vmatprep.subr.bf16.mxu0 0
  %1492 = vmatpush2.bf16.msra.mxu0 0
  %1493 = vmatprep.mubr.bf16.mxu0 0
  %1494 = vmatmul.mubr.bf16.gmra.mxu0 %v1419
  %v1495 = vpop.f32.mrf.mxu0
  %v1496 = vadd.f32 0.0, %v1495
  %v1497 = vpop.f32.mrf.mxu0
  %v1498 = vpop.f32.mrf.mxu0
  %v1499 = vpop.f32.mrf.mxu0
  %1500 = vdwg.mxu0
  %v1501 = vadd.f32 %v615, %v1455
  %v1502 = vxor.u32 %v1501, 2147483648
  %v1503 = vmul.f32 %v1502, 1.442695
  %v1504 = vpow.pop %v1503
  %v1505 = vadd.f32 %v1504, 1.0
  %v1506 = vrcp.pop %v1505
  %v1507 = vmul.f32 1.0, %v1506
  %v1508 = vadd.f32 %v617, %v1457
  %v1509 = vxor.u32 %v1508, 2147483648
  %v1510 = vmul.f32 %v1509, 1.442695
  %v1511 = vpow.pop %v1510
  %v1512 = vadd.f32 %v1511, 1.0
  %v1513 = vrcp.pop %v1512
  %v1514 = vmul.f32 1.0, %v1513
  %v1515 = vadd.f32 %v1496, %v949
  %v1516 = vmul.f32 %v1507, %v1515
  %v1517 = vadd.f32 %v728, %v1516
  %v1518 = vtanh.pop %v1517
  %v1519 = vsub.f32 1.0, %v1514
  %v1520 = vmul.f32 %v1519, %v1518
  %v1521 = vmul.f32 %v1514, %v1185
  %v1522 = vadd.f32 %v1520, %v1521
  %v1523 = vpack.c.bf16 %v1416, %v1416
  %1524 = vmatprep.subr.bf16.mxu0 %v1288
  %1525 = vmatpush1.bf16.msra.mxu0 %v1287
  %1526 = vmatprep.subr.bf16.mxu0 %v1285
  %1527 = vmatpush1.bf16.msra.mxu0 %v1284
  %1528 = vmatprep.subr.bf16.mxu0 %v1282
  %1529 = vmatpush1.bf16.msra.mxu0 %v1281
  %1530 = vmatprep.subr.bf16.mxu0 %v1279
  %1531 = vmatpush1.bf16.msra.mxu0 %v1278
  %1532 = vmatprep.subr.bf16.mxu0 %v1276
  %1533 = vmatpush1.bf16.msra.mxu0 %v1275
  %1534 = vmatprep.subr.bf16.mxu0 %v1273
  %1535 = vmatpush1.bf16.msra.mxu0 %v1272
  %1536 = vmatprep.subr.bf16.mxu0 %v1270
  %1537 = vmatpush1.bf16.msra.mxu0 %v1269
  %1538 = vmatprep.subr.bf16.mxu0 %v1267
  %1539 = vmatpush1.bf16.msra.mxu0 %v1266
  %1540 = vmatprep.subr.bf16.mxu0 0
  %1541 = vmatpush2.bf16.msra.mxu0 0
  %1542 = vmatprep.subr.bf16.mxu0 0
  %1543 = vmatpush2.bf16.msra.mxu0 0
  %1544 = vmatprep.subr.bf16.mxu0 0
  %1545 = vmatpush2.bf16.msra.mxu0 0
  %1546 = vmatprep.subr.bf16.mxu0 0
  %1547 = vmatpush2.bf16.msra.mxu0 0
  %1548 = vmatprep.subr.bf16.mxu0 0
  %1549 = vmatpush2.bf16.msra.mxu0 0
  %1550 = vmatprep.subr.bf16.mxu0 0
  %1551 = vmatpush2.bf16.msra.mxu0 0
  %1552 = vmatprep.subr.bf16.mxu0 0
  %1553 = vmatpush2.bf16.msra.mxu0 0
  %1554 = vmatprep.subr.bf16.mxu0 0
  %1555 = vmatpush2.bf16.msra.mxu0 0
  %1556 = vmatprep.mubr.bf16.mxu0 0
  %1557 = vmatmul.mubr.bf16.gmra.mxu0 %v1523
  %v1558 = vpop.f32.mrf.mxu0
  %v1559 = vadd.f32 0.0, %v1558
  %v1560 = vpop.f32.mrf.mxu0
  %v1561 = vadd.f32 0.0, %v1560
  %v1562 = vpop.f32.mrf.mxu0
  %v1563 = vpop.f32.mrf.mxu0
  %1564 = vdwg.mxu0
  %1565 = vmatprep.subr.bf16.mxu0 0
  %1566 = vmatpush1.bf16.msra.mxu0 %v1289
  %1567 = vmatprep.subr.bf16.mxu0 0
  %1568 = vmatpush1.bf16.msra.mxu0 %v1286
  %1569 = vmatprep.subr.bf16.mxu0 0
  %1570 = vmatpush1.bf16.msra.mxu0 %v1283
  %1571 = vmatprep.subr.bf16.mxu0 0
  %1572 = vmatpush1.bf16.msra.mxu0 %v1280
  %1573 = vmatprep.subr.bf16.mxu0 0
  %1574 = vmatpush1.bf16.msra.mxu0 %v1277
  %1575 = vmatprep.subr.bf16.mxu0 0
  %1576 = vmatpush1.bf16.msra.mxu0 %v1274
  %1577 = vmatprep.subr.bf16.mxu0 0
  %1578 = vmatpush1.bf16.msra.mxu0 %v1271
  %1579 = vmatprep.subr.bf16.mxu0 0
  %1580 = vmatpush1.bf16.msra.mxu0 %v1268
  %1581 = vmatprep.subr.bf16.mxu0 0
  %1582 = vmatpush2.bf16.msra.mxu0 0
  %1583 = vmatprep.subr.bf16.mxu0 0
  %1584 = vmatpush2.bf16.msra.mxu0 0
  %1585 = vmatprep.subr.bf16.mxu0 0
  %1586 = vmatpush2.bf16.msra.mxu0 0
  %1587 = vmatprep.subr.bf16.mxu0 0
  %1588 = vmatpush2.bf16.msra.mxu0 0
  %1589 = vmatprep.subr.bf16.mxu0 0
  %1590 = vmatpush2.bf16.msra.mxu0 0
  %1591 = vmatprep.subr.bf16.mxu0 0
  %1592 = vmatpush2.bf16.msra.mxu0 0
  %1593 = vmatprep.subr.bf16.mxu0 0
  %1594 = vmatpush2.bf16.msra.mxu0 0
  %1595 = vmatprep.subr.bf16.mxu0 0
  %1596 = vmatpush2.bf16.msra.mxu0 0
  %1597 = vmatprep.mubr.bf16.mxu0 0
  %1598 = vmatmul.mubr.bf16.gmra.mxu0 %v1523
  %v1599 = vpop.f32.mrf.mxu0
  %v1600 = vadd.f32 0.0, %v1599
  %v1601 = vpop.f32.mrf.mxu0
  %v1602 = vpop.f32.mrf.mxu0
  %v1603 = vpop.f32.mrf.mxu0
  %1604 = vdwg.mxu0
  %v1605 = vadd.f32 %v760, %v1559
  %v1606 = vxor.u32 %v1605, 2147483648
  %v1607 = vmul.f32 %v1606, 1.442695
  %v1608 = vpow.pop %v1607
  %v1609 = vadd.f32 %v1608, 1.0
  %v1610 = vrcp.pop %v1609
  %v1611 = vmul.f32 1.0, %v1610
  %v1612 = vadd.f32 %v871, %v1561
  %v1613 = vxor.u32 %v1612, 2147483648
  %v1614 = vmul.f32 %v1613, 1.442695
  %v1615 = vpow.pop %v1614
  %v1616 = vadd.f32 %v1615, 1.0
  %v1617 = vrcp.pop %v1616
  %v1618 = vmul.f32 1.0, %v1617
  %v1619 = vadd.f32 %v1600, %v954
  %v1620 = vmul.f32 %v1611, %v1619
  %v1621 = vadd.f32 %v873, %v1620
  %v1622 = vtanh.pop %v1621
  %v1623 = vsub.f32 1.0, %v1618
  %v1624 = vmul.f32 %v1623, %v1622
  %v1625 = vmul.f32 %v1618, %v1416
  %v1626 = vadd.f32 %v1624, %v1625
  %1627 = vst [vmem:[#allocation2 + $0x10] sm:$0xff] %v1522
  %1628 = vst [vmem:[#allocation2 + $0x68] sm:$0xff] %v1626
  %v1629 = vpack.c.bf16 %v1522, %v1522
  %1630 = vmatprep.subr.bf16.mxu0 %v1057
  %1631 = vmatpush1.bf16.msra.mxu0 %v1056
  %1632 = vmatprep.subr.bf16.mxu0 %v1054
  %1633 = vmatpush1.bf16.msra.mxu0 %v1053
  %1634 = vmatprep.subr.bf16.mxu0 %v1051
  %1635 = vmatpush1.bf16.msra.mxu0 %v1050
  %1636 = vmatprep.subr.bf16.mxu0 %v1048
  %1637 = vmatpush1.bf16.msra.mxu0 %v1047
  %1638 = vmatprep.subr.bf16.mxu0 %v1045
  %1639 = vmatpush1.bf16.msra.mxu0 %v1044
  %1640 = vmatprep.subr.bf16.mxu0 %v1042
  %1641 = vmatpush1.bf16.msra.mxu0 %v1041
  %1642 = vmatprep.subr.bf16.mxu0 %v1039
  %1643 = vmatpush1.bf16.msra.mxu0 %v1038
  %1644 = vmatprep.subr.bf16.mxu0 %v1036
  %1645 = vmatpush1.bf16.msra.mxu0 %v1035
  %1646 = vmatprep.subr.bf16.mxu0 0
  %1647 = vmatpush2.bf16.msra.mxu0 0
  %1648 = vmatprep.subr.bf16.mxu0 0
  %1649 = vmatpush2.bf16.msra.mxu0 0
  %1650 = vmatprep.subr.bf16.mxu0 0
  %1651 = vmatpush2.bf16.msra.mxu0 0
  %1652 = vmatprep.subr.bf16.mxu0 0
  %1653 = vmatpush2.bf16.msra.mxu0 0
  %1654 = vmatprep.subr.bf16.mxu0 0
  %1655 = vmatpush2.bf16.msra.mxu0 0
  %1656 = vmatprep.subr.bf16.mxu0 0
  %1657 = vmatpush2.bf16.msra.mxu0 0
  %1658 = vmatprep.subr.bf16.mxu0 0
  %1659 = vmatpush2.bf16.msra.mxu0 0
  %1660 = vmatprep.subr.bf16.mxu0 0
  %1661 = vmatpush2.bf16.msra.mxu0 0
  %1662 = vmatprep.mubr.bf16.mxu0 0
  %1663 = vmatmul.mubr.bf16.gmra.mxu0 %v1629
  %v1664 = vpop.f32.mrf.mxu0
  %v1665 = vadd.f32 0.0, %v1664
  %v1666 = vpop.f32.mrf.mxu0
  %v1667 = vadd.f32 0.0, %v1666
  %v1668 = vpop.f32.mrf.mxu0
  %v1669 = vpop.f32.mrf.mxu0
  %1670 = vdwg.mxu0
  %1671 = vmatprep.subr.bf16.mxu0 0
  %1672 = vmatpush1.bf16.msra.mxu0 %v1058
  %1673 = vmatprep.subr.bf16.mxu0 0
  %1674 = vmatpush1.bf16.msra.mxu0 %v1055
  %1675 = vmatprep.subr.bf16.mxu0 0
  %1676 = vmatpush1.bf16.msra.mxu0 %v1052
  %1677 = vmatprep.subr.bf16.mxu0 0
  %1678 = vmatpush1.bf16.msra.mxu0 %v1049
  %1679 = vmatprep.subr.bf16.mxu0 0
  %1680 = vmatpush1.bf16.msra.mxu0 %v1046
  %1681 = vmatprep.subr.bf16.mxu0 0
  %1682 = vmatpush1.bf16.msra.mxu0 %v1043
  %1683 = vmatprep.subr.bf16.mxu0 0
  %1684 = vmatpush1.bf16.msra.mxu0 %v1040
  %1685 = vmatprep.subr.bf16.mxu0 0
  %1686 = vmatpush1.bf16.msra.mxu0 %v1037
  %1687 = vmatprep.subr.bf16.mxu0 0
  %1688 = vmatpush2.bf16.msra.mxu0 0
  %1689 = vmatprep.subr.bf16.mxu0 0
  %1690 = vmatpush2.bf16.msra.mxu0 0
  %1691 = vmatprep.subr.bf16.mxu0 0
  %1692 = vmatpush2.bf16.msra.mxu0 0
  %1693 = vmatprep.subr.bf16.mxu0 0
  %1694 = vmatpush2.bf16.msra.mxu0 0
  %1695 = vmatprep.subr.bf16.mxu0 0
  %1696 = vmatpush2.bf16.msra.mxu0 0
  %1697 = vmatprep.subr.bf16.mxu0 0
  %1698 = vmatpush2.bf16.msra.mxu0 0
  %1699 = vmatprep.subr.bf16.mxu0 0
  %1700 = vmatpush2.bf16.msra.mxu0 0
  %1701 = vmatprep.subr.bf16.mxu0 0
  %1702 = vmatpush2.bf16.msra.mxu0 0
  %1703 = vmatprep.mubr.bf16.mxu0 0
  %1704 = vmatmul.mubr.bf16.gmra.mxu0 %v1629
  %v1705 = vpop.f32.mrf.mxu0
  %v1706 = vadd.f32 0.0, %v1705
  %v1707 = vpop.f32.mrf.mxu0
  %v1708 = vpop.f32.mrf.mxu0
  %v1709 = vpop.f32.mrf.mxu0
  %1710 = vdwg.mxu0
  %v1711 = vadd.f32 %v621, %v1665
  %v1712 = vxor.u32 %v1711, 2147483648
  %v1713 = vmul.f32 %v1712, 1.442695
  %v1714 = vpow.pop %v1713
  %v1715 = vadd.f32 %v1714, 1.0
  %v1716 = vrcp.pop %v1715
  %v1717 = vmul.f32 1.0, %v1716
  %v1718 = vadd.f32 %v623, %v1667
  %v1719 = vxor.u32 %v1718, 2147483648
  %v1720 = vmul.f32 %v1719, 1.442695
  %v1721 = vpow.pop %v1720
  %v1722 = vadd.f32 %v1721, 1.0
  %v1723 = vrcp.pop %v1722
  %v1724 = vmul.f32 1.0, %v1723
  %v1725 = vadd.f32 %v1706, %v949
  %v1726 = vmul.f32 %v1717, %v1725
  %v1727 = vadd.f32 %v734, %v1726
  %v1728 = vtanh.pop %v1727
  %v1729 = vsub.f32 1.0, %v1724
  %v1730 = vmul.f32 %v1729, %v1728
  %v1731 = vmul.f32 %v1724, %v1522
  %v1732 = vadd.f32 %v1730, %v1731
  %v1733 = vpack.c.bf16 %v1626, %v1626
  %1734 = vmatprep.subr.bf16.mxu0 %v1288
  %1735 = vmatpush1.bf16.msra.mxu0 %v1287
  %1736 = vmatprep.subr.bf16.mxu0 %v1285
  %1737 = vmatpush1.bf16.msra.mxu0 %v1284
  %1738 = vmatprep.subr.bf16.mxu0 %v1282
  %1739 = vmatpush1.bf16.msra.mxu0 %v1281
  %1740 = vmatprep.subr.bf16.mxu0 %v1279
  %1741 = vmatpush1.bf16.msra.mxu0 %v1278
  %1742 = vmatprep.subr.bf16.mxu0 %v1276
  %1743 = vmatpush1.bf16.msra.mxu0 %v1275
  %1744 = vmatprep.subr.bf16.mxu0 %v1273
  %1745 = vmatpush1.bf16.msra.mxu0 %v1272
  %1746 = vmatprep.subr.bf16.mxu0 %v1270
  %1747 = vmatpush1.bf16.msra.mxu0 %v1269
  %1748 = vmatprep.subr.bf16.mxu0 %v1267
  %1749 = vmatpush1.bf16.msra.mxu0 %v1266
  %1750 = vmatprep.subr.bf16.mxu0 0
  %1751 = vmatpush2.bf16.msra.mxu0 0
  %1752 = vmatprep.subr.bf16.mxu0 0
  %1753 = vmatpush2.bf16.msra.mxu0 0
  %1754 = vmatprep.subr.bf16.mxu0 0
  %1755 = vmatpush2.bf16.msra.mxu0 0
  %1756 = vmatprep.subr.bf16.mxu0 0
  %1757 = vmatpush2.bf16.msra.mxu0 0
  %1758 = vmatprep.subr.bf16.mxu0 0
  %1759 = vmatpush2.bf16.msra.mxu0 0
  %1760 = vmatprep.subr.bf16.mxu0 0
  %1761 = vmatpush2.bf16.msra.mxu0 0
  %1762 = vmatprep.subr.bf16.mxu0 0
  %1763 = vmatpush2.bf16.msra.mxu0 0
  %1764 = vmatprep.subr.bf16.mxu0 0
  %1765 = vmatpush2.bf16.msra.mxu0 0
  %1766 = vmatprep.mubr.bf16.mxu0 0
  %1767 = vmatmul.mubr.bf16.gmra.mxu0 %v1733
  %v1768 = vpop.f32.mrf.mxu0
  %v1769 = vadd.f32 0.0, %v1768
  %v1770 = vpop.f32.mrf.mxu0
  %v1771 = vadd.f32 0.0, %v1770
  %v1772 = vpop.f32.mrf.mxu0
  %v1773 = vpop.f32.mrf.mxu0
  %1774 = vdwg.mxu0
  %1775 = vmatprep.subr.bf16.mxu0 0
  %1776 = vmatpush1.bf16.msra.mxu0 %v1289
  %1777 = vmatprep.subr.bf16.mxu0 0
  %1778 = vmatpush1.bf16.msra.mxu0 %v1286
  %1779 = vmatprep.subr.bf16.mxu0 0
  %1780 = vmatpush1.bf16.msra.mxu0 %v1283
  %1781 = vmatprep.subr.bf16.mxu0 0
  %1782 = vmatpush1.bf16.msra.mxu0 %v1280
  %1783 = vmatprep.subr.bf16.mxu0 0
  %1784 = vmatpush1.bf16.msra.mxu0 %v1277
  %1785 = vmatprep.subr.bf16.mxu0 0
  %1786 = vmatpush1.bf16.msra.mxu0 %v1274
  %1787 = vmatprep.subr.bf16.mxu0 0
  %1788 = vmatpush1.bf16.msra.mxu0 %v1271
  %1789 = vmatprep.subr.bf16.mxu0 0
  %1790 = vmatpush1.bf16.msra.mxu0 %v1268
  %1791 = vmatprep.subr.bf16.mxu0 0
  %1792 = vmatpush2.bf16.msra.mxu0 0
  %1793 = vmatprep.subr.bf16.mxu0 0
  %1794 = vmatpush2.bf16.msra.mxu0 0
  %1795 = vmatprep.subr.bf16.mxu0 0
  %1796 = vmatpush2.bf16.msra.mxu0 0
  %1797 = vmatprep.subr.bf16.mxu0 0
  %1798 = vmatpush2.bf16.msra.mxu0 0
  %1799 = vmatprep.subr.bf16.mxu0 0
  %1800 = vmatpush2.bf16.msra.mxu0 0
  %1801 = vmatprep.subr.bf16.mxu0 0
  %1802 = vmatpush2.bf16.msra.mxu0 0
  %1803 = vmatprep.subr.bf16.mxu0 0
  %1804 = vmatpush2.bf16.msra.mxu0 0
  %1805 = vmatprep.subr.bf16.mxu0 0
  %1806 = vmatpush2.bf16.msra.mxu0 0
  %1807 = vmatprep.mubr.bf16.mxu0 0
  %1808 = vmatmul.mubr.bf16.gmra.mxu0 %v1733
  %v1809 = vpop.f32.mrf.mxu0
  %v1810 = vadd.f32 0.0, %v1809
  %v1811 = vpop.f32.mrf.mxu0
  %v1812 = vpop.f32.mrf.mxu0
  %v1813 = vpop.f32.mrf.mxu0
  %1814 = vdwg.mxu0
  %v1815 = vadd.f32 %v754, %v1769
  %v1816 = vxor.u32 %v1815, 2147483648
  %v1817 = vmul.f32 %v1816, 1.442695
  %v1818 = vpow.pop %v1817
  %v1819 = vadd.f32 %v1818, 1.0
  %v1820 = vrcp.pop %v1819
  %v1821 = vmul.f32 1.0, %v1820
  %v1822 = vadd.f32 %v865, %v1771
  %v1823 = vxor.u32 %v1822, 2147483648
  %v1824 = vmul.f32 %v1823, 1.442695
  %v1825 = vpow.pop %v1824
  %v1826 = vadd.f32 %v1825, 1.0
  %v1827 = vrcp.pop %v1826
  %v1828 = vmul.f32 1.0, %v1827
  %v1829 = vadd.f32 %v1810, %v954
  %v1830 = vmul.f32 %v1821, %v1829
  %v1831 = vadd.f32 %v867, %v1830
  %v1832 = vtanh.pop %v1831
  %v1833 = vsub.f32 1.0, %v1828
  %v1834 = vmul.f32 %v1833, %v1832
  %v1835 = vmul.f32 %v1828, %v1626
  %v1836 = vadd.f32 %v1834, %v1835
  %1837 = vst [vmem:[#allocation2 + $0x20] sm:$0xff] %v1732
  %1838 = vst [vmem:[#allocation2 + $0x58] sm:$0xff] %v1836
  %v1839 = vpack.c.bf16 %v1732, %v1732
  %1840 = vmatprep.subr.bf16.mxu0 %v1057
  %1841 = vmatpush1.bf16.msra.mxu0 %v1056
  %1842 = vmatprep.subr.bf16.mxu0 %v1054
  %1843 = vmatpush1.bf16.msra.mxu0 %v1053
  %1844 = vmatprep.subr.bf16.mxu0 %v1051
  %1845 = vmatpush1.bf16.msra.mxu0 %v1050
  %1846 = vmatprep.subr.bf16.mxu0 %v1048
  %1847 = vmatpush1.bf16.msra.mxu0 %v1047
  %1848 = vmatprep.subr.bf16.mxu0 %v1045
  %1849 = vmatpush1.bf16.msra.mxu0 %v1044
  %1850 = vmatprep.subr.bf16.mxu0 %v1042
  %1851 = vmatpush1.bf16.msra.mxu0 %v1041
  %1852 = vmatprep.subr.bf16.mxu0 %v1039
  %1853 = vmatpush1.bf16.msra.mxu0 %v1038
  %1854 = vmatprep.subr.bf16.mxu0 %v1036
  %1855 = vmatpush1.bf16.msra.mxu0 %v1035
  %1856 = vmatprep.subr.bf16.mxu0 0
  %1857 = vmatpush2.bf16.msra.mxu0 0
  %1858 = vmatprep.subr.bf16.mxu0 0
  %1859 = vmatpush2.bf16.msra.mxu0 0
  %1860 = vmatprep.subr.bf16.mxu0 0
  %1861 = vmatpush2.bf16.msra.mxu0 0
  %1862 = vmatprep.subr.bf16.mxu0 0
  %1863 = vmatpush2.bf16.msra.mxu0 0
  %1864 = vmatprep.subr.bf16.mxu0 0
  %1865 = vmatpush2.bf16.msra.mxu0 0
  %1866 = vmatprep.subr.bf16.mxu0 0
  %1867 = vmatpush2.bf16.msra.mxu0 0
  %1868 = vmatprep.subr.bf16.mxu0 0
  %1869 = vmatpush2.bf16.msra.mxu0 0
  %1870 = vmatprep.subr.bf16.mxu0 0
  %1871 = vmatpush2.bf16.msra.mxu0 0
  %1872 = vmatprep.mubr.bf16.mxu0 0
  %1873 = vmatmul.mubr.bf16.gmra.mxu0 %v1839
  %v1874 = vpop.f32.mrf.mxu0
  %v1875 = vadd.f32 0.0, %v1874
  %v1876 = vpop.f32.mrf.mxu0
  %v1877 = vadd.f32 0.0, %v1876
  %v1878 = vpop.f32.mrf.mxu0
  %v1879 = vpop.f32.mrf.mxu0
  %1880 = vdwg.mxu0
  %1881 = vmatprep.subr.bf16.mxu0 0
  %1882 = vmatpush1.bf16.msra.mxu0 %v1058
  %1883 = vmatprep.subr.bf16.mxu0 0
  %1884 = vmatpush1.bf16.msra.mxu0 %v1055
  %1885 = vmatprep.subr.bf16.mxu0 0
  %1886 = vmatpush1.bf16.msra.mxu0 %v1052
  %1887 = vmatprep.subr.bf16.mxu0 0
  %1888 = vmatpush1.bf16.msra.mxu0 %v1049
  %1889 = vmatprep.subr.bf16.mxu0 0
  %1890 = vmatpush1.bf16.msra.mxu0 %v1046
  %1891 = vmatprep.subr.bf16.mxu0 0
  %1892 = vmatpush1.bf16.msra.mxu0 %v1043
  %1893 = vmatprep.subr.bf16.mxu0 0
  %1894 = vmatpush1.bf16.msra.mxu0 %v1040
  %1895 = vmatprep.subr.bf16.mxu0 0
  %1896 = vmatpush1.bf16.msra.mxu0 %v1037
  %1897 = vmatprep.subr.bf16.mxu0 0
  %1898 = vmatpush2.bf16.msra.mxu0 0
  %1899 = vmatprep.subr.bf16.mxu0 0
  %1900 = vmatpush2.bf16.msra.mxu0 0
  %1901 = vmatprep.subr.bf16.mxu0 0
  %1902 = vmatpush2.bf16.msra.mxu0 0
  %1903 = vmatprep.subr.bf16.mxu0 0
  %1904 = vmatpush2.bf16.msra.mxu0 0
  %1905 = vmatprep.subr.bf16.mxu0 0
  %1906 = vmatpush2.bf16.msra.mxu0 0
  %1907 = vmatprep.subr.bf16.mxu0 0
  %1908 = vmatpush2.bf16.msra.mxu0 0
  %1909 = vmatprep.subr.bf16.mxu0 0
  %1910 = vmatpush2.bf16.msra.mxu0 0
  %1911 = vmatprep.subr.bf16.mxu0 0
  %1912 = vmatpush2.bf16.msra.mxu0 0
  %1913 = vmatprep.mubr.bf16.mxu0 0
  %1914 = vmatmul.mubr.bf16.gmra.mxu0 %v1839
  %v1915 = vpop.f32.mrf.mxu0
  %v1916 = vadd.f32 0.0, %v1915
  %v1917 = vpop.f32.mrf.mxu0
  %v1918 = vpop.f32.mrf.mxu0
  %v1919 = vpop.f32.mrf.mxu0
  %1920 = vdwg.mxu0
  %v1921 = vadd.f32 %v627, %v1875
  %v1922 = vxor.u32 %v1921, 2147483648
  %v1923 = vmul.f32 %v1922, 1.442695
  %v1924 = vpow.pop %v1923
  %v1925 = vadd.f32 %v1924, 1.0
  %v1926 = vrcp.pop %v1925
  %v1927 = vmul.f32 1.0, %v1926
  %v1928 = vadd.f32 %v629, %v1877
  %v1929 = vxor.u32 %v1928, 2147483648
  %v1930 = vmul.f32 %v1929, 1.442695
  %v1931 = vpow.pop %v1930
  %v1932 = vadd.f32 %v1931, 1.0
  %v1933 = vrcp.pop %v1932
  %v1934 = vmul.f32 1.0, %v1933
  %v1935 = vadd.f32 %v1916, %v949
  %v1936 = vmul.f32 %v1927, %v1935
  %v1937 = vadd.f32 %v740, %v1936
  %v1938 = vtanh.pop %v1937
  %v1939 = vsub.f32 1.0, %v1934
  %v1940 = vmul.f32 %v1939, %v1938
  %v1941 = vmul.f32 %v1934, %v1732
  %v1942 = vadd.f32 %v1940, %v1941
  %v1943 = vpack.c.bf16 %v1836, %v1836
  %1944 = vmatprep.subr.bf16.mxu0 %v1288
  %1945 = vmatpush1.bf16.msra.mxu0 %v1287
  %1946 = vmatprep.subr.bf16.mxu0 %v1285
  %1947 = vmatpush1.bf16.msra.mxu0 %v1284
  %1948 = vmatprep.subr.bf16.mxu0 %v1282
  %1949 = vmatpush1.bf16.msra.mxu0 %v1281
  %1950 = vmatprep.subr.bf16.mxu0 %v1279
  %1951 = vmatpush1.bf16.msra.mxu0 %v1278
  %1952 = vmatprep.subr.bf16.mxu0 %v1276
  %1953 = vmatpush1.bf16.msra.mxu0 %v1275
  %1954 = vmatprep.subr.bf16.mxu0 %v1273
  %1955 = vmatpush1.bf16.msra.mxu0 %v1272
  %1956 = vmatprep.subr.bf16.mxu0 %v1270
  %1957 = vmatpush1.bf16.msra.mxu0 %v1269
  %1958 = vmatprep.subr.bf16.mxu0 %v1267
  %1959 = vmatpush1.bf16.msra.mxu0 %v1266
  %1960 = vmatprep.subr.bf16.mxu0 0
  %1961 = vmatpush2.bf16.msra.mxu0 0
  %1962 = vmatprep.subr.bf16.mxu0 0
  %1963 = vmatpush2.bf16.msra.mxu0 0
  %1964 = vmatprep.subr.bf16.mxu0 0
  %1965 = vmatpush2.bf16.msra.mxu0 0
  %1966 = vmatprep.subr.bf16.mxu0 0
  %1967 = vmatpush2.bf16.msra.mxu0 0
  %1968 = vmatprep.subr.bf16.mxu0 0
  %1969 = vmatpush2.bf16.msra.mxu0 0
  %1970 = vmatprep.subr.bf16.mxu0 0
  %1971 = vmatpush2.bf16.msra.mxu0 0
  %1972 = vmatprep.subr.bf16.mxu0 0
  %1973 = vmatpush2.bf16.msra.mxu0 0
  %1974 = vmatprep.subr.bf16.mxu0 0
  %1975 = vmatpush2.bf16.msra.mxu0 0
  %1976 = vmatprep.mubr.bf16.mxu0 0
  %1977 = vmatmul.mubr.bf16.gmra.mxu0 %v1943
  %v1978 = vpop.f32.mrf.mxu0
  %v1979 = vadd.f32 0.0, %v1978
  %v1980 = vpop.f32.mrf.mxu0
  %v1981 = vadd.f32 0.0, %v1980
  %v1982 = vpop.f32.mrf.mxu0
  %v1983 = vpop.f32.mrf.mxu0
  %1984 = vdwg.mxu0
  %1985 = vmatprep.subr.bf16.mxu0 0
  %1986 = vmatpush1.bf16.msra.mxu0 %v1289
  %1987 = vmatprep.subr.bf16.mxu0 0
  %1988 = vmatpush1.bf16.msra.mxu0 %v1286
  %1989 = vmatprep.subr.bf16.mxu0 0
  %1990 = vmatpush1.bf16.msra.mxu0 %v1283
  %1991 = vmatprep.subr.bf16.mxu0 0
  %1992 = vmatpush1.bf16.msra.mxu0 %v1280
  %1993 = vmatprep.subr.bf16.mxu0 0
  %1994 = vmatpush1.bf16.msra.mxu0 %v1277
  %1995 = vmatprep.subr.bf16.mxu0 0
  %1996 = vmatpush1.bf16.msra.mxu0 %v1274
  %1997 = vmatprep.subr.bf16.mxu0 0
  %1998 = vmatpush1.bf16.msra.mxu0 %v1271
  %1999 = vmatprep.subr.bf16.mxu0 0
  %2000 = vmatpush1.bf16.msra.mxu0 %v1268
  %2001 = vmatprep.subr.bf16.mxu0 0
  %2002 = vmatpush2.bf16.msra.mxu0 0
  %2003 = vmatprep.subr.bf16.mxu0 0
  %2004 = vmatpush2.bf16.msra.mxu0 0
  %2005 = vmatprep.subr.bf16.mxu0 0
  %2006 = vmatpush2.bf16.msra.mxu0 0
  %2007 = vmatprep.subr.bf16.mxu0 0
  %2008 = vmatpush2.bf16.msra.mxu0 0
  %2009 = vmatprep.subr.bf16.mxu0 0
  %2010 = vmatpush2.bf16.msra.mxu0 0
  %2011 = vmatprep.subr.bf16.mxu0 0
  %2012 = vmatpush2.bf16.msra.mxu0 0
  %2013 = vmatprep.subr.bf16.mxu0 0
  %2014 = vmatpush2.bf16.msra.mxu0 0
  %2015 = vmatprep.subr.bf16.mxu0 0
  %2016 = vmatpush2.bf16.msra.mxu0 0
  %2017 = vmatprep.mubr.bf16.mxu0 0
  %2018 = vmatmul.mubr.bf16.gmra.mxu0 %v1943
  %v2019 = vpop.f32.mrf.mxu0
  %v2020 = vadd.f32 0.0, %v2019
  %v2021 = vpop.f32.mrf.mxu0
  %v2022 = vpop.f32.mrf.mxu0
  %v2023 = vpop.f32.mrf.mxu0
  %2024 = vdwg.mxu0
  %v2025 = vadd.f32 %v748, %v1979
  %v2026 = vxor.u32 %v2025, 2147483648
  %v2027 = vmul.f32 %v2026, 1.442695
  %v2028 = vpow.pop %v2027
  %v2029 = vadd.f32 %v2028, 1.0
  %v2030 = vrcp.pop %v2029
  %v2031 = vmul.f32 1.0, %v2030
  %v2032 = vadd.f32 %v859, %v1981
  %v2033 = vxor.u32 %v2032, 2147483648
  %v2034 = vmul.f32 %v2033, 1.442695
  %v2035 = vpow.pop %v2034
  %v2036 = vadd.f32 %v2035, 1.0
  %v2037 = vrcp.pop %v2036
  %v2038 = vmul.f32 1.0, %v2037
  %v2039 = vadd.f32 %v2020, %v954
  %v2040 = vmul.f32 %v2031, %v2039
  %v2041 = vadd.f32 %v861, %v2040
  %v2042 = vtanh.pop %v2041
  %v2043 = vsub.f32 1.0, %v2038
  %v2044 = vmul.f32 %v2043, %v2042
  %v2045 = vmul.f32 %v2038, %v1836
  %v2046 = vadd.f32 %v2044, %v2045
  %2047 = vst [vmem:[#allocation2 + $0x30] sm:$0xff] %v1942
  %2048 = vst [vmem:[#allocation2 + $0x48] sm:$0xff] %v2046
  %v2049 = vpack.c.bf16 %v1942, %v1942
  %2050 = vmatprep.subr.bf16.mxu0 %v1057
  %2051 = vmatpush1.bf16.msra.mxu0 %v1056
  %2052 = vmatprep.subr.bf16.mxu0 %v1054
  %2053 = vmatpush1.bf16.msra.mxu0 %v1053
  %2054 = vmatprep.subr.bf16.mxu0 %v1051
  %2055 = vmatpush1.bf16.msra.mxu0 %v1050
  %2056 = vmatprep.subr.bf16.mxu0 %v1048
  %2057 = vmatpush1.bf16.msra.mxu0 %v1047
  %2058 = vmatprep.subr.bf16.mxu0 %v1045
  %2059 = vmatpush1.bf16.msra.mxu0 %v1044
  %2060 = vmatprep.subr.bf16.mxu0 %v1042
  %2061 = vmatpush1.bf16.msra.mxu0 %v1041
  %2062 = vmatprep.subr.bf16.mxu0 %v1039
  %2063 = vmatpush1.bf16.msra.mxu0 %v1038
  %2064 = vmatprep.subr.bf16.mxu0 %v1036
  %2065 = vmatpush1.bf16.msra.mxu0 %v1035
  %2066 = vmatprep.subr.bf16.mxu0 0
  %2067 = vmatpush2.bf16.msra.mxu0 0
  %2068 = vmatprep.subr.bf16.mxu0 0
  %2069 = vmatpush2.bf16.msra.mxu0 0
  %2070 = vmatprep.subr.bf16.mxu0 0
  %2071 = vmatpush2.bf16.msra.mxu0 0
  %2072 = vmatprep.subr.bf16.mxu0 0
  %2073 = vmatpush2.bf16.msra.mxu0 0
  %2074 = vmatprep.subr.bf16.mxu0 0
  %2075 = vmatpush2.bf16.msra.mxu0 0
  %2076 = vmatprep.subr.bf16.mxu0 0
  %2077 = vmatpush2.bf16.msra.mxu0 0
  %2078 = vmatprep.subr.bf16.mxu0 0
  %2079 = vmatpush2.bf16.msra.mxu0 0
  %2080 = vmatprep.subr.bf16.mxu0 0
  %2081 = vmatpush2.bf16.msra.mxu0 0
  %2082 = vmatprep.mubr.bf16.mxu0 0
  %2083 = vmatmul.mubr.bf16.gmra.mxu0 %v2049
  %v2084 = vpop.f32.mrf.mxu0
  %v2085 = vadd.f32 0.0, %v2084
  %v2086 = vpop.f32.mrf.mxu0
  %v2087 = vadd.f32 0.0, %v2086
  %v2088 = vpop.f32.mrf.mxu0
  %v2089 = vpop.f32.mrf.mxu0
  %2090 = vdwg.mxu0
  %2091 = vmatprep.subr.bf16.mxu0 0
  %2092 = vmatpush1.bf16.msra.mxu0 %v1058
  %2093 = vmatprep.subr.bf16.mxu0 0
  %2094 = vmatpush1.bf16.msra.mxu0 %v1055
  %2095 = vmatprep.subr.bf16.mxu0 0
  %2096 = vmatpush1.bf16.msra.mxu0 %v1052
  %2097 = vmatprep.subr.bf16.mxu0 0
  %2098 = vmatpush1.bf16.msra.mxu0 %v1049
  %2099 = vmatprep.subr.bf16.mxu0 0
  %2100 = vmatpush1.bf16.msra.mxu0 %v1046
  %2101 = vmatprep.subr.bf16.mxu0 0
  %2102 = vmatpush1.bf16.msra.mxu0 %v1043
  %2103 = vmatprep.subr.bf16.mxu0 0
  %2104 = vmatpush1.bf16.msra.mxu0 %v1040
  %2105 = vmatprep.subr.bf16.mxu0 0
  %2106 = vmatpush1.bf16.msra.mxu0 %v1037
  %2107 = vmatprep.subr.bf16.mxu0 0
  %2108 = vmatpush2.bf16.msra.mxu0 0
  %2109 = vmatprep.subr.bf16.mxu0 0
  %2110 = vmatpush2.bf16.msra.mxu0 0
  %2111 = vmatprep.subr.bf16.mxu0 0
  %2112 = vmatpush2.bf16.msra.mxu0 0
  %2113 = vmatprep.subr.bf16.mxu0 0
  %2114 = vmatpush2.bf16.msra.mxu0 0
  %2115 = vmatprep.subr.bf16.mxu0 0
  %2116 = vmatpush2.bf16.msra.mxu0 0
  %2117 = vmatprep.subr.bf16.mxu0 0
  %2118 = vmatpush2.bf16.msra.mxu0 0
  %2119 = vmatprep.subr.bf16.mxu0 0
  %2120 = vmatpush2.bf16.msra.mxu0 0
  %2121 = vmatprep.subr.bf16.mxu0 0
  %2122 = vmatpush2.bf16.msra.mxu0 0
  %2123 = vmatprep.mubr.bf16.mxu0 0
  %2124 = vmatmul.mubr.bf16.gmra.mxu0 %v2049
  %v2125 = vpop.f32.mrf.mxu0
  %v2126 = vadd.f32 0.0, %v2125
  %v2127 = vpop.f32.mrf.mxu0
  %v2128 = vpop.f32.mrf.mxu0
  %v2129 = vpop.f32.mrf.mxu0
  %2130 = vdwg.mxu0
  %v2131 = vadd.f32 %v633, %v2085
  %v2132 = vxor.u32 %v2131, 2147483648
  %v2133 = vmul.f32 %v2132, 1.442695
  %v2134 = vpow.pop %v2133
  %v2135 = vadd.f32 %v2134, 1.0
  %v2136 = vrcp.pop %v2135
  %v2137 = vmul.f32 1.0, %v2136
  %v2138 = vadd.f32 %v635, %v2087
  %v2139 = vxor.u32 %v2138, 2147483648
  %v2140 = vmul.f32 %v2139, 1.442695
  %v2141 = vpow.pop %v2140
  %v2142 = vadd.f32 %v2141, 1.0
  %v2143 = vrcp.pop %v2142
  %v2144 = vmul.f32 1.0, %v2143
  %v2145 = vadd.f32 %v2126, %v949
  %v2146 = vmul.f32 %v2137, %v2145
  %v2147 = vadd.f32 %v746, %v2146
  %v2148 = vtanh.pop %v2147
  %v2149 = vsub.f32 1.0, %v2144
  %v2150 = vmul.f32 %v2149, %v2148
  %v2151 = vmul.f32 %v2144, %v1942
  %v2152 = vadd.f32 %v2150, %v2151
  %v2153 = vpack.c.bf16 %v2046, %v2046
  %2154 = vmatprep.subr.bf16.mxu0 %v1288
  %2155 = vmatpush1.bf16.msra.mxu0 %v1287
  %2156 = vmatprep.subr.bf16.mxu0 %v1285
  %2157 = vmatpush1.bf16.msra.mxu0 %v1284
  %2158 = vmatprep.subr.bf16.mxu0 %v1282
  %2159 = vmatpush1.bf16.msra.mxu0 %v1281
  %2160 = vmatprep.subr.bf16.mxu0 %v1279
  %2161 = vmatpush1.bf16.msra.mxu0 %v1278
  %2162 = vmatprep.subr.bf16.mxu0 %v1276
  %2163 = vmatpush1.bf16.msra.mxu0 %v1275
  %2164 = vmatprep.subr.bf16.mxu0 %v1273
  %2165 = vmatpush1.bf16.msra.mxu0 %v1272
  %2166 = vmatprep.subr.bf16.mxu0 %v1270
  %2167 = vmatpush1.bf16.msra.mxu0 %v1269
  %2168 = vmatprep.subr.bf16.mxu0 %v1267
  %2169 = vmatpush1.bf16.msra.mxu0 %v1266
  %2170 = vmatprep.subr.bf16.mxu0 0
  %2171 = vmatpush2.bf16.msra.mxu0 0
  %2172 = vmatprep.subr.bf16.mxu0 0
  %2173 = vmatpush2.bf16.msra.mxu0 0
  %2174 = vmatprep.subr.bf16.mxu0 0
  %2175 = vmatpush2.bf16.msra.mxu0 0
  %2176 = vmatprep.subr.bf16.mxu0 0
  %2177 = vmatpush2.bf16.msra.mxu0 0
  %2178 = vmatprep.subr.bf16.mxu0 0
  %2179 = vmatpush2.bf16.msra.mxu0 0
  %2180 = vmatprep.subr.bf16.mxu0 0
  %2181 = vmatpush2.bf16.msra.mxu0 0
  %2182 = vmatprep.subr.bf16.mxu0 0
  %2183 = vmatpush2.bf16.msra.mxu0 0
  %2184 = vmatprep.subr.bf16.mxu0 0
  %2185 = vmatpush2.bf16.msra.mxu0 0
  %2186 = vmatprep.mubr.bf16.mxu0 0
  %2187 = vmatmul.mubr.bf16.gmra.mxu0 %v2153
  %v2188 = vpop.f32.mrf.mxu0
  %v2189 = vadd.f32 0.0, %v2188
  %v2190 = vpop.f32.mrf.mxu0
  %v2191 = vadd.f32 0.0, %v2190
  %v2192 = vpop.f32.mrf.mxu0
  %v2193 = vpop.f32.mrf.mxu0
  %2194 = vdwg.mxu0
  %2195 = vmatprep.subr.bf16.mxu0 0
  %2196 = vmatpush1.bf16.msra.mxu0 %v1289
  %2197 = vmatprep.subr.bf16.mxu0 0
  %2198 = vmatpush1.bf16.msra.mxu0 %v1286
  %2199 = vmatprep.subr.bf16.mxu0 0
  %2200 = vmatpush1.bf16.msra.mxu0 %v1283
  %2201 = vmatprep.subr.bf16.mxu0 0
  %2202 = vmatpush1.bf16.msra.mxu0 %v1280
  %2203 = vmatprep.subr.bf16.mxu0 0
  %2204 = vmatpush1.bf16.msra.mxu0 %v1277
  %2205 = vmatprep.subr.bf16.mxu0 0
  %2206 = vmatpush1.bf16.msra.mxu0 %v1274
  %2207 = vmatprep.subr.bf16.mxu0 0
  %2208 = vmatpush1.bf16.msra.mxu0 %v1271
  %2209 = vmatprep.subr.bf16.mxu0 0
  %2210 = vmatpush1.bf16.msra.mxu0 %v1268
  %2211 = vmatprep.subr.bf16.mxu0 0
  %2212 = vmatpush2.bf16.msra.mxu0 0
  %2213 = vmatprep.subr.bf16.mxu0 0
  %2214 = vmatpush2.bf16.msra.mxu0 0
  %2215 = vmatprep.subr.bf16.mxu0 0
  %2216 = vmatpush2.bf16.msra.mxu0 0
  %2217 = vmatprep.subr.bf16.mxu0 0
  %2218 = vmatpush2.bf16.msra.mxu0 0
  %2219 = vmatprep.subr.bf16.mxu0 0
  %2220 = vmatpush2.bf16.msra.mxu0 0
  %2221 = vmatprep.subr.bf16.mxu0 0
  %2222 = vmatpush2.bf16.msra.mxu0 0
  %2223 = vmatprep.subr.bf16.mxu0 0
  %2224 = vmatpush2.bf16.msra.mxu0 0
  %2225 = vmatprep.subr.bf16.mxu0 0
  %2226 = vmatpush2.bf16.msra.mxu0 0
  %2227 = vmatprep.mubr.bf16.mxu0 0
  %2228 = vmatmul.mubr.bf16.gmra.mxu0 %v2153
  %v2229 = vpop.f32.mrf.mxu0
  %v2230 = vadd.f32 0.0, %v2229
  %v2231 = vpop.f32.mrf.mxu0
  %v2232 = vpop.f32.mrf.mxu0
  %v2233 = vpop.f32.mrf.mxu0
  %2234 = vdwg.mxu0
  %v2235 = vadd.f32 %v742, %v2189
  %v2236 = vxor.u32 %v2235, 2147483648
  %v2237 = vmul.f32 %v2236, 1.442695
  %v2238 = vpow.pop %v2237
  %v2239 = vadd.f32 %v2238, 1.0
  %v2240 = vrcp.pop %v2239
  %v2241 = vmul.f32 1.0, %v2240
  %v2242 = vadd.f32 %v853, %v2191
  %v2243 = vxor.u32 %v2242, 2147483648
  %v2244 = vmul.f32 %v2243, 1.442695
  %v2245 = vpow.pop %v2244
  %v2246 = vadd.f32 %v2245, 1.0
  %v2247 = vrcp.pop %v2246
  %v2248 = vmul.f32 1.0, %v2247
  %v2249 = vadd.f32 %v2230, %v954
  %v2250 = vmul.f32 %v2241, %v2249
  %v2251 = vadd.f32 %v855, %v2250
  %v2252 = vtanh.pop %v2251
  %v2253 = vsub.f32 1.0, %v2248
  %v2254 = vmul.f32 %v2253, %v2252
  %v2255 = vmul.f32 %v2248, %v2046
  %v2256 = vadd.f32 %v2254, %v2255
  %2257 = vst [vmem:[#allocation2 + $0x40] sm:$0xff] %v2152
  %2258 = vst [vmem:[#allocation2 + $0x38] sm:$0xff] %v2256
  %v2259 = vpack.c.bf16 %v2152, %v2152
  %2260 = vmatprep.subr.bf16.mxu0 %v1057
  %2261 = vmatpush1.bf16.msra.mxu0 %v1056
  %2262 = vmatprep.subr.bf16.mxu0 %v1054
  %2263 = vmatpush1.bf16.msra.mxu0 %v1053
  %2264 = vmatprep.subr.bf16.mxu0 %v1051
  %2265 = vmatpush1.bf16.msra.mxu0 %v1050
  %2266 = vmatprep.subr.bf16.mxu0 %v1048
  %2267 = vmatpush1.bf16.msra.mxu0 %v1047
  %2268 = vmatprep.subr.bf16.mxu0 %v1045
  %2269 = vmatpush1.bf16.msra.mxu0 %v1044
  %2270 = vmatprep.subr.bf16.mxu0 %v1042
  %2271 = vmatpush1.bf16.msra.mxu0 %v1041
  %2272 = vmatprep.subr.bf16.mxu0 %v1039
  %2273 = vmatpush1.bf16.msra.mxu0 %v1038
  %2274 = vmatprep.subr.bf16.mxu0 %v1036
  %2275 = vmatpush1.bf16.msra.mxu0 %v1035
  %2276 = vmatprep.subr.bf16.mxu0 0
  %2277 = vmatpush2.bf16.msra.mxu0 0
  %2278 = vmatprep.subr.bf16.mxu0 0
  %2279 = vmatpush2.bf16.msra.mxu0 0
  %2280 = vmatprep.subr.bf16.mxu0 0
  %2281 = vmatpush2.bf16.msra.mxu0 0
  %2282 = vmatprep.subr.bf16.mxu0 0
  %2283 = vmatpush2.bf16.msra.mxu0 0
  %2284 = vmatprep.subr.bf16.mxu0 0
  %2285 = vmatpush2.bf16.msra.mxu0 0
  %2286 = vmatprep.subr.bf16.mxu0 0
  %2287 = vmatpush2.bf16.msra.mxu0 0
  %2288 = vmatprep.subr.bf16.mxu0 0
  %2289 = vmatpush2.bf16.msra.mxu0 0
  %2290 = vmatprep.subr.bf16.mxu0 0
  %2291 = vmatpush2.bf16.msra.mxu0 0
  %2292 = vmatprep.mubr.bf16.mxu0 0
  %2293 = vmatmul.mubr.bf16.gmra.mxu0 %v2259
  %v2294 = vpop.f32.mrf.mxu0
  %v2295 = vadd.f32 0.0, %v2294
  %v2296 = vpop.f32.mrf.mxu0
  %v2297 = vadd.f32 0.0, %v2296
  %v2298 = vpop.f32.mrf.mxu0
  %v2299 = vpop.f32.mrf.mxu0
  %2300 = vdwg.mxu0
  %2301 = vmatprep.subr.bf16.mxu0 0
  %2302 = vmatpush1.bf16.msra.mxu0 %v1058
  %2303 = vmatprep.subr.bf16.mxu0 0
  %2304 = vmatpush1.bf16.msra.mxu0 %v1055
  %2305 = vmatprep.subr.bf16.mxu0 0
  %2306 = vmatpush1.bf16.msra.mxu0 %v1052
  %2307 = vmatprep.subr.bf16.mxu0 0
  %2308 = vmatpush1.bf16.msra.mxu0 %v1049
  %2309 = vmatprep.subr.bf16.mxu0 0
  %2310 = vmatpush1.bf16.msra.mxu0 %v1046
  %2311 = vmatprep.subr.bf16.mxu0 0
  %2312 = vmatpush1.bf16.msra.mxu0 %v1043
  %2313 = vmatprep.subr.bf16.mxu0 0
  %2314 = vmatpush1.bf16.msra.mxu0 %v1040
  %2315 = vmatprep.subr.bf16.mxu0 0
  %2316 = vmatpush1.bf16.msra.mxu0 %v1037
  %2317 = vmatprep.subr.bf16.mxu0 0
  %2318 = vmatpush2.bf16.msra.mxu0 0
  %2319 = vmatprep.subr.bf16.mxu0 0
  %2320 = vmatpush2.bf16.msra.mxu0 0
  %2321 = vmatprep.subr.bf16.mxu0 0
  %2322 = vmatpush2.bf16.msra.mxu0 0
  %2323 = vmatprep.subr.bf16.mxu0 0
  %2324 = vmatpush2.bf16.msra.mxu0 0
  %2325 = vmatprep.subr.bf16.mxu0 0
  %2326 = vmatpush2.bf16.msra.mxu0 0
  %2327 = vmatprep.subr.bf16.mxu0 0
  %2328 = vmatpush2.bf16.msra.mxu0 0
  %2329 = vmatprep.subr.bf16.mxu0 0
  %2330 = vmatpush2.bf16.msra.mxu0 0
  %2331 = vmatprep.subr.bf16.mxu0 0
  %2332 = vmatpush2.bf16.msra.mxu0 0
  %2333 = vmatprep.mubr.bf16.mxu0 0
  %2334 = vmatmul.mubr.bf16.gmra.mxu0 %v2259
  %v2335 = vpop.f32.mrf.mxu0
  %v2336 = vadd.f32 0.0, %v2335
  %v2337 = vpop.f32.mrf.mxu0
  %v2338 = vpop.f32.mrf.mxu0
  %v2339 = vpop.f32.mrf.mxu0
  %2340 = vdwg.mxu0
  %v2341 = vadd.f32 %v639, %v2295
  %v2342 = vxor.u32 %v2341, 2147483648
  %v2343 = vmul.f32 %v2342, 1.442695
  %v2344 = vpow.pop %v2343
  %v2345 = vadd.f32 %v2344, 1.0
  %v2346 = vrcp.pop %v2345
  %v2347 = vmul.f32 1.0, %v2346
  %v2348 = vadd.f32 %v641, %v2297
  %v2349 = vxor.u32 %v2348, 2147483648
  %v2350 = vmul.f32 %v2349, 1.442695
  %v2351 = vpow.pop %v2350
  %v2352 = vadd.f32 %v2351, 1.0
  %v2353 = vrcp.pop %v2352
  %v2354 = vmul.f32 1.0, %v2353
  %v2355 = vadd.f32 %v2336, %v949
  %v2356 = vmul.f32 %v2347, %v2355
  %v2357 = vadd.f32 %v752, %v2356
  %v2358 = vtanh.pop %v2357
  %v2359 = vsub.f32 1.0, %v2354
  %v2360 = vmul.f32 %v2359, %v2358
  %v2361 = vmul.f32 %v2354, %v2152
  %v2362 = vadd.f32 %v2360, %v2361
  %v2363 = vpack.c.bf16 %v2256, %v2256
  %2364 = vmatprep.subr.bf16.mxu0 %v1288
  %2365 = vmatpush1.bf16.msra.mxu0 %v1287
  %2366 = vmatprep.subr.bf16.mxu0 %v1285
  %2367 = vmatpush1.bf16.msra.mxu0 %v1284
  %2368 = vmatprep.subr.bf16.mxu0 %v1282
  %2369 = vmatpush1.bf16.msra.mxu0 %v1281
  %2370 = vmatprep.subr.bf16.mxu0 %v1279
  %2371 = vmatpush1.bf16.msra.mxu0 %v1278
  %2372 = vmatprep.subr.bf16.mxu0 %v1276
  %2373 = vmatpush1.bf16.msra.mxu0 %v1275
  %2374 = vmatprep.subr.bf16.mxu0 %v1273
  %2375 = vmatpush1.bf16.msra.mxu0 %v1272
  %2376 = vmatprep.subr.bf16.mxu0 %v1270
  %2377 = vmatpush1.bf16.msra.mxu0 %v1269
  %2378 = vmatprep.subr.bf16.mxu0 %v1267
  %2379 = vmatpush1.bf16.msra.mxu0 %v1266
  %2380 = vmatprep.subr.bf16.mxu0 0
  %2381 = vmatpush2.bf16.msra.mxu0 0
  %2382 = vmatprep.subr.bf16.mxu0 0
  %2383 = vmatpush2.bf16.msra.mxu0 0
  %2384 = vmatprep.subr.bf16.mxu0 0
  %2385 = vmatpush2.bf16.msra.mxu0 0
  %2386 = vmatprep.subr.bf16.mxu0 0
  %2387 = vmatpush2.bf16.msra.mxu0 0
  %2388 = vmatprep.subr.bf16.mxu0 0
  %2389 = vmatpush2.bf16.msra.mxu0 0
  %2390 = vmatprep.subr.bf16.mxu0 0
  %2391 = vmatpush2.bf16.msra.mxu0 0
  %2392 = vmatprep.subr.bf16.mxu0 0
  %2393 = vmatpush2.bf16.msra.mxu0 0
  %2394 = vmatprep.subr.bf16.mxu0 0
  %2395 = vmatpush2.bf16.msra.mxu0 0
  %2396 = vmatprep.mubr.bf16.mxu0 0
  %2397 = vmatmul.mubr.bf16.gmra.mxu0 %v2363
  %v2398 = vpop.f32.mrf.mxu0
  %v2399 = vadd.f32 0.0, %v2398
  %v2400 = vpop.f32.mrf.mxu0
  %v2401 = vadd.f32 0.0, %v2400
  %v2402 = vpop.f32.mrf.mxu0
  %v2403 = vpop.f32.mrf.mxu0
  %2404 = vdwg.mxu0
  %2405 = vmatprep.subr.bf16.mxu0 0
  %2406 = vmatpush1.bf16.msra.mxu0 %v1289
  %2407 = vmatprep.subr.bf16.mxu0 0
  %2408 = vmatpush1.bf16.msra.mxu0 %v1286
  %2409 = vmatprep.subr.bf16.mxu0 0
  %2410 = vmatpush1.bf16.msra.mxu0 %v1283
  %2411 = vmatprep.subr.bf16.mxu0 0
  %2412 = vmatpush1.bf16.msra.mxu0 %v1280
  %2413 = vmatprep.subr.bf16.mxu0 0
  %2414 = vmatpush1.bf16.msra.mxu0 %v1277
  %2415 = vmatprep.subr.bf16.mxu0 0
  %2416 = vmatpush1.bf16.msra.mxu0 %v1274
  %2417 = vmatprep.subr.bf16.mxu0 0
  %2418 = vmatpush1.bf16.msra.mxu0 %v1271
  %2419 = vmatprep.subr.bf16.mxu0 0
  %2420 = vmatpush1.bf16.msra.mxu0 %v1268
  %2421 = vmatprep.subr.bf16.mxu0 0
  %2422 = vmatpush2.bf16.msra.mxu0 0
  %2423 = vmatprep.subr.bf16.mxu0 0
  %2424 = vmatpush2.bf16.msra.mxu0 0
  %2425 = vmatprep.subr.bf16.mxu0 0
  %2426 = vmatpush2.bf16.msra.mxu0 0
  %2427 = vmatprep.subr.bf16.mxu0 0
  %2428 = vmatpush2.bf16.msra.mxu0 0
  %2429 = vmatprep.subr.bf16.mxu0 0
  %2430 = vmatpush2.bf16.msra.mxu0 0
  %2431 = vmatprep.subr.bf16.mxu0 0
  %2432 = vmatpush2.bf16.msra.mxu0 0
  %2433 = vmatprep.subr.bf16.mxu0 0
  %2434 = vmatpush2.bf16.msra.mxu0 0
  %2435 = vmatprep.subr.bf16.mxu0 0
  %2436 = vmatpush2.bf16.msra.mxu0 0
  %2437 = vmatprep.mubr.bf16.mxu0 0
  %2438 = vmatmul.mubr.bf16.gmra.mxu0 %v2363
  %v2439 = vpop.f32.mrf.mxu0
  %v2440 = vadd.f32 0.0, %v2439
  %v2441 = vpop.f32.mrf.mxu0
  %v2442 = vpop.f32.mrf.mxu0
  %v2443 = vpop.f32.mrf.mxu0
  %2444 = vdwg.mxu0
  %v2445 = vadd.f32 %v736, %v2399
  %v2446 = vxor.u32 %v2445, 2147483648
  %v2447 = vmul.f32 %v2446, 1.442695
  %v2448 = vpow.pop %v2447
  %v2449 = vadd.f32 %v2448, 1.0
  %v2450 = vrcp.pop %v2449
  %v2451 = vmul.f32 1.0, %v2450
  %v2452 = vadd.f32 %v847, %v2401
  %v2453 = vxor.u32 %v2452, 2147483648
  %v2454 = vmul.f32 %v2453, 1.442695
  %v2455 = vpow.pop %v2454
  %v2456 = vadd.f32 %v2455, 1.0
  %v2457 = vrcp.pop %v2456
  %v2458 = vmul.f32 1.0, %v2457
  %v2459 = vadd.f32 %v2440, %v954
  %v2460 = vmul.f32 %v2451, %v2459
  %v2461 = vadd.f32 %v849, %v2460
  %v2462 = vtanh.pop %v2461
  %v2463 = vsub.f32 1.0, %v2458
  %v2464 = vmul.f32 %v2463, %v2462
  %v2465 = vmul.f32 %v2458, %v2256
  %v2466 = vadd.f32 %v2464, %v2465
  %2467 = vst [vmem:[#allocation2 + $0x50] sm:$0xff] %v2362
  %2468 = vst [vmem:[#allocation2 + $0x28] sm:$0xff] %v2466
  %v2469 = vpack.c.bf16 %v2362, %v2362
  %2470 = vmatprep.subr.bf16.mxu0 %v1057
  %2471 = vmatpush1.bf16.msra.mxu0 %v1056
  %2472 = vmatprep.subr.bf16.mxu0 %v1054
  %2473 = vmatpush1.bf16.msra.mxu0 %v1053
  %2474 = vmatprep.subr.bf16.mxu0 %v1051
  %2475 = vmatpush1.bf16.msra.mxu0 %v1050
  %2476 = vmatprep.subr.bf16.mxu0 %v1048
  %2477 = vmatpush1.bf16.msra.mxu0 %v1047
  %2478 = vmatprep.subr.bf16.mxu0 %v1045
  %2479 = vmatpush1.bf16.msra.mxu0 %v1044
  %2480 = vmatprep.subr.bf16.mxu0 %v1042
  %2481 = vmatpush1.bf16.msra.mxu0 %v1041
  %2482 = vmatprep.subr.bf16.mxu0 %v1039
  %2483 = vmatpush1.bf16.msra.mxu0 %v1038
  %2484 = vmatprep.subr.bf16.mxu0 %v1036
  %2485 = vmatpush1.bf16.msra.mxu0 %v1035
  %2486 = vmatprep.subr.bf16.mxu0 0
  %2487 = vmatpush2.bf16.msra.mxu0 0
  %2488 = vmatprep.subr.bf16.mxu0 0
  %2489 = vmatpush2.bf16.msra.mxu0 0
  %2490 = vmatprep.subr.bf16.mxu0 0
  %2491 = vmatpush2.bf16.msra.mxu0 0
  %2492 = vmatprep.subr.bf16.mxu0 0
  %2493 = vmatpush2.bf16.msra.mxu0 0
  %2494 = vmatprep.subr.bf16.mxu0 0
  %2495 = vmatpush2.bf16.msra.mxu0 0
  %2496 = vmatprep.subr.bf16.mxu0 0
  %2497 = vmatpush2.bf16.msra.mxu0 0
  %2498 = vmatprep.subr.bf16.mxu0 0
  %2499 = vmatpush2.bf16.msra.mxu0 0
  %2500 = vmatprep.subr.bf16.mxu0 0
  %2501 = vmatpush2.bf16.msra.mxu0 0
  %2502 = vmatprep.mubr.bf16.mxu0 0
  %2503 = vmatmul.mubr.bf16.gmra.mxu0 %v2469
  %v2504 = vpop.f32.mrf.mxu0
  %v2505 = vadd.f32 0.0, %v2504
  %v2506 = vpop.f32.mrf.mxu0
  %v2507 = vadd.f32 0.0, %v2506
  %v2508 = vpop.f32.mrf.mxu0
  %v2509 = vpop.f32.mrf.mxu0
  %2510 = vdwg.mxu0
  %2511 = vmatprep.subr.bf16.mxu0 0
  %2512 = vmatpush1.bf16.msra.mxu0 %v1058
  %2513 = vmatprep.subr.bf16.mxu0 0
  %2514 = vmatpush1.bf16.msra.mxu0 %v1055
  %2515 = vmatprep.subr.bf16.mxu0 0
  %2516 = vmatpush1.bf16.msra.mxu0 %v1052
  %2517 = vmatprep.subr.bf16.mxu0 0
  %2518 = vmatpush1.bf16.msra.mxu0 %v1049
  %2519 = vmatprep.subr.bf16.mxu0 0
  %2520 = vmatpush1.bf16.msra.mxu0 %v1046
  %2521 = vmatprep.subr.bf16.mxu0 0
  %2522 = vmatpush1.bf16.msra.mxu0 %v1043
  %2523 = vmatprep.subr.bf16.mxu0 0
  %2524 = vmatpush1.bf16.msra.mxu0 %v1040
  %2525 = vmatprep.subr.bf16.mxu0 0
  %2526 = vmatpush1.bf16.msra.mxu0 %v1037
  %2527 = vmatprep.subr.bf16.mxu0 0
  %2528 = vmatpush2.bf16.msra.mxu0 0
  %2529 = vmatprep.subr.bf16.mxu0 0
  %2530 = vmatpush2.bf16.msra.mxu0 0
  %2531 = vmatprep.subr.bf16.mxu0 0
  %2532 = vmatpush2.bf16.msra.mxu0 0
  %2533 = vmatprep.subr.bf16.mxu0 0
  %2534 = vmatpush2.bf16.msra.mxu0 0
  %2535 = vmatprep.subr.bf16.mxu0 0
  %2536 = vmatpush2.bf16.msra.mxu0 0
  %2537 = vmatprep.subr.bf16.mxu0 0
  %2538 = vmatpush2.bf16.msra.mxu0 0
  %2539 = vmatprep.subr.bf16.mxu0 0
  %2540 = vmatpush2.bf16.msra.mxu0 0
  %2541 = vmatprep.subr.bf16.mxu0 0
  %2542 = vmatpush2.bf16.msra.mxu0 0
  %2543 = vmatprep.mubr.bf16.mxu0 0
  %2544 = vmatmul.mubr.bf16.gmra.mxu0 %v2469
  %v2545 = vpop.f32.mrf.mxu0
  %v2546 = vadd.f32 0.0, %v2545
  %v2547 = vpop.f32.mrf.mxu0
  %v2548 = vpop.f32.mrf.mxu0
  %v2549 = vpop.f32.mrf.mxu0
  %2550 = vdwg.mxu0
  %v2551 = vadd.f32 %v645, %v2505
  %v2552 = vxor.u32 %v2551, 2147483648
  %v2553 = vmul.f32 %v2552, 1.442695
  %v2554 = vpow.pop %v2553
  %v2555 = vadd.f32 %v2554, 1.0
  %v2556 = vrcp.pop %v2555
  %v2557 = vmul.f32 1.0, %v2556
  %v2558 = vadd.f32 %v647, %v2507
  %v2559 = vxor.u32 %v2558, 2147483648
  %v2560 = vmul.f32 %v2559, 1.442695
  %v2561 = vpow.pop %v2560
  %v2562 = vadd.f32 %v2561, 1.0
  %v2563 = vrcp.pop %v2562
  %v2564 = vmul.f32 1.0, %v2563
  %v2565 = vadd.f32 %v2546, %v949
  %v2566 = vmul.f32 %v2557, %v2565
  %v2567 = vadd.f32 %v758, %v2566
  %v2568 = vtanh.pop %v2567
  %v2569 = vsub.f32 1.0, %v2564
  %v2570 = vmul.f32 %v2569, %v2568
  %v2571 = vmul.f32 %v2564, %v2362
  %v2572 = vadd.f32 %v2570, %v2571
  %v2573 = vpack.c.bf16 %v2466, %v2466
  %2574 = vmatprep.subr.bf16.mxu0 %v1288
  %2575 = vmatpush1.bf16.msra.mxu0 %v1287
  %2576 = vmatprep.subr.bf16.mxu0 %v1285
  %2577 = vmatpush1.bf16.msra.mxu0 %v1284
  %2578 = vmatprep.subr.bf16.mxu0 %v1282
  %2579 = vmatpush1.bf16.msra.mxu0 %v1281
  %2580 = vmatprep.subr.bf16.mxu0 %v1279
  %2581 = vmatpush1.bf16.msra.mxu0 %v1278
  %2582 = vmatprep.subr.bf16.mxu0 %v1276
  %2583 = vmatpush1.bf16.msra.mxu0 %v1275
  %2584 = vmatprep.subr.bf16.mxu0 %v1273
  %2585 = vmatpush1.bf16.msra.mxu0 %v1272
  %2586 = vmatprep.subr.bf16.mxu0 %v1270
  %2587 = vmatpush1.bf16.msra.mxu0 %v1269
  %2588 = vmatprep.subr.bf16.mxu0 %v1267
  %2589 = vmatpush1.bf16.msra.mxu0 %v1266
  %2590 = vmatprep.subr.bf16.mxu0 0
  %2591 = vmatpush2.bf16.msra.mxu0 0
  %2592 = vmatprep.subr.bf16.mxu0 0
  %2593 = vmatpush2.bf16.msra.mxu0 0
  %2594 = vmatprep.subr.bf16.mxu0 0
  %2595 = vmatpush2.bf16.msra.mxu0 0
  %2596 = vmatprep.subr.bf16.mxu0 0
  %2597 = vmatpush2.bf16.msra.mxu0 0
  %2598 = vmatprep.subr.bf16.mxu0 0
  %2599 = vmatpush2.bf16.msra.mxu0 0
  %2600 = vmatprep.subr.bf16.mxu0 0
  %2601 = vmatpush2.bf16.msra.mxu0 0
  %2602 = vmatprep.subr.bf16.mxu0 0
  %2603 = vmatpush2.bf16.msra.mxu0 0
  %2604 = vmatprep.subr.bf16.mxu0 0
  %2605 = vmatpush2.bf16.msra.mxu0 0
  %2606 = vmatprep.mubr.bf16.mxu0 0
  %2607 = vmatmul.mubr.bf16.gmra.mxu0 %v2573
  %v2608 = vpop.f32.mrf.mxu0
  %v2609 = vadd.f32 0.0, %v2608
  %v2610 = vpop.f32.mrf.mxu0
  %v2611 = vadd.f32 0.0, %v2610
  %v2612 = vpop.f32.mrf.mxu0
  %v2613 = vpop.f32.mrf.mxu0
  %2614 = vdwg.mxu0
  %2615 = vmatprep.subr.bf16.mxu0 0
  %2616 = vmatpush1.bf16.msra.mxu0 %v1289
  %2617 = vmatprep.subr.bf16.mxu0 0
  %2618 = vmatpush1.bf16.msra.mxu0 %v1286
  %2619 = vmatprep.subr.bf16.mxu0 0
  %2620 = vmatpush1.bf16.msra.mxu0 %v1283
  %2621 = vmatprep.subr.bf16.mxu0 0
  %2622 = vmatpush1.bf16.msra.mxu0 %v1280
  %2623 = vmatprep.subr.bf16.mxu0 0
  %2624 = vmatpush1.bf16.msra.mxu0 %v1277
  %2625 = vmatprep.subr.bf16.mxu0 0
  %2626 = vmatpush1.bf16.msra.mxu0 %v1274
  %2627 = vmatprep.subr.bf16.mxu0 0
  %2628 = vmatpush1.bf16.msra.mxu0 %v1271
  %2629 = vmatprep.subr.bf16.mxu0 0
  %2630 = vmatpush1.bf16.msra.mxu0 %v1268
  %2631 = vmatprep.subr.bf16.mxu0 0
  %2632 = vmatpush2.bf16.msra.mxu0 0
  %2633 = vmatprep.subr.bf16.mxu0 0
  %2634 = vmatpush2.bf16.msra.mxu0 0
  %2635 = vmatprep.subr.bf16.mxu0 0
  %2636 = vmatpush2.bf16.msra.mxu0 0
  %2637 = vmatprep.subr.bf16.mxu0 0
  %2638 = vmatpush2.bf16.msra.mxu0 0
  %2639 = vmatprep.subr.bf16.mxu0 0
  %2640 = vmatpush2.bf16.msra.mxu0 0
  %2641 = vmatprep.subr.bf16.mxu0 0
  %2642 = vmatpush2.bf16.msra.mxu0 0
  %2643 = vmatprep.subr.bf16.mxu0 0
  %2644 = vmatpush2.bf16.msra.mxu0 0
  %2645 = vmatprep.subr.bf16.mxu0 0
  %2646 = vmatpush2.bf16.msra.mxu0 0
  %2647 = vmatprep.mubr.bf16.mxu0 0
  %2648 = vmatmul.mubr.bf16.gmra.mxu0 %v2573
  %v2649 = vpop.f32.mrf.mxu0
  %v2650 = vadd.f32 0.0, %v2649
  %v2651 = vpop.f32.mrf.mxu0
  %v2652 = vpop.f32.mrf.mxu0
  %v2653 = vpop.f32.mrf.mxu0
  %2654 = vdwg.mxu0
  %v2655 = vadd.f32 %v730, %v2609
  %v2656 = vxor.u32 %v2655, 2147483648
  %v2657 = vmul.f32 %v2656, 1.442695
  %v2658 = vpow.pop %v2657
  %v2659 = vadd.f32 %v2658, 1.0
  %v2660 = vrcp.pop %v2659
  %v2661 = vmul.f32 1.0, %v2660
  %v2662 = vadd.f32 %v841, %v2611
  %v2663 = vxor.u32 %v2662, 2147483648
  %v2664 = vmul.f32 %v2663, 1.442695
  %v2665 = vpow.pop %v2664
  %v2666 = vadd.f32 %v2665, 1.0
  %v2667 = vrcp.pop %v2666
  %v2668 = vmul.f32 1.0, %v2667
  %v2669 = vadd.f32 %v2650, %v954
  %v2670 = vmul.f32 %v2661, %v2669
  %v2671 = vadd.f32 %v843, %v2670
  %v2672 = vtanh.pop %v2671
  %v2673 = vsub.f32 1.0, %v2668
  %v2674 = vmul.f32 %v2673, %v2672
  %v2675 = vmul.f32 %v2668, %v2466
  %v2676 = vadd.f32 %v2674, %v2675
  %2677 = vst [vmem:[#allocation2 + $0x60] sm:$0xff] %v2572
  %2678 = vst [vmem:[#allocation2 + $0x18] sm:$0xff] %v2676
  %v2679 = vpack.c.bf16 %v2572, %v2572
  %2680 = vmatprep.subr.bf16.mxu0 %v1057
  %2681 = vmatpush1.bf16.msra.mxu0 %v1056
  %2682 = vmatprep.subr.bf16.mxu0 %v1054
  %2683 = vmatpush1.bf16.msra.mxu0 %v1053
  %2684 = vmatprep.subr.bf16.mxu0 %v1051
  %2685 = vmatpush1.bf16.msra.mxu0 %v1050
  %2686 = vmatprep.subr.bf16.mxu0 %v1048
  %2687 = vmatpush1.bf16.msra.mxu0 %v1047
  %2688 = vmatprep.subr.bf16.mxu0 %v1045
  %2689 = vmatpush1.bf16.msra.mxu0 %v1044
  %2690 = vmatprep.subr.bf16.mxu0 %v1042
  %2691 = vmatpush1.bf16.msra.mxu0 %v1041
  %2692 = vmatprep.subr.bf16.mxu0 %v1039
  %2693 = vmatpush1.bf16.msra.mxu0 %v1038
  %2694 = vmatprep.subr.bf16.mxu0 %v1036
  %2695 = vmatpush1.bf16.msra.mxu0 %v1035
  %2696 = vmatprep.subr.bf16.mxu0 0
  %2697 = vmatpush2.bf16.msra.mxu0 0
  %2698 = vmatprep.subr.bf16.mxu0 0
  %2699 = vmatpush2.bf16.msra.mxu0 0
  %2700 = vmatprep.subr.bf16.mxu0 0
  %2701 = vmatpush2.bf16.msra.mxu0 0
  %2702 = vmatprep.subr.bf16.mxu0 0
  %2703 = vmatpush2.bf16.msra.mxu0 0
  %2704 = vmatprep.subr.bf16.mxu0 0
  %2705 = vmatpush2.bf16.msra.mxu0 0
  %2706 = vmatprep.subr.bf16.mxu0 0
  %2707 = vmatpush2.bf16.msra.mxu0 0
  %2708 = vmatprep.subr.bf16.mxu0 0
  %2709 = vmatpush2.bf16.msra.mxu0 0
  %2710 = vmatprep.subr.bf16.mxu0 0
  %2711 = vmatpush2.bf16.msra.mxu0 0
  %2712 = vmatprep.mubr.bf16.mxu0 0
  %2713 = vmatmul.mubr.bf16.gmra.mxu0 %v2679
  %v2714 = vpop.f32.mrf.mxu0
  %v2715 = vadd.f32 0.0, %v2714
  %v2716 = vpop.f32.mrf.mxu0
  %v2717 = vadd.f32 0.0, %v2716
  %v2718 = vpop.f32.mrf.mxu0
  %v2719 = vpop.f32.mrf.mxu0
  %2720 = vdwg.mxu0
  %2721 = vmatprep.subr.bf16.mxu0 0
  %2722 = vmatpush1.bf16.msra.mxu0 %v1058
  %2723 = vmatprep.subr.bf16.mxu0 0
  %2724 = vmatpush1.bf16.msra.mxu0 %v1055
  %2725 = vmatprep.subr.bf16.mxu0 0
  %2726 = vmatpush1.bf16.msra.mxu0 %v1052
  %2727 = vmatprep.subr.bf16.mxu0 0
  %2728 = vmatpush1.bf16.msra.mxu0 %v1049
  %2729 = vmatprep.subr.bf16.mxu0 0
  %2730 = vmatpush1.bf16.msra.mxu0 %v1046
  %2731 = vmatprep.subr.bf16.mxu0 0
  %2732 = vmatpush1.bf16.msra.mxu0 %v1043
  %2733 = vmatprep.subr.bf16.mxu0 0
  %2734 = vmatpush1.bf16.msra.mxu0 %v1040
  %2735 = vmatprep.subr.bf16.mxu0 0
  %2736 = vmatpush1.bf16.msra.mxu0 %v1037
  %2737 = vmatprep.subr.bf16.mxu0 0
  %2738 = vmatpush2.bf16.msra.mxu0 0
  %2739 = vmatprep.subr.bf16.mxu0 0
  %2740 = vmatpush2.bf16.msra.mxu0 0
  %2741 = vmatprep.subr.bf16.mxu0 0
  %2742 = vmatpush2.bf16.msra.mxu0 0
  %2743 = vmatprep.subr.bf16.mxu0 0
  %2744 = vmatpush2.bf16.msra.mxu0 0
  %2745 = vmatprep.subr.bf16.mxu0 0
  %2746 = vmatpush2.bf16.msra.mxu0 0
  %2747 = vmatprep.subr.bf16.mxu0 0
  %2748 = vmatpush2.bf16.msra.mxu0 0
  %2749 = vmatprep.subr.bf16.mxu0 0
  %2750 = vmatpush2.bf16.msra.mxu0 0
  %2751 = vmatprep.subr.bf16.mxu0 0
  %2752 = vmatpush2.bf16.msra.mxu0 0
  %2753 = vmatprep.mubr.bf16.mxu0 0
  %2754 = vmatmul.mubr.bf16.gmra.mxu0 %v2679
  %v2755 = vpop.f32.mrf.mxu0
  %v2756 = vadd.f32 0.0, %v2755
  %v2757 = vpop.f32.mrf.mxu0
  %v2758 = vpop.f32.mrf.mxu0
  %v2759 = vpop.f32.mrf.mxu0
  %2760 = vdwg.mxu0
  %v2761 = vadd.f32 %v651, %v2715
  %v2762 = vxor.u32 %v2761, 2147483648
  %v2763 = vmul.f32 %v2762, 1.442695
  %v2764 = vpow.pop %v2763
  %v2765 = vadd.f32 %v2764, 1.0
  %v2766 = vrcp.pop %v2765
  %v2767 = vmul.f32 1.0, %v2766
  %v2768 = vadd.f32 %v653, %v2717
  %v2769 = vxor.u32 %v2768, 2147483648
  %v2770 = vmul.f32 %v2769, 1.442695
  %v2771 = vpow.pop %v2770
  %v2772 = vadd.f32 %v2771, 1.0
  %v2773 = vrcp.pop %v2772
  %v2774 = vmul.f32 1.0, %v2773
  %v2775 = vadd.f32 %v2756, %v949
  %v2776 = vmul.f32 %v2767, %v2775
  %v2777 = vadd.f32 %v764, %v2776
  %v2778 = vtanh.pop %v2777
  %v2779 = vsub.f32 1.0, %v2774
  %v2780 = vmul.f32 %v2779, %v2778
  %v2781 = vmul.f32 %v2774, %v2572
  %v2782 = vadd.f32 %v2780, %v2781
  %v2783 = vpack.c.bf16 %v2676, %v2676
  %2784 = vmatprep.subr.bf16.mxu0 %v1288
  %2785 = vmatpush1.bf16.msra.mxu0 %v1287
  %2786 = vmatprep.subr.bf16.mxu0 %v1285
  %2787 = vmatpush1.bf16.msra.mxu0 %v1284
  %2788 = vmatprep.subr.bf16.mxu0 %v1282
  %2789 = vmatpush1.bf16.msra.mxu0 %v1281
  %2790 = vmatprep.subr.bf16.mxu0 %v1279
  %2791 = vmatpush1.bf16.msra.mxu0 %v1278
  %2792 = vmatprep.subr.bf16.mxu0 %v1276
  %2793 = vmatpush1.bf16.msra.mxu0 %v1275
  %2794 = vmatprep.subr.bf16.mxu0 %v1273
  %2795 = vmatpush1.bf16.msra.mxu0 %v1272
  %2796 = vmatprep.subr.bf16.mxu0 %v1270
  %2797 = vmatpush1.bf16.msra.mxu0 %v1269
  %2798 = vmatprep.subr.bf16.mxu0 %v1267
  %2799 = vmatpush1.bf16.msra.mxu0 %v1266
  %2800 = vmatprep.subr.bf16.mxu0 0
  %2801 = vmatpush2.bf16.msra.mxu0 0
  %2802 = vmatprep.subr.bf16.mxu0 0
  %2803 = vmatpush2.bf16.msra.mxu0 0
  %2804 = vmatprep.subr.bf16.mxu0 0
  %2805 = vmatpush2.bf16.msra.mxu0 0
  %2806 = vmatprep.subr.bf16.mxu0 0
  %2807 = vmatpush2.bf16.msra.mxu0 0
  %2808 = vmatprep.subr.bf16.mxu0 0
  %2809 = vmatpush2.bf16.msra.mxu0 0
  %2810 = vmatprep.subr.bf16.mxu0 0
  %2811 = vmatpush2.bf16.msra.mxu0 0
  %2812 = vmatprep.subr.bf16.mxu0 0
  %2813 = vmatpush2.bf16.msra.mxu0 0
  %2814 = vmatprep.subr.bf16.mxu0 0
  %2815 = vmatpush2.bf16.msra.mxu0 0
  %2816 = vmatprep.mubr.bf16.mxu0 0
  %2817 = vmatmul.mubr.bf16.gmra.mxu0 %v2783
  %v2818 = vpop.f32.mrf.mxu0
  %v2819 = vadd.f32 0.0, %v2818
  %v2820 = vpop.f32.mrf.mxu0
  %v2821 = vadd.f32 0.0, %v2820
  %v2822 = vpop.f32.mrf.mxu0
  %v2823 = vpop.f32.mrf.mxu0
  %2824 = vdwg.mxu0
  %2825 = vmatprep.subr.bf16.mxu0 0
  %2826 = vmatpush1.bf16.msra.mxu0 %v1289
  %2827 = vmatprep.subr.bf16.mxu0 0
  %2828 = vmatpush1.bf16.msra.mxu0 %v1286
  %2829 = vmatprep.subr.bf16.mxu0 0
  %2830 = vmatpush1.bf16.msra.mxu0 %v1283
  %2831 = vmatprep.subr.bf16.mxu0 0
  %2832 = vmatpush1.bf16.msra.mxu0 %v1280
  %2833 = vmatprep.subr.bf16.mxu0 0
  %2834 = vmatpush1.bf16.msra.mxu0 %v1277
  %2835 = vmatprep.subr.bf16.mxu0 0
  %2836 = vmatpush1.bf16.msra.mxu0 %v1274
  %2837 = vmatprep.subr.bf16.mxu0 0
  %2838 = vmatpush1.bf16.msra.mxu0 %v1271
  %2839 = vmatprep.subr.bf16.mxu0 0
  %2840 = vmatpush1.bf16.msra.mxu0 %v1268
  %2841 = vmatprep.subr.bf16.mxu0 0
  %2842 = vmatpush2.bf16.msra.mxu0 0
  %2843 = vmatprep.subr.bf16.mxu0 0
  %2844 = vmatpush2.bf16.msra.mxu0 0
  %2845 = vmatprep.subr.bf16.mxu0 0
  %2846 = vmatpush2.bf16.msra.mxu0 0
  %2847 = vmatprep.subr.bf16.mxu0 0
  %2848 = vmatpush2.bf16.msra.mxu0 0
  %2849 = vmatprep.subr.bf16.mxu0 0
  %2850 = vmatpush2.bf16.msra.mxu0 0
  %2851 = vmatprep.subr.bf16.mxu0 0
  %2852 = vmatpush2.bf16.msra.mxu0 0
  %2853 = vmatprep.subr.bf16.mxu0 0
  %2854 = vmatpush2.bf16.msra.mxu0 0
  %2855 = vmatprep.subr.bf16.mxu0 0
  %2856 = vmatpush2.bf16.msra.mxu0 0
  %2857 = vmatprep.mubr.bf16.mxu0 0
  %2858 = vmatmul.mubr.bf16.gmra.mxu0 %v2783
  %v2859 = vpop.f32.mrf.mxu0
  %v2860 = vadd.f32 0.0, %v2859
  %v2861 = vpop.f32.mrf.mxu0
  %v2862 = vpop.f32.mrf.mxu0
  %v2863 = vpop.f32.mrf.mxu0
  %2864 = vdwg.mxu0
  %v2865 = vadd.f32 %v724, %v2819
  %v2866 = vxor.u32 %v2865, 2147483648
  %v2867 = vmul.f32 %v2866, 1.442695
  %v2868 = vpow.pop %v2867
  %v2869 = vadd.f32 %v2868, 1.0
  %v2870 = vrcp.pop %v2869
  %v2871 = vmul.f32 1.0, %v2870
  %v2872 = vadd.f32 %v835, %v2821
  %v2873 = vxor.u32 %v2872, 2147483648
  %v2874 = vmul.f32 %v2873, 1.442695
  %v2875 = vpow.pop %v2874
  %v2876 = vadd.f32 %v2875, 1.0
  %v2877 = vrcp.pop %v2876
  %v2878 = vmul.f32 1.0, %v2877
  %v2879 = vadd.f32 %v2860, %v954
  %v2880 = vmul.f32 %v2871, %v2879
  %v2881 = vadd.f32 %v837, %v2880
  %v2882 = vtanh.pop %v2881
  %v2883 = vsub.f32 1.0, %v2878
  %v2884 = vmul.f32 %v2883, %v2882
  %v2885 = vmul.f32 %v2878, %v2676
  %v2886 = vadd.f32 %v2884, %v2885
  %2887 = vst [vmem:[#allocation2 + $0x70] sm:$0xff] %v2782
  %2888 = vst [vmem:[#allocation2 + $0x8] sm:$0xff] %v2886
  %s2889 = smul.u32 4, 32
  %s2890 = smul.u32 %s2889, 6
  %s2891 = sshll.u32 %s2890, 4
  %2892 = dma.done [#allocation6], %s2891
  %s2893 = smul.u32 4, 16
  %s2894 = smul.u32 %s2893, 3
  %s2895 = sshll.u32 %s2894, 4
  %2896 = dma.done %s266, %s2895
  %s2897 = sshll.u32 %s2894, 4
  %2898 = dma.done %s356, %s2897
  %v2899 = vld [vmem:[#allocation2] sm:$0xff]
  %v2900 = vld [vmem:[#allocation2 + $0x8] sm:$0xff]
  %v2901 = vld [vmem:[#allocation2 + $0x10] sm:$0xff]
  %v2902 = vld [vmem:[#allocation2 + $0x18] sm:$0xff]
  %v2903 = vld [vmem:[#allocation2 + $0x20] sm:$0xff]
  %v2904 = vld [vmem:[#allocation2 + $0x28] sm:$0xff]
  %v2905 = vld [vmem:[#allocation2 + $0x30] sm:$0xff]
  %v2906 = vld [vmem:[#allocation2 + $0x38] sm:$0xff]
  %v2907 = vld [vmem:[#allocation2 + $0x40] sm:$0xff]
  %v2908 = vld [vmem:[#allocation2 + $0x48] sm:$0xff]
  %v2909 = vld [vmem:[#allocation2 + $0x50] sm:$0xff]
  %v2910 = vld [vmem:[#allocation2 + $0x58] sm:$0xff]
  %v2911 = vld [vmem:[#allocation2 + $0x60] sm:$0xff]
  %v2912 = vld [vmem:[#allocation2 + $0x68] sm:$0xff]
  %v2913 = vld [vmem:[#allocation2 + $0x70] sm:$0xff]
  %v2914 = vld [vmem:[#allocation2 + $0x78] sm:$0xff]
  %v2915 = vpack.c.bf16 %v2901, %v2899
  %v2916 = vpack.c.bf16 %v2902, %v2900
  %v2917 = vpack.c.bf16 %v2905, %v2903
  %v2918 = vpack.c.bf16 %v2906, %v2904
  %v2919 = vpack.c.bf16 %v2909, %v2907
  %v2920 = vpack.c.bf16 %v2910, %v2908
  %v2921 = vpack.c.bf16 %v2913, %v2911
  %v2922 = vpack.c.bf16 %v2914, %v2912
  %v2923 = vld [vmem:[#allocation3] sm:$0xff]
  %v2924 = vld [vmem:[#allocation3 + $0x8] sm:$0xff]
  %v2925 = vld [vmem:[#allocation3 + $0x10] sm:$0xff]
  %v2926 = vld [vmem:[#allocation3 + $0x18] sm:$0xff]
  %v2927 = vld [vmem:[#allocation3 + $0x20] sm:$0xff]
  %v2928 = vld [vmem:[#allocation3 + $0x28] sm:$0xff]
  %v2929 = vld [vmem:[#allocation3 + $0x30] sm:$0xff]
  %v2930 = vld [vmem:[#allocation3 + $0x38] sm:$0xff]
  %v2931 = vld [vmem:[#allocation3 + $0x40] sm:$0xff]
  %v2932 = vld [vmem:[#allocation3 + $0x48] sm:$0xff]
  %v2933 = vld [vmem:[#allocation3 + $0x50] sm:$0xff]
  %v2934 = vld [vmem:[#allocation3 + $0x58] sm:$0xff]
  %v2935 = vld [vmem:[#allocation3 + $0x60] sm:$0xff]
  %v2936 = vld [vmem:[#allocation3 + $0x68] sm:$0xff]
  %v2937 = vld [vmem:[#allocation3 + $0x70] sm:$0xff]
  %v2938 = vld [vmem:[#allocation3 + $0x78] sm:$0xff]
  %v2939 = vld [vmem:[#allocation3 + $0x80] sm:$0xff]
  %v2940 = vld [vmem:[#allocation3 + $0x88] sm:$0xff]
  %v2941 = vld [vmem:[#allocation3 + $0x90] sm:$0xff]
  %v2942 = vld [vmem:[#allocation3 + $0x98] sm:$0xff]
  %v2943 = vld [vmem:[#allocation3 + $0xa0] sm:$0xff]
  %v2944 = vld [vmem:[#allocation3 + $0xa8] sm:$0xff]
  %v2945 = vld [vmem:[#allocation3 + $0xb0] sm:$0xff]
  %v2946 = vld [vmem:[#allocation3 + $0xb8] sm:$0xff]
  %v2947 = vld [vmem:[#allocation3 + $0xc0] sm:$0xff]
  %v2948 = vld [vmem:[#allocation3 + $0xc8] sm:$0xff]
  %v2949 = vld [vmem:[#allocation3 + $0xd0] sm:$0xff]
  %v2950 = vld [vmem:[#allocation3 + $0xd8] sm:$0xff]
  %v2951 = vld [vmem:[#allocation3 + $0xe0] sm:$0xff]
  %v2952 = vld [vmem:[#allocation3 + $0xe8] sm:$0xff]
  %v2953 = vld [vmem:[#allocation3 + $0xf0] sm:$0xff]
  %v2954 = vld [vmem:[#allocation3 + $0xf8] sm:$0xff]
  %v2955 = vld [vmem:[#allocation3 + $0x100] sm:$0xff]
  %v2956 = vld [vmem:[#allocation3 + $0x108] sm:$0xff]
  %v2957 = vld [vmem:[#allocation3 + $0x110] sm:$0xff]
  %v2958 = vld [vmem:[#allocation3 + $0x118] sm:$0xff]
  %v2959 = vld [vmem:[#allocation3 + $0x120] sm:$0xff]
  %v2960 = vld [vmem:[#allocation3 + $0x128] sm:$0xff]
  %v2961 = vld [vmem:[#allocation3 + $0x130] sm:$0xff]
  %v2962 = vld [vmem:[#allocation3 + $0x138] sm:$0xff]
  %v2963 = vld [vmem:[#allocation3 + $0x140] sm:$0xff]
  %v2964 = vld [vmem:[#allocation3 + $0x148] sm:$0xff]
  %v2965 = vld [vmem:[#allocation3 + $0x150] sm:$0xff]
  %v2966 = vld [vmem:[#allocation3 + $0x158] sm:$0xff]
  %v2967 = vld [vmem:[#allocation3 + $0x160] sm:$0xff]
  %v2968 = vld [vmem:[#allocation3 + $0x168] sm:$0xff]
  %v2969 = vld [vmem:[#allocation3 + $0x170] sm:$0xff]
  %v2970 = vld [vmem:[#allocation3 + $0x178] sm:$0xff]
  %v2971 = vld [vmem:[#allocation3 + $0x180] sm:$0xff]
  %v2972 = vld [vmem:[#allocation3 + $0x188] sm:$0xff]
  %v2973 = vld [vmem:[#allocation3 + $0x190] sm:$0xff]
  %v2974 = vld [vmem:[#allocation3 + $0x198] sm:$0xff]
  %v2975 = vld [vmem:[#allocation3 + $0x1a0] sm:$0xff]
  %v2976 = vld [vmem:[#allocation3 + $0x1a8] sm:$0xff]
  %v2977 = vld [vmem:[#allocation3 + $0x1b0] sm:$0xff]
  %v2978 = vld [vmem:[#allocation3 + $0x1b8] sm:$0xff]
  %v2979 = vld [vmem:[#allocation3 + $0x1c0] sm:$0xff]
  %v2980 = vld [vmem:[#allocation3 + $0x1c8] sm:$0xff]
  %v2981 = vld [vmem:[#allocation3 + $0x1d0] sm:$0xff]
  %v2982 = vld [vmem:[#allocation3 + $0x1d8] sm:$0xff]
  %v2983 = vld [vmem:[#allocation3 + $0x1e0] sm:$0xff]
  %v2984 = vld [vmem:[#allocation3 + $0x1e8] sm:$0xff]
  %v2985 = vld [vmem:[#allocation3 + $0x1f0] sm:$0xff]
  %v2986 = vld [vmem:[#allocation3 + $0x1f8] sm:$0xff]
  %v2987 = vld [vmem:[#allocation3 + $0x200] sm:$0xff]
  %v2988 = vld [vmem:[#allocation3 + $0x208] sm:$0xff]
  %v2989 = vld [vmem:[#allocation3 + $0x210] sm:$0xff]
  %v2990 = vld [vmem:[#allocation3 + $0x218] sm:$0xff]
  %v2991 = vld [vmem:[#allocation3 + $0x220] sm:$0xff]
  %v2992 = vld [vmem:[#allocation3 + $0x228] sm:$0xff]
  %v2993 = vld [vmem:[#allocation3 + $0x230] sm:$0xff]
  %v2994 = vld [vmem:[#allocation3 + $0x238] sm:$0xff]
  %v2995 = vld [vmem:[#allocation3 + $0x240] sm:$0xff]
  %v2996 = vld [vmem:[#allocation3 + $0x248] sm:$0xff]
  %v2997 = vld [vmem:[#allocation3 + $0x250] sm:$0xff]
  %v2998 = vld [vmem:[#allocation3 + $0x258] sm:$0xff]
  %v2999 = vld [vmem:[#allocation3 + $0x260] sm:$0xff]
  %v3000 = vld [vmem:[#allocation3 + $0x268] sm:$0xff]
  %v3001 = vld [vmem:[#allocation3 + $0x270] sm:$0xff]
  %v3002 = vld [vmem:[#allocation3 + $0x278] sm:$0xff]
  %v3003 = vld [vmem:[#allocation3 + $0x280] sm:$0xff]
  %v3004 = vld [vmem:[#allocation3 + $0x288] sm:$0xff]
  %v3005 = vld [vmem:[#allocation3 + $0x290] sm:$0xff]
  %v3006 = vld [vmem:[#allocation3 + $0x298] sm:$0xff]
  %v3007 = vld [vmem:[#allocation3 + $0x2a0] sm:$0xff]
  %v3008 = vld [vmem:[#allocation3 + $0x2a8] sm:$0xff]
  %v3009 = vld [vmem:[#allocation3 + $0x2b0] sm:$0xff]
  %v3010 = vld [vmem:[#allocation3 + $0x2b8] sm:$0xff]
  %v3011 = vld [vmem:[#allocation3 + $0x2c0] sm:$0xff]
  %v3012 = vld [vmem:[#allocation3 + $0x2c8] sm:$0xff]
  %v3013 = vld [vmem:[#allocation3 + $0x2d0] sm:$0xff]
  %v3014 = vld [vmem:[#allocation3 + $0x2d8] sm:$0xff]
  %v3015 = vld [vmem:[#allocation3 + $0x2e0] sm:$0xff]
  %v3016 = vld [vmem:[#allocation3 + $0x2e8] sm:$0xff]
  %v3017 = vld [vmem:[#allocation3 + $0x2f0] sm:$0xff]
  %v3018 = vld [vmem:[#allocation3 + $0x2f8] sm:$0xff]
  %s3019 = scalar_lea.vmem %s9, 1
  %v3020 = vld [vmem:[%s3019] ss:$2 sm:$0x3f]
  %v3022 = vlaneseq
  %v3023 = vshrl.u32 %v3022, 7
  %v3024 = vsub.s32 0, %v3023
  %v3025 = vrot.slane %v3020, %v3024
  %v3026 = vlaneseq
  %v3027 = vshrl.u32 %v3026, 7
  %v3028 = vsub.s32 1, %v3027
  %v3029 = vrot.slane %v3020, %v3028
  %v3030 = vlaneseq
  %v3031 = vshrl.u32 %v3030, 7
  %v3032 = vsub.s32 2, %v3031
  %v3033 = vrot.slane %v3020, %v3032
  %v3034 = vlaneseq
  %v3035 = vshrl.u32 %v3034, 7
  %v3036 = vsub.s32 3, %v3035
  %v3037 = vrot.slane %v3020, %v3036
  %v3038 = vlaneseq
  %v3039 = vshrl.u32 %v3038, 7
  %v3040 = vsub.s32 4, %v3039
  %v3041 = vrot.slane %v3020, %v3040
  %v3042 = vlaneseq
  %v3043 = vshrl.u32 %v3042, 7
  %v3044 = vsub.s32 5, %v3043
  %v3045 = vrot.slane %v3020, %v3044
  %v3148 = vunpack.c.l.b16 %v2923
  %v3149 = vunpack.c.h.b16 %v2923
  %v3150 = vunpack.c.l.b16 %v2924
  %v3151 = vunpack.c.h.b16 %v2924
  %v3152 = vunpack.c.l.b16 %v2925
  %v3153 = vunpack.c.h.b16 %v2925
  %v3154 = vunpack.c.l.b16 %v2926
  %v3155 = vunpack.c.h.b16 %v2926
  %v3156 = vunpack.c.l.b16 %v2927
  %v3157 = vunpack.c.h.b16 %v2927
  %v3158 = vunpack.c.l.b16 %v2928
  %v3159 = vunpack.c.h.b16 %v2928
  %v3160 = vunpack.c.l.b16 %v2929
  %v3161 = vunpack.c.h.b16 %v2929
  %v3162 = vunpack.c.l.b16 %v2930
  %v3163 = vunpack.c.h.b16 %v2930
  %v3164 = vunpack.c.l.b16 %v2931
  %v3165 = vunpack.c.h.b16 %v2931
  %v3166 = vunpack.c.l.b16 %v2932
  %v3167 = vunpack.c.h.b16 %v2932
  %v3168 = vunpack.c.l.b16 %v2933
  %v3169 = vunpack.c.h.b16 %v2933
  %v3170 = vunpack.c.l.b16 %v2934
  %v3171 = vunpack.c.h.b16 %v2934
  %v3172 = vunpack.c.l.b16 %v2935
  %v3173 = vunpack.c.h.b16 %v2935
  %v3174 = vunpack.c.l.b16 %v2936
  %v3175 = vunpack.c.h.b16 %v2936
  %v3176 = vunpack.c.l.b16 %v2937
  %v3177 = vunpack.c.h.b16 %v2937
  %v3178 = vunpack.c.l.b16 %v2938
  %v3179 = vunpack.c.h.b16 %v2938
  %v3180 = vunpack.c.l.b16 %v2939
  %v3181 = vunpack.c.h.b16 %v2939
  %v3182 = vunpack.c.l.b16 %v2940
  %v3183 = vunpack.c.h.b16 %v2940
  %v3184 = vunpack.c.l.b16 %v2941
  %v3185 = vunpack.c.h.b16 %v2941
  %v3186 = vunpack.c.l.b16 %v2942
  %v3187 = vunpack.c.h.b16 %v2942
  %v3188 = vunpack.c.l.b16 %v2943
  %v3189 = vunpack.c.h.b16 %v2943
  %v3190 = vunpack.c.l.b16 %v2944
  %v3191 = vunpack.c.h.b16 %v2944
  %v3192 = vunpack.c.l.b16 %v2945
  %v3193 = vunpack.c.h.b16 %v2945
  %v3194 = vunpack.c.l.b16 %v2946
  %v3195 = vunpack.c.h.b16 %v2946
  %v3196 = vunpack.c.l.b16 %v2947
  %v3197 = vunpack.c.h.b16 %v2947
  %v3198 = vunpack.c.l.b16 %v2948
  %v3199 = vunpack.c.h.b16 %v2948
  %v3200 = vunpack.c.l.b16 %v2949
  %v3201 = vunpack.c.h.b16 %v2949
  %v3202 = vunpack.c.l.b16 %v2950
  %v3203 = vunpack.c.h.b16 %v2950
  %v3204 = vunpack.c.l.b16 %v2951
  %v3205 = vunpack.c.h.b16 %v2951
  %v3206 = vunpack.c.l.b16 %v2952
  %v3207 = vunpack.c.h.b16 %v2952
  %v3208 = vunpack.c.l.b16 %v2953
  %v3209 = vunpack.c.h.b16 %v2953
  %v3210 = vunpack.c.l.b16 %v2954
  %v3211 = vunpack.c.h.b16 %v2954
  %v3212 = vunpack.c.l.b16 %v2955
  %v3213 = vunpack.c.h.b16 %v2955
  %v3214 = vunpack.c.l.b16 %v2956
  %v3215 = vunpack.c.h.b16 %v2956
  %v3216 = vunpack.c.l.b16 %v2957
  %v3217 = vunpack.c.h.b16 %v2957
  %v3218 = vunpack.c.l.b16 %v2958
  %v3219 = vunpack.c.h.b16 %v2958
  %v3220 = vunpack.c.l.b16 %v2959
  %v3221 = vunpack.c.h.b16 %v2959
  %v3222 = vunpack.c.l.b16 %v2960
  %v3223 = vunpack.c.h.b16 %v2960
  %v3224 = vunpack.c.l.b16 %v2961
  %v3225 = vunpack.c.h.b16 %v2961
  %v3226 = vunpack.c.l.b16 %v2962
  %v3227 = vunpack.c.h.b16 %v2962
  %v3228 = vunpack.c.l.b16 %v2963
  %v3229 = vunpack.c.h.b16 %v2963
  %v3230 = vunpack.c.l.b16 %v2964
  %v3231 = vunpack.c.h.b16 %v2964
  %v3232 = vunpack.c.l.b16 %v2965
  %v3233 = vunpack.c.h.b16 %v2965
  %v3234 = vunpack.c.l.b16 %v2966
  %v3235 = vunpack.c.h.b16 %v2966
  %v3236 = vunpack.c.l.b16 %v2967
  %v3237 = vunpack.c.h.b16 %v2967
  %v3238 = vunpack.c.l.b16 %v2968
  %v3239 = vunpack.c.h.b16 %v2968
  %v3240 = vunpack.c.l.b16 %v2969
  %v3241 = vunpack.c.h.b16 %v2969
  %v3242 = vunpack.c.l.b16 %v2970
  %v3243 = vunpack.c.h.b16 %v2970
  %v3244 = vunpack.c.l.b16 %v2971
  %v3245 = vunpack.c.h.b16 %v2971
  %v3246 = vunpack.c.l.b16 %v2972
  %v3247 = vunpack.c.h.b16 %v2972
  %v3248 = vunpack.c.l.b16 %v2973
  %v3249 = vunpack.c.h.b16 %v2973
  %v3250 = vunpack.c.l.b16 %v2974
  %v3251 = vunpack.c.h.b16 %v2974
  %v3252 = vunpack.c.l.b16 %v2975
  %v3253 = vunpack.c.h.b16 %v2975
  %v3254 = vunpack.c.l.b16 %v2976
  %v3255 = vunpack.c.h.b16 %v2976
  %v3256 = vunpack.c.l.b16 %v2977
  %v3257 = vunpack.c.h.b16 %v2977
  %v3258 = vunpack.c.l.b16 %v2978
  %v3259 = vunpack.c.h.b16 %v2978
  %v3260 = vunpack.c.l.b16 %v2979
  %v3261 = vunpack.c.h.b16 %v2979
  %v3262 = vunpack.c.l.b16 %v2980
  %v3263 = vunpack.c.h.b16 %v2980
  %v3264 = vunpack.c.l.b16 %v2981
  %v3265 = vunpack.c.h.b16 %v2981
  %v3266 = vunpack.c.l.b16 %v2982
  %v3267 = vunpack.c.h.b16 %v2982
  %v3268 = vunpack.c.l.b16 %v2983
  %v3269 = vunpack.c.h.b16 %v2983
  %v3270 = vunpack.c.l.b16 %v2984
  %v3271 = vunpack.c.h.b16 %v2984
  %v3272 = vunpack.c.l.b16 %v2985
  %v3273 = vunpack.c.h.b16 %v2985
  %v3274 = vunpack.c.l.b16 %v2986
  %v3275 = vunpack.c.h.b16 %v2986
  %v3276 = vunpack.c.l.b16 %v2987
  %v3277 = vunpack.c.h.b16 %v2987
  %v3278 = vunpack.c.l.b16 %v2988
  %v3279 = vunpack.c.h.b16 %v2988
  %v3280 = vunpack.c.l.b16 %v2989
  %v3281 = vunpack.c.h.b16 %v2989
  %v3282 = vunpack.c.l.b16 %v2990
  %v3283 = vunpack.c.h.b16 %v2990
  %v3284 = vunpack.c.l.b16 %v2991
  %v3285 = vunpack.c.h.b16 %v2991
  %v3286 = vunpack.c.l.b16 %v2992
  %v3287 = vunpack.c.h.b16 %v2992
  %v3288 = vunpack.c.l.b16 %v2993
  %v3289 = vunpack.c.h.b16 %v2993
  %v3290 = vunpack.c.l.b16 %v2994
  %v3291 = vunpack.c.h.b16 %v2994
  %v3292 = vunpack.c.l.b16 %v2995
  %v3293 = vunpack.c.h.b16 %v2995
  %v3294 = vunpack.c.l.b16 %v2996
  %v3295 = vunpack.c.h.b16 %v2996
  %v3296 = vunpack.c.l.b16 %v2997
  %v3297 = vunpack.c.h.b16 %v2997
  %v3298 = vunpack.c.l.b16 %v2998
  %v3299 = vunpack.c.h.b16 %v2998
  %v3300 = vunpack.c.l.b16 %v2999
  %v3301 = vunpack.c.h.b16 %v2999
  %v3302 = vunpack.c.l.b16 %v3000
  %v3303 = vunpack.c.h.b16 %v3000
  %v3304 = vunpack.c.l.b16 %v3001
  %v3305 = vunpack.c.h.b16 %v3001
  %v3306 = vunpack.c.l.b16 %v3002
  %v3307 = vunpack.c.h.b16 %v3002
  %v3308 = vunpack.c.l.b16 %v3003
  %v3309 = vunpack.c.h.b16 %v3003
  %v3310 = vunpack.c.l.b16 %v3004
  %v3311 = vunpack.c.h.b16 %v3004
  %v3312 = vunpack.c.l.b16 %v3005
  %v3313 = vunpack.c.h.b16 %v3005
  %v3314 = vunpack.c.l.b16 %v3006
  %v3315 = vunpack.c.h.b16 %v3006
  %v3316 = vunpack.c.l.b16 %v3007
  %v3317 = vunpack.c.h.b16 %v3007
  %v3318 = vunpack.c.l.b16 %v3008
  %v3319 = vunpack.c.h.b16 %v3008
  %v3320 = vunpack.c.l.b16 %v3009
  %v3321 = vunpack.c.h.b16 %v3009
  %v3322 = vunpack.c.l.b16 %v3010
  %v3323 = vunpack.c.h.b16 %v3010
  %v3324 = vunpack.c.l.b16 %v3011
  %v3325 = vunpack.c.h.b16 %v3011
  %v3326 = vunpack.c.l.b16 %v3012
  %v3327 = vunpack.c.h.b16 %v3012
  %v3328 = vunpack.c.l.b16 %v3013
  %v3329 = vunpack.c.h.b16 %v3013
  %v3330 = vunpack.c.l.b16 %v3014
  %v3331 = vunpack.c.h.b16 %v3014
  %v3332 = vunpack.c.l.b16 %v3015
  %v3333 = vunpack.c.h.b16 %v3015
  %v3334 = vunpack.c.l.b16 %v3016
  %v3335 = vunpack.c.h.b16 %v3016
  %v3336 = vunpack.c.l.b16 %v3017
  %v3337 = vunpack.c.h.b16 %v3017
  %v3338 = vunpack.c.l.b16 %v3018
  %v3339 = vunpack.c.h.b16 %v3018
  %v3340 = vpack.c.b16 %v3154, %v3148
  %v3341 = vpack.c.b16 %v3155, %v3149
  %v3342 = vpack.c.b16 %v3156, %v3150
  %v3343 = vpack.c.b16 %v3157, %v3151
  %v3344 = vpack.c.b16 %v3158, %v3152
  %v3345 = vpack.c.b16 %v3159, %v3153
  %v3346 = vpack.c.b16 %v3166, %v3160
  %v3347 = vpack.c.b16 %v3167, %v3161
  %v3348 = vpack.c.b16 %v3168, %v3162
  %v3349 = vpack.c.b16 %v3169, %v3163
  %v3350 = vpack.c.b16 %v3170, %v3164
  %v3351 = vpack.c.b16 %v3171, %v3165
  %v3352 = vpack.c.b16 %v3178, %v3172
  %v3353 = vpack.c.b16 %v3179, %v3173
  %v3354 = vpack.c.b16 %v3180, %v3174
  %v3355 = vpack.c.b16 %v3181, %v3175
  %v3356 = vpack.c.b16 %v3182, %v3176
  %v3357 = vpack.c.b16 %v3183, %v3177
  %v3358 = vpack.c.b16 %v3190, %v3184
  %v3359 = vpack.c.b16 %v3191, %v3185
  %v3360 = vpack.c.b16 %v3192, %v3186
  %v3361 = vpack.c.b16 %v3193, %v3187
  %v3362 = vpack.c.b16 %v3194, %v3188
  %v3363 = vpack.c.b16 %v3195, %v3189
  %v3364 = vpack.c.b16 %v3202, %v3196
  %v3365 = vpack.c.b16 %v3203, %v3197
  %v3366 = vpack.c.b16 %v3204, %v3198
  %v3367 = vpack.c.b16 %v3205, %v3199
  %v3368 = vpack.c.b16 %v3206, %v3200
  %v3369 = vpack.c.b16 %v3207, %v3201
  %v3370 = vpack.c.b16 %v3214, %v3208
  %v3371 = vpack.c.b16 %v3215, %v3209
  %v3372 = vpack.c.b16 %v3216, %v3210
  %v3373 = vpack.c.b16 %v3217, %v3211
  %v3374 = vpack.c.b16 %v3218, %v3212
  %v3375 = vpack.c.b16 %v3219, %v3213
  %v3376 = vpack.c.b16 %v3226, %v3220
  %v3377 = vpack.c.b16 %v3227, %v3221
  %v3378 = vpack.c.b16 %v3228, %v3222
  %v3379 = vpack.c.b16 %v3229, %v3223
  %v3380 = vpack.c.b16 %v3230, %v3224
  %v3381 = vpack.c.b16 %v3231, %v3225
  %v3382 = vpack.c.b16 %v3238, %v3232
  %v3383 = vpack.c.b16 %v3239, %v3233
  %v3384 = vpack.c.b16 %v3240, %v3234
  %v3385 = vpack.c.b16 %v3241, %v3235
  %v3386 = vpack.c.b16 %v3242, %v3236
  %v3387 = vpack.c.b16 %v3243, %v3237
  %v3388 = vpack.c.b16 %v3250, %v3244
  %v3389 = vpack.c.b16 %v3251, %v3245
  %v3390 = vpack.c.b16 %v3252, %v3246
  %v3391 = vpack.c.b16 %v3253, %v3247
  %v3392 = vpack.c.b16 %v3254, %v3248
  %v3393 = vpack.c.b16 %v3255, %v3249
  %v3394 = vpack.c.b16 %v3262, %v3256
  %v3395 = vpack.c.b16 %v3263, %v3257
  %v3396 = vpack.c.b16 %v3264, %v3258
  %v3397 = vpack.c.b16 %v3265, %v3259
  %v3398 = vpack.c.b16 %v3266, %v3260
  %v3399 = vpack.c.b16 %v3267, %v3261
  %v3400 = vpack.c.b16 %v3274, %v3268
  %v3401 = vpack.c.b16 %v3275, %v3269
  %v3402 = vpack.c.b16 %v3276, %v3270
  %v3403 = vpack.c.b16 %v3277, %v3271
  %v3404 = vpack.c.b16 %v3278, %v3272
  %v3405 = vpack.c.b16 %v3279, %v3273
  %v3406 = vpack.c.b16 %v3286, %v3280
  %v3407 = vpack.c.b16 %v3287, %v3281
  %v3408 = vpack.c.b16 %v3288, %v3282
  %v3409 = vpack.c.b16 %v3289, %v3283
  %v3410 = vpack.c.b16 %v3290, %v3284
  %v3411 = vpack.c.b16 %v3291, %v3285
  %v3412 = vpack.c.b16 %v3298, %v3292
  %v3413 = vpack.c.b16 %v3299, %v3293
  %v3414 = vpack.c.b16 %v3300, %v3294
  %v3415 = vpack.c.b16 %v3301, %v3295
  %v3416 = vpack.c.b16 %v3302, %v3296
  %v3417 = vpack.c.b16 %v3303, %v3297
  %v3418 = vpack.c.b16 %v3310, %v3304
  %v3419 = vpack.c.b16 %v3311, %v3305
  %v3420 = vpack.c.b16 %v3312, %v3306
  %v3421 = vpack.c.b16 %v3313, %v3307
  %v3422 = vpack.c.b16 %v3314, %v3308
  %v3423 = vpack.c.b16 %v3315, %v3309
  %v3424 = vpack.c.b16 %v3322, %v3316
  %v3425 = vpack.c.b16 %v3323, %v3317
  %v3426 = vpack.c.b16 %v3324, %v3318
  %v3427 = vpack.c.b16 %v3325, %v3319
  %v3428 = vpack.c.b16 %v3326, %v3320
  %v3429 = vpack.c.b16 %v3327, %v3321
  %v3430 = vpack.c.b16 %v3334, %v3328
  %v3431 = vpack.c.b16 %v3335, %v3329
  %v3432 = vpack.c.b16 %v3336, %v3330
  %v3433 = vpack.c.b16 %v3337, %v3331
  %v3434 = vpack.c.b16 %v3338, %v3332
  %v3435 = vpack.c.b16 %v3339, %v3333
  %3532 = vmatprep.subr.bf16.mxu0 %v3383
  %3533 = vmatpush1.bf16.msra.mxu0 %v3382
  %3534 = vmatprep.subr.bf16.mxu0 %v3377
  %3535 = vmatpush1.bf16.msra.mxu0 %v3376
  %3536 = vmatprep.subr.bf16.mxu0 %v3371
  %3537 = vmatpush1.bf16.msra.mxu0 %v3370
  %3538 = vmatprep.subr.bf16.mxu0 %v3365
  %3539 = vmatpush1.bf16.msra.mxu0 %v3364
  %3540 = vmatprep.subr.bf16.mxu0 %v3359
  %3541 = vmatpush1.bf16.msra.mxu0 %v3358
  %3542 = vmatprep.subr.bf16.mxu0 %v3353
  %3543 = vmatpush1.bf16.msra.mxu0 %v3352
  %3544 = vmatprep.subr.bf16.mxu0 %v3347
  %3545 = vmatpush1.bf16.msra.mxu0 %v3346
  %3546 = vmatprep.subr.bf16.mxu0 %v3341
  %3547 = vmatpush1.bf16.msra.mxu0 %v3340
  %3548 = vmatprep.subr.bf16.mxu0 %v3431
  %3549 = vmatpush2.bf16.msra.mxu0 %v3430
  %3550 = vmatprep.subr.bf16.mxu0 %v3425
  %3551 = vmatpush2.bf16.msra.mxu0 %v3424
  %3552 = vmatprep.subr.bf16.mxu0 %v3419
  %3553 = vmatpush2.bf16.msra.mxu0 %v3418
  %3554 = vmatprep.subr.bf16.mxu0 %v3413
  %3555 = vmatpush2.bf16.msra.mxu0 %v3412
  %3556 = vmatprep.subr.bf16.mxu0 %v3407
  %3557 = vmatpush2.bf16.msra.mxu0 %v3406
  %3558 = vmatprep.subr.bf16.mxu0 %v3401
  %3559 = vmatpush2.bf16.msra.mxu0 %v3400
  %3560 = vmatprep.subr.bf16.mxu0 %v3395
  %3561 = vmatpush2.bf16.msra.mxu0 %v3394
  %3562 = vmatprep.subr.bf16.mxu0 %v3389
  %3563 = vmatpush2.bf16.msra.mxu0 %v3388
  %3564 = vmatprep.mubr.bf16.mxu0 %v2916
  %3565 = vmatmul.mubr.bf16.gmra.mxu0 %v2915
  %v3566 = vpop.f32.mrf.mxu0
  %v3567 = vadd.f32 %v3025, %v3566
  %v3568 = vpop.f32.mrf.mxu0
  %v3569 = vadd.f32 %v3029, %v3568
  %v3570 = vpop.f32.mrf.mxu0
  %v3571 = vadd.f32 %v3025, %v3570
  %v3572 = vpop.f32.mrf.mxu0
  %v3573 = vadd.f32 %v3029, %v3572
  %3574 = vmatprep.mubr.bf16.mxu0 %v2918
  %3575 = vmatmul.mubr.bf16.gmra.mxu0 %v2917
  %v3576 = vpop.f32.mrf.mxu0
  %v3577 = vadd.f32 %v3025, %v3576
  %v3578 = vpop.f32.mrf.mxu0
  %v3579 = vadd.f32 %v3029, %v3578
  %v3580 = vpop.f32.mrf.mxu0
  %v3581 = vadd.f32 %v3025, %v3580
  %v3582 = vpop.f32.mrf.mxu0
  %v3583 = vadd.f32 %v3029, %v3582
  %3584 = vmatprep.mubr.bf16.mxu0 %v2920
  %3585 = vmatmul.mubr.bf16.gmra.mxu0 %v2919
  %v3586 = vpop.f32.mrf.mxu0
  %v3587 = vadd.f32 %v3025, %v3586
  %v3588 = vpop.f32.mrf.mxu0
  %v3589 = vadd.f32 %v3029, %v3588
  %v3590 = vpop.f32.mrf.mxu0
  %v3591 = vadd.f32 %v3025, %v3590
  %v3592 = vpop.f32.mrf.mxu0
  %v3593 = vadd.f32 %v3029, %v3592
  %3594 = vmatprep.mubr.bf16.mxu0 %v2922
  %3595 = vmatmul.mubr.bf16.gmra.mxu0 %v2921
  %v3596 = vpop.f32.mrf.mxu0
  %v3597 = vadd.f32 %v3025, %v3596
  %v3598 = vpop.f32.mrf.mxu0
  %v3599 = vadd.f32 %v3029, %v3598
  %v3600 = vpop.f32.mrf.mxu0
  %v3601 = vadd.f32 %v3025, %v3600
  %v3602 = vpop.f32.mrf.mxu0
  %v3603 = vadd.f32 %v3029, %v3602
  %3604 = vdwg.mxu0
  %3605 = vmatprep.subr.bf16.mxu0 %v3385
  %3606 = vmatpush1.bf16.msra.mxu0 %v3384
  %3607 = vmatprep.subr.bf16.mxu0 %v3379
  %3608 = vmatpush1.bf16.msra.mxu0 %v3378
  %3609 = vmatprep.subr.bf16.mxu0 %v3373
  %3610 = vmatpush1.bf16.msra.mxu0 %v3372
  %3611 = vmatprep.subr.bf16.mxu0 %v3367
  %3612 = vmatpush1.bf16.msra.mxu0 %v3366
  %3613 = vmatprep.subr.bf16.mxu0 %v3361
  %3614 = vmatpush1.bf16.msra.mxu0 %v3360
  %3615 = vmatprep.subr.bf16.mxu0 %v3355
  %3616 = vmatpush1.bf16.msra.mxu0 %v3354
  %3617 = vmatprep.subr.bf16.mxu0 %v3349
  %3618 = vmatpush1.bf16.msra.mxu0 %v3348
  %3619 = vmatprep.subr.bf16.mxu0 %v3343
  %3620 = vmatpush1.bf16.msra.mxu0 %v3342
  %3621 = vmatprep.subr.bf16.mxu0 %v3433
  %3622 = vmatpush2.bf16.msra.mxu0 %v3432
  %3623 = vmatprep.subr.bf16.mxu0 %v3427
  %3624 = vmatpush2.bf16.msra.mxu0 %v3426
  %3625 = vmatprep.subr.bf16.mxu0 %v3421
  %3626 = vmatpush2.bf16.msra.mxu0 %v3420
  %3627 = vmatprep.subr.bf16.mxu0 %v3415
  %3628 = vmatpush2.bf16.msra.mxu0 %v3414
  %3629 = vmatprep.subr.bf16.mxu0 %v3409
  %3630 = vmatpush2.bf16.msra.mxu0 %v3408
  %3631 = vmatprep.subr.bf16.mxu0 %v3403
  %3632 = vmatpush2.bf16.msra.mxu0 %v3402
  %3633 = vmatprep.subr.bf16.mxu0 %v3397
  %3634 = vmatpush2.bf16.msra.mxu0 %v3396
  %3635 = vmatprep.subr.bf16.mxu0 %v3391
  %3636 = vmatpush2.bf16.msra.mxu0 %v3390
  %3637 = vmatprep.mubr.bf16.mxu0 %v2916
  %3638 = vmatmul.mubr.bf16.gmra.mxu0 %v2915
  %v3639 = vpop.f32.mrf.mxu0
  %v3640 = vadd.f32 %v3033, %v3639
  %v3641 = vpop.f32.mrf.mxu0
  %v3642 = vpop.f32.mrf.mxu0
  %v3643 = vadd.f32 %v3033, %v3642
  %v3644 = vpop.f32.mrf.mxu0
  %3645 = vmatprep.mubr.bf16.mxu0 %v2918
  %3646 = vmatmul.mubr.bf16.gmra.mxu0 %v2917
  %v3647 = vpop.f32.mrf.mxu0
  %v3648 = vadd.f32 %v3033, %v3647
  %v3649 = vpop.f32.mrf.mxu0
  %v3650 = vpop.f32.mrf.mxu0
  %v3651 = vadd.f32 %v3033, %v3650
  %v3652 = vpop.f32.mrf.mxu0
  %3653 = vmatprep.mubr.bf16.mxu0 %v2920
  %3654 = vmatmul.mubr.bf16.gmra.mxu0 %v2919
  %v3655 = vpop.f32.mrf.mxu0
  %v3656 = vadd.f32 %v3033, %v3655
  %v3657 = vpop.f32.mrf.mxu0
  %v3658 = vpop.f32.mrf.mxu0
  %v3659 = vadd.f32 %v3033, %v3658
  %v3660 = vpop.f32.mrf.mxu0
  %3661 = vmatprep.mubr.bf16.mxu0 %v2922
  %3662 = vmatmul.mubr.bf16.gmra.mxu0 %v2921
  %v3663 = vpop.f32.mrf.mxu0
  %v3664 = vadd.f32 %v3033, %v3663
  %v3665 = vpop.f32.mrf.mxu0
  %v3666 = vpop.f32.mrf.mxu0
  %v3667 = vadd.f32 %v3033, %v3666
  %v3668 = vpop.f32.mrf.mxu0
  %v3669 = vadd.f32 %v3037, %v3668
  %3670 = vdwg.mxu0
  %3671 = vmatprep.subr.bf16.mxu0 %v3387
  %3672 = vmatpush1.bf16.msra.mxu0 %v3386
  %3673 = vmatprep.subr.bf16.mxu0 %v3381
  %3674 = vmatpush1.bf16.msra.mxu0 %v3380
  %3675 = vmatprep.subr.bf16.mxu0 %v3375
  %3676 = vmatpush1.bf16.msra.mxu0 %v3374
  %3677 = vmatprep.subr.bf16.mxu0 %v3369
  %3678 = vmatpush1.bf16.msra.mxu0 %v3368
  %3679 = vmatprep.subr.bf16.mxu0 %v3363
  %3680 = vmatpush1.bf16.msra.mxu0 %v3362
  %3681 = vmatprep.subr.bf16.mxu0 %v3357
  %3682 = vmatpush1.bf16.msra.mxu0 %v3356
  %3683 = vmatprep.subr.bf16.mxu0 %v3351
  %3684 = vmatpush1.bf16.msra.mxu0 %v3350
  %3685 = vmatprep.subr.bf16.mxu0 %v3345
  %3686 = vmatpush1.bf16.msra.mxu0 %v3344
  %3687 = vmatprep.subr.bf16.mxu0 %v3435
  %3688 = vmatpush2.bf16.msra.mxu0 %v3434
  %3689 = vmatprep.subr.bf16.mxu0 %v3429
  %3690 = vmatpush2.bf16.msra.mxu0 %v3428
  %3691 = vmatprep.subr.bf16.mxu0 %v3423
  %3692 = vmatpush2.bf16.msra.mxu0 %v3422
  %3693 = vmatprep.subr.bf16.mxu0 %v3417
  %3694 = vmatpush2.bf16.msra.mxu0 %v3416
  %3695 = vmatprep.subr.bf16.mxu0 %v3411
  %3696 = vmatpush2.bf16.msra.mxu0 %v3410
  %3697 = vmatprep.subr.bf16.mxu0 %v3405
  %3698 = vmatpush2.bf16.msra.mxu0 %v3404
  %3699 = vmatprep.subr.bf16.mxu0 %v3399
  %3700 = vmatpush2.bf16.msra.mxu0 %v3398
  %3701 = vmatprep.subr.bf16.mxu0 %v3393
  %3702 = vmatpush2.bf16.msra.mxu0 %v3392
  %3703 = vmatprep.mubr.bf16.mxu0 %v2916
  %3704 = vmatmul.mubr.bf16.gmra.mxu0 %v2915
  %v3705 = vpop.f32.mrf.mxu0
  %v3706 = vpop.f32.mrf.mxu0
  %v3707 = vpop.f32.mrf.mxu0
  %v3708 = vpop.f32.mrf.mxu0
  %3709 = vmatprep.mubr.bf16.mxu0 %v2918
  %3710 = vmatmul.mubr.bf16.gmra.mxu0 %v2917
  %v3711 = vpop.f32.mrf.mxu0
  %v3712 = vpop.f32.mrf.mxu0
  %v3713 = vpop.f32.mrf.mxu0
  %v3714 = vpop.f32.mrf.mxu0
  %3715 = vmatprep.mubr.bf16.mxu0 %v2920
  %3716 = vmatmul.mubr.bf16.gmra.mxu0 %v2919
  %v3717 = vpop.f32.mrf.mxu0
  %v3718 = vpop.f32.mrf.mxu0
  %v3719 = vpop.f32.mrf.mxu0
  %v3720 = vpop.f32.mrf.mxu0
  %3721 = vmatprep.mubr.bf16.mxu0 %v2922
  %3722 = vmatmul.mubr.bf16.gmra.mxu0 %v2921
  %v3723 = vpop.f32.mrf.mxu0
  %v3724 = vpop.f32.mrf.mxu0
  %v3725 = vpop.f32.mrf.mxu0
  %v3726 = vadd.f32 %v3041, %v3725
  %v3727 = vpop.f32.mrf.mxu0
  %v3728 = vadd.f32 %v3045, %v3727
  %3729 = vdwg.mxu0
  %v3730 = vld [vmem:[#allocation4] sm:$0xff]
  %v3731 = vld [vmem:[#allocation4 + $0x8] sm:$0xf]
  %v3732 = vld [vmem:[#allocation4 + $0xc] sm:$0xff]
  %v3733 = vld [vmem:[#allocation4 + $0x14] sm:$0xf]
  %v3734 = vld [vmem:[#allocation4 + $0x18] sm:$0xff]
  %v3735 = vld [vmem:[#allocation4 + $0x20] sm:$0xf]
  %v3736 = vld [vmem:[#allocation4 + $0x24] sm:$0xff]
  %v3737 = vld [vmem:[#allocation4 + $0x2c] sm:$0xf]
  %v3738 = vld [vmem:[#allocation4 + $0x30] sm:$0xff]
  %v3739 = vld [vmem:[#allocation4 + $0x38] sm:$0xf]
  %v3740 = vld [vmem:[#allocation4 + $0x3c] sm:$0xff]
  %v3741 = vld [vmem:[#allocation4 + $0x44] sm:$0xf]
  %v3742 = vld [vmem:[#allocation4 + $0x48] sm:$0xff]
  %v3743 = vld [vmem:[#allocation4 + $0x50] sm:$0xf]
  %v3744 = vld [vmem:[#allocation4 + $0x54] sm:$0xff]
  %v3745 = vld [vmem:[#allocation4 + $0x5c] sm:$0xf]
  %v3746 = vld [vmem:[#allocation4 + $0x60] sm:$0xff]
  %v3747 = vld [vmem:[#allocation4 + $0x68] sm:$0xf]
  %v3748 = vld [vmem:[#allocation4 + $0x6c] sm:$0xff]
  %v3749 = vld [vmem:[#allocation4 + $0x74] sm:$0xf]
  %v3750 = vld [vmem:[#allocation4 + $0x78] sm:$0xff]
  %v3751 = vld [vmem:[#allocation4 + $0x80] sm:$0xf]
  %v3752 = vld [vmem:[#allocation4 + $0x84] sm:$0xff]
  %v3753 = vld [vmem:[#allocation4 + $0x8c] sm:$0xf]
  %v3754 = vld [vmem:[#allocation4 + $0x90] sm:$0xff]
  %v3755 = vld [vmem:[#allocation4 + $0x98] sm:$0xf]
  %v3756 = vld [vmem:[#allocation4 + $0x9c] sm:$0xff]
  %v3757 = vld [vmem:[#allocation4 + $0xa4] sm:$0xf]
  %v3758 = vld [vmem:[#allocation4 + $0xa8] sm:$0xff]
  %v3759 = vld [vmem:[#allocation4 + $0xb0] sm:$0xf]
  %v3760 = vld [vmem:[#allocation4 + $0xb4] sm:$0xff]
  %v3761 = vld [vmem:[#allocation4 + $0xbc] sm:$0xf]
  %v3762 = vld [vmem:[%s10 + $0x2] sm:$0x1]
  %v3763 = vlaneseq
  %v3764 = vshrl.u32 %v3763, 7
  %v3765 = vsub.s32 0, %v3764
  %v3766 = vrot.slane %v3762, %v3765
  %v3799 = vunpack.c.l.b16 %v3730
  %v3800 = vunpack.c.h.b16 %v3730
  %v3801 = vunpack.c.l.b16 %v3731
  %v3802 = vunpack.c.l.b16 %v3732
  %v3803 = vunpack.c.h.b16 %v3732
  %v3804 = vunpack.c.l.b16 %v3733
  %v3805 = vunpack.c.l.b16 %v3734
  %v3806 = vunpack.c.h.b16 %v3734
  %v3807 = vunpack.c.l.b16 %v3735
  %v3808 = vunpack.c.l.b16 %v3736
  %v3809 = vunpack.c.h.b16 %v3736
  %v3810 = vunpack.c.l.b16 %v3737
  %v3811 = vunpack.c.l.b16 %v3738
  %v3812 = vunpack.c.h.b16 %v3738
  %v3813 = vunpack.c.l.b16 %v3739
  %v3814 = vunpack.c.l.b16 %v3740
  %v3815 = vunpack.c.h.b16 %v3740
  %v3816 = vunpack.c.l.b16 %v3741
  %v3817 = vunpack.c.l.b16 %v3742
  %v3818 = vunpack.c.h.b16 %v3742
  %v3819 = vunpack.c.l.b16 %v3743
  %v3820 = vunpack.c.l.b16 %v3744
  %v3821 = vunpack.c.h.b16 %v3744
  %v3822 = vunpack.c.l.b16 %v3745
  %v3823 = vunpack.c.l.b16 %v3746
  %v3824 = vunpack.c.h.b16 %v3746
  %v3825 = vunpack.c.l.b16 %v3747
  %v3826 = vunpack.c.l.b16 %v3748
  %v3827 = vunpack.c.h.b16 %v3748
  %v3828 = vunpack.c.l.b16 %v3749
  %v3829 = vunpack.c.l.b16 %v3750
  %v3830 = vunpack.c.h.b16 %v3750
  %v3831 = vunpack.c.l.b16 %v3751
  %v3832 = vunpack.c.l.b16 %v3752
  %v3833 = vunpack.c.h.b16 %v3752
  %v3834 = vunpack.c.l.b16 %v3753
  %v3835 = vunpack.c.l.b16 %v3754
  %v3836 = vunpack.c.h.b16 %v3754
  %v3837 = vunpack.c.l.b16 %v3755
  %v3838 = vunpack.c.l.b16 %v3756
  %v3839 = vunpack.c.h.b16 %v3756
  %v3840 = vunpack.c.l.b16 %v3757
  %v3841 = vunpack.c.l.b16 %v3758
  %v3842 = vunpack.c.h.b16 %v3758
  %v3843 = vunpack.c.l.b16 %v3759
  %v3844 = vunpack.c.l.b16 %v3760
  %v3845 = vunpack.c.h.b16 %v3760
  %v3846 = vunpack.c.l.b16 %v3761
  %v3847 = vpack.c.b16 %v3802, %v3799
  %v3848 = vpack.c.b16 %v3803, %v3800
  %v3849 = vpack.c.b16 %v3804, %v3801
  %v3850 = vpack.c.b16 %v3808, %v3805
  %v3851 = vpack.c.b16 %v3809, %v3806
  %v3852 = vpack.c.b16 %v3810, %v3807
  %v3853 = vpack.c.b16 %v3814, %v3811
  %v3854 = vpack.c.b16 %v3815, %v3812
  %v3855 = vpack.c.b16 %v3816, %v3813
  %v3856 = vpack.c.b16 %v3820, %v3817
  %v3857 = vpack.c.b16 %v3821, %v3818
  %v3858 = vpack.c.b16 %v3822, %v3819
  %v3859 = vpack.c.b16 %v3826, %v3823
  %v3860 = vpack.c.b16 %v3827, %v3824
  %v3861 = vpack.c.b16 %v3828, %v3825
  %v3862 = vpack.c.b16 %v3832, %v3829
  %v3863 = vpack.c.b16 %v3833, %v3830
  %v3864 = vpack.c.b16 %v3834, %v3831
  %v3865 = vpack.c.b16 %v3838, %v3835
  %v3866 = vpack.c.b16 %v3839, %v3836
  %v3867 = vpack.c.b16 %v3840, %v3837
  %v3868 = vpack.c.b16 %v3844, %v3841
  %v3869 = vpack.c.b16 %v3845, %v3842
  %v3870 = vpack.c.b16 %v3846, %v3843
  %3895 = vmatprep.subr.bf16.mxu0 %v3869
  %3896 = vmatpush1.bf16.msra.mxu0 %v3868
  %3897 = vmatprep.subr.bf16.mxu0 %v3866
  %3898 = vmatpush1.bf16.msra.mxu0 %v3865
  %3899 = vmatprep.subr.bf16.mxu0 %v3863
  %3900 = vmatpush1.bf16.msra.mxu0 %v3862
  %3901 = vmatprep.subr.bf16.mxu0 %v3860
  %3902 = vmatpush1.bf16.msra.mxu0 %v3859
  %3903 = vmatprep.subr.bf16.mxu0 %v3857
  %3904 = vmatpush1.bf16.msra.mxu0 %v3856
  %3905 = vmatprep.subr.bf16.mxu0 %v3854
  %3906 = vmatpush1.bf16.msra.mxu0 %v3853
  %3907 = vmatprep.subr.bf16.mxu0 %v3851
  %3908 = vmatpush1.bf16.msra.mxu0 %v3850
  %3909 = vmatprep.subr.bf16.mxu0 %v3848
  %3910 = vmatpush1.bf16.msra.mxu0 %v3847
  %3911 = vmatprep.subr.bf16.mxu0 0
  %3912 = vmatpush2.bf16.msra.mxu0 0
  %3913 = vmatprep.subr.bf16.mxu0 0
  %3914 = vmatpush2.bf16.msra.mxu0 0
  %3915 = vmatprep.subr.bf16.mxu0 0
  %3916 = vmatpush2.bf16.msra.mxu0 0
  %3917 = vmatprep.subr.bf16.mxu0 0
  %3918 = vmatpush2.bf16.msra.mxu0 0
  %3919 = vmatprep.subr.bf16.mxu0 0
  %3920 = vmatpush2.bf16.msra.mxu0 0
  %3921 = vmatprep.subr.bf16.mxu0 0
  %3922 = vmatpush2.bf16.msra.mxu0 0
  %3923 = vmatprep.subr.bf16.mxu0 0
  %3924 = vmatpush2.bf16.msra.mxu0 0
  %3925 = vmatprep.subr.bf16.mxu0 0
  %3926 = vmatpush2.bf16.msra.mxu0 0
  %3927 = vmatprep.mubr.bf16.mxu0 0
  %3928 = vmatmul.mubr.bf16.gmra.mxu0 0
  %v3929 = vpop.f32.mrf.mxu0
  %v3930 = vadd.f32 0.0, %v3929
  %v3931 = vpop.f32.mrf.mxu0
  %v3932 = vadd.f32 0.0, %v3931
  %v3933 = vpop.f32.mrf.mxu0
  %v3934 = vpop.f32.mrf.mxu0
  %3935 = vdwg.mxu0
  %3936 = vmatprep.subr.bf16.mxu0 0
  %3937 = vmatpush1.bf16.msra.mxu0 %v3870
  %3938 = vmatprep.subr.bf16.mxu0 0
  %3939 = vmatpush1.bf16.msra.mxu0 %v3867
  %3940 = vmatprep.subr.bf16.mxu0 0
  %3941 = vmatpush1.bf16.msra.mxu0 %v3864
  %3942 = vmatprep.subr.bf16.mxu0 0
  %3943 = vmatpush1.bf16.msra.mxu0 %v3861
  %3944 = vmatprep.subr.bf16.mxu0 0
  %3945 = vmatpush1.bf16.msra.mxu0 %v3858
  %3946 = vmatprep.subr.bf16.mxu0 0
  %3947 = vmatpush1.bf16.msra.mxu0 %v3855
  %3948 = vmatprep.subr.bf16.mxu0 0
  %3949 = vmatpush1.bf16.msra.mxu0 %v3852
  %3950 = vmatprep.subr.bf16.mxu0 0
  %3951 = vmatpush1.bf16.msra.mxu0 %v3849
  %3952 = vmatprep.subr.bf16.mxu0 0
  %3953 = vmatpush2.bf16.msra.mxu0 0
  %3954 = vmatprep.subr.bf16.mxu0 0
  %3955 = vmatpush2.bf16.msra.mxu0 0
  %3956 = vmatprep.subr.bf16.mxu0 0
  %3957 = vmatpush2.bf16.msra.mxu0 0
  %3958 = vmatprep.subr.bf16.mxu0 0
  %3959 = vmatpush2.bf16.msra.mxu0 0
  %3960 = vmatprep.subr.bf16.mxu0 0
  %3961 = vmatpush2.bf16.msra.mxu0 0
  %3962 = vmatprep.subr.bf16.mxu0 0
  %3963 = vmatpush2.bf16.msra.mxu0 0
  %3964 = vmatprep.subr.bf16.mxu0 0
  %3965 = vmatpush2.bf16.msra.mxu0 0
  %3966 = vmatprep.subr.bf16.mxu0 0
  %3967 = vmatpush2.bf16.msra.mxu0 0
  %3968 = vmatprep.mubr.bf16.mxu0 0
  %3969 = vmatmul.mubr.bf16.gmra.mxu0 0
  %v3970 = vpop.f32.mrf.mxu0
  %v3971 = vadd.f32 0.0, %v3970
  %v3972 = vpop.f32.mrf.mxu0
  %v3973 = vpop.f32.mrf.mxu0
  %v3974 = vpop.f32.mrf.mxu0
  %3975 = vdwg.mxu0
  %v3976 = vadd.f32 %v3567, %v3930
  %v3977 = vxor.u32 %v3976, 2147483648
  %v3978 = vmul.f32 %v3977, 1.442695
  %v3979 = vpow.pop %v3978
  %v3980 = vadd.f32 %v3979, 1.0
  %v3981 = vrcp.pop %v3980
  %v3982 = vmul.f32 1.0, %v3981
  %v3983 = vadd.f32 %v3569, %v3932
  %v3984 = vxor.u32 %v3983, 2147483648
  %v3985 = vmul.f32 %v3984, 1.442695
  %v3986 = vpow.pop %v3985
  %v3987 = vadd.f32 %v3986, 1.0
  %v3988 = vrcp.pop %v3987
  %v3989 = vmul.f32 1.0, %v3988
  %v3990 = vadd.f32 %v3971, %v3766
  %v3991 = vmul.f32 %v3982, %v3990
  %v3992 = vadd.f32 %v3640, %v3991
  %v3993 = vtanh.pop %v3992
  %v3994 = vsub.f32 1.0, %v3989
  %v3995 = vmul.f32 %v3994, %v3993
  %v3996 = vmul.f32 %v3989, 0.0
  %v3997 = vadd.f32 %v3995, %v3996
  %v3998 = vpack.c.bf16 %v3997, %v3997
  %3999 = vmatprep.subr.bf16.mxu0 %v3869
  %4000 = vmatpush1.bf16.msra.mxu0 %v3868
  %4001 = vmatprep.subr.bf16.mxu0 %v3866
  %4002 = vmatpush1.bf16.msra.mxu0 %v3865
  %4003 = vmatprep.subr.bf16.mxu0 %v3863
  %4004 = vmatpush1.bf16.msra.mxu0 %v3862
  %4005 = vmatprep.subr.bf16.mxu0 %v3860
  %4006 = vmatpush1.bf16.msra.mxu0 %v3859
  %4007 = vmatprep.subr.bf16.mxu0 %v3857
  %4008 = vmatpush1.bf16.msra.mxu0 %v3856
  %4009 = vmatprep.subr.bf16.mxu0 %v3854
  %4010 = vmatpush1.bf16.msra.mxu0 %v3853
  %4011 = vmatprep.subr.bf16.mxu0 %v3851
  %4012 = vmatpush1.bf16.msra.mxu0 %v3850
  %4013 = vmatprep.subr.bf16.mxu0 %v3848
  %4014 = vmatpush1.bf16.msra.mxu0 %v3847
  %4015 = vmatprep.subr.bf16.mxu0 0
  %4016 = vmatpush2.bf16.msra.mxu0 0
  %4017 = vmatprep.subr.bf16.mxu0 0
  %4018 = vmatpush2.bf16.msra.mxu0 0
  %4019 = vmatprep.subr.bf16.mxu0 0
  %4020 = vmatpush2.bf16.msra.mxu0 0
  %4021 = vmatprep.subr.bf16.mxu0 0
  %4022 = vmatpush2.bf16.msra.mxu0 0
  %4023 = vmatprep.subr.bf16.mxu0 0
  %4024 = vmatpush2.bf16.msra.mxu0 0
  %4025 = vmatprep.subr.bf16.mxu0 0
  %4026 = vmatpush2.bf16.msra.mxu0 0
  %4027 = vmatprep.subr.bf16.mxu0 0
  %4028 = vmatpush2.bf16.msra.mxu0 0
  %4029 = vmatprep.subr.bf16.mxu0 0
  %4030 = vmatpush2.bf16.msra.mxu0 0
  %4031 = vmatprep.mubr.bf16.mxu0 0
  %4032 = vmatmul.mubr.bf16.gmra.mxu0 %v3998
  %v4033 = vpop.f32.mrf.mxu0
  %v4034 = vadd.f32 0.0, %v4033
  %v4035 = vpop.f32.mrf.mxu0
  %v4036 = vadd.f32 0.0, %v4035
  %v4037 = vpop.f32.mrf.mxu0
  %v4038 = vpop.f32.mrf.mxu0
  %4039 = vdwg.mxu0
  %4040 = vmatprep.subr.bf16.mxu0 0
  %4041 = vmatpush1.bf16.msra.mxu0 %v3870
  %4042 = vmatprep.subr.bf16.mxu0 0
  %4043 = vmatpush1.bf16.msra.mxu0 %v3867
  %4044 = vmatprep.subr.bf16.mxu0 0
  %4045 = vmatpush1.bf16.msra.mxu0 %v3864
  %4046 = vmatprep.subr.bf16.mxu0 0
  %4047 = vmatpush1.bf16.msra.mxu0 %v3861
  %4048 = vmatprep.subr.bf16.mxu0 0
  %4049 = vmatpush1.bf16.msra.mxu0 %v3858
  %4050 = vmatprep.subr.bf16.mxu0 0
  %4051 = vmatpush1.bf16.msra.mxu0 %v3855
  %4052 = vmatprep.subr.bf16.mxu0 0
  %4053 = vmatpush1.bf16.msra.mxu0 %v3852
  %4054 = vmatprep.subr.bf16.mxu0 0
  %4055 = vmatpush1.bf16.msra.mxu0 %v3849
  %4056 = vmatprep.subr.bf16.mxu0 0
  %4057 = vmatpush2.bf16.msra.mxu0 0
  %4058 = vmatprep.subr.bf16.mxu0 0
  %4059 = vmatpush2.bf16.msra.mxu0 0
  %4060 = vmatprep.subr.bf16.mxu0 0
  %4061 = vmatpush2.bf16.msra.mxu0 0
  %4062 = vmatprep.subr.bf16.mxu0 0
  %4063 = vmatpush2.bf16.msra.mxu0 0
  %4064 = vmatprep.subr.bf16.mxu0 0
  %4065 = vmatpush2.bf16.msra.mxu0 0
  %4066 = vmatprep.subr.bf16.mxu0 0
  %4067 = vmatpush2.bf16.msra.mxu0 0
  %4068 = vmatprep.subr.bf16.mxu0 0
  %4069 = vmatpush2.bf16.msra.mxu0 0
  %4070 = vmatprep.subr.bf16.mxu0 0
  %4071 = vmatpush2.bf16.msra.mxu0 0
  %4072 = vmatprep.mubr.bf16.mxu0 0
  %4073 = vmatmul.mubr.bf16.gmra.mxu0 %v3998
  %v4074 = vpop.f32.mrf.mxu0
  %v4075 = vadd.f32 0.0, %v4074
  %v4076 = vpop.f32.mrf.mxu0
  %v4077 = vpop.f32.mrf.mxu0
  %v4078 = vpop.f32.mrf.mxu0
  %4079 = vdwg.mxu0
  %v4080 = vadd.f32 %v3571, %v4034
  %v4081 = vxor.u32 %v4080, 2147483648
  %v4082 = vmul.f32 %v4081, 1.442695
  %v4083 = vpow.pop %v4082
  %v4084 = vadd.f32 %v4083, 1.0
  %v4085 = vrcp.pop %v4084
  %v4086 = vmul.f32 1.0, %v4085
  %v4087 = vadd.f32 %v3573, %v4036
  %v4088 = vxor.u32 %v4087, 2147483648
  %v4089 = vmul.f32 %v4088, 1.442695
  %v4090 = vpow.pop %v4089
  %v4091 = vadd.f32 %v4090, 1.0
  %v4092 = vrcp.pop %v4091
  %v4093 = vmul.f32 1.0, %v4092
  %v4094 = vadd.f32 %v4075, %v3766
  %v4095 = vmul.f32 %v4086, %v4094
  %v4096 = vadd.f32 %v3643, %v4095
  %v4097 = vtanh.pop %v4096
  %v4098 = vsub.f32 1.0, %v4093
  %v4099 = vmul.f32 %v4098, %v4097
  %v4100 = vmul.f32 %v4093, %v3997
  %v4101 = vadd.f32 %v4099, %v4100
  %v4102 = vpack.c.bf16 %v4101, %v4101
  %4103 = vmatprep.subr.bf16.mxu0 %v3869
  %4104 = vmatpush1.bf16.msra.mxu0 %v3868
  %4105 = vmatprep.subr.bf16.mxu0 %v3866
  %4106 = vmatpush1.bf16.msra.mxu0 %v3865
  %4107 = vmatprep.subr.bf16.mxu0 %v3863
  %4108 = vmatpush1.bf16.msra.mxu0 %v3862
  %4109 = vmatprep.subr.bf16.mxu0 %v3860
  %4110 = vmatpush1.bf16.msra.mxu0 %v3859
  %4111 = vmatprep.subr.bf16.mxu0 %v3857
  %4112 = vmatpush1.bf16.msra.mxu0 %v3856
  %4113 = vmatprep.subr.bf16.mxu0 %v3854
  %4114 = vmatpush1.bf16.msra.mxu0 %v3853
  %4115 = vmatprep.subr.bf16.mxu0 %v3851
  %4116 = vmatpush1.bf16.msra.mxu0 %v3850
  %4117 = vmatprep.subr.bf16.mxu0 %v3848
  %4118 = vmatpush1.bf16.msra.mxu0 %v3847
  %4119 = vmatprep.subr.bf16.mxu0 0
  %4120 = vmatpush2.bf16.msra.mxu0 0
  %4121 = vmatprep.subr.bf16.mxu0 0
  %4122 = vmatpush2.bf16.msra.mxu0 0
  %4123 = vmatprep.subr.bf16.mxu0 0
  %4124 = vmatpush2.bf16.msra.mxu0 0
  %4125 = vmatprep.subr.bf16.mxu0 0
  %4126 = vmatpush2.bf16.msra.mxu0 0
  %4127 = vmatprep.subr.bf16.mxu0 0
  %4128 = vmatpush2.bf16.msra.mxu0 0
  %4129 = vmatprep.subr.bf16.mxu0 0
  %4130 = vmatpush2.bf16.msra.mxu0 0
  %4131 = vmatprep.subr.bf16.mxu0 0
  %4132 = vmatpush2.bf16.msra.mxu0 0
  %4133 = vmatprep.subr.bf16.mxu0 0
  %4134 = vmatpush2.bf16.msra.mxu0 0
  %4135 = vmatprep.mubr.bf16.mxu0 0
  %4136 = vmatmul.mubr.bf16.gmra.mxu0 %v4102
  %v4137 = vpop.f32.mrf.mxu0
  %v4138 = vadd.f32 0.0, %v4137
  %v4139 = vpop.f32.mrf.mxu0
  %v4140 = vadd.f32 0.0, %v4139
  %v4141 = vpop.f32.mrf.mxu0
  %v4142 = vpop.f32.mrf.mxu0
  %4143 = vdwg.mxu0
  %4144 = vmatprep.subr.bf16.mxu0 0
  %4145 = vmatpush1.bf16.msra.mxu0 %v3870
  %4146 = vmatprep.subr.bf16.mxu0 0
  %4147 = vmatpush1.bf16.msra.mxu0 %v3867
  %4148 = vmatprep.subr.bf16.mxu0 0
  %4149 = vmatpush1.bf16.msra.mxu0 %v3864
  %4150 = vmatprep.subr.bf16.mxu0 0
  %4151 = vmatpush1.bf16.msra.mxu0 %v3861
  %4152 = vmatprep.subr.bf16.mxu0 0
  %4153 = vmatpush1.bf16.msra.mxu0 %v3858
  %4154 = vmatprep.subr.bf16.mxu0 0
  %4155 = vmatpush1.bf16.msra.mxu0 %v3855
  %4156 = vmatprep.subr.bf16.mxu0 0
  %4157 = vmatpush1.bf16.msra.mxu0 %v3852
  %4158 = vmatprep.subr.bf16.mxu0 0
  %4159 = vmatpush1.bf16.msra.mxu0 %v3849
  %4160 = vmatprep.subr.bf16.mxu0 0
  %4161 = vmatpush2.bf16.msra.mxu0 0
  %4162 = vmatprep.subr.bf16.mxu0 0
  %4163 = vmatpush2.bf16.msra.mxu0 0
  %4164 = vmatprep.subr.bf16.mxu0 0
  %4165 = vmatpush2.bf16.msra.mxu0 0
  %4166 = vmatprep.subr.bf16.mxu0 0
  %4167 = vmatpush2.bf16.msra.mxu0 0
  %4168 = vmatprep.subr.bf16.mxu0 0
  %4169 = vmatpush2.bf16.msra.mxu0 0
  %4170 = vmatprep.subr.bf16.mxu0 0
  %4171 = vmatpush2.bf16.msra.mxu0 0
  %4172 = vmatprep.subr.bf16.mxu0 0
  %4173 = vmatpush2.bf16.msra.mxu0 0
  %4174 = vmatprep.subr.bf16.mxu0 0
  %4175 = vmatpush2.bf16.msra.mxu0 0
  %4176 = vmatprep.mubr.bf16.mxu0 0
  %4177 = vmatmul.mubr.bf16.gmra.mxu0 %v4102
  %v4178 = vpop.f32.mrf.mxu0
  %v4179 = vadd.f32 0.0, %v4178
  %v4180 = vpop.f32.mrf.mxu0
  %v4181 = vpop.f32.mrf.mxu0
  %v4182 = vpop.f32.mrf.mxu0
  %4183 = vdwg.mxu0
  %v4184 = vadd.f32 %v3577, %v4138
  %v4185 = vxor.u32 %v4184, 2147483648
  %v4186 = vmul.f32 %v4185, 1.442695
  %v4187 = vpow.pop %v4186
  %v4188 = vadd.f32 %v4187, 1.0
  %v4189 = vrcp.pop %v4188
  %v4190 = vmul.f32 1.0, %v4189
  %v4191 = vadd.f32 %v3579, %v4140
  %v4192 = vxor.u32 %v4191, 2147483648
  %v4193 = vmul.f32 %v4192, 1.442695
  %v4194 = vpow.pop %v4193
  %v4195 = vadd.f32 %v4194, 1.0
  %v4196 = vrcp.pop %v4195
  %v4197 = vmul.f32 1.0, %v4196
  %v4198 = vadd.f32 %v4179, %v3766
  %v4199 = vmul.f32 %v4190, %v4198
  %v4200 = vadd.f32 %v3648, %v4199
  %v4201 = vtanh.pop %v4200
  %v4202 = vsub.f32 1.0, %v4197
  %v4203 = vmul.f32 %v4202, %v4201
  %v4204 = vmul.f32 %v4197, %v4101
  %v4205 = vadd.f32 %v4203, %v4204
  %v4206 = vpack.c.bf16 %v4205, %v4205
  %4207 = vmatprep.subr.bf16.mxu0 %v3869
  %4208 = vmatpush1.bf16.msra.mxu0 %v3868
  %4209 = vmatprep.subr.bf16.mxu0 %v3866
  %4210 = vmatpush1.bf16.msra.mxu0 %v3865
  %4211 = vmatprep.subr.bf16.mxu0 %v3863
  %4212 = vmatpush1.bf16.msra.mxu0 %v3862
  %4213 = vmatprep.subr.bf16.mxu0 %v3860
  %4214 = vmatpush1.bf16.msra.mxu0 %v3859
  %4215 = vmatprep.subr.bf16.mxu0 %v3857
  %4216 = vmatpush1.bf16.msra.mxu0 %v3856
  %4217 = vmatprep.subr.bf16.mxu0 %v3854
  %4218 = vmatpush1.bf16.msra.mxu0 %v3853
  %4219 = vmatprep.subr.bf16.mxu0 %v3851
  %4220 = vmatpush1.bf16.msra.mxu0 %v3850
  %4221 = vmatprep.subr.bf16.mxu0 %v3848
  %4222 = vmatpush1.bf16.msra.mxu0 %v3847
  %4223 = vmatprep.subr.bf16.mxu0 0
  %4224 = vmatpush2.bf16.msra.mxu0 0
  %4225 = vmatprep.subr.bf16.mxu0 0
  %4226 = vmatpush2.bf16.msra.mxu0 0
  %4227 = vmatprep.subr.bf16.mxu0 0
  %4228 = vmatpush2.bf16.msra.mxu0 0
  %4229 = vmatprep.subr.bf16.mxu0 0
  %4230 = vmatpush2.bf16.msra.mxu0 0
  %4231 = vmatprep.subr.bf16.mxu0 0
  %4232 = vmatpush2.bf16.msra.mxu0 0
  %4233 = vmatprep.subr.bf16.mxu0 0
  %4234 = vmatpush2.bf16.msra.mxu0 0
  %4235 = vmatprep.subr.bf16.mxu0 0
  %4236 = vmatpush2.bf16.msra.mxu0 0
  %4237 = vmatprep.subr.bf16.mxu0 0
  %4238 = vmatpush2.bf16.msra.mxu0 0
  %4239 = vmatprep.mubr.bf16.mxu0 0
  %4240 = vmatmul.mubr.bf16.gmra.mxu0 %v4206
  %v4241 = vpop.f32.mrf.mxu0
  %v4242 = vadd.f32 0.0, %v4241
  %v4243 = vpop.f32.mrf.mxu0
  %v4244 = vadd.f32 0.0, %v4243
  %v4245 = vpop.f32.mrf.mxu0
  %v4246 = vpop.f32.mrf.mxu0
  %4247 = vdwg.mxu0
  %4248 = vmatprep.subr.bf16.mxu0 0
  %4249 = vmatpush1.bf16.msra.mxu0 %v3870
  %4250 = vmatprep.subr.bf16.mxu0 0
  %4251 = vmatpush1.bf16.msra.mxu0 %v3867
  %4252 = vmatprep.subr.bf16.mxu0 0
  %4253 = vmatpush1.bf16.msra.mxu0 %v3864
  %4254 = vmatprep.subr.bf16.mxu0 0
  %4255 = vmatpush1.bf16.msra.mxu0 %v3861
  %4256 = vmatprep.subr.bf16.mxu0 0
  %4257 = vmatpush1.bf16.msra.mxu0 %v3858
  %4258 = vmatprep.subr.bf16.mxu0 0
  %4259 = vmatpush1.bf16.msra.mxu0 %v3855
  %4260 = vmatprep.subr.bf16.mxu0 0
  %4261 = vmatpush1.bf16.msra.mxu0 %v3852
  %4262 = vmatprep.subr.bf16.mxu0 0
  %4263 = vmatpush1.bf16.msra.mxu0 %v3849
  %4264 = vmatprep.subr.bf16.mxu0 0
  %4265 = vmatpush2.bf16.msra.mxu0 0
  %4266 = vmatprep.subr.bf16.mxu0 0
  %4267 = vmatpush2.bf16.msra.mxu0 0
  %4268 = vmatprep.subr.bf16.mxu0 0
  %4269 = vmatpush2.bf16.msra.mxu0 0
  %4270 = vmatprep.subr.bf16.mxu0 0
  %4271 = vmatpush2.bf16.msra.mxu0 0
  %4272 = vmatprep.subr.bf16.mxu0 0
  %4273 = vmatpush2.bf16.msra.mxu0 0
  %4274 = vmatprep.subr.bf16.mxu0 0
  %4275 = vmatpush2.bf16.msra.mxu0 0
  %4276 = vmatprep.subr.bf16.mxu0 0
  %4277 = vmatpush2.bf16.msra.mxu0 0
  %4278 = vmatprep.subr.bf16.mxu0 0
  %4279 = vmatpush2.bf16.msra.mxu0 0
  %4280 = vmatprep.mubr.bf16.mxu0 0
  %4281 = vmatmul.mubr.bf16.gmra.mxu0 %v4206
  %v4282 = vpop.f32.mrf.mxu0
  %v4283 = vadd.f32 0.0, %v4282
  %v4284 = vpop.f32.mrf.mxu0
  %v4285 = vpop.f32.mrf.mxu0
  %v4286 = vpop.f32.mrf.mxu0
  %4287 = vdwg.mxu0
  %v4288 = vadd.f32 %v3581, %v4242
  %v4289 = vxor.u32 %v4288, 2147483648
  %v4290 = vmul.f32 %v4289, 1.442695
  %v4291 = vpow.pop %v4290
  %v4292 = vadd.f32 %v4291, 1.0
  %v4293 = vrcp.pop %v4292
  %v4294 = vmul.f32 1.0, %v4293
  %v4295 = vadd.f32 %v3583, %v4244
  %v4296 = vxor.u32 %v4295, 2147483648
  %v4297 = vmul.f32 %v4296, 1.442695
  %v4298 = vpow.pop %v4297
  %v4299 = vadd.f32 %v4298, 1.0
  %v4300 = vrcp.pop %v4299
  %v4301 = vmul.f32 1.0, %v4300
  %v4302 = vadd.f32 %v4283, %v3766
  %v4303 = vmul.f32 %v4294, %v4302
  %v4304 = vadd.f32 %v3651, %v4303
  %v4305 = vtanh.pop %v4304
  %v4306 = vsub.f32 1.0, %v4301
  %v4307 = vmul.f32 %v4306, %v4305
  %v4308 = vmul.f32 %v4301, %v4205
  %v4309 = vadd.f32 %v4307, %v4308
  %v4310 = vpack.c.bf16 %v4309, %v4309
  %4311 = vmatprep.subr.bf16.mxu0 %v3869
  %4312 = vmatpush1.bf16.msra.mxu0 %v3868
  %4313 = vmatprep.subr.bf16.mxu0 %v3866
  %4314 = vmatpush1.bf16.msra.mxu0 %v3865
  %4315 = vmatprep.subr.bf16.mxu0 %v3863
  %4316 = vmatpush1.bf16.msra.mxu0 %v3862
  %4317 = vmatprep.subr.bf16.mxu0 %v3860
  %4318 = vmatpush1.bf16.msra.mxu0 %v3859
  %4319 = vmatprep.subr.bf16.mxu0 %v3857
  %4320 = vmatpush1.bf16.msra.mxu0 %v3856
  %4321 = vmatprep.subr.bf16.mxu0 %v3854
  %4322 = vmatpush1.bf16.msra.mxu0 %v3853
  %4323 = vmatprep.subr.bf16.mxu0 %v3851
  %4324 = vmatpush1.bf16.msra.mxu0 %v3850
  %4325 = vmatprep.subr.bf16.mxu0 %v3848
  %4326 = vmatpush1.bf16.msra.mxu0 %v3847
  %4327 = vmatprep.subr.bf16.mxu0 0
  %4328 = vmatpush2.bf16.msra.mxu0 0
  %4329 = vmatprep.subr.bf16.mxu0 0
  %4330 = vmatpush2.bf16.msra.mxu0 0
  %4331 = vmatprep.subr.bf16.mxu0 0
  %4332 = vmatpush2.bf16.msra.mxu0 0
  %4333 = vmatprep.subr.bf16.mxu0 0
  %4334 = vmatpush2.bf16.msra.mxu0 0
  %4335 = vmatprep.subr.bf16.mxu0 0
  %4336 = vmatpush2.bf16.msra.mxu0 0
  %4337 = vmatprep.subr.bf16.mxu0 0
  %4338 = vmatpush2.bf16.msra.mxu0 0
  %4339 = vmatprep.subr.bf16.mxu0 0
  %4340 = vmatpush2.bf16.msra.mxu0 0
  %4341 = vmatprep.subr.bf16.mxu0 0
  %4342 = vmatpush2.bf16.msra.mxu0 0
  %4343 = vmatprep.mubr.bf16.mxu0 0
  %4344 = vmatmul.mubr.bf16.gmra.mxu0 %v4310
  %v4345 = vpop.f32.mrf.mxu0
  %v4346 = vadd.f32 0.0, %v4345
  %v4347 = vpop.f32.mrf.mxu0
  %v4348 = vadd.f32 0.0, %v4347
  %v4349 = vpop.f32.mrf.mxu0
  %v4350 = vpop.f32.mrf.mxu0
  %4351 = vdwg.mxu0
  %4352 = vmatprep.subr.bf16.mxu0 0
  %4353 = vmatpush1.bf16.msra.mxu0 %v3870
  %4354 = vmatprep.subr.bf16.mxu0 0
  %4355 = vmatpush1.bf16.msra.mxu0 %v3867
  %4356 = vmatprep.subr.bf16.mxu0 0
  %4357 = vmatpush1.bf16.msra.mxu0 %v3864
  %4358 = vmatprep.subr.bf16.mxu0 0
  %4359 = vmatpush1.bf16.msra.mxu0 %v3861
  %4360 = vmatprep.subr.bf16.mxu0 0
  %4361 = vmatpush1.bf16.msra.mxu0 %v3858
  %4362 = vmatprep.subr.bf16.mxu0 0
  %4363 = vmatpush1.bf16.msra.mxu0 %v3855
  %4364 = vmatprep.subr.bf16.mxu0 0
  %4365 = vmatpush1.bf16.msra.mxu0 %v3852
  %4366 = vmatprep.subr.bf16.mxu0 0
  %4367 = vmatpush1.bf16.msra.mxu0 %v3849
  %4368 = vmatprep.subr.bf16.mxu0 0
  %4369 = vmatpush2.bf16.msra.mxu0 0
  %4370 = vmatprep.subr.bf16.mxu0 0
  %4371 = vmatpush2.bf16.msra.mxu0 0
  %4372 = vmatprep.subr.bf16.mxu0 0
  %4373 = vmatpush2.bf16.msra.mxu0 0
  %4374 = vmatprep.subr.bf16.mxu0 0
  %4375 = vmatpush2.bf16.msra.mxu0 0
  %4376 = vmatprep.subr.bf16.mxu0 0
  %4377 = vmatpush2.bf16.msra.mxu0 0
  %4378 = vmatprep.subr.bf16.mxu0 0
  %4379 = vmatpush2.bf16.msra.mxu0 0
  %4380 = vmatprep.subr.bf16.mxu0 0
  %4381 = vmatpush2.bf16.msra.mxu0 0
  %4382 = vmatprep.subr.bf16.mxu0 0
  %4383 = vmatpush2.bf16.msra.mxu0 0
  %4384 = vmatprep.mubr.bf16.mxu0 0
  %4385 = vmatmul.mubr.bf16.gmra.mxu0 %v4310
  %v4386 = vpop.f32.mrf.mxu0
  %v4387 = vadd.f32 0.0, %v4386
  %v4388 = vpop.f32.mrf.mxu0
  %v4389 = vpop.f32.mrf.mxu0
  %v4390 = vpop.f32.mrf.mxu0
  %4391 = vdwg.mxu0
  %v4392 = vadd.f32 %v3587, %v4346
  %v4393 = vxor.u32 %v4392, 2147483648
  %v4394 = vmul.f32 %v4393, 1.442695
  %v4395 = vpow.pop %v4394
  %v4396 = vadd.f32 %v4395, 1.0
  %v4397 = vrcp.pop %v4396
  %v4398 = vmul.f32 1.0, %v4397
  %v4399 = vadd.f32 %v3589, %v4348
  %v4400 = vxor.u32 %v4399, 2147483648
  %v4401 = vmul.f32 %v4400, 1.442695
  %v4402 = vpow.pop %v4401
  %v4403 = vadd.f32 %v4402, 1.0
  %v4404 = vrcp.pop %v4403
  %v4405 = vmul.f32 1.0, %v4404
  %v4406 = vadd.f32 %v4387, %v3766
  %v4407 = vmul.f32 %v4398, %v4406
  %v4408 = vadd.f32 %v3656, %v4407
  %v4409 = vtanh.pop %v4408
  %v4410 = vsub.f32 1.0, %v4405
  %v4411 = vmul.f32 %v4410, %v4409
  %v4412 = vmul.f32 %v4405, %v4309
  %v4413 = vadd.f32 %v4411, %v4412
  %v4414 = vpack.c.bf16 %v4413, %v4413
  %4415 = vmatprep.subr.bf16.mxu0 %v3869
  %4416 = vmatpush1.bf16.msra.mxu0 %v3868
  %4417 = vmatprep.subr.bf16.mxu0 %v3866
  %4418 = vmatpush1.bf16.msra.mxu0 %v3865
  %4419 = vmatprep.subr.bf16.mxu0 %v3863
  %4420 = vmatpush1.bf16.msra.mxu0 %v3862
  %4421 = vmatprep.subr.bf16.mxu0 %v3860
  %4422 = vmatpush1.bf16.msra.mxu0 %v3859
  %4423 = vmatprep.subr.bf16.mxu0 %v3857
  %4424 = vmatpush1.bf16.msra.mxu0 %v3856
  %4425 = vmatprep.subr.bf16.mxu0 %v3854
  %4426 = vmatpush1.bf16.msra.mxu0 %v3853
  %4427 = vmatprep.subr.bf16.mxu0 %v3851
  %4428 = vmatpush1.bf16.msra.mxu0 %v3850
  %4429 = vmatprep.subr.bf16.mxu0 %v3848
  %4430 = vmatpush1.bf16.msra.mxu0 %v3847
  %4431 = vmatprep.subr.bf16.mxu0 0
  %4432 = vmatpush2.bf16.msra.mxu0 0
  %4433 = vmatprep.subr.bf16.mxu0 0
  %4434 = vmatpush2.bf16.msra.mxu0 0
  %4435 = vmatprep.subr.bf16.mxu0 0
  %4436 = vmatpush2.bf16.msra.mxu0 0
  %4437 = vmatprep.subr.bf16.mxu0 0
  %4438 = vmatpush2.bf16.msra.mxu0 0
  %4439 = vmatprep.subr.bf16.mxu0 0
  %4440 = vmatpush2.bf16.msra.mxu0 0
  %4441 = vmatprep.subr.bf16.mxu0 0
  %4442 = vmatpush2.bf16.msra.mxu0 0
  %4443 = vmatprep.subr.bf16.mxu0 0
  %4444 = vmatpush2.bf16.msra.mxu0 0
  %4445 = vmatprep.subr.bf16.mxu0 0
  %4446 = vmatpush2.bf16.msra.mxu0 0
  %4447 = vmatprep.mubr.bf16.mxu0 0
  %4448 = vmatmul.mubr.bf16.gmra.mxu0 %v4414
  %v4449 = vpop.f32.mrf.mxu0
  %v4450 = vadd.f32 0.0, %v4449
  %v4451 = vpop.f32.mrf.mxu0
  %v4452 = vadd.f32 0.0, %v4451
  %v4453 = vpop.f32.mrf.mxu0
  %v4454 = vpop.f32.mrf.mxu0
  %4455 = vdwg.mxu0
  %4456 = vmatprep.subr.bf16.mxu0 0
  %4457 = vmatpush1.bf16.msra.mxu0 %v3870
  %4458 = vmatprep.subr.bf16.mxu0 0
  %4459 = vmatpush1.bf16.msra.mxu0 %v3867
  %4460 = vmatprep.subr.bf16.mxu0 0
  %4461 = vmatpush1.bf16.msra.mxu0 %v3864
  %4462 = vmatprep.subr.bf16.mxu0 0
  %4463 = vmatpush1.bf16.msra.mxu0 %v3861
  %4464 = vmatprep.subr.bf16.mxu0 0
  %4465 = vmatpush1.bf16.msra.mxu0 %v3858
  %4466 = vmatprep.subr.bf16.mxu0 0
  %4467 = vmatpush1.bf16.msra.mxu0 %v3855
  %4468 = vmatprep.subr.bf16.mxu0 0
  %4469 = vmatpush1.bf16.msra.mxu0 %v3852
  %4470 = vmatprep.subr.bf16.mxu0 0
  %4471 = vmatpush1.bf16.msra.mxu0 %v3849
  %4472 = vmatprep.subr.bf16.mxu0 0
  %4473 = vmatpush2.bf16.msra.mxu0 0
  %4474 = vmatprep.subr.bf16.mxu0 0
  %4475 = vmatpush2.bf16.msra.mxu0 0
  %4476 = vmatprep.subr.bf16.mxu0 0
  %4477 = vmatpush2.bf16.msra.mxu0 0
  %4478 = vmatprep.subr.bf16.mxu0 0
  %4479 = vmatpush2.bf16.msra.mxu0 0
  %4480 = vmatprep.subr.bf16.mxu0 0
  %4481 = vmatpush2.bf16.msra.mxu0 0
  %4482 = vmatprep.subr.bf16.mxu0 0
  %4483 = vmatpush2.bf16.msra.mxu0 0
  %4484 = vmatprep.subr.bf16.mxu0 0
  %4485 = vmatpush2.bf16.msra.mxu0 0
  %4486 = vmatprep.subr.bf16.mxu0 0
  %4487 = vmatpush2.bf16.msra.mxu0 0
  %4488 = vmatprep.mubr.bf16.mxu0 0
  %4489 = vmatmul.mubr.bf16.gmra.mxu0 %v4414
  %v4490 = vpop.f32.mrf.mxu0
  %v4491 = vadd.f32 0.0, %v4490
  %v4492 = vpop.f32.mrf.mxu0
  %v4493 = vpop.f32.mrf.mxu0
  %v4494 = vpop.f32.mrf.mxu0
  %4495 = vdwg.mxu0
  %v4496 = vadd.f32 %v3591, %v4450
  %v4497 = vxor.u32 %v4496, 2147483648
  %v4498 = vmul.f32 %v4497, 1.442695
  %v4499 = vpow.pop %v4498
  %v4500 = vadd.f32 %v4499, 1.0
  %v4501 = vrcp.pop %v4500
  %v4502 = vmul.f32 1.0, %v4501
  %v4503 = vadd.f32 %v3593, %v4452
  %v4504 = vxor.u32 %v4503, 2147483648
  %v4505 = vmul.f32 %v4504, 1.442695
  %v4506 = vpow.pop %v4505
  %v4507 = vadd.f32 %v4506, 1.0
  %v4508 = vrcp.pop %v4507
  %v4509 = vmul.f32 1.0, %v4508
  %v4510 = vadd.f32 %v4491, %v3766
  %v4511 = vmul.f32 %v4502, %v4510
  %v4512 = vadd.f32 %v3659, %v4511
  %v4513 = vtanh.pop %v4512
  %v4514 = vsub.f32 1.0, %v4509
  %v4515 = vmul.f32 %v4514, %v4513
  %v4516 = vmul.f32 %v4509, %v4413
  %v4517 = vadd.f32 %v4515, %v4516
  %v4518 = vpack.c.bf16 %v4517, %v4517
  %4519 = vmatprep.subr.bf16.mxu0 %v3869
  %4520 = vmatpush1.bf16.msra.mxu0 %v3868
  %4521 = vmatprep.subr.bf16.mxu0 %v3866
  %4522 = vmatpush1.bf16.msra.mxu0 %v3865
  %4523 = vmatprep.subr.bf16.mxu0 %v3863
  %4524 = vmatpush1.bf16.msra.mxu0 %v3862
  %4525 = vmatprep.subr.bf16.mxu0 %v3860
  %4526 = vmatpush1.bf16.msra.mxu0 %v3859
  %4527 = vmatprep.subr.bf16.mxu0 %v3857
  %4528 = vmatpush1.bf16.msra.mxu0 %v3856
  %4529 = vmatprep.subr.bf16.mxu0 %v3854
  %4530 = vmatpush1.bf16.msra.mxu0 %v3853
  %4531 = vmatprep.subr.bf16.mxu0 %v3851
  %4532 = vmatpush1.bf16.msra.mxu0 %v3850
  %4533 = vmatprep.subr.bf16.mxu0 %v3848
  %4534 = vmatpush1.bf16.msra.mxu0 %v3847
  %4535 = vmatprep.subr.bf16.mxu0 0
  %4536 = vmatpush2.bf16.msra.mxu0 0
  %4537 = vmatprep.subr.bf16.mxu0 0
  %4538 = vmatpush2.bf16.msra.mxu0 0
  %4539 = vmatprep.subr.bf16.mxu0 0
  %4540 = vmatpush2.bf16.msra.mxu0 0
  %4541 = vmatprep.subr.bf16.mxu0 0
  %4542 = vmatpush2.bf16.msra.mxu0 0
  %4543 = vmatprep.subr.bf16.mxu0 0
  %4544 = vmatpush2.bf16.msra.mxu0 0
  %4545 = vmatprep.subr.bf16.mxu0 0
  %4546 = vmatpush2.bf16.msra.mxu0 0
  %4547 = vmatprep.subr.bf16.mxu0 0
  %4548 = vmatpush2.bf16.msra.mxu0 0
  %4549 = vmatprep.subr.bf16.mxu0 0
  %4550 = vmatpush2.bf16.msra.mxu0 0
  %4551 = vmatprep.mubr.bf16.mxu0 0
  %4552 = vmatmul.mubr.bf16.gmra.mxu0 %v4518
  %v4553 = vpop.f32.mrf.mxu0
  %v4554 = vadd.f32 0.0, %v4553
  %v4555 = vpop.f32.mrf.mxu0
  %v4556 = vadd.f32 0.0, %v4555
  %v4557 = vpop.f32.mrf.mxu0
  %v4558 = vpop.f32.mrf.mxu0
  %4559 = vdwg.mxu0
  %4560 = vmatprep.subr.bf16.mxu0 0
  %4561 = vmatpush1.bf16.msra.mxu0 %v3870
  %4562 = vmatprep.subr.bf16.mxu0 0
  %4563 = vmatpush1.bf16.msra.mxu0 %v3867
  %4564 = vmatprep.subr.bf16.mxu0 0
  %4565 = vmatpush1.bf16.msra.mxu0 %v3864
  %4566 = vmatprep.subr.bf16.mxu0 0
  %4567 = vmatpush1.bf16.msra.mxu0 %v3861
  %4568 = vmatprep.subr.bf16.mxu0 0
  %4569 = vmatpush1.bf16.msra.mxu0 %v3858
  %4570 = vmatprep.subr.bf16.mxu0 0
  %4571 = vmatpush1.bf16.msra.mxu0 %v3855
  %4572 = vmatprep.subr.bf16.mxu0 0
  %4573 = vmatpush1.bf16.msra.mxu0 %v3852
  %4574 = vmatprep.subr.bf16.mxu0 0
  %4575 = vmatpush1.bf16.msra.mxu0 %v3849
  %4576 = vmatprep.subr.bf16.mxu0 0
  %4577 = vmatpush2.bf16.msra.mxu0 0
  %4578 = vmatprep.subr.bf16.mxu0 0
  %4579 = vmatpush2.bf16.msra.mxu0 0
  %4580 = vmatprep.subr.bf16.mxu0 0
  %4581 = vmatpush2.bf16.msra.mxu0 0
  %4582 = vmatprep.subr.bf16.mxu0 0
  %4583 = vmatpush2.bf16.msra.mxu0 0
  %4584 = vmatprep.subr.bf16.mxu0 0
  %4585 = vmatpush2.bf16.msra.mxu0 0
  %4586 = vmatprep.subr.bf16.mxu0 0
  %4587 = vmatpush2.bf16.msra.mxu0 0
  %4588 = vmatprep.subr.bf16.mxu0 0
  %4589 = vmatpush2.bf16.msra.mxu0 0
  %4590 = vmatprep.subr.bf16.mxu0 0
  %4591 = vmatpush2.bf16.msra.mxu0 0
  %4592 = vmatprep.mubr.bf16.mxu0 0
  %4593 = vmatmul.mubr.bf16.gmra.mxu0 %v4518
  %v4594 = vpop.f32.mrf.mxu0
  %v4595 = vadd.f32 0.0, %v4594
  %v4596 = vpop.f32.mrf.mxu0
  %v4597 = vpop.f32.mrf.mxu0
  %v4598 = vpop.f32.mrf.mxu0
  %4599 = vdwg.mxu0
  %v4600 = vadd.f32 %v3597, %v4554
  %v4601 = vxor.u32 %v4600, 2147483648
  %v4602 = vmul.f32 %v4601, 1.442695
  %v4603 = vpow.pop %v4602
  %v4604 = vadd.f32 %v4603, 1.0
  %v4605 = vrcp.pop %v4604
  %v4606 = vmul.f32 1.0, %v4605
  %v4607 = vadd.f32 %v3599, %v4556
  %v4608 = vxor.u32 %v4607, 2147483648
  %v4609 = vmul.f32 %v4608, 1.442695
  %v4610 = vpow.pop %v4609
  %v4611 = vadd.f32 %v4610, 1.0
  %v4612 = vrcp.pop %v4611
  %v4613 = vmul.f32 1.0, %v4612
  %v4614 = vadd.f32 %v4595, %v3766
  %v4615 = vmul.f32 %v4606, %v4614
  %v4616 = vadd.f32 %v3664, %v4615
  %v4617 = vtanh.pop %v4616
  %v4618 = vsub.f32 1.0, %v4613
  %v4619 = vmul.f32 %v4618, %v4617
  %v4620 = vmul.f32 %v4613, %v4517
  %v4621 = vadd.f32 %v4619, %v4620
  %v4622 = vpack.c.bf16 %v4621, %v4621
  %4623 = vmatprep.subr.bf16.mxu0 %v3869
  %4624 = vmatpush1.bf16.msra.mxu0 %v3868
  %4625 = vmatprep.subr.bf16.mxu0 %v3866
  %4626 = vmatpush1.bf16.msra.mxu0 %v3865
  %4627 = vmatprep.subr.bf16.mxu0 %v3863
  %4628 = vmatpush1.bf16.msra.mxu0 %v3862
  %4629 = vmatprep.subr.bf16.mxu0 %v3860
  %4630 = vmatpush1.bf16.msra.mxu0 %v3859
  %4631 = vmatprep.subr.bf16.mxu0 %v3857
  %4632 = vmatpush1.bf16.msra.mxu0 %v3856
  %4633 = vmatprep.subr.bf16.mxu0 %v3854
  %4634 = vmatpush1.bf16.msra.mxu0 %v3853
  %4635 = vmatprep.subr.bf16.mxu0 %v3851
  %4636 = vmatpush1.bf16.msra.mxu0 %v3850
  %4637 = vmatprep.subr.bf16.mxu0 %v3848
  %4638 = vmatpush1.bf16.msra.mxu0 %v3847
  %4639 = vmatprep.subr.bf16.mxu0 0
  %4640 = vmatpush2.bf16.msra.mxu0 0
  %4641 = vmatprep.subr.bf16.mxu0 0
  %4642 = vmatpush2.bf16.msra.mxu0 0
  %4643 = vmatprep.subr.bf16.mxu0 0
  %4644 = vmatpush2.bf16.msra.mxu0 0
  %4645 = vmatprep.subr.bf16.mxu0 0
  %4646 = vmatpush2.bf16.msra.mxu0 0
  %4647 = vmatprep.subr.bf16.mxu0 0
  %4648 = vmatpush2.bf16.msra.mxu0 0
  %4649 = vmatprep.subr.bf16.mxu0 0
  %4650 = vmatpush2.bf16.msra.mxu0 0
  %4651 = vmatprep.subr.bf16.mxu0 0
  %4652 = vmatpush2.bf16.msra.mxu0 0
  %4653 = vmatprep.subr.bf16.mxu0 0
  %4654 = vmatpush2.bf16.msra.mxu0 0
  %4655 = vmatprep.mubr.bf16.mxu0 0
  %4656 = vmatmul.mubr.bf16.gmra.mxu0 %v4622
  %v4657 = vpop.f32.mrf.mxu0
  %v4658 = vadd.f32 0.0, %v4657
  %v4659 = vpop.f32.mrf.mxu0
  %v4660 = vadd.f32 0.0, %v4659
  %v4661 = vpop.f32.mrf.mxu0
  %v4662 = vpop.f32.mrf.mxu0
  %4663 = vdwg.mxu0
  %4664 = vmatprep.subr.bf16.mxu0 0
  %4665 = vmatpush1.bf16.msra.mxu0 %v3870
  %4666 = vmatprep.subr.bf16.mxu0 0
  %4667 = vmatpush1.bf16.msra.mxu0 %v3867
  %4668 = vmatprep.subr.bf16.mxu0 0
  %4669 = vmatpush1.bf16.msra.mxu0 %v3864
  %4670 = vmatprep.subr.bf16.mxu0 0
  %4671 = vmatpush1.bf16.msra.mxu0 %v3861
  %4672 = vmatprep.subr.bf16.mxu0 0
  %4673 = vmatpush1.bf16.msra.mxu0 %v3858
  %4674 = vmatprep.subr.bf16.mxu0 0
  %4675 = vmatpush1.bf16.msra.mxu0 %v3855
  %4676 = vmatprep.subr.bf16.mxu0 0
  %4677 = vmatpush1.bf16.msra.mxu0 %v3852
  %4678 = vmatprep.subr.bf16.mxu0 0
  %4679 = vmatpush1.bf16.msra.mxu0 %v3849
  %4680 = vmatprep.subr.bf16.mxu0 0
  %4681 = vmatpush2.bf16.msra.mxu0 0
  %4682 = vmatprep.subr.bf16.mxu0 0
  %4683 = vmatpush2.bf16.msra.mxu0 0
  %4684 = vmatprep.subr.bf16.mxu0 0
  %4685 = vmatpush2.bf16.msra.mxu0 0
  %4686 = vmatprep.subr.bf16.mxu0 0
  %4687 = vmatpush2.bf16.msra.mxu0 0
  %4688 = vmatprep.subr.bf16.mxu0 0
  %4689 = vmatpush2.bf16.msra.mxu0 0
  %4690 = vmatprep.subr.bf16.mxu0 0
  %4691 = vmatpush2.bf16.msra.mxu0 0
  %4692 = vmatprep.subr.bf16.mxu0 0
  %4693 = vmatpush2.bf16.msra.mxu0 0
  %4694 = vmatprep.subr.bf16.mxu0 0
  %4695 = vmatpush2.bf16.msra.mxu0 0
  %4696 = vmatprep.mubr.bf16.mxu0 0
  %4697 = vmatmul.mubr.bf16.gmra.mxu0 %v4622
  %v4698 = vpop.f32.mrf.mxu0
  %v4699 = vadd.f32 0.0, %v4698
  %v4700 = vpop.f32.mrf.mxu0
  %v4701 = vpop.f32.mrf.mxu0
  %v4702 = vpop.f32.mrf.mxu0
  %4703 = vdwg.mxu0
  %v4704 = vadd.f32 %v3601, %v4658
  %v4705 = vxor.u32 %v4704, 2147483648
  %v4706 = vmul.f32 %v4705, 1.442695
  %v4707 = vpow.pop %v4706
  %v4708 = vadd.f32 %v4707, 1.0
  %v4709 = vrcp.pop %v4708
  %v4710 = vmul.f32 1.0, %v4709
  %v4711 = vadd.f32 %v3603, %v4660
  %v4712 = vxor.u32 %v4711, 2147483648
  %v4713 = vmul.f32 %v4712, 1.442695
  %v4714 = vpow.pop %v4713
  %v4715 = vadd.f32 %v4714, 1.0
  %v4716 = vrcp.pop %v4715
  %v4717 = vmul.f32 1.0, %v4716
  %v4718 = vadd.f32 %v4699, %v3766
  %v4719 = vmul.f32 %v4710, %v4718
  %v4720 = vadd.f32 %v3667, %v4719
  %v4721 = vtanh.pop %v4720
  %v4722 = vsub.f32 1.0, %v4717
  %v4723 = vmul.f32 %v4722, %v4721
  %v4724 = vmul.f32 %v4717, %v4621
  %v4725 = vadd.f32 %v4723, %v4724
  %v4726 = vld [vmem:[%s10 + $0x3] sm:$0x1]
  %v4727 = vlaneseq
  %v4728 = vshrl.u32 %v4727, 7
  %v4729 = vsub.s32 0, %v4728
  %v4730 = vrot.slane %v4726, %v4729
  %v4731 = vld [vmem:[#allocation5] sm:$0xff]
  %v4732 = vld [vmem:[#allocation5 + $0x8] sm:$0xf]
  %v4733 = vld [vmem:[#allocation5 + $0xc] sm:$0xff]
  %v4734 = vld [vmem:[#allocation5 + $0x14] sm:$0xf]
  %v4735 = vld [vmem:[#allocation5 + $0x18] sm:$0xff]
  %v4736 = vld [vmem:[#allocation5 + $0x20] sm:$0xf]
  %v4737 = vld [vmem:[#allocation5 + $0x24] sm:$0xff]
  %v4738 = vld [vmem:[#allocation5 + $0x2c] sm:$0xf]
  %v4739 = vld [vmem:[#allocation5 + $0x30] sm:$0xff]
  %v4740 = vld [vmem:[#allocation5 + $0x38] sm:$0xf]
  %v4741 = vld [vmem:[#allocation5 + $0x3c] sm:$0xff]
  %v4742 = vld [vmem:[#allocation5 + $0x44] sm:$0xf]
  %v4743 = vld [vmem:[#allocation5 + $0x48] sm:$0xff]
  %v4744 = vld [vmem:[#allocation5 + $0x50] sm:$0xf]
  %v4745 = vld [vmem:[#allocation5 + $0x54] sm:$0xff]
  %v4746 = vld [vmem:[#allocation5 + $0x5c] sm:$0xf]
  %v4747 = vld [vmem:[#allocation5 + $0x60] sm:$0xff]
  %v4748 = vld [vmem:[#allocation5 + $0x68] sm:$0xf]
  %v4749 = vld [vmem:[#allocation5 + $0x6c] sm:$0xff]
  %v4750 = vld [vmem:[#allocation5 + $0x74] sm:$0xf]
  %v4751 = vld [vmem:[#allocation5 + $0x78] sm:$0xff]
  %v4752 = vld [vmem:[#allocation5 + $0x80] sm:$0xf]
  %v4753 = vld [vmem:[#allocation5 + $0x84] sm:$0xff]
  %v4754 = vld [vmem:[#allocation5 + $0x8c] sm:$0xf]
  %v4755 = vld [vmem:[#allocation5 + $0x90] sm:$0xff]
  %v4756 = vld [vmem:[#allocation5 + $0x98] sm:$0xf]
  %v4757 = vld [vmem:[#allocation5 + $0x9c] sm:$0xff]
  %v4758 = vld [vmem:[#allocation5 + $0xa4] sm:$0xf]
  %v4759 = vld [vmem:[#allocation5 + $0xa8] sm:$0xff]
  %v4760 = vld [vmem:[#allocation5 + $0xb0] sm:$0xf]
  %v4761 = vld [vmem:[#allocation5 + $0xb4] sm:$0xff]
  %v4762 = vld [vmem:[#allocation5 + $0xbc] sm:$0xf]
  %v4795 = vunpack.c.l.b16 %v4731
  %v4796 = vunpack.c.h.b16 %v4731
  %v4797 = vunpack.c.l.b16 %v4732
  %v4798 = vunpack.c.l.b16 %v4733
  %v4799 = vunpack.c.h.b16 %v4733
  %v4800 = vunpack.c.l.b16 %v4734
  %v4801 = vunpack.c.l.b16 %v4735
  %v4802 = vunpack.c.h.b16 %v4735
  %v4803 = vunpack.c.l.b16 %v4736
  %v4804 = vunpack.c.l.b16 %v4737
  %v4805 = vunpack.c.h.b16 %v4737
  %v4806 = vunpack.c.l.b16 %v4738
  %v4807 = vunpack.c.l.b16 %v4739
  %v4808 = vunpack.c.h.b16 %v4739
  %v4809 = vunpack.c.l.b16 %v4740
  %v4810 = vunpack.c.l.b16 %v4741
  %v4811 = vunpack.c.h.b16 %v4741
  %v4812 = vunpack.c.l.b16 %v4742
  %v4813 = vunpack.c.l.b16 %v4743
  %v4814 = vunpack.c.h.b16 %v4743
  %v4815 = vunpack.c.l.b16 %v4744
  %v4816 = vunpack.c.l.b16 %v4745
  %v4817 = vunpack.c.h.b16 %v4745
  %v4818 = vunpack.c.l.b16 %v4746
  %v4819 = vunpack.c.l.b16 %v4747
  %v4820 = vunpack.c.h.b16 %v4747
  %v4821 = vunpack.c.l.b16 %v4748
  %v4822 = vunpack.c.l.b16 %v4749
  %v4823 = vunpack.c.h.b16 %v4749
  %v4824 = vunpack.c.l.b16 %v4750
  %v4825 = vunpack.c.l.b16 %v4751
  %v4826 = vunpack.c.h.b16 %v4751
  %v4827 = vunpack.c.l.b16 %v4752
  %v4828 = vunpack.c.l.b16 %v4753
  %v4829 = vunpack.c.h.b16 %v4753
  %v4830 = vunpack.c.l.b16 %v4754
  %v4831 = vunpack.c.l.b16 %v4755
  %v4832 = vunpack.c.h.b16 %v4755
  %v4833 = vunpack.c.l.b16 %v4756
  %v4834 = vunpack.c.l.b16 %v4757
  %v4835 = vunpack.c.h.b16 %v4757
  %v4836 = vunpack.c.l.b16 %v4758
  %v4837 = vunpack.c.l.b16 %v4759
  %v4838 = vunpack.c.h.b16 %v4759
  %v4839 = vunpack.c.l.b16 %v4760
  %v4840 = vunpack.c.l.b16 %v4761
  %v4841 = vunpack.c.h.b16 %v4761
  %v4842 = vunpack.c.l.b16 %v4762
  %v4843 = vpack.c.b16 %v4798, %v4795
  %v4844 = vpack.c.b16 %v4799, %v4796
  %v4845 = vpack.c.b16 %v4800, %v4797
  %v4846 = vpack.c.b16 %v4804, %v4801
  %v4847 = vpack.c.b16 %v4805, %v4802
  %v4848 = vpack.c.b16 %v4806, %v4803
  %v4849 = vpack.c.b16 %v4810, %v4807
  %v4850 = vpack.c.b16 %v4811, %v4808
  %v4851 = vpack.c.b16 %v4812, %v4809
  %v4852 = vpack.c.b16 %v4816, %v4813
  %v4853 = vpack.c.b16 %v4817, %v4814
  %v4854 = vpack.c.b16 %v4818, %v4815
  %v4855 = vpack.c.b16 %v4822, %v4819
  %v4856 = vpack.c.b16 %v4823, %v4820
  %v4857 = vpack.c.b16 %v4824, %v4821
  %v4858 = vpack.c.b16 %v4828, %v4825
  %v4859 = vpack.c.b16 %v4829, %v4826
  %v4860 = vpack.c.b16 %v4830, %v4827
  %v4861 = vpack.c.b16 %v4834, %v4831
  %v4862 = vpack.c.b16 %v4835, %v4832
  %v4863 = vpack.c.b16 %v4836, %v4833
  %v4864 = vpack.c.b16 %v4840, %v4837
  %v4865 = vpack.c.b16 %v4841, %v4838
  %v4866 = vpack.c.b16 %v4842, %v4839
  %4891 = vmatprep.subr.bf16.mxu0 %v4865
  %4892 = vmatpush1.bf16.msra.mxu0 %v4864
  %4893 = vmatprep.subr.bf16.mxu0 %v4862
  %4894 = vmatpush1.bf16.msra.mxu0 %v4861
  %4895 = vmatprep.subr.bf16.mxu0 %v4859
  %4896 = vmatpush1.bf16.msra.mxu0 %v4858
  %4897 = vmatprep.subr.bf16.mxu0 %v4856
  %4898 = vmatpush1.bf16.msra.mxu0 %v4855
  %4899 = vmatprep.subr.bf16.mxu0 %v4853
  %4900 = vmatpush1.bf16.msra.mxu0 %v4852
  %4901 = vmatprep.subr.bf16.mxu0 %v4850
  %4902 = vmatpush1.bf16.msra.mxu0 %v4849
  %4903 = vmatprep.subr.bf16.mxu0 %v4847
  %4904 = vmatpush1.bf16.msra.mxu0 %v4846
  %4905 = vmatprep.subr.bf16.mxu0 %v4844
  %4906 = vmatpush1.bf16.msra.mxu0 %v4843
  %4907 = vmatprep.subr.bf16.mxu0 0
  %4908 = vmatpush2.bf16.msra.mxu0 0
  %4909 = vmatprep.subr.bf16.mxu0 0
  %4910 = vmatpush2.bf16.msra.mxu0 0
  %4911 = vmatprep.subr.bf16.mxu0 0
  %4912 = vmatpush2.bf16.msra.mxu0 0
  %4913 = vmatprep.subr.bf16.mxu0 0
  %4914 = vmatpush2.bf16.msra.mxu0 0
  %4915 = vmatprep.subr.bf16.mxu0 0
  %4916 = vmatpush2.bf16.msra.mxu0 0
  %4917 = vmatprep.subr.bf16.mxu0 0
  %4918 = vmatpush2.bf16.msra.mxu0 0
  %4919 = vmatprep.subr.bf16.mxu0 0
  %4920 = vmatpush2.bf16.msra.mxu0 0
  %4921 = vmatprep.subr.bf16.mxu0 0
  %4922 = vmatpush2.bf16.msra.mxu0 0
  %4923 = vmatprep.mubr.bf16.mxu0 0
  %4924 = vmatmul.mubr.bf16.gmra.mxu0 0
  %v4925 = vpop.f32.mrf.mxu0
  %v4926 = vadd.f32 0.0, %v4925
  %v4927 = vpop.f32.mrf.mxu0
  %v4928 = vadd.f32 0.0, %v4927
  %v4929 = vpop.f32.mrf.mxu0
  %v4930 = vpop.f32.mrf.mxu0
  %4931 = vdwg.mxu0
  %4932 = vmatprep.subr.bf16.mxu0 0
  %4933 = vmatpush1.bf16.msra.mxu0 %v4866
  %4934 = vmatprep.subr.bf16.mxu0 0
  %4935 = vmatpush1.bf16.msra.mxu0 %v4863
  %4936 = vmatprep.subr.bf16.mxu0 0
  %4937 = vmatpush1.bf16.msra.mxu0 %v4860
  %4938 = vmatprep.subr.bf16.mxu0 0
  %4939 = vmatpush1.bf16.msra.mxu0 %v4857
  %4940 = vmatprep.subr.bf16.mxu0 0
  %4941 = vmatpush1.bf16.msra.mxu0 %v4854
  %4942 = vmatprep.subr.bf16.mxu0 0
  %4943 = vmatpush1.bf16.msra.mxu0 %v4851
  %4944 = vmatprep.subr.bf16.mxu0 0
  %4945 = vmatpush1.bf16.msra.mxu0 %v4848
  %4946 = vmatprep.subr.bf16.mxu0 0
  %4947 = vmatpush1.bf16.msra.mxu0 %v4845
  %4948 = vmatprep.subr.bf16.mxu0 0
  %4949 = vmatpush2.bf16.msra.mxu0 0
  %4950 = vmatprep.subr.bf16.mxu0 0
  %4951 = vmatpush2.bf16.msra.mxu0 0
  %4952 = vmatprep.subr.bf16.mxu0 0
  %4953 = vmatpush2.bf16.msra.mxu0 0
  %4954 = vmatprep.subr.bf16.mxu0 0
  %4955 = vmatpush2.bf16.msra.mxu0 0
  %4956 = vmatprep.subr.bf16.mxu0 0
  %4957 = vmatpush2.bf16.msra.mxu0 0
  %4958 = vmatprep.subr.bf16.mxu0 0
  %4959 = vmatpush2.bf16.msra.mxu0 0
  %4960 = vmatprep.subr.bf16.mxu0 0
  %4961 = vmatpush2.bf16.msra.mxu0 0
  %4962 = vmatprep.subr.bf16.mxu0 0
  %4963 = vmatpush2.bf16.msra.mxu0 0
  %4964 = vmatprep.mubr.bf16.mxu0 0
  %4965 = vmatmul.mubr.bf16.gmra.mxu0 0
  %v4966 = vpop.f32.mrf.mxu0
  %v4967 = vadd.f32 0.0, %v4966
  %v4968 = vpop.f32.mrf.mxu0
  %v4969 = vpop.f32.mrf.mxu0
  %v4970 = vpop.f32.mrf.mxu0
  %4971 = vdwg.mxu0
  %v4972 = vadd.f32 %v3669, %v4926
  %v4973 = vxor.u32 %v4972, 2147483648
  %v4974 = vmul.f32 %v4973, 1.442695
  %v4975 = vpow.pop %v4974
  %v4976 = vadd.f32 %v4975, 1.0
  %v4977 = vrcp.pop %v4976
  %v4978 = vmul.f32 1.0, %v4977
  %v4979 = vadd.f32 %v3726, %v4928
  %v4980 = vxor.u32 %v4979, 2147483648
  %v4981 = vmul.f32 %v4980, 1.442695
  %v4982 = vpow.pop %v4981
  %v4983 = vadd.f32 %v4982, 1.0
  %v4984 = vrcp.pop %v4983
  %v4985 = vmul.f32 1.0, %v4984
  %v4986 = vadd.f32 %v4967, %v4730
  %v4987 = vmul.f32 %v4978, %v4986
  %v4988 = vadd.f32 %v3728, %v4987
  %v4989 = vtanh.pop %v4988
  %v4990 = vsub.f32 1.0, %v4985
  %v4991 = vmul.f32 %v4990, %v4989
  %v4992 = vmul.f32 %v4985, 0.0
  %v4993 = vadd.f32 %v4991, %v4992
  %v4994 = vpack.c.bf16 %v4725, %v4725
  %v4995 = vld [vmem:[%s7] sm:$0xf]
  %v4996 = vld [vmem:[%s7 + $0x4] sm:$0xf]
  %v4997 = vld [vmem:[%s7 + $0x8] sm:$0xf]
  %v4998 = vld [vmem:[%s7 + $0xc] sm:$0xf]
  %v4999 = vld [vmem:[%s7 + $0x10] sm:$0xf]
  %v5000 = vld [vmem:[%s7 + $0x14] sm:$0xf]
  %v5001 = vld [vmem:[%s7 + $0x18] sm:$0xf]
  %v5002 = vld [vmem:[%s7 + $0x1c] sm:$0xf]
  %v5003 = vld [vmem:[%s7 + $0x20] sm:$0xf]
  %v5004 = vld [vmem:[%s7 + $0x24] sm:$0xf]
  %v5005 = vld [vmem:[%s7 + $0x28] sm:$0xf]
  %v5006 = vld [vmem:[%s7 + $0x2c] sm:$0xf]
  %v5007 = vld [vmem:[%s7 + $0x30] sm:$0xf]
  %v5008 = vld [vmem:[%s7 + $0x34] sm:$0xf]
  %v5009 = vld [vmem:[%s7 + $0x38] sm:$0xf]
  %v5010 = vld [vmem:[%s7 + $0x3c] sm:$0xf]
  %v5011 = vpack.c.bf16 %v4993, %v4993
  %v5012 = vld [vmem:[%s7 + $0x40] sm:$0xf]
  %v5013 = vld [vmem:[%s7 + $0x44] sm:$0xf]
  %v5014 = vld [vmem:[%s7 + $0x48] sm:$0xf]
  %v5015 = vld [vmem:[%s7 + $0x4c] sm:$0xf]
  %v5016 = vld [vmem:[%s7 + $0x50] sm:$0xf]
  %v5017 = vld [vmem:[%s7 + $0x54] sm:$0xf]
  %v5018 = vld [vmem:[%s7 + $0x58] sm:$0xf]
  %v5019 = vld [vmem:[%s7 + $0x5c] sm:$0xf]
  %v5020 = vld [vmem:[%s7 + $0x60] sm:$0xf]
  %v5021 = vld [vmem:[%s7 + $0x64] sm:$0xf]
  %v5022 = vld [vmem:[%s7 + $0x68] sm:$0xf]
  %v5023 = vld [vmem:[%s7 + $0x6c] sm:$0xf]
  %v5024 = vld [vmem:[%s7 + $0x70] sm:$0xf]
  %v5025 = vld [vmem:[%s7 + $0x74] sm:$0xf]
  %v5026 = vld [vmem:[%s7 + $0x78] sm:$0xf]
  %v5027 = vld [vmem:[%s7 + $0x7c] sm:$0xf]
  %v5044 = vunpack.c.l.b16 %v5012
  %v5045 = vunpack.c.l.b16 %v5013
  %v5046 = vunpack.c.l.b16 %v5014
  %v5047 = vunpack.c.l.b16 %v5015
  %v5048 = vunpack.c.l.b16 %v5016
  %v5049 = vunpack.c.l.b16 %v5017
  %v5050 = vunpack.c.l.b16 %v5018
  %v5051 = vunpack.c.l.b16 %v5019
  %v5052 = vunpack.c.l.b16 %v5020
  %v5053 = vunpack.c.l.b16 %v5021
  %v5054 = vunpack.c.l.b16 %v5022
  %v5055 = vunpack.c.l.b16 %v5023
  %v5056 = vunpack.c.l.b16 %v5024
  %v5057 = vunpack.c.l.b16 %v5025
  %v5058 = vunpack.c.l.b16 %v5026
  %v5059 = vunpack.c.l.b16 %v5027
  %v5060 = vpack.c.b16 %v5045, %v5044
  %v5061 = vpack.c.b16 %v5047, %v5046
  %v5062 = vpack.c.b16 %v5049, %v5048
  %v5063 = vpack.c.b16 %v5051, %v5050
  %v5064 = vpack.c.b16 %v5053, %v5052
  %v5065 = vpack.c.b16 %v5055, %v5054
  %v5066 = vpack.c.b16 %v5057, %v5056
  %v5067 = vpack.c.b16 %v5059, %v5058
  %5076 = vmatprep.subr.bf16.mxu0 0
  %5077 = vmatpush1.bf16.msra.mxu0 %v5067
  %5078 = vmatprep.subr.bf16.mxu0 0
  %5079 = vmatpush1.bf16.msra.mxu0 %v5066
  %5080 = vmatprep.subr.bf16.mxu0 0
  %5081 = vmatpush1.bf16.msra.mxu0 %v5065
  %5082 = vmatprep.subr.bf16.mxu0 0
  %5083 = vmatpush1.bf16.msra.mxu0 %v5064
  %5084 = vmatprep.subr.bf16.mxu0 0
  %5085 = vmatpush1.bf16.msra.mxu0 %v5063
  %5086 = vmatprep.subr.bf16.mxu0 0
  %5087 = vmatpush1.bf16.msra.mxu0 %v5062
  %5088 = vmatprep.subr.bf16.mxu0 0
  %5089 = vmatpush1.bf16.msra.mxu0 %v5061
  %5090 = vmatprep.subr.bf16.mxu0 0
  %5091 = vmatpush1.bf16.msra.mxu0 %v5060
  %5092 = vmatprep.subr.bf16.mxu0 0
  %5093 = vmatpush2.bf16.msra.mxu0 0
  %5094 = vmatprep.subr.bf16.mxu0 0
  %5095 = vmatpush2.bf16.msra.mxu0 0
  %5096 = vmatprep.subr.bf16.mxu0 0
  %5097 = vmatpush2.bf16.msra.mxu0 0
  %5098 = vmatprep.subr.bf16.mxu0 0
  %5099 = vmatpush2.bf16.msra.mxu0 0
  %5100 = vmatprep.subr.bf16.mxu0 0
  %5101 = vmatpush2.bf16.msra.mxu0 0
  %5102 = vmatprep.subr.bf16.mxu0 0
  %5103 = vmatpush2.bf16.msra.mxu0 0
  %5104 = vmatprep.subr.bf16.mxu0 0
  %5105 = vmatpush2.bf16.msra.mxu0 0
  %5106 = vmatprep.subr.bf16.mxu0 0
  %5107 = vmatpush2.bf16.msra.mxu0 0
  %5108 = vmatprep.mubr.bf16.mxu0 0
  %5109 = vmatmul.mubr.bf16.gmra.mxu0 %v5011
  %v5110 = vpop.f32.mrf.mxu0
  %v5111 = vadd.f32 0.0, %v5110
  %v5112 = vpop.f32.mrf.mxu0
  %v5113 = vpop.f32.mrf.mxu0
  %v5114 = vpop.f32.mrf.mxu0
  %5115 = vdwg.mxu0
  %v5132 = vunpack.c.l.b16 %v4995
  %v5133 = vunpack.c.l.b16 %v4996
  %v5134 = vunpack.c.l.b16 %v4997
  %v5135 = vunpack.c.l.b16 %v4998
  %v5136 = vunpack.c.l.b16 %v4999
  %v5137 = vunpack.c.l.b16 %v5000
  %v5138 = vunpack.c.l.b16 %v5001
  %v5139 = vunpack.c.l.b16 %v5002
  %v5140 = vunpack.c.l.b16 %v5003
  %v5141 = vunpack.c.l.b16 %v5004
  %v5142 = vunpack.c.l.b16 %v5005
  %v5143 = vunpack.c.l.b16 %v5006
  %v5144 = vunpack.c.l.b16 %v5007
  %v5145 = vunpack.c.l.b16 %v5008
  %v5146 = vunpack.c.l.b16 %v5009
  %v5147 = vunpack.c.l.b16 %v5010
  %v5148 = vpack.c.b16 %v5133, %v5132
  %v5149 = vpack.c.b16 %v5135, %v5134
  %v5150 = vpack.c.b16 %v5137, %v5136
  %v5151 = vpack.c.b16 %v5139, %v5138
  %v5152 = vpack.c.b16 %v5141, %v5140
  %v5153 = vpack.c.b16 %v5143, %v5142
  %v5154 = vpack.c.b16 %v5145, %v5144
  %v5155 = vpack.c.b16 %v5147, %v5146
  %5164 = vmatprep.subr.bf16.mxu0 0
  %5165 = vmatpush1.bf16.msra.mxu0 %v5155
  %5166 = vmatprep.subr.bf16.mxu0 0
  %5167 = vmatpush1.bf16.msra.mxu0 %v5154
  %5168 = vmatprep.subr.bf16.mxu0 0
  %5169 = vmatpush1.bf16.msra.mxu0 %v5153
  %5170 = vmatprep.subr.bf16.mxu0 0
  %5171 = vmatpush1.bf16.msra.mxu0 %v5152
  %5172 = vmatprep.subr.bf16.mxu0 0
  %5173 = vmatpush1.bf16.msra.mxu0 %v5151
  %5174 = vmatprep.subr.bf16.mxu0 0
  %5175 = vmatpush1.bf16.msra.mxu0 %v5150
  %5176 = vmatprep.subr.bf16.mxu0 0
  %5177 = vmatpush1.bf16.msra.mxu0 %v5149
  %5178 = vmatprep.subr.bf16.mxu0 0
  %5179 = vmatpush1.bf16.msra.mxu0 %v5148
  %5180 = vmatprep.subr.bf16.mxu0 0
  %5181 = vmatpush2.bf16.msra.mxu0 0
  %5182 = vmatprep.subr.bf16.mxu0 0
  %5183 = vmatpush2.bf16.msra.mxu0 0
  %5184 = vmatprep.subr.bf16.mxu0 0
  %5185 = vmatpush2.bf16.msra.mxu0 0
  %5186 = vmatprep.subr.bf16.mxu0 0
  %5187 = vmatpush2.bf16.msra.mxu0 0
  %5188 = vmatprep.subr.bf16.mxu0 0
  %5189 = vmatpush2.bf16.msra.mxu0 0
  %5190 = vmatprep.subr.bf16.mxu0 0
  %5191 = vmatpush2.bf16.msra.mxu0 0
  %5192 = vmatprep.subr.bf16.mxu0 0
  %5193 = vmatpush2.bf16.msra.mxu0 0
  %5194 = vmatprep.subr.bf16.mxu0 0
  %5195 = vmatpush2.bf16.msra.mxu0 0
  %5196 = vmatprep.mubr.bf16.mxu0 0
  %5197 = vmatmul.mubr.bf16.gmra.mxu0 %v4994
  %v5198 = vpop.f32.mrf.mxu0
  %v5199 = vadd.f32 %v5111, %v5198
  %v5200 = vpop.f32.mrf.mxu0
  %v5201 = vpop.f32.mrf.mxu0
  %v5202 = vpop.f32.mrf.mxu0
  %5203 = vdwg.mxu0
  %v5204 = vld [vmem:[%s8] sm:$0x1]
  %v5206 = vlaneseq
  %v5207 = vshrl.u32 %v5206, 7
  %v5208 = vsub.s32 0, %v5207
  %v5209 = vrot.slane %v5204, %v5208
  %v5211 = vadd.f32 %v5199, %v5209
  %5212 = vst [vmem:[%s11] sm:$0xff] %v5211
  // Predicated region
  $region136: #{bigru_classifier_forward.1} parent=0 // pred_check
    _
  $region137: #{bigru_classifier_forward.1} parent=0 // pred_check_branch
    %5214 = sbr.rel (0) target = $region139
  $region138: #{bigru_classifier_forward.1} parent=0 // pred_region
    _
  $region139: #{bigru_classifier_forward.1} parent=0 // pred_fallthru
    _
  // Predicated region
  $region140: #{bigru_classifier_forward.1} parent=0 // pred_check
    _
  $region141: #{bigru_classifier_forward.1} parent=0 // pred_check_branch
    %5216 = sbr.rel (0) target = $region143
  $region142: #{bigru_classifier_forward.1} parent=0 // pred_region
    _
  $region143: #{bigru_classifier_forward.1} parent=0 // pred_fallthru
    _
  %5217 = vsyncmov [#allocation6]
  %s5218 = vpop.sfrf %5217
  %p5219 = scmp.eq.s32.totalorder %s5218, 0
  %p5220 = pneg %p5219
  %5222 = shalt.err (%p5220)
  %s5223 = scalar_lea.sflag [#allocation6], 1
  %5224 = vsyncmov %s5223
  %s5225 = vpop.sfrf %5224
  %p5226 = scmp.eq.s32.totalorder %s5225, 0
  %p5227 = pneg %p5226
  %5229 = shalt.err (%p5227)
  %s5230 = scalar_lea.sflag [#allocation6], 2
  %5231 = vsyncmov %s5230
  %s5232 = vpop.sfrf %5231
  %p5233 = scmp.eq.s32.totalorder %s5232, 0
  %p5234 = pneg %p5233
  %5236 = shalt.err (%p5234)

</llo_original>
